<compile_context>
chip_gen: v6e
topology: v6e:2x2x1
jax: 0.10.0
libtpu: 0.0.40
codegen_flags: <defaults>
</compile_context>

<pallas_src>
import functools

import jax
import jax.numpy as jnp
import numpy as np
from jax.experimental import pallas as pl
from jax.experimental.pallas import tpu as pltpu


def make_kernel_np(k):
    k = np.asarray(k, dtype=np.float32)
    if k.ndim == 1:
        k = np.outer(k, k)
    k = k / k.sum()
    return k


def _phase_taps(K, up, pad0):
    """For each output phase: (kernel row/col index a, source offset d) pairs."""
    taps = []
    for ph in range(up):
        lst = []
        for a in range(K):
            c = ph + (K - 1) - pad0 - a
            if c % up == 0:
                lst.append((a, c // up))
        taps.append(lst)
    offs = [d for lst in taps for (_, d) in lst]
    pad_lo = max(0, -min(offs)) if offs else 0
    pad_hi = max(0, max(offs)) if offs else 0
    return taps, pad_lo, pad_hi


# ----------------------------------------------------------------------------
# In-kernel helpers (all offsets/weights are Python constants).
# ----------------------------------------------------------------------------

def _fill_padded(x_ref, xpad_ref, H, W, pad_lo, pad_hi):
    """Build the zero-padded plane block in VMEM (replaces wrapper jnp.pad)."""
    if pad_lo or pad_hi:
        # Re-zero every grid step: no cross-step / cross-core state to manage.
        xpad_ref[...] = jnp.zeros(xpad_ref.shape, xpad_ref.dtype)
    xpad_ref[:, pad_lo:pad_lo + H, pad_lo:pad_lo + W] = x_ref[...]


def _accum_phase(xpad_ref, k2d, rtaps, ctaps, h0, ch, W, pad_lo, blk, cache):
    """f32 accumulator for one (py, px) phase over rows [h0, h0+ch)."""
    acc = None
    for (a, dy) in rtaps:
        for (b, dx) in ctaps:
            w = float(k2d[a, b])
            if w == 0.0:
                continue
            key = (dy, dx)
            if key not in cache:
                ys = h0 + dy + pad_lo
                xs = dx + pad_lo
                # Per-tap window load straight from the ref (no full f32 copy).
                cache[key] = xpad_ref[:, ys:ys + ch, xs:xs + W].astype(jnp.float32)
            term = w * cache[key]
            acc = term if acc is None else acc + term
    if acc is None:
        acc = jnp.zeros((blk, ch, W), jnp.float32)
    return acc


def _upsample_fused_kernel(x_ref, o_ref, xpad_ref, *, k2d, taps, f, H, W,
                           pad_lo, pad_hi, hc):
    """Fused kernel: phases interleaved in registers, dense lane-wide stores."""
    blk = x_ref.shape[0]
    _fill_padded(x_ref, xpad_ref, H, W, pad_lo, pad_hi)
    for h0 in range(0, H, hc):
        ch = min(hc, H - h0)
        cache = {}
        rows = []
        for py in range(f):
            cols = []
            for px in range(f):
                acc = _accum_phase(xpad_ref, k2d, taps[py], taps[px],
                                   h0, ch, W, pad_lo, blk, cache)
                cols.append(acc.astype(o_ref.dtype))
            rows.append(jnp.stack(cols, axis=-1))          # (blk, ch, W, f)
        tile = jnp.stack(rows, axis=2)                     # (blk, ch, f, W, f)
        # Row-major merge: element (b, hh*f+py, w*f+px) <- tile[b, hh, py, w, px]
        o_ref[:, h0 * f:(h0 + ch) * f, :] = tile.reshape(blk, ch * f, W * f)


def _upsample_phase_kernel(x_ref, o_ref, xpad_ref, *, k2d, taps, f, H, W,
                           pad_lo, pad_hi):
    """Fallback kernel: dense per-phase planes, wrapper-side interleave."""
    blk = x_ref.shape[0]
    _fill_padded(x_ref, xpad_ref, H, W, pad_lo, pad_hi)
    cache = {}
    for py in range(f):
        for px in range(f):
            acc = _accum_phase(xpad_ref, k2d, taps[py], taps[px],
                               0, H, W, pad_lo, blk, cache)
            o_ref[:, py * f + px, :, :] = acc.astype(o_ref.dtype)


# ----------------------------------------------------------------------------
# Wrapper.
# ----------------------------------------------------------------------------

def _pick_block(NC, per_plane_bytes, budget_bytes, out_plane_bytes):
    """Largest divisor of NC fitting the VMEM budget; prefer >=4 grid steps."""
    divs, d = [], 1
    while d * d <= NC:
        if NC % d == 0:
            divs.append(d)
            divs.append(NC // d)
        d += 1
    divs = sorted(set(divs))
    fits = [d for d in divs if d * per_plane_bytes <= budget_bytes] or [1]
    blk = max(fits)
    # >=4 steps -> auto-pipeline hides DMA and both v7x cores get work, but only
    # when each step still moves a roofline-friendly amount of output.
    good = [d for d in fits
            if NC // d >= 4 and d * out_plane_bytes >= 2 * 1024 * 1024]
    if good:
        blk = max(good)
    return blk


def _upsample_impl(x, k2d, factor, pad, fused):
    N, C, H, W = x.shape
    K = int(k2d.shape[0])
    assert k2d.shape[0] == k2d.shape[1]
    pad0, pad1 = pad
    assert pad0 >= 0 and pad1 >= 0, "negative pads not supported"
    f = int(factor)
    out_h = H * f + pad0 + pad1 - K + 1
    out_w = W * f + pad0 + pad1 - K + 1
    assert out_h == H * f and out_w == W * f

    taps, pad_lo, pad_hi = _phase_taps(K, f, pad0)
    Hp = H + pad_lo + pad_hi
    Wp = W + pad_lo + pad_hi
    NC = N * C
    x_planes = x.reshape(NC, H, W)            # free (row-major compatible)
    it = jnp.dtype(x.dtype).itemsize
    k2d_np = np.asarray(k2d, np.float32)

    # --- per-generation VMEM sizing -----------------------------------------
    try:
        info = pltpu.get_tpu_info()
        vmem_cap = int(getattr(info, "vmem_capacity_bytes", 64 << 20))
    except Exception:
        vmem_cap = 64 << 20                    # v7x-safe conservative default
    vmem_limit = int(min(max(vmem_cap * 3 // 4, 32 << 20), 100 << 20))
    budget = max(4 << 20, min(vmem_cap // 3, 24 << 20) - (4 << 20))

    in_plane = H * W * it
    out_plane = f * f * H * W * it
    pad_plane = Hp * Wp * it
    tmp_plane = 8 * f * f * H * W              # f32 accumulators + interleave temps
    per_plane = 2 * in_plane + 2 * out_plane + pad_plane + tmp_plane
    blk = _pick_block(NC, per_plane, budget, out_plane)
    num_blocks = NC // blk
    # Bound the (blk, hc, W, f) interleave temporaries.
    hc = max(1, min(H, 8192 // max(1, blk * W * f)))
    # TODO(synk): very large single planes (>~16 MiB each, e.g. 1024x1024) still
    # need spatial H-halo tiling; current version tiles only over the N*C axis.

    cost = pl.CostEstimate(
        flops=2 * NC * H * W * K * K,
        transcendentals=0,
        bytes_accessed=int(NC * (H * W + f * f * H * W) * it),
    )
    cparams = pltpu.CompilerParams(
        dimension_semantics=("parallel",),
        vmem_limit_bytes=vmem_limit,
    )
    scratch = [pltpu.VMEM((blk, Hp, Wp), x.dtype)]

    if fused:
        kern = functools.partial(
            _upsample_fused_kernel, k2d=k2d_np, taps=taps, f=f, H=H, W=W,
            pad_lo=pad_lo, pad_hi=pad_hi, hc=hc)
        out = pl.pallas_call(
            kern,
            out_shape=jax.ShapeDtypeStruct((NC, H * f, W * f), x.dtype),
            grid_spec=pltpu.PrefetchScalarGridSpec(
                num_scalar_prefetch=0,
                grid=(num_blocks,),
                in_specs=[pl.BlockSpec((blk, H, W), lambda i: (i, 0, 0))],
                out_specs=pl.BlockSpec((blk, H * f, W * f), lambda i: (i, 0, 0)),
                scratch_shapes=scratch,
            ),
            compiler_params=cparams,
            cost_estimate=cost,
        )(x_planes)
        return out.reshape(N, C, H * f, W * f)   # free reshape, no transpose

    # Fallback: dense phase planes + wrapper-side interleave (layout plumbing).
    kern = functools.partial(
        _upsample_phase_kernel, k2d=k2d_np, taps=taps, f=f, H=H, W=W,
        pad_lo=pad_lo, pad_hi=pad_hi)
    P = f * f
    phases = pl.pallas_call(
        kern,
        out_shape=jax.ShapeDtypeStruct((NC, P, H, W), x.dtype),
        grid_spec=pltpu.PrefetchScalarGridSpec(
            num_scalar_prefetch=0,
            grid=(num_blocks,),
            in_specs=[pl.BlockSpec((blk, H, W), lambda i: (i, 0, 0))],
            out_specs=pl.BlockSpec((blk, P, H, W), lambda i: (i, 0, 0, 0)),
            scratch_shapes=scratch,
        ),
        compiler_params=cparams,
        cost_estimate=cost,
    )(x_planes)
    out = phases.reshape(NC, f, f, H, W).transpose(0, 3, 1, 4, 2)
    return out.reshape(N, C, H * f, W * f)


# One-time capability probe for the in-register phase interleave
# (stack + minor-dim reshape).  If Mosaic rejects it we fall back to the
# phase-plane kernel, so the module always runs.
_FUSED_OK = None


def _fused_supported():
    global _FUSED_OK
    if _FUSED_OK is None:
        try:
            k = make_kernel_np([1, 3, 3, 1]) * 4.0   # factor=2 -> pad=(2, 1)
            xp = jnp.ones((1, 4, 16, 16), jnp.float32)
            jax.block_until_ready(_upsample_impl(xp, k, 2, (2, 1), fused=True))
            _FUSED_OK = True
        except Exception:
            _FUSED_OK = False
    return _FUSED_OK


def upfirdn2d_upsample(x, k2d, factor, pad):
    """Pallas-backed upfirdn2d(x, k2d, up=factor, down=1, pad=pad)."""
    return _upsample_impl(x, k2d, factor, pad, fused=_fused_supported())


class Upsample:
    """Pallas equivalent of the PyTorch Upsample module (upfirdn2d, up=factor)."""

    def __init__(self, kernel, factor=2):
        self.factor = factor
        self.kernel = make_kernel_np(kernel) * (factor ** 2)
        p = self.kernel.shape[0] - factor
        self.pad = ((p + 1) // 2 + factor - 1, p // 2)

    def __call__(self, x):
        return upfirdn2d_upsample(x, self.kernel, self.factor, self.pad)


# ----------------------------------------------------------------------------
# Pure-JAX reference (transliteration of torch upfirdn2d_native, down=1).
# ----------------------------------------------------------------------------

def upfirdn2d_ref(x, k2d, up, pad0, pad1):
    N, C, H, W = x.shape
    u = jnp.zeros((N, C, H, up, W, up), jnp.float32)
    u = u.at[:, :, :, 0, :, 0].set(x.astype(jnp.float32))
    u = u.reshape(N, C, H * up, W * up)
    u = jnp.pad(u, ((0, 0), (0, 0), (pad0, pad1), (pad0, pad1)))
    K = k2d.shape[0]
    out_h = H * up + pad0 + pad1 - K + 1
    out_w = W * up + pad0 + pad1 - K + 1
    kf = np.asarray(k2d)[::-1, ::-1]
    out = jnp.zeros((N, C, out_h, out_w), jnp.float32)
    for ky in range(K):
        for kx in range(K):
            out = out + float(kf[ky, kx]) * u[:, :, ky:ky + out_h, kx:kx + out_w]
    return out.astype(x.dtype)


if __name__ == "__main__":
    key = jax.random.PRNGKey(0)
    N, C, H, W = 2, 4, 16, 16
    x = jax.random.normal(key, (N, C, H, W), dtype=jnp.float32)

    # (a) canonical StyleGAN2 upsample: [1,3,3,1], factor=2
    mod = Upsample(kernel=[1, 3, 3, 1], factor=2)
    out = jax.block_until_ready(mod(x))
    assert out.shape == (N, C, H * 2, W * 2), out.shape
    ref = upfirdn2d_ref(x, mod.kernel, mod.factor, mod.pad[0], mod.pad[1])
    err = float(jnp.max(jnp.abs(out - ref)))
    assert jnp.allclose(out, ref, atol=1e-5, rtol=1e-5), err

    # (b) asymmetric FIR kernel, factor=2 (exercises tap/weight indexing)
    mod_a = Upsample(kernel=[1.0, 2.0, 3.0, 4.0], factor=2)
    out_a = jax.block_until_ready(mod_a(x))
    ref_a = upfirdn2d_ref(x, mod_a.kernel, 2, mod_a.pad[0], mod_a.pad[1])
    err_a = float(jnp.max(jnp.abs(out_a - ref_a)))
    assert jnp.allclose(out_a, ref_a, atol=1e-5, rtol=1e-5), err_a

    # (c) factor=4 tap math, validated through the always-available
    #     phase-plane path (no in-register interleave involved).
    mod_4 = Upsample(kernel=[1, 3, 3, 1], factor=4)
    out_4 = jax.block_until_ready(
        _upsample_impl(x, mod_4.kernel, 4, mod_4.pad, fused=False))
    ref_4 = upfirdn2d_ref(x, mod_4.kernel, 4, mod_4.pad[0], mod_4.pad[1])
    err_4 = float(jnp.max(jnp.abs(out_4 - ref_4)))
    assert jnp.allclose(out_4, ref_4, atol=1e-5, rtol=1e-5), err_4

    print("KERNEL_OK")
</pallas_src>

<mosaic_0001>
module attributes {stable_mosaic.version = 11 : i64} {
  func.func @_upsample_fused_kernel(%arg0: i32, %arg1: memref<4x16x16xf32, #tpu.memory_space<vmem>>, %arg2: memref<4x32x32xf32, #tpu.memory_space<vmem>>, %arg3: memref<4x18x18xf32, #tpu.memory_space<vmem>>) attributes {dimension_semantics = [#tpu.dimension_semantics<parallel>], iteration_bounds = array<i64: 1>, scalar_prefetch = 0 : i64, scratch_operands = 1 : i64, tpu.core_type = #tpu.core_type<tc>, window_params = [{transform_indices = @transform_0, window_bounds = array<i64: 4, 16, 16>}, {transform_indices = @transform_1, window_bounds = array<i64: 4, 32, 32>}]} {
    %cst = arith.constant 0.000000e+00 : f32
    %0 = vector.broadcast %cst : f32 to vector<4x18x18xf32>
    %c0 = arith.constant 0 : index
    %c0_0 = arith.constant 0 : index
    %c0_1 = arith.constant 0 : index
    %1 = vector.load %arg3[%c0, %c0_0, %c0_1] : memref<4x18x18xf32, #tpu.memory_space<vmem>>, vector<4x18x18xf32>
    tpu.vector_store %arg3[%c0, %c0_0, %c0_1], %0 {strides = array<i32>} : memref<4x18x18xf32, #tpu.memory_space<vmem>>, vector<4x18x18xf32>,
    %c0_2 = arith.constant 0 : index
    %c0_3 = arith.constant 0 : index
    %c0_4 = arith.constant 0 : index
    %2 = vector.load %arg1[%c0_2, %c0_3, %c0_4] : memref<4x16x16xf32, #tpu.memory_space<vmem>>, vector<4x16x16xf32>
    %c0_5 = arith.constant 0 : index
    %c1 = arith.constant 1 : index
    %c1_6 = arith.constant 1 : index
    %3 = vector.load %arg3[%c0_5, %c1, %c1_6] : memref<4x18x18xf32, #tpu.memory_space<vmem>>, vector<4x16x16xf32>
    tpu.vector_store %arg3[%c0_5, %c1, %c1_6], %2 {strides = array<i32>} : memref<4x18x18xf32, #tpu.memory_space<vmem>>, vector<4x16x16xf32>,
    %c0_7 = arith.constant 0 : index
    %c1_8 = arith.constant 1 : index
    %c1_9 = arith.constant 1 : index
    %4 = vector.load %arg3[%c0_7, %c1_8, %c1_9] : memref<4x18x18xf32, #tpu.memory_space<vmem>>, vector<4x16x16xf32>
    %cst_10 = arith.constant 5.625000e-01 : f32
    %5 = vector.broadcast %cst_10 : f32 to vector<4x16x16xf32>
    %6 = arith.mulf %5, %4 : vector<4x16x16xf32>
    %c0_11 = arith.constant 0 : index
    %c1_12 = arith.constant 1 : index
    %c0_13 = arith.constant 0 : index
    %7 = vector.load %arg3[%c0_11, %c1_12, %c0_13] : memref<4x18x18xf32, #tpu.memory_space<vmem>>, vector<4x16x16xf32>
    %cst_14 = arith.constant 1.875000e-01 : f32
    %8 = vector.broadcast %cst_14 : f32 to vector<4x16x16xf32>
    %9 = arith.mulf %8, %7 : vector<4x16x16xf32>
    %10 = arith.addf %6, %9 : vector<4x16x16xf32>
    %c0_15 = arith.constant 0 : index
    %c0_16 = arith.constant 0 : index
    %c1_17 = arith.constant 1 : index
    %11 = vector.load %arg3[%c0_15, %c0_16, %c1_17] : memref<4x18x18xf32, #tpu.memory_space<vmem>>, vector<4x16x16xf32>
    %cst_18 = arith.constant 1.875000e-01 : f32
    %12 = vector.broadcast %cst_18 : f32 to vector<4x16x16xf32>
    %13 = arith.mulf %12, %11 : vector<4x16x16xf32>
    %14 = arith.addf %10, %13 : vector<4x16x16xf32>
    %c0_19 = arith.constant 0 : index
    %c0_20 = arith.constant 0 : index
    %c0_21 = arith.constant 0 : index
    %15 = vector.load %arg3[%c0_19, %c0_20, %c0_21] : memref<4x18x18xf32, #tpu.memory_space<vmem>>, vector<4x16x16xf32>
    %cst_22 = arith.constant 6.250000e-02 : f32
    %16 = vector.broadcast %cst_22 : f32 to vector<4x16x16xf32>
    %17 = arith.mulf %16, %15 : vector<4x16x16xf32>
    %18 = arith.addf %14, %17 : vector<4x16x16xf32>
    %c0_23 = arith.constant 0 : index
    %c1_24 = arith.constant 1 : index
    %c2 = arith.constant 2 : index
    %19 = vector.load %arg3[%c0_23, %c1_24, %c2] : memref<4x18x18xf32, #tpu.memory_space<vmem>>, vector<4x16x16xf32>
    %cst_25 = arith.constant 1.875000e-01 : f32
    %20 = vector.broadcast %cst_25 : f32 to vector<4x16x16xf32>
    %21 = arith.mulf %20, %19 : vector<4x16x16xf32>
    %cst_26 = arith.constant 5.625000e-01 : f32
    %22 = vector.broadcast %cst_26 : f32 to vector<4x16x16xf32>
    %23 = arith.mulf %22, %4 : vector<4x16x16xf32>
    %24 = arith.addf %21, %23 : vector<4x16x16xf32>
    %c0_27 = arith.constant 0 : index
    %c0_28 = arith.constant 0 : index
    %c2_29 = arith.constant 2 : index
    %25 = vector.load %arg3[%c0_27, %c0_28, %c2_29] : memref<4x18x18xf32, #tpu.memory_space<vmem>>, vector<4x16x16xf32>
    %cst_30 = arith.constant 6.250000e-02 : f32
    %26 = vector.broadcast %cst_30 : f32 to vector<4x16x16xf32>
    %27 = arith.mulf %26, %25 : vector<4x16x16xf32>
    %28 = arith.addf %24, %27 : vector<4x16x16xf32>
    %cst_31 = arith.constant 1.875000e-01 : f32
    %29 = vector.broadcast %cst_31 : f32 to vector<4x16x16xf32>
    %30 = arith.mulf %29, %11 : vector<4x16x16xf32>
    %31 = arith.addf %28, %30 : vector<4x16x16xf32>
    %32 = vector.shape_cast %18 : vector<4x16x16xf32> to vector<4x16x16x1xf32>
    %33 = vector.shape_cast %31 : vector<4x16x16xf32> to vector<4x16x16x1xf32>
    %34 = tpu.concatenate %32, %33 in 3 : vector<4x16x16x1xf32>, vector<4x16x16x1xf32> -> vector<4x16x16x2xf32>
    %c0_32 = arith.constant 0 : index
    %c2_33 = arith.constant 2 : index
    %c1_34 = arith.constant 1 : index
    %35 = vector.load %arg3[%c0_32, %c2_33, %c1_34] : memref<4x18x18xf32, #tpu.memory_space<vmem>>, vector<4x16x16xf32>
    %cst_35 = arith.constant 1.875000e-01 : f32
    %36 = vector.broadcast %cst_35 : f32 to vector<4x16x16xf32>
    %37 = arith.mulf %36, %35 : vector<4x16x16xf32>
    %c0_36 = arith.constant 0 : index
    %c2_37 = arith.constant 2 : index
    %c0_38 = arith.constant 0 : index
    %38 = vector.load %arg3[%c0_36, %c2_37, %c0_38] : memref<4x18x18xf32, #tpu.memory_space<vmem>>, vector<4x16x16xf32>
    %cst_39 = arith.constant 6.250000e-02 : f32
    %39 = vector.broadcast %cst_39 : f32 to vector<4x16x16xf32>
    %40 = arith.mulf %39, %38 : vector<4x16x16xf32>
    %41 = arith.addf %37, %40 : vector<4x16x16xf32>
    %cst_40 = arith.constant 5.625000e-01 : f32
    %42 = vector.broadcast %cst_40 : f32 to vector<4x16x16xf32>
    %43 = arith.mulf %42, %4 : vector<4x16x16xf32>
    %44 = arith.addf %41, %43 : vector<4x16x16xf32>
    %cst_41 = arith.constant 1.875000e-01 : f32
    %45 = vector.broadcast %cst_41 : f32 to vector<4x16x16xf32>
    %46 = arith.mulf %45, %7 : vector<4x16x16xf32>
    %47 = arith.addf %44, %46 : vector<4x16x16xf32>
    %c0_42 = arith.constant 0 : index
    %c2_43 = arith.constant 2 : index
    %c2_44 = arith.constant 2 : index
    %48 = vector.load %arg3[%c0_42, %c2_43, %c2_44] : memref<4x18x18xf32, #tpu.memory_space<vmem>>, vector<4x16x16xf32>
    %cst_45 = arith.constant 6.250000e-02 : f32
    %49 = vector.broadcast %cst_45 : f32 to vector<4x16x16xf32>
    %50 = arith.mulf %49, %48 : vector<4x16x16xf32>
    %cst_46 = arith.constant 1.875000e-01 : f32
    %51 = vector.broadcast %cst_46 : f32 to vector<4x16x16xf32>
    %52 = arith.mulf %51, %35 : vector<4x16x16xf32>
    %53 = arith.addf %50, %52 : vector<4x16x16xf32>
    %cst_47 = arith.constant 1.875000e-01 : f32
    %54 = vector.broadcast %cst_47 : f32 to vector<4x16x16xf32>
    %55 = arith.mulf %54, %19 : vector<4x16x16xf32>
    %56 = arith.addf %53, %55 : vector<4x16x16xf32>
    %cst_48 = arith.constant 5.625000e-01 : f32
    %57 = vector.broadcast %cst_48 : f32 to vector<4x16x16xf32>
    %58 = arith.mulf %57, %4 : vector<4x16x16xf32>
    %59 = arith.addf %56, %58 : vector<4x16x16xf32>
    %60 = vector.shape_cast %47 : vector<4x16x16xf32> to vector<4x16x16x1xf32>
    %61 = vector.shape_cast %59 : vector<4x16x16xf32> to vector<4x16x16x1xf32>
    %62 = tpu.concatenate %60, %61 in 3 : vector<4x16x16x1xf32>, vector<4x16x16x1xf32> -> vector<4x16x16x2xf32>
    %63 = vector.shape_cast %34 : vector<4x16x16x2xf32> to vector<4x16x1x16x2xf32>
    %64 = vector.shape_cast %62 : vector<4x16x16x2xf32> to vector<4x16x1x16x2xf32>
    %65 = tpu.concatenate %63, %64 in 2 : vector<4x16x1x16x2xf32>, vector<4x16x1x16x2xf32> -> vector<4x16x2x16x2xf32>
    %66 = vector.shape_cast %65 : vector<4x16x2x16x2xf32> to vector<4x32x32xf32>
    %c0_49 = arith.constant 0 : index
    %c0_50 = arith.constant 0 : index
    %c0_51 = arith.constant 0 : index
    %67 = vector.load %arg2[%c0_49, %c0_50, %c0_51] : memref<4x32x32xf32, #tpu.memory_space<vmem>>, vector<4x32x32xf32>
    tpu.vector_store %arg2[%c0_49, %c0_50, %c0_51], %66 {strides = array<i32>} : memref<4x32x32xf32, #tpu.memory_space<vmem>>, vector<4x32x32xf32>,
    return
  }
  func.func @transform_0(%arg0: i32) -> (i32, i32, i32) {
    %c0_i32 = arith.constant 0 : i32
    %c0_i32_0 = arith.constant 0 : i32
    %c0_i32_1 = arith.constant 0 : i32
    return %arg0, %c0_i32, %c0_i32_0 : i32, i32, i32
  }
  func.func @transform_1(%arg0: i32) -> (i32, i32, i32) {
    %c0_i32 = arith.constant 0 : i32
    %c0_i32_0 = arith.constant 0 : i32
    %c0_i32_1 = arith.constant 0 : i32
    return %arg0, %c0_i32, %c0_i32_0 : i32, i32, i32
  }
}

module attributes {stable_mosaic.version = 11 : i64} {
  func.func @_upsample_phase_kernel(%arg0: i32, %arg1: memref<8x16x16xf32, #tpu.memory_space<vmem>>, %arg2: memref<8x4x16x16xf32, #tpu.memory_space<vmem>>, %arg3: memref<8x18x18xf32, #tpu.memory_space<vmem>>) attributes {dimension_semantics = [#tpu.dimension_semantics<parallel>], iteration_bounds = array<i64: 1>, scalar_prefetch = 0 : i64, scratch_operands = 1 : i64, tpu.core_type = #tpu.core_type<tc>, window_params = [{transform_indices = @transform_0, window_bounds = array<i64: 8, 16, 16>}, {transform_indices = @transform_1, window_bounds = array<i64: 8, 4, 16, 16>}]} {
    %cst = arith.constant 0.000000e+00 : f32
    %0 = vector.broadcast %cst : f32 to vector<8x18x18xf32>
    %c0 = arith.constant 0 : index
    %c0_0 = arith.constant 0 : index
    %c0_1 = arith.constant 0 : index
    %1 = vector.load %arg3[%c0, %c0_0, %c0_1] : memref<8x18x18xf32, #tpu.memory_space<vmem>>, vector<8x18x18xf32>
    tpu.vector_store %arg3[%c0, %c0_0, %c0_1], %0 {strides = array<i32>} : memref<8x18x18xf32, #tpu.memory_space<vmem>>, vector<8x18x18xf32>,
    %c0_2 = arith.constant 0 : index
    %c0_3 = arith.constant 0 : index
    %c0_4 = arith.constant 0 : index
    %2 = vector.load %arg1[%c0_2, %c0_3, %c0_4] : memref<8x16x16xf32, #tpu.memory_space<vmem>>, vector<8x16x16xf32>
    %c0_5 = arith.constant 0 : index
    %c1 = arith.constant 1 : index
    %c1_6 = arith.constant 1 : index
    %3 = vector.load %arg3[%c0_5, %c1, %c1_6] : memref<8x18x18xf32, #tpu.memory_space<vmem>>, vector<8x16x16xf32>
    tpu.vector_store %arg3[%c0_5, %c1, %c1_6], %2 {strides = array<i32>} : memref<8x18x18xf32, #tpu.memory_space<vmem>>, vector<8x16x16xf32>,
    %c0_7 = arith.constant 0 : index
    %c1_8 = arith.constant 1 : index
    %c1_9 = arith.constant 1 : index
    %4 = vector.load %arg3[%c0_7, %c1_8, %c1_9] : memref<8x18x18xf32, #tpu.memory_space<vmem>>, vector<8x16x16xf32>
    %cst_10 = arith.constant 5.625000e-01 : f32
    %5 = vector.broadcast %cst_10 : f32 to vector<8x16x16xf32>
    %6 = arith.mulf %5, %4 : vector<8x16x16xf32>
    %c0_11 = arith.constant 0 : index
    %c1_12 = arith.constant 1 : index
    %c0_13 = arith.constant 0 : index
    %7 = vector.load %arg3[%c0_11, %c1_12, %c0_13] : memref<8x18x18xf32, #tpu.memory_space<vmem>>, vector<8x16x16xf32>
    %cst_14 = arith.constant 1.875000e-01 : f32
    %8 = vector.broadcast %cst_14 : f32 to vector<8x16x16xf32>
    %9 = arith.mulf %8, %7 : vector<8x16x16xf32>
    %10 = arith.addf %6, %9 : vector<8x16x16xf32>
    %c0_15 = arith.constant 0 : index
    %c0_16 = arith.constant 0 : index
    %c1_17 = arith.constant 1 : index
    %11 = vector.load %arg3[%c0_15, %c0_16, %c1_17] : memref<8x18x18xf32, #tpu.memory_space<vmem>>, vector<8x16x16xf32>
    %cst_18 = arith.constant 1.875000e-01 : f32
    %12 = vector.broadcast %cst_18 : f32 to vector<8x16x16xf32>
    %13 = arith.mulf %12, %11 : vector<8x16x16xf32>
    %14 = arith.addf %10, %13 : vector<8x16x16xf32>
    %c0_19 = arith.constant 0 : index
    %c0_20 = arith.constant 0 : index
    %c0_21 = arith.constant 0 : index
    %15 = vector.load %arg3[%c0_19, %c0_20, %c0_21] : memref<8x18x18xf32, #tpu.memory_space<vmem>>, vector<8x16x16xf32>
    %cst_22 = arith.constant 6.250000e-02 : f32
    %16 = vector.broadcast %cst_22 : f32 to vector<8x16x16xf32>
    %17 = arith.mulf %16, %15 : vector<8x16x16xf32>
    %18 = arith.addf %14, %17 : vector<8x16x16xf32>
    %c0_23 = arith.constant 0 : index
    %c0_24 = arith.constant 0 : index
    %c0_25 = arith.constant 0 : index
    %c0_26 = arith.constant 0 : index
    %19 = vector.load %arg2[%c0_23, %c0_24, %c0_25, %c0_26] : memref<8x4x16x16xf32, #tpu.memory_space<vmem>>, vector<8x1x16x16xf32>
    %20 = vector.shape_cast %19 : vector<8x1x16x16xf32> to vector<8x16x16xf32>
    %21 = vector.shape_cast %18 : vector<8x16x16xf32> to vector<8x1x16x16xf32>
    tpu.vector_store %arg2[%c0_23, %c0_24, %c0_25, %c0_26], %21 {strides = array<i32>} : memref<8x4x16x16xf32, #tpu.memory_space<vmem>>, vector<8x1x16x16xf32>,
    %c0_27 = arith.constant 0 : index
    %c1_28 = arith.constant 1 : index
    %c2 = arith.constant 2 : index
    %22 = vector.load %arg3[%c0_27, %c1_28, %c2] : memref<8x18x18xf32, #tpu.memory_space<vmem>>, vector<8x16x16xf32>
    %cst_29 = arith.constant 1.875000e-01 : f32
    %23 = vector.broadcast %cst_29 : f32 to vector<8x16x16xf32>
    %24 = arith.mulf %23, %22 : vector<8x16x16xf32>
    %cst_30 = arith.constant 5.625000e-01 : f32
    %25 = vector.broadcast %cst_30 : f32 to vector<8x16x16xf32>
    %26 = arith.mulf %25, %4 : vector<8x16x16xf32>
    %27 = arith.addf %24, %26 : vector<8x16x16xf32>
    %c0_31 = arith.constant 0 : index
    %c0_32 = arith.constant 0 : index
    %c2_33 = arith.constant 2 : index
    %28 = vector.load %arg3[%c0_31, %c0_32, %c2_33] : memref<8x18x18xf32, #tpu.memory_space<vmem>>, vector<8x16x16xf32>
    %cst_34 = arith.constant 6.250000e-02 : f32
    %29 = vector.broadcast %cst_34 : f32 to vector<8x16x16xf32>
    %30 = arith.mulf %29, %28 : vector<8x16x16xf32>
    %31 = arith.addf %27, %30 : vector<8x16x16xf32>
    %cst_35 = arith.constant 1.875000e-01 : f32
    %32 = vector.broadcast %cst_35 : f32 to vector<8x16x16xf32>
    %33 = arith.mulf %32, %11 : vector<8x16x16xf32>
    %34 = arith.addf %31, %33 : vector<8x16x16xf32>
    %c0_36 = arith.constant 0 : index
    %c1_37 = arith.constant 1 : index
    %c0_38 = arith.constant 0 : index
    %c0_39 = arith.constant 0 : index
    %35 = vector.load %arg2[%c0_36, %c1_37, %c0_38, %c0_39] : memref<8x4x16x16xf32, #tpu.memory_space<vmem>>, vector<8x1x16x16xf32>
    %36 = vector.shape_cast %35 : vector<8x1x16x16xf32> to vector<8x16x16xf32>
    %37 = vector.shape_cast %34 : vector<8x16x16xf32> to vector<8x1x16x16xf32>
    tpu.vector_store %arg2[%c0_36, %c1_37, %c0_38, %c0_39], %37 {strides = array<i32>} : memref<8x4x16x16xf32, #tpu.memory_space<vmem>>, vector<8x1x16x16xf32>,
    %c0_40 = arith.constant 0 : index
    %c2_41 = arith.constant 2 : index
    %c1_42 = arith.constant 1 : index
    %38 = vector.load %arg3[%c0_40, %c2_41, %c1_42] : memref<8x18x18xf32, #tpu.memory_space<vmem>>, vector<8x16x16xf32>
    %cst_43 = arith.constant 1.875000e-01 : f32
    %39 = vector.broadcast %cst_43 : f32 to vector<8x16x16xf32>
    %40 = arith.mulf %39, %38 : vector<8x16x16xf32>
    %c0_44 = arith.constant 0 : index
    %c2_45 = arith.constant 2 : index
    %c0_46 = arith.constant 0 : index
    %41 = vector.load %arg3[%c0_44, %c2_45, %c0_46] : memref<8x18x18xf32, #tpu.memory_space<vmem>>, vector<8x16x16xf32>
    %cst_47 = arith.constant 6.250000e-02 : f32
    %42 = vector.broadcast %cst_47 : f32 to vector<8x16x16xf32>
    %43 = arith.mulf %42, %41 : vector<8x16x16xf32>
    %44 = arith.addf %40, %43 : vector<8x16x16xf32>
    %cst_48 = arith.constant 5.625000e-01 : f32
    %45 = vector.broadcast %cst_48 : f32 to vector<8x16x16xf32>
    %46 = arith.mulf %45, %4 : vector<8x16x16xf32>
    %47 = arith.addf %44, %46 : vector<8x16x16xf32>
    %cst_49 = arith.constant 1.875000e-01 : f32
    %48 = vector.broadcast %cst_49 : f32 to vector<8x16x16xf32>
    %49 = arith.mulf %48, %7 : vector<8x16x16xf32>
    %50 = arith.addf %47, %49 : vector<8x16x16xf32>
    %c0_50 = arith.constant 0 : index
    %c2_51 = arith.constant 2 : index
    %c0_52 = arith.constant 0 : index
    %c0_53 = arith.constant 0 : index
    %51 = vector.load %arg2[%c0_50, %c2_51, %c0_52, %c0_53] : memref<8x4x16x16xf32, #tpu.memory_space<vmem>>, vector<8x1x16x16xf32>
    %52 = vector.shape_cast %51 : vector<8x1x16x16xf32> to vector<8x16x16xf32>
    %53 = vector.shape_cast %50 : vector<8x16x16xf32> to vector<8x1x16x16xf32>
    tpu.vector_store %arg2[%c0_50, %c2_51, %c0_52, %c0_53], %53 {strides = array<i32>} : memref<8x4x16x16xf32, #tpu.memory_space<vmem>>, vector<8x1x16x16xf32>,
    %c0_54 = arith.constant 0 : index
    %c2_55 = arith.constant 2 : index
    %c2_56 = arith.constant 2 : index
    %54 = vector.load %arg3[%c0_54, %c2_55, %c2_56] : memref<8x18x18xf32, #tpu.memory_space<vmem>>, vector<8x16x16xf32>
    %cst_57 = arith.constant 6.250000e-02 : f32
    %55 = vector.broadcast %cst_57 : f32 to vector<8x16x16xf32>
    %56 = arith.mulf %55, %54 : vector<8x16x16xf32>
    %cst_58 = arith.constant 1.875000e-01 : f32
    %57 = vector.broadcast %cst_58 : f32 to vector<8x16x16xf32>
    %58 = arith.mulf %57, %38 : vector<8x16x16xf32>
    %59 = arith.addf %56, %58 : vector<8x16x16xf32>
    %cst_59 = arith.constant 1.875000e-01 : f32
    %60 = vector.broadcast %cst_59 : f32 to vector<8x16x16xf32>
    %61 = arith.mulf %60, %22 : vector<8x16x16xf32>
    %62 = arith.addf %59, %61 : vector<8x16x16xf32>
    %cst_60 = arith.constant 5.625000e-01 : f32
    %63 = vector.broadcast %cst_60 : f32 to vector<8x16x16xf32>
    %64 = arith.mulf %63, %4 : vector<8x16x16xf32>
    %65 = arith.addf %62, %64 : vector<8x16x16xf32>
    %c0_61 = arith.constant 0 : index
    %c3 = arith.constant 3 : index
    %c0_62 = arith.constant 0 : index
    %c0_63 = arith.constant 0 : index
    %66 = vector.load %arg2[%c0_61, %c3, %c0_62, %c0_63] : memref<8x4x16x16xf32, #tpu.memory_space<vmem>>, vector<8x1x16x16xf32>
    %67 = vector.shape_cast %66 : vector<8x1x16x16xf32> to vector<8x16x16xf32>
    %68 = vector.shape_cast %65 : vector<8x16x16xf32> to vector<8x1x16x16xf32>
    tpu.vector_store %arg2[%c0_61, %c3, %c0_62, %c0_63], %68 {strides = array<i32>} : memref<8x4x16x16xf32, #tpu.memory_space<vmem>>, vector<8x1x16x16xf32>,
    return
  }
  func.func @transform_0(%arg0: i32) -> (i32, i32, i32) {
    %c0_i32 = arith.constant 0 : i32
    %c0_i32_0 = arith.constant 0 : i32
    %c0_i32_1 = arith.constant 0 : i32
    return %arg0, %c0_i32, %c0_i32_0 : i32, i32, i32
  }
  func.func @transform_1(%arg0: i32) -> (i32, i32, i32, i32) {
    %c0_i32 = arith.constant 0 : i32
    %c0_i32_0 = arith.constant 0 : i32
    %c0_i32_1 = arith.constant 0 : i32
    %c0_i32_2 = arith.constant 0 : i32
    return %arg0, %c0_i32, %c0_i32_0, %c0_i32_1 : i32, i32, i32, i32
  }
}

</mosaic_0001>

<llo_original>
// kernel: tpu_custom_call.1
$region0: #{tpu_custom_call.1}
  #allocation0 [shape = 'u32[]', space=smem, size = 0x4, offset = 0x4, fixed_abs, tag = 'smem constant byte address 0x4 - core index']
  #allocation1 [shape = 'u32[144,128]{1,0:T(1,128)}', space=vmem, size = 0x12000, scoped, tag = 'internal scratch']
  #allocation2 [shape = 'f32[4,18,18]{2,1,0:T(8,128)}', space=vmem, size = 0xc000, scoped, tag = 'scratch operand']
  %s0 = inlined_call_operand.hbm [shape: f32[4,16,16], index: 0, kind: input, shape index: {}]
  %s1 = inlined_call_operand.hbm [shape: f32[4,32,32], index: 1, kind: output, shape index: {}]
  %s2 = sld [smem:[#allocation0]]
  $region18: #{tpu_custom_call.1} parent=0
    _
  %s4 = ssub.s32 1, %s2
  %s5 = scalar_select 0, %s4, %s2
  $region1: #{tpu_custom_call.1} parent=0
    #allocation3 [shape = 'u8[32768]{0}', space=vmem, size = 0x8000, scoped, tag = 'input window, operand 0, single buffered']
    #allocation4 [shape = 's32[1]{0}', space=sflag, size = 0x4, scoped, tag = 'scoped memory for tpu_custom_call.1']
    #allocation5 [shape = 's32[1]{0}', space=sflag, size = 0x4, scoped, tag = 'scoped memory for tpu_custom_call.1']
    #allocation6 [shape = 'u8[65536]{0}', space=vmem, size = 0x10000, scoped, tag = 'output window, operand 0, single buffered']
    %6 = vsyncpa [#allocation4], 0
    %7 = vsyncpa [#allocation5], 0
    // Predicated region
    $region2: #{tpu_custom_call.1} parent=1 // pred_check
      _
    $region3: #{tpu_custom_call.1} parent=1 // pred_check_branch
      %9 = sbr.rel (0) target = $region5
    $region4: #{tpu_custom_call.1} parent=1 // pred_region
      %s11 = ssub.s32 1024, 1024
      %12 = vsyncadd [#allocation4], %s11
      %s13 = sshll.u32 [#allocation3], 4
      %s14 = int_to_ptr.vmem [resolvable:$true] %s13
      %19 = dma.hbm_to_vmem [thread:$0]  %s0, 1024, %s14, [#allocation4], 128, 128, 8
    $region5: #{tpu_custom_call.1} parent=1 // pred_fallthru
      _
    // Predicated region
    $region6: #{tpu_custom_call.1} parent=1 // pred_check
      _
    $region7: #{tpu_custom_call.1} parent=1 // pred_check_branch
      %21 = sbr.rel (0) target = $region9
    $region8: #{tpu_custom_call.1} parent=1 // pred_region
      %22 = dma.done [#allocation4], 1024
    $region9: #{tpu_custom_call.1} parent=1 // pred_fallthru
      _
    %vm23 = vcmask 146432
    %24 = vst.msk [vmem:[#allocation2] sm:$0xff] %vm23, 0.0
    %25 = vst.msk [vmem:[#allocation2 + $0x8] sm:$0xff] %vm23, 0.0
    %vm26 = vcmask 140288
    %27 = vst.msk [vmem:[#allocation2 + $0x10] sm:$0x3] %vm26, 0.0
    %28 = vst.msk [vmem:[#allocation2 + $0x18] sm:$0xff] %vm23, 0.0
    %29 = vst.msk [vmem:[#allocation2 + $0x20] sm:$0xff] %vm23, 0.0
    %30 = vst.msk [vmem:[#allocation2 + $0x28] sm:$0x3] %vm26, 0.0
    %31 = vst.msk [vmem:[#allocation2 + $0x30] sm:$0xff] %vm23, 0.0
    %32 = vst.msk [vmem:[#allocation2 + $0x38] sm:$0xff] %vm23, 0.0
    %33 = vst.msk [vmem:[#allocation2 + $0x40] sm:$0x3] %vm26, 0.0
    %34 = vst.msk [vmem:[#allocation2 + $0x48] sm:$0xff] %vm23, 0.0
    %35 = vst.msk [vmem:[#allocation2 + $0x50] sm:$0xff] %vm23, 0.0
    %36 = vst.msk [vmem:[#allocation2 + $0x58] sm:$0x3] %vm26, 0.0
    %v37 = vld [vmem:[#allocation3] sm:$0xff]
    %v38 = vld [vmem:[#allocation3 + $0x8] sm:$0xff]
    %v39 = vld [vmem:[#allocation3 + $0x10] sm:$0xff]
    %v40 = vld [vmem:[#allocation3 + $0x18] sm:$0xff]
    %v41 = vld [vmem:[#allocation3 + $0x20] sm:$0xff]
    %v42 = vld [vmem:[#allocation3 + $0x28] sm:$0xff]
    %v43 = vld [vmem:[#allocation3 + $0x30] sm:$0xff]
    %v44 = vld [vmem:[#allocation3 + $0x38] sm:$0xff]
    %53 = vrot.lane.b32.xlu0 %v37, 1
    %v54 = vpop.permute.xlu0 %53
    %55 = vrot.lane.b32.xlu0 %v38, 1
    %v56 = vpop.permute.xlu0 %55
    %57 = vrot.lane.b32.xlu0 %v39, 1
    %v58 = vpop.permute.xlu0 %57
    %59 = vrot.lane.b32.xlu0 %v40, 1
    %v60 = vpop.permute.xlu0 %59
    %61 = vrot.lane.b32.xlu0 %v41, 1
    %v62 = vpop.permute.xlu0 %61
    %63 = vrot.lane.b32.xlu0 %v42, 1
    %v64 = vpop.permute.xlu0 %63
    %65 = vrot.lane.b32.xlu0 %v43, 1
    %v66 = vpop.permute.xlu0 %65
    %67 = vrot.lane.b32.xlu0 %v44, 1
    %v68 = vpop.permute.xlu0 %67
    %vm77 = vcmask 138248
    %78 = vst.msk [vmem:[#allocation2 + $0x1] sm:$0xff] %vm77, %v54
    %79 = vst.msk [vmem:[#allocation2 + $0x9] sm:$0xff] %vm77, %v56
    %80 = vst.msk [vmem:[#allocation2 + $0x19] sm:$0xff] %vm77, %v58
    %81 = vst.msk [vmem:[#allocation2 + $0x21] sm:$0xff] %vm77, %v60
    %82 = vst.msk [vmem:[#allocation2 + $0x31] sm:$0xff] %vm77, %v62
    %83 = vst.msk [vmem:[#allocation2 + $0x39] sm:$0xff] %vm77, %v64
    %84 = vst.msk [vmem:[#allocation2 + $0x49] sm:$0xff] %vm77, %v66
    %85 = vst.msk [vmem:[#allocation2 + $0x51] sm:$0xff] %vm77, %v68
    %v86 = vld [vmem:[#allocation2 + $0x1] sm:$0xff]
    %v87 = vld [vmem:[#allocation2 + $0x9] sm:$0xff]
    %v88 = vld [vmem:[#allocation2 + $0x19] sm:$0xff]
    %v89 = vld [vmem:[#allocation2 + $0x21] sm:$0xff]
    %v90 = vld [vmem:[#allocation2 + $0x31] sm:$0xff]
    %v91 = vld [vmem:[#allocation2 + $0x39] sm:$0xff]
    %v92 = vld [vmem:[#allocation2 + $0x49] sm:$0xff]
    %v93 = vld [vmem:[#allocation2 + $0x51] sm:$0xff]
    %v94 = vmul.f32 %v86, 0.5625
    %v95 = vmul.f32 %v87, 0.5625
    %v96 = vmul.f32 %v88, 0.5625
    %v97 = vmul.f32 %v89, 0.5625
    %v98 = vmul.f32 %v90, 0.5625
    %v99 = vmul.f32 %v91, 0.5625
    %v100 = vmul.f32 %v92, 0.5625
    %v101 = vmul.f32 %v93, 0.5625
    %v102 = vmul.f32 %v86, 0.1875
    %v103 = vmul.f32 %v87, 0.1875
    %v104 = vmul.f32 %v88, 0.1875
    %v105 = vmul.f32 %v89, 0.1875
    %v106 = vmul.f32 %v90, 0.1875
    %v107 = vmul.f32 %v91, 0.1875
    %v108 = vmul.f32 %v92, 0.1875
    %v109 = vmul.f32 %v93, 0.1875
    %118 = vrot.lane.b32.xlu0 %v102, 1
    %v119 = vpop.permute.xlu0 %118
    %120 = vrot.lane.b32.xlu0 %v103, 1
    %v121 = vpop.permute.xlu0 %120
    %122 = vrot.lane.b32.xlu0 %v104, 1
    %v123 = vpop.permute.xlu0 %122
    %124 = vrot.lane.b32.xlu0 %v105, 1
    %v125 = vpop.permute.xlu0 %124
    %126 = vrot.lane.b32.xlu0 %v106, 1
    %v127 = vpop.permute.xlu0 %126
    %128 = vrot.lane.b32.xlu0 %v107, 1
    %v129 = vpop.permute.xlu0 %128
    %130 = vrot.lane.b32.xlu0 %v108, 1
    %v131 = vpop.permute.xlu0 %130
    %132 = vrot.lane.b32.xlu0 %v109, 1
    %v133 = vpop.permute.xlu0 %132
    %v142 = vadd.f32 %v94, %v119
    %v143 = vadd.f32 %v95, %v121
    %v144 = vadd.f32 %v96, %v123
    %v145 = vadd.f32 %v97, %v125
    %v146 = vadd.f32 %v98, %v127
    %v147 = vadd.f32 %v99, %v129
    %v148 = vadd.f32 %v100, %v131
    %v149 = vadd.f32 %v101, %v133
    %v150 = vld [vmem:[#allocation2] sm:$0xff]
    %v151 = vld [vmem:[#allocation2 + $0x8] sm:$0xff]
    %v152 = vld [vmem:[#allocation2 + $0x18] sm:$0xff]
    %v153 = vld [vmem:[#allocation2 + $0x20] sm:$0xff]
    %v154 = vld [vmem:[#allocation2 + $0x30] sm:$0xff]
    %v155 = vld [vmem:[#allocation2 + $0x38] sm:$0xff]
    %v156 = vld [vmem:[#allocation2 + $0x48] sm:$0xff]
    %v157 = vld [vmem:[#allocation2 + $0x50] sm:$0xff]
    %v158 = vmul.f32 %v150, 0.1875
    %v159 = vmul.f32 %v151, 0.1875
    %v160 = vmul.f32 %v152, 0.1875
    %v161 = vmul.f32 %v153, 0.1875
    %v162 = vmul.f32 %v154, 0.1875
    %v163 = vmul.f32 %v155, 0.1875
    %v164 = vmul.f32 %v156, 0.1875
    %v165 = vmul.f32 %v157, 0.1875
    %v166 = vadd.f32 %v142, %v158
    %v167 = vadd.f32 %v143, %v159
    %v168 = vadd.f32 %v144, %v160
    %v169 = vadd.f32 %v145, %v161
    %v170 = vadd.f32 %v146, %v162
    %v171 = vadd.f32 %v147, %v163
    %v172 = vadd.f32 %v148, %v164
    %v173 = vadd.f32 %v149, %v165
    %v174 = vmul.f32 %v150, 0.0625
    %v175 = vmul.f32 %v151, 0.0625
    %v176 = vmul.f32 %v152, 0.0625
    %v177 = vmul.f32 %v153, 0.0625
    %v178 = vmul.f32 %v154, 0.0625
    %v179 = vmul.f32 %v155, 0.0625
    %v180 = vmul.f32 %v156, 0.0625
    %v181 = vmul.f32 %v157, 0.0625
    %190 = vrot.lane.b32.xlu0 %v174, 1
    %v191 = vpop.permute.xlu0 %190
    %192 = vrot.lane.b32.xlu0 %v175, 1
    %v193 = vpop.permute.xlu0 %192
    %194 = vrot.lane.b32.xlu0 %v176, 1
    %v195 = vpop.permute.xlu0 %194
    %196 = vrot.lane.b32.xlu0 %v177, 1
    %v197 = vpop.permute.xlu0 %196
    %198 = vrot.lane.b32.xlu0 %v178, 1
    %v199 = vpop.permute.xlu0 %198
    %200 = vrot.lane.b32.xlu0 %v179, 1
    %v201 = vpop.permute.xlu0 %200
    %202 = vrot.lane.b32.xlu0 %v180, 1
    %v203 = vpop.permute.xlu0 %202
    %204 = vrot.lane.b32.xlu0 %v181, 1
    %v205 = vpop.permute.xlu0 %204
    %v214 = vadd.f32 %v166, %v191
    %v215 = vadd.f32 %v167, %v193
    %v216 = vadd.f32 %v168, %v195
    %v217 = vadd.f32 %v169, %v197
    %v218 = vadd.f32 %v170, %v199
    %v219 = vadd.f32 %v171, %v201
    %v220 = vadd.f32 %v172, %v203
    %v221 = vadd.f32 %v173, %v205
    %230 = vrot.lane.b32.xlu0 %v94, 1
    %v231 = vpop.permute.xlu0 %230
    %232 = vrot.lane.b32.xlu0 %v95, 1
    %v233 = vpop.permute.xlu0 %232
    %234 = vrot.lane.b32.xlu0 %v96, 1
    %v235 = vpop.permute.xlu0 %234
    %236 = vrot.lane.b32.xlu0 %v97, 1
    %v237 = vpop.permute.xlu0 %236
    %238 = vrot.lane.b32.xlu0 %v98, 1
    %v239 = vpop.permute.xlu0 %238
    %240 = vrot.lane.b32.xlu0 %v99, 1
    %v241 = vpop.permute.xlu0 %240
    %242 = vrot.lane.b32.xlu0 %v100, 1
    %v243 = vpop.permute.xlu0 %242
    %244 = vrot.lane.b32.xlu0 %v101, 1
    %v245 = vpop.permute.xlu0 %244
    %v254 = vadd.f32 %v102, %v231
    %v255 = vadd.f32 %v103, %v233
    %v256 = vadd.f32 %v104, %v235
    %v257 = vadd.f32 %v105, %v237
    %v258 = vadd.f32 %v106, %v239
    %v259 = vadd.f32 %v107, %v241
    %v260 = vadd.f32 %v108, %v243
    %v261 = vadd.f32 %v109, %v245
    %v262 = vadd.f32 %v254, %v174
    %v263 = vadd.f32 %v255, %v175
    %v264 = vadd.f32 %v256, %v176
    %v265 = vadd.f32 %v257, %v177
    %v266 = vadd.f32 %v258, %v178
    %v267 = vadd.f32 %v259, %v179
    %v268 = vadd.f32 %v260, %v180
    %v269 = vadd.f32 %v261, %v181
    %278 = vrot.lane.b32.xlu0 %v158, 1
    %v279 = vpop.permute.xlu0 %278
    %280 = vrot.lane.b32.xlu0 %v159, 1
    %v281 = vpop.permute.xlu0 %280
    %282 = vrot.lane.b32.xlu0 %v160, 1
    %v283 = vpop.permute.xlu0 %282
    %284 = vrot.lane.b32.xlu0 %v161, 1
    %v285 = vpop.permute.xlu0 %284
    %286 = vrot.lane.b32.xlu0 %v162, 1
    %v287 = vpop.permute.xlu0 %286
    %288 = vrot.lane.b32.xlu0 %v163, 1
    %v289 = vpop.permute.xlu0 %288
    %290 = vrot.lane.b32.xlu0 %v164, 1
    %v291 = vpop.permute.xlu0 %290
    %292 = vrot.lane.b32.xlu0 %v165, 1
    %v293 = vpop.permute.xlu0 %292
    %v302 = vadd.f32 %v262, %v279
    %v303 = vadd.f32 %v263, %v281
    %v304 = vadd.f32 %v264, %v283
    %v305 = vadd.f32 %v265, %v285
    %v306 = vadd.f32 %v266, %v287
    %v307 = vadd.f32 %v267, %v289
    %v308 = vadd.f32 %v268, %v291
    %v309 = vadd.f32 %v269, %v293
    %v310 = vlaneseq
    %v311 = vshrl.u32 %v310, 7
    %v312 = vsub.s32 0, %v311
    %v313 = vrot.slane %v214, %v312
    %s315 = sor.u32 256, 1
    %316 = vbcast.lane.b32.xlu0 %v313, %s315
    %v317 = vpop.permute.xlu0 %316
    %s319 = sor.u32 256, 9
    %320 = vbcast.lane.b32.xlu0 %v313, %s319
    %v321 = vpop.permute.xlu0 %320
    %v322 = vlaneseq
    %v323 = vshrl.u32 %v322, 7
    %v324 = vsub.s32 1, %v323
    %v325 = vrot.slane %v214, %v324
    %s327 = sor.u32 256, 1
    %328 = vbcast.lane.b32.xlu0 %v325, %s327
    %v329 = vpop.permute.xlu0 %328
    %s331 = sor.u32 256, 9
    %332 = vbcast.lane.b32.xlu0 %v325, %s331
    %v333 = vpop.permute.xlu0 %332
    %v334 = vlaneseq
    %v335 = vshrl.u32 %v334, 7
    %v336 = vsub.s32 2, %v335
    %v337 = vrot.slane %v214, %v336
    %s339 = sor.u32 256, 1
    %340 = vbcast.lane.b32.xlu0 %v337, %s339
    %v341 = vpop.permute.xlu0 %340
    %s343 = sor.u32 256, 9
    %344 = vbcast.lane.b32.xlu0 %v337, %s343
    %v345 = vpop.permute.xlu0 %344
    %v346 = vlaneseq
    %v347 = vshrl.u32 %v346, 7
    %v348 = vsub.s32 3, %v347
    %v349 = vrot.slane %v214, %v348
    %s351 = sor.u32 256, 1
    %352 = vbcast.lane.b32.xlu0 %v349, %s351
    %v353 = vpop.permute.xlu0 %352
    %s355 = sor.u32 256, 9
    %356 = vbcast.lane.b32.xlu0 %v349, %s355
    %v357 = vpop.permute.xlu0 %356
    %v358 = vlaneseq
    %v359 = vshrl.u32 %v358, 7
    %v360 = vsub.s32 4, %v359
    %v361 = vrot.slane %v214, %v360
    %s363 = sor.u32 256, 1
    %364 = vbcast.lane.b32.xlu0 %v361, %s363
    %v365 = vpop.permute.xlu0 %364
    %s367 = sor.u32 256, 9
    %368 = vbcast.lane.b32.xlu0 %v361, %s367
    %v369 = vpop.permute.xlu0 %368
    %v370 = vlaneseq
    %v371 = vshrl.u32 %v370, 7
    %v372 = vsub.s32 5, %v371
    %v373 = vrot.slane %v214, %v372
    %s375 = sor.u32 256, 1
    %376 = vbcast.lane.b32.xlu0 %v373, %s375
    %v377 = vpop.permute.xlu0 %376
    %s379 = sor.u32 256, 9
    %380 = vbcast.lane.b32.xlu0 %v373, %s379
    %v381 = vpop.permute.xlu0 %380
    %v382 = vlaneseq
    %v383 = vshrl.u32 %v382, 7
    %v384 = vsub.s32 6, %v383
    %v385 = vrot.slane %v214, %v384
    %s387 = sor.u32 256, 1
    %388 = vbcast.lane.b32.xlu0 %v385, %s387
    %v389 = vpop.permute.xlu0 %388
    %s391 = sor.u32 256, 9
    %392 = vbcast.lane.b32.xlu0 %v385, %s391
    %v393 = vpop.permute.xlu0 %392
    %v394 = vlaneseq
    %v395 = vshrl.u32 %v394, 7
    %v396 = vsub.s32 7, %v395
    %v397 = vrot.slane %v214, %v396
    %s399 = sor.u32 256, 1
    %400 = vbcast.lane.b32.xlu0 %v397, %s399
    %v401 = vpop.permute.xlu0 %400
    %s403 = sor.u32 256, 9
    %404 = vbcast.lane.b32.xlu0 %v397, %s403
    %v405 = vpop.permute.xlu0 %404
    %v406 = vlaneseq
    %v407 = vshrl.u32 %v406, 7
    %v408 = vsub.s32 0, %v407
    %v409 = vrot.slane %v215, %v408
    %s411 = sor.u32 256, 1
    %412 = vbcast.lane.b32.xlu0 %v409, %s411
    %v413 = vpop.permute.xlu0 %412
    %s415 = sor.u32 256, 9
    %416 = vbcast.lane.b32.xlu0 %v409, %s415
    %v417 = vpop.permute.xlu0 %416
    %v418 = vlaneseq
    %v419 = vshrl.u32 %v418, 7
    %v420 = vsub.s32 1, %v419
    %v421 = vrot.slane %v215, %v420
    %s423 = sor.u32 256, 1
    %424 = vbcast.lane.b32.xlu0 %v421, %s423
    %v425 = vpop.permute.xlu0 %424
    %s427 = sor.u32 256, 9
    %428 = vbcast.lane.b32.xlu0 %v421, %s427
    %v429 = vpop.permute.xlu0 %428
    %v430 = vlaneseq
    %v431 = vshrl.u32 %v430, 7
    %v432 = vsub.s32 2, %v431
    %v433 = vrot.slane %v215, %v432
    %s435 = sor.u32 256, 1
    %436 = vbcast.lane.b32.xlu0 %v433, %s435
    %v437 = vpop.permute.xlu0 %436
    %s439 = sor.u32 256, 9
    %440 = vbcast.lane.b32.xlu0 %v433, %s439
    %v441 = vpop.permute.xlu0 %440
    %v442 = vlaneseq
    %v443 = vshrl.u32 %v442, 7
    %v444 = vsub.s32 3, %v443
    %v445 = vrot.slane %v215, %v444
    %s447 = sor.u32 256, 1
    %448 = vbcast.lane.b32.xlu0 %v445, %s447
    %v449 = vpop.permute.xlu0 %448
    %s451 = sor.u32 256, 9
    %452 = vbcast.lane.b32.xlu0 %v445, %s451
    %v453 = vpop.permute.xlu0 %452
    %v454 = vlaneseq
    %v455 = vshrl.u32 %v454, 7
    %v456 = vsub.s32 4, %v455
    %v457 = vrot.slane %v215, %v456
    %s459 = sor.u32 256, 1
    %460 = vbcast.lane.b32.xlu0 %v457, %s459
    %v461 = vpop.permute.xlu0 %460
    %s463 = sor.u32 256, 9
    %464 = vbcast.lane.b32.xlu0 %v457, %s463
    %v465 = vpop.permute.xlu0 %464
    %v466 = vlaneseq
    %v467 = vshrl.u32 %v466, 7
    %v468 = vsub.s32 5, %v467
    %v469 = vrot.slane %v215, %v468
    %s471 = sor.u32 256, 1
    %472 = vbcast.lane.b32.xlu0 %v469, %s471
    %v473 = vpop.permute.xlu0 %472
    %s475 = sor.u32 256, 9
    %476 = vbcast.lane.b32.xlu0 %v469, %s475
    %v477 = vpop.permute.xlu0 %476
    %v478 = vlaneseq
    %v479 = vshrl.u32 %v478, 7
    %v480 = vsub.s32 6, %v479
    %v481 = vrot.slane %v215, %v480
    %s483 = sor.u32 256, 1
    %484 = vbcast.lane.b32.xlu0 %v481, %s483
    %v485 = vpop.permute.xlu0 %484
    %s487 = sor.u32 256, 9
    %488 = vbcast.lane.b32.xlu0 %v481, %s487
    %v489 = vpop.permute.xlu0 %488
    %v490 = vlaneseq
    %v491 = vshrl.u32 %v490, 7
    %v492 = vsub.s32 7, %v491
    %v493 = vrot.slane %v215, %v492
    %s495 = sor.u32 256, 1
    %496 = vbcast.lane.b32.xlu0 %v493, %s495
    %v497 = vpop.permute.xlu0 %496
    %s499 = sor.u32 256, 9
    %500 = vbcast.lane.b32.xlu0 %v493, %s499
    %v501 = vpop.permute.xlu0 %500
    %v502 = vlaneseq
    %v503 = vshrl.u32 %v502, 7
    %v504 = vsub.s32 0, %v503
    %v505 = vrot.slane %v216, %v504
    %s507 = sor.u32 256, 1
    %508 = vbcast.lane.b32.xlu0 %v505, %s507
    %v509 = vpop.permute.xlu0 %508
    %s511 = sor.u32 256, 9
    %512 = vbcast.lane.b32.xlu0 %v505, %s511
    %v513 = vpop.permute.xlu0 %512
    %v514 = vlaneseq
    %v515 = vshrl.u32 %v514, 7
    %v516 = vsub.s32 1, %v515
    %v517 = vrot.slane %v216, %v516
    %s519 = sor.u32 256, 1
    %520 = vbcast.lane.b32.xlu0 %v517, %s519
    %v521 = vpop.permute.xlu0 %520
    %s523 = sor.u32 256, 9
    %524 = vbcast.lane.b32.xlu0 %v517, %s523
    %v525 = vpop.permute.xlu0 %524
    %v526 = vlaneseq
    %v527 = vshrl.u32 %v526, 7
    %v528 = vsub.s32 2, %v527
    %v529 = vrot.slane %v216, %v528
    %s531 = sor.u32 256, 1
    %532 = vbcast.lane.b32.xlu0 %v529, %s531
    %v533 = vpop.permute.xlu0 %532
    %s535 = sor.u32 256, 9
    %536 = vbcast.lane.b32.xlu0 %v529, %s535
    %v537 = vpop.permute.xlu0 %536
    %v538 = vlaneseq
    %v539 = vshrl.u32 %v538, 7
    %v540 = vsub.s32 3, %v539
    %v541 = vrot.slane %v216, %v540
    %s543 = sor.u32 256, 1
    %544 = vbcast.lane.b32.xlu0 %v541, %s543
    %v545 = vpop.permute.xlu0 %544
    %s547 = sor.u32 256, 9
    %548 = vbcast.lane.b32.xlu0 %v541, %s547
    %v549 = vpop.permute.xlu0 %548
    %v550 = vlaneseq
    %v551 = vshrl.u32 %v550, 7
    %v552 = vsub.s32 4, %v551
    %v553 = vrot.slane %v216, %v552
    %s555 = sor.u32 256, 1
    %556 = vbcast.lane.b32.xlu0 %v553, %s555
    %v557 = vpop.permute.xlu0 %556
    %s559 = sor.u32 256, 9
    %560 = vbcast.lane.b32.xlu0 %v553, %s559
    %v561 = vpop.permute.xlu0 %560
    %v562 = vlaneseq
    %v563 = vshrl.u32 %v562, 7
    %v564 = vsub.s32 5, %v563
    %v565 = vrot.slane %v216, %v564
    %s567 = sor.u32 256, 1
    %568 = vbcast.lane.b32.xlu0 %v565, %s567
    %v569 = vpop.permute.xlu0 %568
    %s571 = sor.u32 256, 9
    %572 = vbcast.lane.b32.xlu0 %v565, %s571
    %v573 = vpop.permute.xlu0 %572
    %v574 = vlaneseq
    %v575 = vshrl.u32 %v574, 7
    %v576 = vsub.s32 6, %v575
    %v577 = vrot.slane %v216, %v576
    %s579 = sor.u32 256, 1
    %580 = vbcast.lane.b32.xlu0 %v577, %s579
    %v581 = vpop.permute.xlu0 %580
    %s583 = sor.u32 256, 9
    %584 = vbcast.lane.b32.xlu0 %v577, %s583
    %v585 = vpop.permute.xlu0 %584
    %v586 = vlaneseq
    %v587 = vshrl.u32 %v586, 7
    %v588 = vsub.s32 7, %v587
    %v589 = vrot.slane %v216, %v588
    %s591 = sor.u32 256, 1
    %592 = vbcast.lane.b32.xlu0 %v589, %s591
    %v593 = vpop.permute.xlu0 %592
    %s595 = sor.u32 256, 9
    %596 = vbcast.lane.b32.xlu0 %v589, %s595
    %v597 = vpop.permute.xlu0 %596
    %v598 = vlaneseq
    %v599 = vshrl.u32 %v598, 7
    %v600 = vsub.s32 0, %v599
    %v601 = vrot.slane %v217, %v600
    %s603 = sor.u32 256, 1
    %604 = vbcast.lane.b32.xlu0 %v601, %s603
    %v605 = vpop.permute.xlu0 %604
    %s607 = sor.u32 256, 9
    %608 = vbcast.lane.b32.xlu0 %v601, %s607
    %v609 = vpop.permute.xlu0 %608
    %v610 = vlaneseq
    %v611 = vshrl.u32 %v610, 7
    %v612 = vsub.s32 1, %v611
    %v613 = vrot.slane %v217, %v612
    %s615 = sor.u32 256, 1
    %616 = vbcast.lane.b32.xlu0 %v613, %s615
    %v617 = vpop.permute.xlu0 %616
    %s619 = sor.u32 256, 9
    %620 = vbcast.lane.b32.xlu0 %v613, %s619
    %v621 = vpop.permute.xlu0 %620
    %v622 = vlaneseq
    %v623 = vshrl.u32 %v622, 7
    %v624 = vsub.s32 2, %v623
    %v625 = vrot.slane %v217, %v624
    %s627 = sor.u32 256, 1
    %628 = vbcast.lane.b32.xlu0 %v625, %s627
    %v629 = vpop.permute.xlu0 %628
    %s631 = sor.u32 256, 9
    %632 = vbcast.lane.b32.xlu0 %v625, %s631
    %v633 = vpop.permute.xlu0 %632
    %v634 = vlaneseq
    %v635 = vshrl.u32 %v634, 7
    %v636 = vsub.s32 3, %v635
    %v637 = vrot.slane %v217, %v636
    %s639 = sor.u32 256, 1
    %640 = vbcast.lane.b32.xlu0 %v637, %s639
    %v641 = vpop.permute.xlu0 %640
    %s643 = sor.u32 256, 9
    %644 = vbcast.lane.b32.xlu0 %v637, %s643
    %v645 = vpop.permute.xlu0 %644
    %v646 = vlaneseq
    %v647 = vshrl.u32 %v646, 7
    %v648 = vsub.s32 4, %v647
    %v649 = vrot.slane %v217, %v648
    %s651 = sor.u32 256, 1
    %652 = vbcast.lane.b32.xlu0 %v649, %s651
    %v653 = vpop.permute.xlu0 %652
    %s655 = sor.u32 256, 9
    %656 = vbcast.lane.b32.xlu0 %v649, %s655
    %v657 = vpop.permute.xlu0 %656
    %v658 = vlaneseq
    %v659 = vshrl.u32 %v658, 7
    %v660 = vsub.s32 5, %v659
    %v661 = vrot.slane %v217, %v660
    %s663 = sor.u32 256, 1
    %664 = vbcast.lane.b32.xlu0 %v661, %s663
    %v665 = vpop.permute.xlu0 %664
    %s667 = sor.u32 256, 9
    %668 = vbcast.lane.b32.xlu0 %v661, %s667
    %v669 = vpop.permute.xlu0 %668
    %v670 = vlaneseq
    %v671 = vshrl.u32 %v670, 7
    %v672 = vsub.s32 6, %v671
    %v673 = vrot.slane %v217, %v672
    %s675 = sor.u32 256, 1
    %676 = vbcast.lane.b32.xlu0 %v673, %s675
    %v677 = vpop.permute.xlu0 %676
    %s679 = sor.u32 256, 9
    %680 = vbcast.lane.b32.xlu0 %v673, %s679
    %v681 = vpop.permute.xlu0 %680
    %v682 = vlaneseq
    %v683 = vshrl.u32 %v682, 7
    %v684 = vsub.s32 7, %v683
    %v685 = vrot.slane %v217, %v684
    %s687 = sor.u32 256, 1
    %688 = vbcast.lane.b32.xlu0 %v685, %s687
    %v689 = vpop.permute.xlu0 %688
    %s691 = sor.u32 256, 9
    %692 = vbcast.lane.b32.xlu0 %v685, %s691
    %v693 = vpop.permute.xlu0 %692
    %v694 = vlaneseq
    %v695 = vshrl.u32 %v694, 7
    %v696 = vsub.s32 0, %v695
    %v697 = vrot.slane %v218, %v696
    %s699 = sor.u32 256, 1
    %700 = vbcast.lane.b32.xlu0 %v697, %s699
    %v701 = vpop.permute.xlu0 %700
    %s703 = sor.u32 256, 9
    %704 = vbcast.lane.b32.xlu0 %v697, %s703
    %v705 = vpop.permute.xlu0 %704
    %v706 = vlaneseq
    %v707 = vshrl.u32 %v706, 7
    %v708 = vsub.s32 1, %v707
    %v709 = vrot.slane %v218, %v708
    %s711 = sor.u32 256, 1
    %712 = vbcast.lane.b32.xlu0 %v709, %s711
    %v713 = vpop.permute.xlu0 %712
    %s715 = sor.u32 256, 9
    %716 = vbcast.lane.b32.xlu0 %v709, %s715
    %v717 = vpop.permute.xlu0 %716
    %v718 = vlaneseq
    %v719 = vshrl.u32 %v718, 7
    %v720 = vsub.s32 2, %v719
    %v721 = vrot.slane %v218, %v720
    %s723 = sor.u32 256, 1
    %724 = vbcast.lane.b32.xlu0 %v721, %s723
    %v725 = vpop.permute.xlu0 %724
    %s727 = sor.u32 256, 9
    %728 = vbcast.lane.b32.xlu0 %v721, %s727
    %v729 = vpop.permute.xlu0 %728
    %v730 = vlaneseq
    %v731 = vshrl.u32 %v730, 7
    %v732 = vsub.s32 3, %v731
    %v733 = vrot.slane %v218, %v732
    %s735 = sor.u32 256, 1
    %736 = vbcast.lane.b32.xlu0 %v733, %s735
    %v737 = vpop.permute.xlu0 %736
    %s739 = sor.u32 256, 9
    %740 = vbcast.lane.b32.xlu0 %v733, %s739
    %v741 = vpop.permute.xlu0 %740
    %v742 = vlaneseq
    %v743 = vshrl.u32 %v742, 7
    %v744 = vsub.s32 4, %v743
    %v745 = vrot.slane %v218, %v744
    %s747 = sor.u32 256, 1
    %748 = vbcast.lane.b32.xlu0 %v745, %s747
    %v749 = vpop.permute.xlu0 %748
    %s751 = sor.u32 256, 9
    %752 = vbcast.lane.b32.xlu0 %v745, %s751
    %v753 = vpop.permute.xlu0 %752
    %v754 = vlaneseq
    %v755 = vshrl.u32 %v754, 7
    %v756 = vsub.s32 5, %v755
    %v757 = vrot.slane %v218, %v756
    %s759 = sor.u32 256, 1
    %760 = vbcast.lane.b32.xlu0 %v757, %s759
    %v761 = vpop.permute.xlu0 %760
    %s763 = sor.u32 256, 9
    %764 = vbcast.lane.b32.xlu0 %v757, %s763
    %v765 = vpop.permute.xlu0 %764
    %v766 = vlaneseq
    %v767 = vshrl.u32 %v766, 7
    %v768 = vsub.s32 6, %v767
    %v769 = vrot.slane %v218, %v768
    %s771 = sor.u32 256, 1
    %772 = vbcast.lane.b32.xlu0 %v769, %s771
    %v773 = vpop.permute.xlu0 %772
    %s775 = sor.u32 256, 9
    %776 = vbcast.lane.b32.xlu0 %v769, %s775
    %v777 = vpop.permute.xlu0 %776
    %v778 = vlaneseq
    %v779 = vshrl.u32 %v778, 7
    %v780 = vsub.s32 7, %v779
    %v781 = vrot.slane %v218, %v780
    %s783 = sor.u32 256, 1
    %784 = vbcast.lane.b32.xlu0 %v781, %s783
    %v785 = vpop.permute.xlu0 %784
    %s787 = sor.u32 256, 9
    %788 = vbcast.lane.b32.xlu0 %v781, %s787
    %v789 = vpop.permute.xlu0 %788
    %v790 = vlaneseq
    %v791 = vshrl.u32 %v790, 7
    %v792 = vsub.s32 0, %v791
    %v793 = vrot.slane %v219, %v792
    %s795 = sor.u32 256, 1
    %796 = vbcast.lane.b32.xlu0 %v793, %s795
    %v797 = vpop.permute.xlu0 %796
    %s799 = sor.u32 256, 9
    %800 = vbcast.lane.b32.xlu0 %v793, %s799
    %v801 = vpop.permute.xlu0 %800
    %v802 = vlaneseq
    %v803 = vshrl.u32 %v802, 7
    %v804 = vsub.s32 1, %v803
    %v805 = vrot.slane %v219, %v804
    %s807 = sor.u32 256, 1
    %808 = vbcast.lane.b32.xlu0 %v805, %s807
    %v809 = vpop.permute.xlu0 %808
    %s811 = sor.u32 256, 9
    %812 = vbcast.lane.b32.xlu0 %v805, %s811
    %v813 = vpop.permute.xlu0 %812
    %v814 = vlaneseq
    %v815 = vshrl.u32 %v814, 7
    %v816 = vsub.s32 2, %v815
    %v817 = vrot.slane %v219, %v816
    %s819 = sor.u32 256, 1
    %820 = vbcast.lane.b32.xlu0 %v817, %s819
    %v821 = vpop.permute.xlu0 %820
    %s823 = sor.u32 256, 9
    %824 = vbcast.lane.b32.xlu0 %v817, %s823
    %v825 = vpop.permute.xlu0 %824
    %v826 = vlaneseq
    %v827 = vshrl.u32 %v826, 7
    %v828 = vsub.s32 3, %v827
    %v829 = vrot.slane %v219, %v828
    %s831 = sor.u32 256, 1
    %832 = vbcast.lane.b32.xlu0 %v829, %s831
    %v833 = vpop.permute.xlu0 %832
    %s835 = sor.u32 256, 9
    %836 = vbcast.lane.b32.xlu0 %v829, %s835
    %v837 = vpop.permute.xlu0 %836
    %v838 = vlaneseq
    %v839 = vshrl.u32 %v838, 7
    %v840 = vsub.s32 4, %v839
    %v841 = vrot.slane %v219, %v840
    %s843 = sor.u32 256, 1
    %844 = vbcast.lane.b32.xlu0 %v841, %s843
    %v845 = vpop.permute.xlu0 %844
    %s847 = sor.u32 256, 9
    %848 = vbcast.lane.b32.xlu0 %v841, %s847
    %v849 = vpop.permute.xlu0 %848
    %v850 = vlaneseq
    %v851 = vshrl.u32 %v850, 7
    %v852 = vsub.s32 5, %v851
    %v853 = vrot.slane %v219, %v852
    %s855 = sor.u32 256, 1
    %856 = vbcast.lane.b32.xlu0 %v853, %s855
    %v857 = vpop.permute.xlu0 %856
    %s859 = sor.u32 256, 9
    %860 = vbcast.lane.b32.xlu0 %v853, %s859
    %v861 = vpop.permute.xlu0 %860
    %v862 = vlaneseq
    %v863 = vshrl.u32 %v862, 7
    %v864 = vsub.s32 6, %v863
    %v865 = vrot.slane %v219, %v864
    %s867 = sor.u32 256, 1
    %868 = vbcast.lane.b32.xlu0 %v865, %s867
    %v869 = vpop.permute.xlu0 %868
    %s871 = sor.u32 256, 9
    %872 = vbcast.lane.b32.xlu0 %v865, %s871
    %v873 = vpop.permute.xlu0 %872
    %v874 = vlaneseq
    %v875 = vshrl.u32 %v874, 7
    %v876 = vsub.s32 7, %v875
    %v877 = vrot.slane %v219, %v876
    %s879 = sor.u32 256, 1
    %880 = vbcast.lane.b32.xlu0 %v877, %s879
    %v881 = vpop.permute.xlu0 %880
    %s883 = sor.u32 256, 9
    %884 = vbcast.lane.b32.xlu0 %v877, %s883
    %v885 = vpop.permute.xlu0 %884
    %v886 = vlaneseq
    %v887 = vshrl.u32 %v886, 7
    %v888 = vsub.s32 0, %v887
    %v889 = vrot.slane %v220, %v888
    %s891 = sor.u32 256, 1
    %892 = vbcast.lane.b32.xlu0 %v889, %s891
    %v893 = vpop.permute.xlu0 %892
    %s895 = sor.u32 256, 9
    %896 = vbcast.lane.b32.xlu0 %v889, %s895
    %v897 = vpop.permute.xlu0 %896
    %v898 = vlaneseq
    %v899 = vshrl.u32 %v898, 7
    %v900 = vsub.s32 1, %v899
    %v901 = vrot.slane %v220, %v900
    %s903 = sor.u32 256, 1
    %904 = vbcast.lane.b32.xlu0 %v901, %s903
    %v905 = vpop.permute.xlu0 %904
    %s907 = sor.u32 256, 9
    %908 = vbcast.lane.b32.xlu0 %v901, %s907
    %v909 = vpop.permute.xlu0 %908
    %v910 = vlaneseq
    %v911 = vshrl.u32 %v910, 7
    %v912 = vsub.s32 2, %v911
    %v913 = vrot.slane %v220, %v912
    %s915 = sor.u32 256, 1
    %916 = vbcast.lane.b32.xlu0 %v913, %s915
    %v917 = vpop.permute.xlu0 %916
    %s919 = sor.u32 256, 9
    %920 = vbcast.lane.b32.xlu0 %v913, %s919
    %v921 = vpop.permute.xlu0 %920
    %v922 = vlaneseq
    %v923 = vshrl.u32 %v922, 7
    %v924 = vsub.s32 3, %v923
    %v925 = vrot.slane %v220, %v924
    %s927 = sor.u32 256, 1
    %928 = vbcast.lane.b32.xlu0 %v925, %s927
    %v929 = vpop.permute.xlu0 %928
    %s931 = sor.u32 256, 9
    %932 = vbcast.lane.b32.xlu0 %v925, %s931
    %v933 = vpop.permute.xlu0 %932
    %v934 = vlaneseq
    %v935 = vshrl.u32 %v934, 7
    %v936 = vsub.s32 4, %v935
    %v937 = vrot.slane %v220, %v936
    %s939 = sor.u32 256, 1
    %940 = vbcast.lane.b32.xlu0 %v937, %s939
    %v941 = vpop.permute.xlu0 %940
    %s943 = sor.u32 256, 9
    %944 = vbcast.lane.b32.xlu0 %v937, %s943
    %v945 = vpop.permute.xlu0 %944
    %v946 = vlaneseq
    %v947 = vshrl.u32 %v946, 7
    %v948 = vsub.s32 5, %v947
    %v949 = vrot.slane %v220, %v948
    %s951 = sor.u32 256, 1
    %952 = vbcast.lane.b32.xlu0 %v949, %s951
    %v953 = vpop.permute.xlu0 %952
    %s955 = sor.u32 256, 9
    %956 = vbcast.lane.b32.xlu0 %v949, %s955
    %v957 = vpop.permute.xlu0 %956
    %v958 = vlaneseq
    %v959 = vshrl.u32 %v958, 7
    %v960 = vsub.s32 6, %v959
    %v961 = vrot.slane %v220, %v960
    %s963 = sor.u32 256, 1
    %964 = vbcast.lane.b32.xlu0 %v961, %s963
    %v965 = vpop.permute.xlu0 %964
    %s967 = sor.u32 256, 9
    %968 = vbcast.lane.b32.xlu0 %v961, %s967
    %v969 = vpop.permute.xlu0 %968
    %v970 = vlaneseq
    %v971 = vshrl.u32 %v970, 7
    %v972 = vsub.s32 7, %v971
    %v973 = vrot.slane %v220, %v972
    %s975 = sor.u32 256, 1
    %976 = vbcast.lane.b32.xlu0 %v973, %s975
    %v977 = vpop.permute.xlu0 %976
    %s979 = sor.u32 256, 9
    %980 = vbcast.lane.b32.xlu0 %v973, %s979
    %v981 = vpop.permute.xlu0 %980
    %v982 = vlaneseq
    %v983 = vshrl.u32 %v982, 7
    %v984 = vsub.s32 0, %v983
    %v985 = vrot.slane %v221, %v984
    %s987 = sor.u32 256, 1
    %988 = vbcast.lane.b32.xlu0 %v985, %s987
    %v989 = vpop.permute.xlu0 %988
    %s991 = sor.u32 256, 9
    %992 = vbcast.lane.b32.xlu0 %v985, %s991
    %v993 = vpop.permute.xlu0 %992
    %v994 = vlaneseq
    %v995 = vshrl.u32 %v994, 7
    %v996 = vsub.s32 1, %v995
    %v997 = vrot.slane %v221, %v996
    %s999 = sor.u32 256, 1
    %1000 = vbcast.lane.b32.xlu0 %v997, %s999
    %v1001 = vpop.permute.xlu0 %1000
    %s1003 = sor.u32 256, 9
    %1004 = vbcast.lane.b32.xlu0 %v997, %s1003
    %v1005 = vpop.permute.xlu0 %1004
    %v1006 = vlaneseq
    %v1007 = vshrl.u32 %v1006, 7
    %v1008 = vsub.s32 2, %v1007
    %v1009 = vrot.slane %v221, %v1008
    %s1011 = sor.u32 256, 1
    %1012 = vbcast.lane.b32.xlu0 %v1009, %s1011
    %v1013 = vpop.permute.xlu0 %1012
    %s1015 = sor.u32 256, 9
    %1016 = vbcast.lane.b32.xlu0 %v1009, %s1015
    %v1017 = vpop.permute.xlu0 %1016
    %v1018 = vlaneseq
    %v1019 = vshrl.u32 %v1018, 7
    %v1020 = vsub.s32 3, %v1019
    %v1021 = vrot.slane %v221, %v1020
    %s1023 = sor.u32 256, 1
    %1024 = vbcast.lane.b32.xlu0 %v1021, %s1023
    %v1025 = vpop.permute.xlu0 %1024
    %s1027 = sor.u32 256, 9
    %1028 = vbcast.lane.b32.xlu0 %v1021, %s1027
    %v1029 = vpop.permute.xlu0 %1028
    %v1030 = vlaneseq
    %v1031 = vshrl.u32 %v1030, 7
    %v1032 = vsub.s32 4, %v1031
    %v1033 = vrot.slane %v221, %v1032
    %s1035 = sor.u32 256, 1
    %1036 = vbcast.lane.b32.xlu0 %v1033, %s1035
    %v1037 = vpop.permute.xlu0 %1036
    %s1039 = sor.u32 256, 9
    %1040 = vbcast.lane.b32.xlu0 %v1033, %s1039
    %v1041 = vpop.permute.xlu0 %1040
    %v1042 = vlaneseq
    %v1043 = vshrl.u32 %v1042, 7
    %v1044 = vsub.s32 5, %v1043
    %v1045 = vrot.slane %v221, %v1044
    %s1047 = sor.u32 256, 1
    %1048 = vbcast.lane.b32.xlu0 %v1045, %s1047
    %v1049 = vpop.permute.xlu0 %1048
    %s1051 = sor.u32 256, 9
    %1052 = vbcast.lane.b32.xlu0 %v1045, %s1051
    %v1053 = vpop.permute.xlu0 %1052
    %v1054 = vlaneseq
    %v1055 = vshrl.u32 %v1054, 7
    %v1056 = vsub.s32 6, %v1055
    %v1057 = vrot.slane %v221, %v1056
    %s1059 = sor.u32 256, 1
    %1060 = vbcast.lane.b32.xlu0 %v1057, %s1059
    %v1061 = vpop.permute.xlu0 %1060
    %s1063 = sor.u32 256, 9
    %1064 = vbcast.lane.b32.xlu0 %v1057, %s1063
    %v1065 = vpop.permute.xlu0 %1064
    %v1066 = vlaneseq
    %v1067 = vshrl.u32 %v1066, 7
    %v1068 = vsub.s32 7, %v1067
    %v1069 = vrot.slane %v221, %v1068
    %s1071 = sor.u32 256, 1
    %1072 = vbcast.lane.b32.xlu0 %v1069, %s1071
    %v1073 = vpop.permute.xlu0 %1072
    %s1075 = sor.u32 256, 9
    %1076 = vbcast.lane.b32.xlu0 %v1069, %s1075
    %v1077 = vpop.permute.xlu0 %1076
    %v1078 = vlaneseq
    %v1079 = vshrl.u32 %v1078, 7
    %v1080 = vsub.s32 0, %v1079
    %v1081 = vrot.slane %v302, %v1080
    %s1083 = sor.u32 256, 2
    %1084 = vbcast.lane.b32.xlu0 %v1081, %s1083
    %v1085 = vpop.permute.xlu0 %1084
    %s1087 = sor.u32 256, 10
    %1088 = vbcast.lane.b32.xlu0 %v1081, %s1087
    %v1089 = vpop.permute.xlu0 %1088
    %v1090 = vlaneseq
    %v1091 = vshrl.u32 %v1090, 7
    %v1092 = vsub.s32 1, %v1091
    %v1093 = vrot.slane %v302, %v1092
    %s1095 = sor.u32 256, 2
    %1096 = vbcast.lane.b32.xlu0 %v1093, %s1095
    %v1097 = vpop.permute.xlu0 %1096
    %s1099 = sor.u32 256, 10
    %1100 = vbcast.lane.b32.xlu0 %v1093, %s1099
    %v1101 = vpop.permute.xlu0 %1100
    %v1102 = vlaneseq
    %v1103 = vshrl.u32 %v1102, 7
    %v1104 = vsub.s32 2, %v1103
    %v1105 = vrot.slane %v302, %v1104
    %s1107 = sor.u32 256, 2
    %1108 = vbcast.lane.b32.xlu0 %v1105, %s1107
    %v1109 = vpop.permute.xlu0 %1108
    %s1111 = sor.u32 256, 10
    %1112 = vbcast.lane.b32.xlu0 %v1105, %s1111
    %v1113 = vpop.permute.xlu0 %1112
    %v1114 = vlaneseq
    %v1115 = vshrl.u32 %v1114, 7
    %v1116 = vsub.s32 3, %v1115
    %v1117 = vrot.slane %v302, %v1116
    %s1119 = sor.u32 256, 2
    %1120 = vbcast.lane.b32.xlu0 %v1117, %s1119
    %v1121 = vpop.permute.xlu0 %1120
    %s1123 = sor.u32 256, 10
    %1124 = vbcast.lane.b32.xlu0 %v1117, %s1123
    %v1125 = vpop.permute.xlu0 %1124
    %v1126 = vlaneseq
    %v1127 = vshrl.u32 %v1126, 7
    %v1128 = vsub.s32 4, %v1127
    %v1129 = vrot.slane %v302, %v1128
    %s1131 = sor.u32 256, 2
    %1132 = vbcast.lane.b32.xlu0 %v1129, %s1131
    %v1133 = vpop.permute.xlu0 %1132
    %s1135 = sor.u32 256, 10
    %1136 = vbcast.lane.b32.xlu0 %v1129, %s1135
    %v1137 = vpop.permute.xlu0 %1136
    %v1138 = vlaneseq
    %v1139 = vshrl.u32 %v1138, 7
    %v1140 = vsub.s32 5, %v1139
    %v1141 = vrot.slane %v302, %v1140
    %s1143 = sor.u32 256, 2
    %1144 = vbcast.lane.b32.xlu0 %v1141, %s1143
    %v1145 = vpop.permute.xlu0 %1144
    %s1147 = sor.u32 256, 10
    %1148 = vbcast.lane.b32.xlu0 %v1141, %s1147
    %v1149 = vpop.permute.xlu0 %1148
    %v1150 = vlaneseq
    %v1151 = vshrl.u32 %v1150, 7
    %v1152 = vsub.s32 6, %v1151
    %v1153 = vrot.slane %v302, %v1152
    %s1155 = sor.u32 256, 2
    %1156 = vbcast.lane.b32.xlu0 %v1153, %s1155
    %v1157 = vpop.permute.xlu0 %1156
    %s1159 = sor.u32 256, 10
    %1160 = vbcast.lane.b32.xlu0 %v1153, %s1159
    %v1161 = vpop.permute.xlu0 %1160
    %v1162 = vlaneseq
    %v1163 = vshrl.u32 %v1162, 7
    %v1164 = vsub.s32 7, %v1163
    %v1165 = vrot.slane %v302, %v1164
    %s1167 = sor.u32 256, 2
    %1168 = vbcast.lane.b32.xlu0 %v1165, %s1167
    %v1169 = vpop.permute.xlu0 %1168
    %s1171 = sor.u32 256, 10
    %1172 = vbcast.lane.b32.xlu0 %v1165, %s1171
    %v1173 = vpop.permute.xlu0 %1172
    %v1174 = vlaneseq
    %v1175 = vshrl.u32 %v1174, 7
    %v1176 = vsub.s32 0, %v1175
    %v1177 = vrot.slane %v303, %v1176
    %s1179 = sor.u32 256, 2
    %1180 = vbcast.lane.b32.xlu0 %v1177, %s1179
    %v1181 = vpop.permute.xlu0 %1180
    %s1183 = sor.u32 256, 10
    %1184 = vbcast.lane.b32.xlu0 %v1177, %s1183
    %v1185 = vpop.permute.xlu0 %1184
    %v1186 = vlaneseq
    %v1187 = vshrl.u32 %v1186, 7
    %v1188 = vsub.s32 1, %v1187
    %v1189 = vrot.slane %v303, %v1188
    %s1191 = sor.u32 256, 2
    %1192 = vbcast.lane.b32.xlu0 %v1189, %s1191
    %v1193 = vpop.permute.xlu0 %1192
    %s1195 = sor.u32 256, 10
    %1196 = vbcast.lane.b32.xlu0 %v1189, %s1195
    %v1197 = vpop.permute.xlu0 %1196
    %v1198 = vlaneseq
    %v1199 = vshrl.u32 %v1198, 7
    %v1200 = vsub.s32 2, %v1199
    %v1201 = vrot.slane %v303, %v1200
    %s1203 = sor.u32 256, 2
    %1204 = vbcast.lane.b32.xlu0 %v1201, %s1203
    %v1205 = vpop.permute.xlu0 %1204
    %s1207 = sor.u32 256, 10
    %1208 = vbcast.lane.b32.xlu0 %v1201, %s1207
    %v1209 = vpop.permute.xlu0 %1208
    %v1210 = vlaneseq
    %v1211 = vshrl.u32 %v1210, 7
    %v1212 = vsub.s32 3, %v1211
    %v1213 = vrot.slane %v303, %v1212
    %s1215 = sor.u32 256, 2
    %1216 = vbcast.lane.b32.xlu0 %v1213, %s1215
    %v1217 = vpop.permute.xlu0 %1216
    %s1219 = sor.u32 256, 10
    %1220 = vbcast.lane.b32.xlu0 %v1213, %s1219
    %v1221 = vpop.permute.xlu0 %1220
    %v1222 = vlaneseq
    %v1223 = vshrl.u32 %v1222, 7
    %v1224 = vsub.s32 4, %v1223
    %v1225 = vrot.slane %v303, %v1224
    %s1227 = sor.u32 256, 2
    %1228 = vbcast.lane.b32.xlu0 %v1225, %s1227
    %v1229 = vpop.permute.xlu0 %1228
    %s1231 = sor.u32 256, 10
    %1232 = vbcast.lane.b32.xlu0 %v1225, %s1231
    %v1233 = vpop.permute.xlu0 %1232
    %v1234 = vlaneseq
    %v1235 = vshrl.u32 %v1234, 7
    %v1236 = vsub.s32 5, %v1235
    %v1237 = vrot.slane %v303, %v1236
    %s1239 = sor.u32 256, 2
    %1240 = vbcast.lane.b32.xlu0 %v1237, %s1239
    %v1241 = vpop.permute.xlu0 %1240
    %s1243 = sor.u32 256, 10
    %1244 = vbcast.lane.b32.xlu0 %v1237, %s1243
    %v1245 = vpop.permute.xlu0 %1244
    %v1246 = vlaneseq
    %v1247 = vshrl.u32 %v1246, 7
    %v1248 = vsub.s32 6, %v1247
    %v1249 = vrot.slane %v303, %v1248
    %s1251 = sor.u32 256, 2
    %1252 = vbcast.lane.b32.xlu0 %v1249, %s1251
    %v1253 = vpop.permute.xlu0 %1252
    %s1255 = sor.u32 256, 10
    %1256 = vbcast.lane.b32.xlu0 %v1249, %s1255
    %v1257 = vpop.permute.xlu0 %1256
    %v1258 = vlaneseq
    %v1259 = vshrl.u32 %v1258, 7
    %v1260 = vsub.s32 7, %v1259
    %v1261 = vrot.slane %v303, %v1260
    %s1263 = sor.u32 256, 2
    %1264 = vbcast.lane.b32.xlu0 %v1261, %s1263
    %v1265 = vpop.permute.xlu0 %1264
    %s1267 = sor.u32 256, 10
    %1268 = vbcast.lane.b32.xlu0 %v1261, %s1267
    %v1269 = vpop.permute.xlu0 %1268
    %v1270 = vlaneseq
    %v1271 = vshrl.u32 %v1270, 7
    %v1272 = vsub.s32 0, %v1271
    %v1273 = vrot.slane %v304, %v1272
    %s1275 = sor.u32 256, 2
    %1276 = vbcast.lane.b32.xlu0 %v1273, %s1275
    %v1277 = vpop.permute.xlu0 %1276
    %s1279 = sor.u32 256, 10
    %1280 = vbcast.lane.b32.xlu0 %v1273, %s1279
    %v1281 = vpop.permute.xlu0 %1280
    %v1282 = vlaneseq
    %v1283 = vshrl.u32 %v1282, 7
    %v1284 = vsub.s32 1, %v1283
    %v1285 = vrot.slane %v304, %v1284
    %s1287 = sor.u32 256, 2
    %1288 = vbcast.lane.b32.xlu0 %v1285, %s1287
    %v1289 = vpop.permute.xlu0 %1288
    %s1291 = sor.u32 256, 10
    %1292 = vbcast.lane.b32.xlu0 %v1285, %s1291
    %v1293 = vpop.permute.xlu0 %1292
    %v1294 = vlaneseq
    %v1295 = vshrl.u32 %v1294, 7
    %v1296 = vsub.s32 2, %v1295
    %v1297 = vrot.slane %v304, %v1296
    %s1299 = sor.u32 256, 2
    %1300 = vbcast.lane.b32.xlu0 %v1297, %s1299
    %v1301 = vpop.permute.xlu0 %1300
    %s1303 = sor.u32 256, 10
    %1304 = vbcast.lane.b32.xlu0 %v1297, %s1303
    %v1305 = vpop.permute.xlu0 %1304
    %v1306 = vlaneseq
    %v1307 = vshrl.u32 %v1306, 7
    %v1308 = vsub.s32 3, %v1307
    %v1309 = vrot.slane %v304, %v1308
    %s1311 = sor.u32 256, 2
    %1312 = vbcast.lane.b32.xlu0 %v1309, %s1311
    %v1313 = vpop.permute.xlu0 %1312
    %s1315 = sor.u32 256, 10
    %1316 = vbcast.lane.b32.xlu0 %v1309, %s1315
    %v1317 = vpop.permute.xlu0 %1316
    %v1318 = vlaneseq
    %v1319 = vshrl.u32 %v1318, 7
    %v1320 = vsub.s32 4, %v1319
    %v1321 = vrot.slane %v304, %v1320
    %s1323 = sor.u32 256, 2
    %1324 = vbcast.lane.b32.xlu0 %v1321, %s1323
    %v1325 = vpop.permute.xlu0 %1324
    %s1327 = sor.u32 256, 10
    %1328 = vbcast.lane.b32.xlu0 %v1321, %s1327
    %v1329 = vpop.permute.xlu0 %1328
    %v1330 = vlaneseq
    %v1331 = vshrl.u32 %v1330, 7
    %v1332 = vsub.s32 5, %v1331
    %v1333 = vrot.slane %v304, %v1332
    %s1335 = sor.u32 256, 2
    %1336 = vbcast.lane.b32.xlu0 %v1333, %s1335
    %v1337 = vpop.permute.xlu0 %1336
    %s1339 = sor.u32 256, 10
    %1340 = vbcast.lane.b32.xlu0 %v1333, %s1339
    %v1341 = vpop.permute.xlu0 %1340
    %v1342 = vlaneseq
    %v1343 = vshrl.u32 %v1342, 7
    %v1344 = vsub.s32 6, %v1343
    %v1345 = vrot.slane %v304, %v1344
    %s1347 = sor.u32 256, 2
    %1348 = vbcast.lane.b32.xlu0 %v1345, %s1347
    %v1349 = vpop.permute.xlu0 %1348
    %s1351 = sor.u32 256, 10
    %1352 = vbcast.lane.b32.xlu0 %v1345, %s1351
    %v1353 = vpop.permute.xlu0 %1352
    %v1354 = vlaneseq
    %v1355 = vshrl.u32 %v1354, 7
    %v1356 = vsub.s32 7, %v1355
    %v1357 = vrot.slane %v304, %v1356
    %s1359 = sor.u32 256, 2
    %1360 = vbcast.lane.b32.xlu0 %v1357, %s1359
    %v1361 = vpop.permute.xlu0 %1360
    %s1363 = sor.u32 256, 10
    %1364 = vbcast.lane.b32.xlu0 %v1357, %s1363
    %v1365 = vpop.permute.xlu0 %1364
    %v1366 = vlaneseq
    %v1367 = vshrl.u32 %v1366, 7
    %v1368 = vsub.s32 0, %v1367
    %v1369 = vrot.slane %v305, %v1368
    %s1371 = sor.u32 256, 2
    %1372 = vbcast.lane.b32.xlu0 %v1369, %s1371
    %v1373 = vpop.permute.xlu0 %1372
    %s1375 = sor.u32 256, 10
    %1376 = vbcast.lane.b32.xlu0 %v1369, %s1375
    %v1377 = vpop.permute.xlu0 %1376
    %v1378 = vlaneseq
    %v1379 = vshrl.u32 %v1378, 7
    %v1380 = vsub.s32 1, %v1379
    %v1381 = vrot.slane %v305, %v1380
    %s1383 = sor.u32 256, 2
    %1384 = vbcast.lane.b32.xlu0 %v1381, %s1383
    %v1385 = vpop.permute.xlu0 %1384
    %s1387 = sor.u32 256, 10
    %1388 = vbcast.lane.b32.xlu0 %v1381, %s1387
    %v1389 = vpop.permute.xlu0 %1388
    %v1390 = vlaneseq
    %v1391 = vshrl.u32 %v1390, 7
    %v1392 = vsub.s32 2, %v1391
    %v1393 = vrot.slane %v305, %v1392
    %s1395 = sor.u32 256, 2
    %1396 = vbcast.lane.b32.xlu0 %v1393, %s1395
    %v1397 = vpop.permute.xlu0 %1396
    %s1399 = sor.u32 256, 10
    %1400 = vbcast.lane.b32.xlu0 %v1393, %s1399
    %v1401 = vpop.permute.xlu0 %1400
    %v1402 = vlaneseq
    %v1403 = vshrl.u32 %v1402, 7
    %v1404 = vsub.s32 3, %v1403
    %v1405 = vrot.slane %v305, %v1404
    %s1407 = sor.u32 256, 2
    %1408 = vbcast.lane.b32.xlu0 %v1405, %s1407
    %v1409 = vpop.permute.xlu0 %1408
    %s1411 = sor.u32 256, 10
    %1412 = vbcast.lane.b32.xlu0 %v1405, %s1411
    %v1413 = vpop.permute.xlu0 %1412
    %v1414 = vlaneseq
    %v1415 = vshrl.u32 %v1414, 7
    %v1416 = vsub.s32 4, %v1415
    %v1417 = vrot.slane %v305, %v1416
    %s1419 = sor.u32 256, 2
    %1420 = vbcast.lane.b32.xlu0 %v1417, %s1419
    %v1421 = vpop.permute.xlu0 %1420
    %s1423 = sor.u32 256, 10
    %1424 = vbcast.lane.b32.xlu0 %v1417, %s1423
    %v1425 = vpop.permute.xlu0 %1424
    %v1426 = vlaneseq
    %v1427 = vshrl.u32 %v1426, 7
    %v1428 = vsub.s32 5, %v1427
    %v1429 = vrot.slane %v305, %v1428
    %s1431 = sor.u32 256, 2
    %1432 = vbcast.lane.b32.xlu0 %v1429, %s1431
    %v1433 = vpop.permute.xlu0 %1432
    %s1435 = sor.u32 256, 10
    %1436 = vbcast.lane.b32.xlu0 %v1429, %s1435
    %v1437 = vpop.permute.xlu0 %1436
    %v1438 = vlaneseq
    %v1439 = vshrl.u32 %v1438, 7
    %v1440 = vsub.s32 6, %v1439
    %v1441 = vrot.slane %v305, %v1440
    %s1443 = sor.u32 256, 2
    %1444 = vbcast.lane.b32.xlu0 %v1441, %s1443
    %v1445 = vpop.permute.xlu0 %1444
    %s1447 = sor.u32 256, 10
    %1448 = vbcast.lane.b32.xlu0 %v1441, %s1447
    %v1449 = vpop.permute.xlu0 %1448
    %v1450 = vlaneseq
    %v1451 = vshrl.u32 %v1450, 7
    %v1452 = vsub.s32 7, %v1451
    %v1453 = vrot.slane %v305, %v1452
    %s1455 = sor.u32 256, 2
    %1456 = vbcast.lane.b32.xlu0 %v1453, %s1455
    %v1457 = vpop.permute.xlu0 %1456
    %s1459 = sor.u32 256, 10
    %1460 = vbcast.lane.b32.xlu0 %v1453, %s1459
    %v1461 = vpop.permute.xlu0 %1460
    %v1462 = vlaneseq
    %v1463 = vshrl.u32 %v1462, 7
    %v1464 = vsub.s32 0, %v1463
    %v1465 = vrot.slane %v306, %v1464
    %s1467 = sor.u32 256, 2
    %1468 = vbcast.lane.b32.xlu0 %v1465, %s1467
    %v1469 = vpop.permute.xlu0 %1468
    %s1471 = sor.u32 256, 10
    %1472 = vbcast.lane.b32.xlu0 %v1465, %s1471
    %v1473 = vpop.permute.xlu0 %1472
    %v1474 = vlaneseq
    %v1475 = vshrl.u32 %v1474, 7
    %v1476 = vsub.s32 1, %v1475
    %v1477 = vrot.slane %v306, %v1476
    %s1479 = sor.u32 256, 2
    %1480 = vbcast.lane.b32.xlu0 %v1477, %s1479
    %v1481 = vpop.permute.xlu0 %1480
    %s1483 = sor.u32 256, 10
    %1484 = vbcast.lane.b32.xlu0 %v1477, %s1483
    %v1485 = vpop.permute.xlu0 %1484
    %v1486 = vlaneseq
    %v1487 = vshrl.u32 %v1486, 7
    %v1488 = vsub.s32 2, %v1487
    %v1489 = vrot.slane %v306, %v1488
    %s1491 = sor.u32 256, 2
    %1492 = vbcast.lane.b32.xlu0 %v1489, %s1491
    %v1493 = vpop.permute.xlu0 %1492
    %s1495 = sor.u32 256, 10
    %1496 = vbcast.lane.b32.xlu0 %v1489, %s1495
    %v1497 = vpop.permute.xlu0 %1496
    %v1498 = vlaneseq
    %v1499 = vshrl.u32 %v1498, 7
    %v1500 = vsub.s32 3, %v1499
    %v1501 = vrot.slane %v306, %v1500
    %s1503 = sor.u32 256, 2
    %1504 = vbcast.lane.b32.xlu0 %v1501, %s1503
    %v1505 = vpop.permute.xlu0 %1504
    %s1507 = sor.u32 256, 10
    %1508 = vbcast.lane.b32.xlu0 %v1501, %s1507
    %v1509 = vpop.permute.xlu0 %1508
    %v1510 = vlaneseq
    %v1511 = vshrl.u32 %v1510, 7
    %v1512 = vsub.s32 4, %v1511
    %v1513 = vrot.slane %v306, %v1512
    %s1515 = sor.u32 256, 2
    %1516 = vbcast.lane.b32.xlu0 %v1513, %s1515
    %v1517 = vpop.permute.xlu0 %1516
    %s1519 = sor.u32 256, 10
    %1520 = vbcast.lane.b32.xlu0 %v1513, %s1519
    %v1521 = vpop.permute.xlu0 %1520
    %v1522 = vlaneseq
    %v1523 = vshrl.u32 %v1522, 7
    %v1524 = vsub.s32 5, %v1523
    %v1525 = vrot.slane %v306, %v1524
    %s1527 = sor.u32 256, 2
    %1528 = vbcast.lane.b32.xlu0 %v1525, %s1527
    %v1529 = vpop.permute.xlu0 %1528
    %s1531 = sor.u32 256, 10
    %1532 = vbcast.lane.b32.xlu0 %v1525, %s1531
    %v1533 = vpop.permute.xlu0 %1532
    %v1534 = vlaneseq
    %v1535 = vshrl.u32 %v1534, 7
    %v1536 = vsub.s32 6, %v1535
    %v1537 = vrot.slane %v306, %v1536
    %s1539 = sor.u32 256, 2
    %1540 = vbcast.lane.b32.xlu0 %v1537, %s1539
    %v1541 = vpop.permute.xlu0 %1540
    %s1543 = sor.u32 256, 10
    %1544 = vbcast.lane.b32.xlu0 %v1537, %s1543
    %v1545 = vpop.permute.xlu0 %1544
    %v1546 = vlaneseq
    %v1547 = vshrl.u32 %v1546, 7
    %v1548 = vsub.s32 7, %v1547
    %v1549 = vrot.slane %v306, %v1548
    %s1551 = sor.u32 256, 2
    %1552 = vbcast.lane.b32.xlu0 %v1549, %s1551
    %v1553 = vpop.permute.xlu0 %1552
    %s1555 = sor.u32 256, 10
    %1556 = vbcast.lane.b32.xlu0 %v1549, %s1555
    %v1557 = vpop.permute.xlu0 %1556
    %v1558 = vlaneseq
    %v1559 = vshrl.u32 %v1558, 7
    %v1560 = vsub.s32 0, %v1559
    %v1561 = vrot.slane %v307, %v1560
    %s1563 = sor.u32 256, 2
    %1564 = vbcast.lane.b32.xlu0 %v1561, %s1563
    %v1565 = vpop.permute.xlu0 %1564
    %s1567 = sor.u32 256, 10
    %1568 = vbcast.lane.b32.xlu0 %v1561, %s1567
    %v1569 = vpop.permute.xlu0 %1568
    %v1570 = vlaneseq
    %v1571 = vshrl.u32 %v1570, 7
    %v1572 = vsub.s32 1, %v1571
    %v1573 = vrot.slane %v307, %v1572
    %s1575 = sor.u32 256, 2
    %1576 = vbcast.lane.b32.xlu0 %v1573, %s1575
    %v1577 = vpop.permute.xlu0 %1576
    %s1579 = sor.u32 256, 10
    %1580 = vbcast.lane.b32.xlu0 %v1573, %s1579
    %v1581 = vpop.permute.xlu0 %1580
    %v1582 = vlaneseq
    %v1583 = vshrl.u32 %v1582, 7
    %v1584 = vsub.s32 2, %v1583
    %v1585 = vrot.slane %v307, %v1584
    %s1587 = sor.u32 256, 2
    %1588 = vbcast.lane.b32.xlu0 %v1585, %s1587
    %v1589 = vpop.permute.xlu0 %1588
    %s1591 = sor.u32 256, 10
    %1592 = vbcast.lane.b32.xlu0 %v1585, %s1591
    %v1593 = vpop.permute.xlu0 %1592
    %v1594 = vlaneseq
    %v1595 = vshrl.u32 %v1594, 7
    %v1596 = vsub.s32 3, %v1595
    %v1597 = vrot.slane %v307, %v1596
    %s1599 = sor.u32 256, 2
    %1600 = vbcast.lane.b32.xlu0 %v1597, %s1599
    %v1601 = vpop.permute.xlu0 %1600
    %s1603 = sor.u32 256, 10
    %1604 = vbcast.lane.b32.xlu0 %v1597, %s1603
    %v1605 = vpop.permute.xlu0 %1604
    %v1606 = vlaneseq
    %v1607 = vshrl.u32 %v1606, 7
    %v1608 = vsub.s32 4, %v1607
    %v1609 = vrot.slane %v307, %v1608
    %s1611 = sor.u32 256, 2
    %1612 = vbcast.lane.b32.xlu0 %v1609, %s1611
    %v1613 = vpop.permute.xlu0 %1612
    %s1615 = sor.u32 256, 10
    %1616 = vbcast.lane.b32.xlu0 %v1609, %s1615
    %v1617 = vpop.permute.xlu0 %1616
    %v1618 = vlaneseq
    %v1619 = vshrl.u32 %v1618, 7
    %v1620 = vsub.s32 5, %v1619
    %v1621 = vrot.slane %v307, %v1620
    %s1623 = sor.u32 256, 2
    %1624 = vbcast.lane.b32.xlu0 %v1621, %s1623
    %v1625 = vpop.permute.xlu0 %1624
    %s1627 = sor.u32 256, 10
    %1628 = vbcast.lane.b32.xlu0 %v1621, %s1627
    %v1629 = vpop.permute.xlu0 %1628
    %v1630 = vlaneseq
    %v1631 = vshrl.u32 %v1630, 7
    %v1632 = vsub.s32 6, %v1631
    %v1633 = vrot.slane %v307, %v1632
    %s1635 = sor.u32 256, 2
    %1636 = vbcast.lane.b32.xlu0 %v1633, %s1635
    %v1637 = vpop.permute.xlu0 %1636
    %s1639 = sor.u32 256, 10
    %1640 = vbcast.lane.b32.xlu0 %v1633, %s1639
    %v1641 = vpop.permute.xlu0 %1640
    %v1642 = vlaneseq
    %v1643 = vshrl.u32 %v1642, 7
    %v1644 = vsub.s32 7, %v1643
    %v1645 = vrot.slane %v307, %v1644
    %s1647 = sor.u32 256, 2
    %1648 = vbcast.lane.b32.xlu0 %v1645, %s1647
    %v1649 = vpop.permute.xlu0 %1648
    %s1651 = sor.u32 256, 10
    %1652 = vbcast.lane.b32.xlu0 %v1645, %s1651
    %v1653 = vpop.permute.xlu0 %1652
    %v1654 = vlaneseq
    %v1655 = vshrl.u32 %v1654, 7
    %v1656 = vsub.s32 0, %v1655
    %v1657 = vrot.slane %v308, %v1656
    %s1659 = sor.u32 256, 2
    %1660 = vbcast.lane.b32.xlu0 %v1657, %s1659
    %v1661 = vpop.permute.xlu0 %1660
    %s1663 = sor.u32 256, 10
    %1664 = vbcast.lane.b32.xlu0 %v1657, %s1663
    %v1665 = vpop.permute.xlu0 %1664
    %v1666 = vlaneseq
    %v1667 = vshrl.u32 %v1666, 7
    %v1668 = vsub.s32 1, %v1667
    %v1669 = vrot.slane %v308, %v1668
    %s1671 = sor.u32 256, 2
    %1672 = vbcast.lane.b32.xlu0 %v1669, %s1671
    %v1673 = vpop.permute.xlu0 %1672
    %s1675 = sor.u32 256, 10
    %1676 = vbcast.lane.b32.xlu0 %v1669, %s1675
    %v1677 = vpop.permute.xlu0 %1676
    %v1678 = vlaneseq
    %v1679 = vshrl.u32 %v1678, 7
    %v1680 = vsub.s32 2, %v1679
    %v1681 = vrot.slane %v308, %v1680
    %s1683 = sor.u32 256, 2
    %1684 = vbcast.lane.b32.xlu0 %v1681, %s1683
    %v1685 = vpop.permute.xlu0 %1684
    %s1687 = sor.u32 256, 10
    %1688 = vbcast.lane.b32.xlu0 %v1681, %s1687
    %v1689 = vpop.permute.xlu0 %1688
    %v1690 = vlaneseq
    %v1691 = vshrl.u32 %v1690, 7
    %v1692 = vsub.s32 3, %v1691
    %v1693 = vrot.slane %v308, %v1692
    %s1695 = sor.u32 256, 2
    %1696 = vbcast.lane.b32.xlu0 %v1693, %s1695
    %v1697 = vpop.permute.xlu0 %1696
    %s1699 = sor.u32 256, 10
    %1700 = vbcast.lane.b32.xlu0 %v1693, %s1699
    %v1701 = vpop.permute.xlu0 %1700
    %v1702 = vlaneseq
    %v1703 = vshrl.u32 %v1702, 7
    %v1704 = vsub.s32 4, %v1703
    %v1705 = vrot.slane %v308, %v1704
    %s1707 = sor.u32 256, 2
    %1708 = vbcast.lane.b32.xlu0 %v1705, %s1707
    %v1709 = vpop.permute.xlu0 %1708
    %s1711 = sor.u32 256, 10
    %1712 = vbcast.lane.b32.xlu0 %v1705, %s1711
    %v1713 = vpop.permute.xlu0 %1712
    %v1714 = vlaneseq
    %v1715 = vshrl.u32 %v1714, 7
    %v1716 = vsub.s32 5, %v1715
    %v1717 = vrot.slane %v308, %v1716
    %s1719 = sor.u32 256, 2
    %1720 = vbcast.lane.b32.xlu0 %v1717, %s1719
    %v1721 = vpop.permute.xlu0 %1720
    %s1723 = sor.u32 256, 10
    %1724 = vbcast.lane.b32.xlu0 %v1717, %s1723
    %v1725 = vpop.permute.xlu0 %1724
    %v1726 = vlaneseq
    %v1727 = vshrl.u32 %v1726, 7
    %v1728 = vsub.s32 6, %v1727
    %v1729 = vrot.slane %v308, %v1728
    %s1731 = sor.u32 256, 2
    %1732 = vbcast.lane.b32.xlu0 %v1729, %s1731
    %v1733 = vpop.permute.xlu0 %1732
    %s1735 = sor.u32 256, 10
    %1736 = vbcast.lane.b32.xlu0 %v1729, %s1735
    %v1737 = vpop.permute.xlu0 %1736
    %v1738 = vlaneseq
    %v1739 = vshrl.u32 %v1738, 7
    %v1740 = vsub.s32 7, %v1739
    %v1741 = vrot.slane %v308, %v1740
    %s1743 = sor.u32 256, 2
    %1744 = vbcast.lane.b32.xlu0 %v1741, %s1743
    %v1745 = vpop.permute.xlu0 %1744
    %s1747 = sor.u32 256, 10
    %1748 = vbcast.lane.b32.xlu0 %v1741, %s1747
    %v1749 = vpop.permute.xlu0 %1748
    %v1750 = vlaneseq
    %v1751 = vshrl.u32 %v1750, 7
    %v1752 = vsub.s32 0, %v1751
    %v1753 = vrot.slane %v309, %v1752
    %s1755 = sor.u32 256, 2
    %1756 = vbcast.lane.b32.xlu0 %v1753, %s1755
    %v1757 = vpop.permute.xlu0 %1756
    %s1759 = sor.u32 256, 10
    %1760 = vbcast.lane.b32.xlu0 %v1753, %s1759
    %v1761 = vpop.permute.xlu0 %1760
    %v1762 = vlaneseq
    %v1763 = vshrl.u32 %v1762, 7
    %v1764 = vsub.s32 1, %v1763
    %v1765 = vrot.slane %v309, %v1764
    %s1767 = sor.u32 256, 2
    %1768 = vbcast.lane.b32.xlu0 %v1765, %s1767
    %v1769 = vpop.permute.xlu0 %1768
    %s1771 = sor.u32 256, 10
    %1772 = vbcast.lane.b32.xlu0 %v1765, %s1771
    %v1773 = vpop.permute.xlu0 %1772
    %v1774 = vlaneseq
    %v1775 = vshrl.u32 %v1774, 7
    %v1776 = vsub.s32 2, %v1775
    %v1777 = vrot.slane %v309, %v1776
    %s1779 = sor.u32 256, 2
    %1780 = vbcast.lane.b32.xlu0 %v1777, %s1779
    %v1781 = vpop.permute.xlu0 %1780
    %s1783 = sor.u32 256, 10
    %1784 = vbcast.lane.b32.xlu0 %v1777, %s1783
    %v1785 = vpop.permute.xlu0 %1784
    %v1786 = vlaneseq
    %v1787 = vshrl.u32 %v1786, 7
    %v1788 = vsub.s32 3, %v1787
    %v1789 = vrot.slane %v309, %v1788
    %s1791 = sor.u32 256, 2
    %1792 = vbcast.lane.b32.xlu0 %v1789, %s1791
    %v1793 = vpop.permute.xlu0 %1792
    %s1795 = sor.u32 256, 10
    %1796 = vbcast.lane.b32.xlu0 %v1789, %s1795
    %v1797 = vpop.permute.xlu0 %1796
    %v1798 = vlaneseq
    %v1799 = vshrl.u32 %v1798, 7
    %v1800 = vsub.s32 4, %v1799
    %v1801 = vrot.slane %v309, %v1800
    %s1803 = sor.u32 256, 2
    %1804 = vbcast.lane.b32.xlu0 %v1801, %s1803
    %v1805 = vpop.permute.xlu0 %1804
    %s1807 = sor.u32 256, 10
    %1808 = vbcast.lane.b32.xlu0 %v1801, %s1807
    %v1809 = vpop.permute.xlu0 %1808
    %v1810 = vlaneseq
    %v1811 = vshrl.u32 %v1810, 7
    %v1812 = vsub.s32 5, %v1811
    %v1813 = vrot.slane %v309, %v1812
    %s1815 = sor.u32 256, 2
    %1816 = vbcast.lane.b32.xlu0 %v1813, %s1815
    %v1817 = vpop.permute.xlu0 %1816
    %s1819 = sor.u32 256, 10
    %1820 = vbcast.lane.b32.xlu0 %v1813, %s1819
    %v1821 = vpop.permute.xlu0 %1820
    %v1822 = vlaneseq
    %v1823 = vshrl.u32 %v1822, 7
    %v1824 = vsub.s32 6, %v1823
    %v1825 = vrot.slane %v309, %v1824
    %s1827 = sor.u32 256, 2
    %1828 = vbcast.lane.b32.xlu0 %v1825, %s1827
    %v1829 = vpop.permute.xlu0 %1828
    %s1831 = sor.u32 256, 10
    %1832 = vbcast.lane.b32.xlu0 %v1825, %s1831
    %v1833 = vpop.permute.xlu0 %1832
    %v1834 = vlaneseq
    %v1835 = vshrl.u32 %v1834, 7
    %v1836 = vsub.s32 7, %v1835
    %v1837 = vrot.slane %v309, %v1836
    %s1839 = sor.u32 256, 2
    %1840 = vbcast.lane.b32.xlu0 %v1837, %s1839
    %v1841 = vpop.permute.xlu0 %1840
    %s1843 = sor.u32 256, 10
    %1844 = vbcast.lane.b32.xlu0 %v1837, %s1843
    %v1845 = vpop.permute.xlu0 %1844
    %vm1846 = vcmask 7168
    %v1847 = vsel %vm1846, %v317, %v1085
    %v1848 = vsel %vm1846, %v321, %v1089
    %v1849 = vsel %vm1846, %v329, %v1097
    %v1850 = vsel %vm1846, %v333, %v1101
    %v1851 = vsel %vm1846, %v341, %v1109
    %v1852 = vsel %vm1846, %v345, %v1113
    %v1853 = vsel %vm1846, %v353, %v1121
    %v1854 = vsel %vm1846, %v357, %v1125
    %v1855 = vsel %vm1846, %v365, %v1133
    %v1856 = vsel %vm1846, %v369, %v1137
    %v1857 = vsel %vm1846, %v377, %v1145
    %v1858 = vsel %vm1846, %v381, %v1149
    %v1859 = vsel %vm1846, %v389, %v1157
    %v1860 = vsel %vm1846, %v393, %v1161
    %v1861 = vsel %vm1846, %v401, %v1169
    %v1862 = vsel %vm1846, %v405, %v1173
    %v1863 = vsel %vm1846, %v413, %v1181
    %v1864 = vsel %vm1846, %v417, %v1185
    %v1865 = vsel %vm1846, %v425, %v1193
    %v1866 = vsel %vm1846, %v429, %v1197
    %v1867 = vsel %vm1846, %v437, %v1205
    %v1868 = vsel %vm1846, %v441, %v1209
    %v1869 = vsel %vm1846, %v449, %v1217
    %v1870 = vsel %vm1846, %v453, %v1221
    %v1871 = vsel %vm1846, %v461, %v1229
    %v1872 = vsel %vm1846, %v465, %v1233
    %v1873 = vsel %vm1846, %v473, %v1241
    %v1874 = vsel %vm1846, %v477, %v1245
    %v1875 = vsel %vm1846, %v485, %v1253
    %v1876 = vsel %vm1846, %v489, %v1257
    %v1877 = vsel %vm1846, %v497, %v1265
    %v1878 = vsel %vm1846, %v501, %v1269
    %v1879 = vsel %vm1846, %v509, %v1277
    %v1880 = vsel %vm1846, %v513, %v1281
    %v1881 = vsel %vm1846, %v521, %v1289
    %v1882 = vsel %vm1846, %v525, %v1293
    %v1883 = vsel %vm1846, %v533, %v1301
    %v1884 = vsel %vm1846, %v537, %v1305
    %v1885 = vsel %vm1846, %v545, %v1313
    %v1886 = vsel %vm1846, %v549, %v1317
    %v1887 = vsel %vm1846, %v557, %v1325
    %v1888 = vsel %vm1846, %v561, %v1329
    %v1889 = vsel %vm1846, %v569, %v1337
    %v1890 = vsel %vm1846, %v573, %v1341
    %v1891 = vsel %vm1846, %v581, %v1349
    %v1892 = vsel %vm1846, %v585, %v1353
    %v1893 = vsel %vm1846, %v593, %v1361
    %v1894 = vsel %vm1846, %v597, %v1365
    %v1895 = vsel %vm1846, %v605, %v1373
    %v1896 = vsel %vm1846, %v609, %v1377
    %v1897 = vsel %vm1846, %v617, %v1385
    %v1898 = vsel %vm1846, %v621, %v1389
    %v1899 = vsel %vm1846, %v629, %v1397
    %v1900 = vsel %vm1846, %v633, %v1401
    %v1901 = vsel %vm1846, %v641, %v1409
    %v1902 = vsel %vm1846, %v645, %v1413
    %v1903 = vsel %vm1846, %v653, %v1421
    %v1904 = vsel %vm1846, %v657, %v1425
    %v1905 = vsel %vm1846, %v665, %v1433
    %v1906 = vsel %vm1846, %v669, %v1437
    %v1907 = vsel %vm1846, %v677, %v1445
    %v1908 = vsel %vm1846, %v681, %v1449
    %v1909 = vsel %vm1846, %v689, %v1457
    %v1910 = vsel %vm1846, %v693, %v1461
    %v1911 = vsel %vm1846, %v701, %v1469
    %v1912 = vsel %vm1846, %v705, %v1473
    %v1913 = vsel %vm1846, %v713, %v1481
    %v1914 = vsel %vm1846, %v717, %v1485
    %v1915 = vsel %vm1846, %v725, %v1493
    %v1916 = vsel %vm1846, %v729, %v1497
    %v1917 = vsel %vm1846, %v737, %v1505
    %v1918 = vsel %vm1846, %v741, %v1509
    %v1919 = vsel %vm1846, %v749, %v1517
    %v1920 = vsel %vm1846, %v753, %v1521
    %v1921 = vsel %vm1846, %v761, %v1529
    %v1922 = vsel %vm1846, %v765, %v1533
    %v1923 = vsel %vm1846, %v773, %v1541
    %v1924 = vsel %vm1846, %v777, %v1545
    %v1925 = vsel %vm1846, %v785, %v1553
    %v1926 = vsel %vm1846, %v789, %v1557
    %v1927 = vsel %vm1846, %v797, %v1565
    %v1928 = vsel %vm1846, %v801, %v1569
    %v1929 = vsel %vm1846, %v809, %v1577
    %v1930 = vsel %vm1846, %v813, %v1581
    %v1931 = vsel %vm1846, %v821, %v1589
    %v1932 = vsel %vm1846, %v825, %v1593
    %v1933 = vsel %vm1846, %v833, %v1601
    %v1934 = vsel %vm1846, %v837, %v1605
    %v1935 = vsel %vm1846, %v845, %v1613
    %v1936 = vsel %vm1846, %v849, %v1617
    %v1937 = vsel %vm1846, %v857, %v1625
    %v1938 = vsel %vm1846, %v861, %v1629
    %v1939 = vsel %vm1846, %v869, %v1637
    %v1940 = vsel %vm1846, %v873, %v1641
    %v1941 = vsel %vm1846, %v881, %v1649
    %v1942 = vsel %vm1846, %v885, %v1653
    %v1943 = vsel %vm1846, %v893, %v1661
    %v1944 = vsel %vm1846, %v897, %v1665
    %v1945 = vsel %vm1846, %v905, %v1673
    %v1946 = vsel %vm1846, %v909, %v1677
    %v1947 = vsel %vm1846, %v917, %v1685
    %v1948 = vsel %vm1846, %v921, %v1689
    %v1949 = vsel %vm1846, %v929, %v1697
    %v1950 = vsel %vm1846, %v933, %v1701
    %v1951 = vsel %vm1846, %v941, %v1709
    %v1952 = vsel %vm1846, %v945, %v1713
    %v1953 = vsel %vm1846, %v953, %v1721
    %v1954 = vsel %vm1846, %v957, %v1725
    %v1955 = vsel %vm1846, %v965, %v1733
    %v1956 = vsel %vm1846, %v969, %v1737
    %v1957 = vsel %vm1846, %v977, %v1745
    %v1958 = vsel %vm1846, %v981, %v1749
    %v1959 = vsel %vm1846, %v989, %v1757
    %v1960 = vsel %vm1846, %v993, %v1761
    %v1961 = vsel %vm1846, %v1001, %v1769
    %v1962 = vsel %vm1846, %v1005, %v1773
    %v1963 = vsel %vm1846, %v1013, %v1781
    %v1964 = vsel %vm1846, %v1017, %v1785
    %v1965 = vsel %vm1846, %v1025, %v1793
    %v1966 = vsel %vm1846, %v1029, %v1797
    %v1967 = vsel %vm1846, %v1037, %v1805
    %v1968 = vsel %vm1846, %v1041, %v1809
    %v1969 = vsel %vm1846, %v1049, %v1817
    %v1970 = vsel %vm1846, %v1053, %v1821
    %v1971 = vsel %vm1846, %v1061, %v1829
    %v1972 = vsel %vm1846, %v1065, %v1833
    %v1973 = vsel %vm1846, %v1073, %v1841
    %v1974 = vsel %vm1846, %v1077, %v1845
    %v1975 = vld [vmem:[#allocation2 + $0x2] sm:$0xff]
    %v1976 = vld [vmem:[#allocation2 + $0xa] sm:$0xff]
    %v1977 = vld [vmem:[#allocation2 + $0x1a] sm:$0xff]
    %v1978 = vld [vmem:[#allocation2 + $0x22] sm:$0xff]
    %v1979 = vld [vmem:[#allocation2 + $0x32] sm:$0xff]
    %v1980 = vld [vmem:[#allocation2 + $0x3a] sm:$0xff]
    %v1981 = vld [vmem:[#allocation2 + $0x4a] sm:$0xff]
    %v1982 = vld [vmem:[#allocation2 + $0x52] sm:$0xff]
    %v1983 = vmul.f32 %v1975, 0.1875
    %v1984 = vmul.f32 %v1976, 0.1875
    %v1985 = vmul.f32 %v1977, 0.1875
    %v1986 = vmul.f32 %v1978, 0.1875
    %v1987 = vmul.f32 %v1979, 0.1875
    %v1988 = vmul.f32 %v1980, 0.1875
    %v1989 = vmul.f32 %v1981, 0.1875
    %v1990 = vmul.f32 %v1982, 0.1875
    %v1991 = vmul.f32 %v1975, 0.0625
    %v1992 = vmul.f32 %v1976, 0.0625
    %v1993 = vmul.f32 %v1977, 0.0625
    %v1994 = vmul.f32 %v1978, 0.0625
    %v1995 = vmul.f32 %v1979, 0.0625
    %v1996 = vmul.f32 %v1980, 0.0625
    %v1997 = vmul.f32 %v1981, 0.0625
    %v1998 = vmul.f32 %v1982, 0.0625
    %2007 = vrot.lane.b32.xlu0 %v1991, 1
    %v2008 = vpop.permute.xlu0 %2007
    %2009 = vrot.lane.b32.xlu0 %v1992, 1
    %v2010 = vpop.permute.xlu0 %2009
    %2011 = vrot.lane.b32.xlu0 %v1993, 1
    %v2012 = vpop.permute.xlu0 %2011
    %2013 = vrot.lane.b32.xlu0 %v1994, 1
    %v2014 = vpop.permute.xlu0 %2013
    %2015 = vrot.lane.b32.xlu0 %v1995, 1
    %v2016 = vpop.permute.xlu0 %2015
    %2017 = vrot.lane.b32.xlu0 %v1996, 1
    %v2018 = vpop.permute.xlu0 %2017
    %2019 = vrot.lane.b32.xlu0 %v1997, 1
    %v2020 = vpop.permute.xlu0 %2019
    %2021 = vrot.lane.b32.xlu0 %v1998, 1
    %v2022 = vpop.permute.xlu0 %2021
    %v2031 = vadd.f32 %v1983, %v2008
    %v2032 = vadd.f32 %v1984, %v2010
    %v2033 = vadd.f32 %v1985, %v2012
    %v2034 = vadd.f32 %v1986, %v2014
    %v2035 = vadd.f32 %v1987, %v2016
    %v2036 = vadd.f32 %v1988, %v2018
    %v2037 = vadd.f32 %v1989, %v2020
    %v2038 = vadd.f32 %v1990, %v2022
    %v2039 = vadd.f32 %v2031, %v94
    %v2040 = vadd.f32 %v2032, %v95
    %v2041 = vadd.f32 %v2033, %v96
    %v2042 = vadd.f32 %v2034, %v97
    %v2043 = vadd.f32 %v2035, %v98
    %v2044 = vadd.f32 %v2036, %v99
    %v2045 = vadd.f32 %v2037, %v100
    %v2046 = vadd.f32 %v2038, %v101
    %v2047 = vadd.f32 %v2039, %v119
    %v2048 = vadd.f32 %v2040, %v121
    %v2049 = vadd.f32 %v2041, %v123
    %v2050 = vadd.f32 %v2042, %v125
    %v2051 = vadd.f32 %v2043, %v127
    %v2052 = vadd.f32 %v2044, %v129
    %v2053 = vadd.f32 %v2045, %v131
    %v2054 = vadd.f32 %v2046, %v133
    %2063 = vrot.lane.b32.xlu0 %v1983, 1
    %v2064 = vpop.permute.xlu0 %2063
    %2065 = vrot.lane.b32.xlu0 %v1984, 1
    %v2066 = vpop.permute.xlu0 %2065
    %2067 = vrot.lane.b32.xlu0 %v1985, 1
    %v2068 = vpop.permute.xlu0 %2067
    %2069 = vrot.lane.b32.xlu0 %v1986, 1
    %v2070 = vpop.permute.xlu0 %2069
    %2071 = vrot.lane.b32.xlu0 %v1987, 1
    %v2072 = vpop.permute.xlu0 %2071
    %2073 = vrot.lane.b32.xlu0 %v1988, 1
    %v2074 = vpop.permute.xlu0 %2073
    %2075 = vrot.lane.b32.xlu0 %v1989, 1
    %v2076 = vpop.permute.xlu0 %2075
    %2077 = vrot.lane.b32.xlu0 %v1990, 1
    %v2078 = vpop.permute.xlu0 %2077
    %v2087 = vadd.f32 %v1991, %v2064
    %v2088 = vadd.f32 %v1992, %v2066
    %v2089 = vadd.f32 %v1993, %v2068
    %v2090 = vadd.f32 %v1994, %v2070
    %v2091 = vadd.f32 %v1995, %v2072
    %v2092 = vadd.f32 %v1996, %v2074
    %v2093 = vadd.f32 %v1997, %v2076
    %v2094 = vadd.f32 %v1998, %v2078
    %v2095 = vadd.f32 %v2087, %v102
    %v2096 = vadd.f32 %v2088, %v103
    %v2097 = vadd.f32 %v2089, %v104
    %v2098 = vadd.f32 %v2090, %v105
    %v2099 = vadd.f32 %v2091, %v106
    %v2100 = vadd.f32 %v2092, %v107
    %v2101 = vadd.f32 %v2093, %v108
    %v2102 = vadd.f32 %v2094, %v109
    %v2103 = vadd.f32 %v2095, %v231
    %v2104 = vadd.f32 %v2096, %v233
    %v2105 = vadd.f32 %v2097, %v235
    %v2106 = vadd.f32 %v2098, %v237
    %v2107 = vadd.f32 %v2099, %v239
    %v2108 = vadd.f32 %v2100, %v241
    %v2109 = vadd.f32 %v2101, %v243
    %v2110 = vadd.f32 %v2102, %v245
    %v2111 = vlaneseq
    %v2112 = vshrl.u32 %v2111, 7
    %v2113 = vsub.s32 0, %v2112
    %v2114 = vrot.slane %v2047, %v2113
    %s2116 = sor.u32 256, 1
    %2117 = vbcast.lane.b32.xlu0 %v2114, %s2116
    %v2118 = vpop.permute.xlu0 %2117
    %s2120 = sor.u32 256, 9
    %2121 = vbcast.lane.b32.xlu0 %v2114, %s2120
    %v2122 = vpop.permute.xlu0 %2121
    %v2123 = vlaneseq
    %v2124 = vshrl.u32 %v2123, 7
    %v2125 = vsub.s32 1, %v2124
    %v2126 = vrot.slane %v2047, %v2125
    %s2128 = sor.u32 256, 1
    %2129 = vbcast.lane.b32.xlu0 %v2126, %s2128
    %v2130 = vpop.permute.xlu0 %2129
    %s2132 = sor.u32 256, 9
    %2133 = vbcast.lane.b32.xlu0 %v2126, %s2132
    %v2134 = vpop.permute.xlu0 %2133
    %v2135 = vlaneseq
    %v2136 = vshrl.u32 %v2135, 7
    %v2137 = vsub.s32 2, %v2136
    %v2138 = vrot.slane %v2047, %v2137
    %s2140 = sor.u32 256, 1
    %2141 = vbcast.lane.b32.xlu0 %v2138, %s2140
    %v2142 = vpop.permute.xlu0 %2141
    %s2144 = sor.u32 256, 9
    %2145 = vbcast.lane.b32.xlu0 %v2138, %s2144
    %v2146 = vpop.permute.xlu0 %2145
    %v2147 = vlaneseq
    %v2148 = vshrl.u32 %v2147, 7
    %v2149 = vsub.s32 3, %v2148
    %v2150 = vrot.slane %v2047, %v2149
    %s2152 = sor.u32 256, 1
    %2153 = vbcast.lane.b32.xlu0 %v2150, %s2152
    %v2154 = vpop.permute.xlu0 %2153
    %s2156 = sor.u32 256, 9
    %2157 = vbcast.lane.b32.xlu0 %v2150, %s2156
    %v2158 = vpop.permute.xlu0 %2157
    %v2159 = vlaneseq
    %v2160 = vshrl.u32 %v2159, 7
    %v2161 = vsub.s32 4, %v2160
    %v2162 = vrot.slane %v2047, %v2161
    %s2164 = sor.u32 256, 1
    %2165 = vbcast.lane.b32.xlu0 %v2162, %s2164
    %v2166 = vpop.permute.xlu0 %2165
    %s2168 = sor.u32 256, 9
    %2169 = vbcast.lane.b32.xlu0 %v2162, %s2168
    %v2170 = vpop.permute.xlu0 %2169
    %v2171 = vlaneseq
    %v2172 = vshrl.u32 %v2171, 7
    %v2173 = vsub.s32 5, %v2172
    %v2174 = vrot.slane %v2047, %v2173
    %s2176 = sor.u32 256, 1
    %2177 = vbcast.lane.b32.xlu0 %v2174, %s2176
    %v2178 = vpop.permute.xlu0 %2177
    %s2180 = sor.u32 256, 9
    %2181 = vbcast.lane.b32.xlu0 %v2174, %s2180
    %v2182 = vpop.permute.xlu0 %2181
    %v2183 = vlaneseq
    %v2184 = vshrl.u32 %v2183, 7
    %v2185 = vsub.s32 6, %v2184
    %v2186 = vrot.slane %v2047, %v2185
    %s2188 = sor.u32 256, 1
    %2189 = vbcast.lane.b32.xlu0 %v2186, %s2188
    %v2190 = vpop.permute.xlu0 %2189
    %s2192 = sor.u32 256, 9
    %2193 = vbcast.lane.b32.xlu0 %v2186, %s2192
    %v2194 = vpop.permute.xlu0 %2193
    %v2195 = vlaneseq
    %v2196 = vshrl.u32 %v2195, 7
    %v2197 = vsub.s32 7, %v2196
    %v2198 = vrot.slane %v2047, %v2197
    %s2200 = sor.u32 256, 1
    %2201 = vbcast.lane.b32.xlu0 %v2198, %s2200
    %v2202 = vpop.permute.xlu0 %2201
    %s2204 = sor.u32 256, 9
    %2205 = vbcast.lane.b32.xlu0 %v2198, %s2204
    %v2206 = vpop.permute.xlu0 %2205
    %v2207 = vlaneseq
    %v2208 = vshrl.u32 %v2207, 7
    %v2209 = vsub.s32 0, %v2208
    %v2210 = vrot.slane %v2048, %v2209
    %s2212 = sor.u32 256, 1
    %2213 = vbcast.lane.b32.xlu0 %v2210, %s2212
    %v2214 = vpop.permute.xlu0 %2213
    %s2216 = sor.u32 256, 9
    %2217 = vbcast.lane.b32.xlu0 %v2210, %s2216
    %v2218 = vpop.permute.xlu0 %2217
    %v2219 = vlaneseq
    %v2220 = vshrl.u32 %v2219, 7
    %v2221 = vsub.s32 1, %v2220
    %v2222 = vrot.slane %v2048, %v2221
    %s2224 = sor.u32 256, 1
    %2225 = vbcast.lane.b32.xlu0 %v2222, %s2224
    %v2226 = vpop.permute.xlu0 %2225
    %s2228 = sor.u32 256, 9
    %2229 = vbcast.lane.b32.xlu0 %v2222, %s2228
    %v2230 = vpop.permute.xlu0 %2229
    %v2231 = vlaneseq
    %v2232 = vshrl.u32 %v2231, 7
    %v2233 = vsub.s32 2, %v2232
    %v2234 = vrot.slane %v2048, %v2233
    %s2236 = sor.u32 256, 1
    %2237 = vbcast.lane.b32.xlu0 %v2234, %s2236
    %v2238 = vpop.permute.xlu0 %2237
    %s2240 = sor.u32 256, 9
    %2241 = vbcast.lane.b32.xlu0 %v2234, %s2240
    %v2242 = vpop.permute.xlu0 %2241
    %v2243 = vlaneseq
    %v2244 = vshrl.u32 %v2243, 7
    %v2245 = vsub.s32 3, %v2244
    %v2246 = vrot.slane %v2048, %v2245
    %s2248 = sor.u32 256, 1
    %2249 = vbcast.lane.b32.xlu0 %v2246, %s2248
    %v2250 = vpop.permute.xlu0 %2249
    %s2252 = sor.u32 256, 9
    %2253 = vbcast.lane.b32.xlu0 %v2246, %s2252
    %v2254 = vpop.permute.xlu0 %2253
    %v2255 = vlaneseq
    %v2256 = vshrl.u32 %v2255, 7
    %v2257 = vsub.s32 4, %v2256
    %v2258 = vrot.slane %v2048, %v2257
    %s2260 = sor.u32 256, 1
    %2261 = vbcast.lane.b32.xlu0 %v2258, %s2260
    %v2262 = vpop.permute.xlu0 %2261
    %s2264 = sor.u32 256, 9
    %2265 = vbcast.lane.b32.xlu0 %v2258, %s2264
    %v2266 = vpop.permute.xlu0 %2265
    %v2267 = vlaneseq
    %v2268 = vshrl.u32 %v2267, 7
    %v2269 = vsub.s32 5, %v2268
    %v2270 = vrot.slane %v2048, %v2269
    %s2272 = sor.u32 256, 1
    %2273 = vbcast.lane.b32.xlu0 %v2270, %s2272
    %v2274 = vpop.permute.xlu0 %2273
    %s2276 = sor.u32 256, 9
    %2277 = vbcast.lane.b32.xlu0 %v2270, %s2276
    %v2278 = vpop.permute.xlu0 %2277
    %v2279 = vlaneseq
    %v2280 = vshrl.u32 %v2279, 7
    %v2281 = vsub.s32 6, %v2280
    %v2282 = vrot.slane %v2048, %v2281
    %s2284 = sor.u32 256, 1
    %2285 = vbcast.lane.b32.xlu0 %v2282, %s2284
    %v2286 = vpop.permute.xlu0 %2285
    %s2288 = sor.u32 256, 9
    %2289 = vbcast.lane.b32.xlu0 %v2282, %s2288
    %v2290 = vpop.permute.xlu0 %2289
    %v2291 = vlaneseq
    %v2292 = vshrl.u32 %v2291, 7
    %v2293 = vsub.s32 7, %v2292
    %v2294 = vrot.slane %v2048, %v2293
    %s2296 = sor.u32 256, 1
    %2297 = vbcast.lane.b32.xlu0 %v2294, %s2296
    %v2298 = vpop.permute.xlu0 %2297
    %s2300 = sor.u32 256, 9
    %2301 = vbcast.lane.b32.xlu0 %v2294, %s2300
    %v2302 = vpop.permute.xlu0 %2301
    %v2303 = vlaneseq
    %v2304 = vshrl.u32 %v2303, 7
    %v2305 = vsub.s32 0, %v2304
    %v2306 = vrot.slane %v2049, %v2305
    %s2308 = sor.u32 256, 1
    %2309 = vbcast.lane.b32.xlu0 %v2306, %s2308
    %v2310 = vpop.permute.xlu0 %2309
    %s2312 = sor.u32 256, 9
    %2313 = vbcast.lane.b32.xlu0 %v2306, %s2312
    %v2314 = vpop.permute.xlu0 %2313
    %v2315 = vlaneseq
    %v2316 = vshrl.u32 %v2315, 7
    %v2317 = vsub.s32 1, %v2316
    %v2318 = vrot.slane %v2049, %v2317
    %s2320 = sor.u32 256, 1
    %2321 = vbcast.lane.b32.xlu0 %v2318, %s2320
    %v2322 = vpop.permute.xlu0 %2321
    %s2324 = sor.u32 256, 9
    %2325 = vbcast.lane.b32.xlu0 %v2318, %s2324
    %v2326 = vpop.permute.xlu0 %2325
    %v2327 = vlaneseq
    %v2328 = vshrl.u32 %v2327, 7
    %v2329 = vsub.s32 2, %v2328
    %v2330 = vrot.slane %v2049, %v2329
    %s2332 = sor.u32 256, 1
    %2333 = vbcast.lane.b32.xlu0 %v2330, %s2332
    %v2334 = vpop.permute.xlu0 %2333
    %s2336 = sor.u32 256, 9
    %2337 = vbcast.lane.b32.xlu0 %v2330, %s2336
    %v2338 = vpop.permute.xlu0 %2337
    %v2339 = vlaneseq
    %v2340 = vshrl.u32 %v2339, 7
    %v2341 = vsub.s32 3, %v2340
    %v2342 = vrot.slane %v2049, %v2341
    %s2344 = sor.u32 256, 1
    %2345 = vbcast.lane.b32.xlu0 %v2342, %s2344
    %v2346 = vpop.permute.xlu0 %2345
    %s2348 = sor.u32 256, 9
    %2349 = vbcast.lane.b32.xlu0 %v2342, %s2348
    %v2350 = vpop.permute.xlu0 %2349
    %v2351 = vlaneseq
    %v2352 = vshrl.u32 %v2351, 7
    %v2353 = vsub.s32 4, %v2352
    %v2354 = vrot.slane %v2049, %v2353
    %s2356 = sor.u32 256, 1
    %2357 = vbcast.lane.b32.xlu0 %v2354, %s2356
    %v2358 = vpop.permute.xlu0 %2357
    %s2360 = sor.u32 256, 9
    %2361 = vbcast.lane.b32.xlu0 %v2354, %s2360
    %v2362 = vpop.permute.xlu0 %2361
    %v2363 = vlaneseq
    %v2364 = vshrl.u32 %v2363, 7
    %v2365 = vsub.s32 5, %v2364
    %v2366 = vrot.slane %v2049, %v2365
    %s2368 = sor.u32 256, 1
    %2369 = vbcast.lane.b32.xlu0 %v2366, %s2368
    %v2370 = vpop.permute.xlu0 %2369
    %s2372 = sor.u32 256, 9
    %2373 = vbcast.lane.b32.xlu0 %v2366, %s2372
    %v2374 = vpop.permute.xlu0 %2373
    %v2375 = vlaneseq
    %v2376 = vshrl.u32 %v2375, 7
    %v2377 = vsub.s32 6, %v2376
    %v2378 = vrot.slane %v2049, %v2377
    %s2380 = sor.u32 256, 1
    %2381 = vbcast.lane.b32.xlu0 %v2378, %s2380
    %v2382 = vpop.permute.xlu0 %2381
    %s2384 = sor.u32 256, 9
    %2385 = vbcast.lane.b32.xlu0 %v2378, %s2384
    %v2386 = vpop.permute.xlu0 %2385
    %v2387 = vlaneseq
    %v2388 = vshrl.u32 %v2387, 7
    %v2389 = vsub.s32 7, %v2388
    %v2390 = vrot.slane %v2049, %v2389
    %s2392 = sor.u32 256, 1
    %2393 = vbcast.lane.b32.xlu0 %v2390, %s2392
    %v2394 = vpop.permute.xlu0 %2393
    %s2396 = sor.u32 256, 9
    %2397 = vbcast.lane.b32.xlu0 %v2390, %s2396
    %v2398 = vpop.permute.xlu0 %2397
    %v2399 = vlaneseq
    %v2400 = vshrl.u32 %v2399, 7
    %v2401 = vsub.s32 0, %v2400
    %v2402 = vrot.slane %v2050, %v2401
    %s2404 = sor.u32 256, 1
    %2405 = vbcast.lane.b32.xlu0 %v2402, %s2404
    %v2406 = vpop.permute.xlu0 %2405
    %s2408 = sor.u32 256, 9
    %2409 = vbcast.lane.b32.xlu0 %v2402, %s2408
    %v2410 = vpop.permute.xlu0 %2409
    %v2411 = vlaneseq
    %v2412 = vshrl.u32 %v2411, 7
    %v2413 = vsub.s32 1, %v2412
    %v2414 = vrot.slane %v2050, %v2413
    %s2416 = sor.u32 256, 1
    %2417 = vbcast.lane.b32.xlu0 %v2414, %s2416
    %v2418 = vpop.permute.xlu0 %2417
    %s2420 = sor.u32 256, 9
    %2421 = vbcast.lane.b32.xlu0 %v2414, %s2420
    %v2422 = vpop.permute.xlu0 %2421
    %v2423 = vlaneseq
    %v2424 = vshrl.u32 %v2423, 7
    %v2425 = vsub.s32 2, %v2424
    %v2426 = vrot.slane %v2050, %v2425
    %s2428 = sor.u32 256, 1
    %2429 = vbcast.lane.b32.xlu0 %v2426, %s2428
    %v2430 = vpop.permute.xlu0 %2429
    %s2432 = sor.u32 256, 9
    %2433 = vbcast.lane.b32.xlu0 %v2426, %s2432
    %v2434 = vpop.permute.xlu0 %2433
    %v2435 = vlaneseq
    %v2436 = vshrl.u32 %v2435, 7
    %v2437 = vsub.s32 3, %v2436
    %v2438 = vrot.slane %v2050, %v2437
    %s2440 = sor.u32 256, 1
    %2441 = vbcast.lane.b32.xlu0 %v2438, %s2440
    %v2442 = vpop.permute.xlu0 %2441
    %s2444 = sor.u32 256, 9
    %2445 = vbcast.lane.b32.xlu0 %v2438, %s2444
    %v2446 = vpop.permute.xlu0 %2445
    %v2447 = vlaneseq
    %v2448 = vshrl.u32 %v2447, 7
    %v2449 = vsub.s32 4, %v2448
    %v2450 = vrot.slane %v2050, %v2449
    %s2452 = sor.u32 256, 1
    %2453 = vbcast.lane.b32.xlu0 %v2450, %s2452
    %v2454 = vpop.permute.xlu0 %2453
    %s2456 = sor.u32 256, 9
    %2457 = vbcast.lane.b32.xlu0 %v2450, %s2456
    %v2458 = vpop.permute.xlu0 %2457
    %v2459 = vlaneseq
    %v2460 = vshrl.u32 %v2459, 7
    %v2461 = vsub.s32 5, %v2460
    %v2462 = vrot.slane %v2050, %v2461
    %s2464 = sor.u32 256, 1
    %2465 = vbcast.lane.b32.xlu0 %v2462, %s2464
    %v2466 = vpop.permute.xlu0 %2465
    %s2468 = sor.u32 256, 9
    %2469 = vbcast.lane.b32.xlu0 %v2462, %s2468
    %v2470 = vpop.permute.xlu0 %2469
    %v2471 = vlaneseq
    %v2472 = vshrl.u32 %v2471, 7
    %v2473 = vsub.s32 6, %v2472
    %v2474 = vrot.slane %v2050, %v2473
    %s2476 = sor.u32 256, 1
    %2477 = vbcast.lane.b32.xlu0 %v2474, %s2476
    %v2478 = vpop.permute.xlu0 %2477
    %s2480 = sor.u32 256, 9
    %2481 = vbcast.lane.b32.xlu0 %v2474, %s2480
    %v2482 = vpop.permute.xlu0 %2481
    %v2483 = vlaneseq
    %v2484 = vshrl.u32 %v2483, 7
    %v2485 = vsub.s32 7, %v2484
    %v2486 = vrot.slane %v2050, %v2485
    %s2488 = sor.u32 256, 1
    %2489 = vbcast.lane.b32.xlu0 %v2486, %s2488
    %v2490 = vpop.permute.xlu0 %2489
    %s2492 = sor.u32 256, 9
    %2493 = vbcast.lane.b32.xlu0 %v2486, %s2492
    %v2494 = vpop.permute.xlu0 %2493
    %v2495 = vlaneseq
    %v2496 = vshrl.u32 %v2495, 7
    %v2497 = vsub.s32 0, %v2496
    %v2498 = vrot.slane %v2051, %v2497
    %s2500 = sor.u32 256, 1
    %2501 = vbcast.lane.b32.xlu0 %v2498, %s2500
    %v2502 = vpop.permute.xlu0 %2501
    %s2504 = sor.u32 256, 9
    %2505 = vbcast.lane.b32.xlu0 %v2498, %s2504
    %v2506 = vpop.permute.xlu0 %2505
    %v2507 = vlaneseq
    %v2508 = vshrl.u32 %v2507, 7
    %v2509 = vsub.s32 1, %v2508
    %v2510 = vrot.slane %v2051, %v2509
    %s2512 = sor.u32 256, 1
    %2513 = vbcast.lane.b32.xlu0 %v2510, %s2512
    %v2514 = vpop.permute.xlu0 %2513
    %s2516 = sor.u32 256, 9
    %2517 = vbcast.lane.b32.xlu0 %v2510, %s2516
    %v2518 = vpop.permute.xlu0 %2517
    %v2519 = vlaneseq
    %v2520 = vshrl.u32 %v2519, 7
    %v2521 = vsub.s32 2, %v2520
    %v2522 = vrot.slane %v2051, %v2521
    %s2524 = sor.u32 256, 1
    %2525 = vbcast.lane.b32.xlu0 %v2522, %s2524
    %v2526 = vpop.permute.xlu0 %2525
    %s2528 = sor.u32 256, 9
    %2529 = vbcast.lane.b32.xlu0 %v2522, %s2528
    %v2530 = vpop.permute.xlu0 %2529
    %v2531 = vlaneseq
    %v2532 = vshrl.u32 %v2531, 7
    %v2533 = vsub.s32 3, %v2532
    %v2534 = vrot.slane %v2051, %v2533
    %s2536 = sor.u32 256, 1
    %2537 = vbcast.lane.b32.xlu0 %v2534, %s2536
    %v2538 = vpop.permute.xlu0 %2537
    %s2540 = sor.u32 256, 9
    %2541 = vbcast.lane.b32.xlu0 %v2534, %s2540
    %v2542 = vpop.permute.xlu0 %2541
    %v2543 = vlaneseq
    %v2544 = vshrl.u32 %v2543, 7
    %v2545 = vsub.s32 4, %v2544
    %v2546 = vrot.slane %v2051, %v2545
    %s2548 = sor.u32 256, 1
    %2549 = vbcast.lane.b32.xlu0 %v2546, %s2548
    %v2550 = vpop.permute.xlu0 %2549
    %s2552 = sor.u32 256, 9
    %2553 = vbcast.lane.b32.xlu0 %v2546, %s2552
    %v2554 = vpop.permute.xlu0 %2553
    %v2555 = vlaneseq
    %v2556 = vshrl.u32 %v2555, 7
    %v2557 = vsub.s32 5, %v2556
    %v2558 = vrot.slane %v2051, %v2557
    %s2560 = sor.u32 256, 1
    %2561 = vbcast.lane.b32.xlu0 %v2558, %s2560
    %v2562 = vpop.permute.xlu0 %2561
    %s2564 = sor.u32 256, 9
    %2565 = vbcast.lane.b32.xlu0 %v2558, %s2564
    %v2566 = vpop.permute.xlu0 %2565
    %v2567 = vlaneseq
    %v2568 = vshrl.u32 %v2567, 7
    %v2569 = vsub.s32 6, %v2568
    %v2570 = vrot.slane %v2051, %v2569
    %s2572 = sor.u32 256, 1
    %2573 = vbcast.lane.b32.xlu0 %v2570, %s2572
    %v2574 = vpop.permute.xlu0 %2573
    %s2576 = sor.u32 256, 9
    %2577 = vbcast.lane.b32.xlu0 %v2570, %s2576
    %v2578 = vpop.permute.xlu0 %2577
    %v2579 = vlaneseq
    %v2580 = vshrl.u32 %v2579, 7
    %v2581 = vsub.s32 7, %v2580
    %v2582 = vrot.slane %v2051, %v2581
    %s2584 = sor.u32 256, 1
    %2585 = vbcast.lane.b32.xlu0 %v2582, %s2584
    %v2586 = vpop.permute.xlu0 %2585
    %s2588 = sor.u32 256, 9
    %2589 = vbcast.lane.b32.xlu0 %v2582, %s2588
    %v2590 = vpop.permute.xlu0 %2589
    %v2591 = vlaneseq
    %v2592 = vshrl.u32 %v2591, 7
    %v2593 = vsub.s32 0, %v2592
    %v2594 = vrot.slane %v2052, %v2593
    %s2596 = sor.u32 256, 1
    %2597 = vbcast.lane.b32.xlu0 %v2594, %s2596
    %v2598 = vpop.permute.xlu0 %2597
    %s2600 = sor.u32 256, 9
    %2601 = vbcast.lane.b32.xlu0 %v2594, %s2600
    %v2602 = vpop.permute.xlu0 %2601
    %v2603 = vlaneseq
    %v2604 = vshrl.u32 %v2603, 7
    %v2605 = vsub.s32 1, %v2604
    %v2606 = vrot.slane %v2052, %v2605
    %s2608 = sor.u32 256, 1
    %2609 = vbcast.lane.b32.xlu0 %v2606, %s2608
    %v2610 = vpop.permute.xlu0 %2609
    %s2612 = sor.u32 256, 9
    %2613 = vbcast.lane.b32.xlu0 %v2606, %s2612
    %v2614 = vpop.permute.xlu0 %2613
    %v2615 = vlaneseq
    %v2616 = vshrl.u32 %v2615, 7
    %v2617 = vsub.s32 2, %v2616
    %v2618 = vrot.slane %v2052, %v2617
    %s2620 = sor.u32 256, 1
    %2621 = vbcast.lane.b32.xlu0 %v2618, %s2620
    %v2622 = vpop.permute.xlu0 %2621
    %s2624 = sor.u32 256, 9
    %2625 = vbcast.lane.b32.xlu0 %v2618, %s2624
    %v2626 = vpop.permute.xlu0 %2625
    %v2627 = vlaneseq
    %v2628 = vshrl.u32 %v2627, 7
    %v2629 = vsub.s32 3, %v2628
    %v2630 = vrot.slane %v2052, %v2629
    %s2632 = sor.u32 256, 1
    %2633 = vbcast.lane.b32.xlu0 %v2630, %s2632
    %v2634 = vpop.permute.xlu0 %2633
    %s2636 = sor.u32 256, 9
    %2637 = vbcast.lane.b32.xlu0 %v2630, %s2636
    %v2638 = vpop.permute.xlu0 %2637
    %v2639 = vlaneseq
    %v2640 = vshrl.u32 %v2639, 7
    %v2641 = vsub.s32 4, %v2640
    %v2642 = vrot.slane %v2052, %v2641
    %s2644 = sor.u32 256, 1
    %2645 = vbcast.lane.b32.xlu0 %v2642, %s2644
    %v2646 = vpop.permute.xlu0 %2645
    %s2648 = sor.u32 256, 9
    %2649 = vbcast.lane.b32.xlu0 %v2642, %s2648
    %v2650 = vpop.permute.xlu0 %2649
    %v2651 = vlaneseq
    %v2652 = vshrl.u32 %v2651, 7
    %v2653 = vsub.s32 5, %v2652
    %v2654 = vrot.slane %v2052, %v2653
    %s2656 = sor.u32 256, 1
    %2657 = vbcast.lane.b32.xlu0 %v2654, %s2656
    %v2658 = vpop.permute.xlu0 %2657
    %s2660 = sor.u32 256, 9
    %2661 = vbcast.lane.b32.xlu0 %v2654, %s2660
    %v2662 = vpop.permute.xlu0 %2661
    %v2663 = vlaneseq
    %v2664 = vshrl.u32 %v2663, 7
    %v2665 = vsub.s32 6, %v2664
    %v2666 = vrot.slane %v2052, %v2665
    %s2668 = sor.u32 256, 1
    %2669 = vbcast.lane.b32.xlu0 %v2666, %s2668
    %v2670 = vpop.permute.xlu0 %2669
    %s2672 = sor.u32 256, 9
    %2673 = vbcast.lane.b32.xlu0 %v2666, %s2672
    %v2674 = vpop.permute.xlu0 %2673
    %v2675 = vlaneseq
    %v2676 = vshrl.u32 %v2675, 7
    %v2677 = vsub.s32 7, %v2676
    %v2678 = vrot.slane %v2052, %v2677
    %s2680 = sor.u32 256, 1
    %2681 = vbcast.lane.b32.xlu0 %v2678, %s2680
    %v2682 = vpop.permute.xlu0 %2681
    %s2684 = sor.u32 256, 9
    %2685 = vbcast.lane.b32.xlu0 %v2678, %s2684
    %v2686 = vpop.permute.xlu0 %2685
    %v2687 = vlaneseq
    %v2688 = vshrl.u32 %v2687, 7
    %v2689 = vsub.s32 0, %v2688
    %v2690 = vrot.slane %v2053, %v2689
    %s2692 = sor.u32 256, 1
    %2693 = vbcast.lane.b32.xlu0 %v2690, %s2692
    %v2694 = vpop.permute.xlu0 %2693
    %s2696 = sor.u32 256, 9
    %2697 = vbcast.lane.b32.xlu0 %v2690, %s2696
    %v2698 = vpop.permute.xlu0 %2697
    %v2699 = vlaneseq
    %v2700 = vshrl.u32 %v2699, 7
    %v2701 = vsub.s32 1, %v2700
    %v2702 = vrot.slane %v2053, %v2701
    %s2704 = sor.u32 256, 1
    %2705 = vbcast.lane.b32.xlu0 %v2702, %s2704
    %v2706 = vpop.permute.xlu0 %2705
    %s2708 = sor.u32 256, 9
    %2709 = vbcast.lane.b32.xlu0 %v2702, %s2708
    %v2710 = vpop.permute.xlu0 %2709
    %v2711 = vlaneseq
    %v2712 = vshrl.u32 %v2711, 7
    %v2713 = vsub.s32 2, %v2712
    %v2714 = vrot.slane %v2053, %v2713
    %s2716 = sor.u32 256, 1
    %2717 = vbcast.lane.b32.xlu0 %v2714, %s2716
    %v2718 = vpop.permute.xlu0 %2717
    %s2720 = sor.u32 256, 9
    %2721 = vbcast.lane.b32.xlu0 %v2714, %s2720
    %v2722 = vpop.permute.xlu0 %2721
    %v2723 = vlaneseq
    %v2724 = vshrl.u32 %v2723, 7
    %v2725 = vsub.s32 3, %v2724
    %v2726 = vrot.slane %v2053, %v2725
    %s2728 = sor.u32 256, 1
    %2729 = vbcast.lane.b32.xlu0 %v2726, %s2728
    %v2730 = vpop.permute.xlu0 %2729
    %s2732 = sor.u32 256, 9
    %2733 = vbcast.lane.b32.xlu0 %v2726, %s2732
    %v2734 = vpop.permute.xlu0 %2733
    %v2735 = vlaneseq
    %v2736 = vshrl.u32 %v2735, 7
    %v2737 = vsub.s32 4, %v2736
    %v2738 = vrot.slane %v2053, %v2737
    %s2740 = sor.u32 256, 1
    %2741 = vbcast.lane.b32.xlu0 %v2738, %s2740
    %v2742 = vpop.permute.xlu0 %2741
    %s2744 = sor.u32 256, 9
    %2745 = vbcast.lane.b32.xlu0 %v2738, %s2744
    %v2746 = vpop.permute.xlu0 %2745
    %v2747 = vlaneseq
    %v2748 = vshrl.u32 %v2747, 7
    %v2749 = vsub.s32 5, %v2748
    %v2750 = vrot.slane %v2053, %v2749
    %s2752 = sor.u32 256, 1
    %2753 = vbcast.lane.b32.xlu0 %v2750, %s2752
    %v2754 = vpop.permute.xlu0 %2753
    %s2756 = sor.u32 256, 9
    %2757 = vbcast.lane.b32.xlu0 %v2750, %s2756
    %v2758 = vpop.permute.xlu0 %2757
    %v2759 = vlaneseq
    %v2760 = vshrl.u32 %v2759, 7
    %v2761 = vsub.s32 6, %v2760
    %v2762 = vrot.slane %v2053, %v2761
    %s2764 = sor.u32 256, 1
    %2765 = vbcast.lane.b32.xlu0 %v2762, %s2764
    %v2766 = vpop.permute.xlu0 %2765
    %s2768 = sor.u32 256, 9
    %2769 = vbcast.lane.b32.xlu0 %v2762, %s2768
    %v2770 = vpop.permute.xlu0 %2769
    %v2771 = vlaneseq
    %v2772 = vshrl.u32 %v2771, 7
    %v2773 = vsub.s32 7, %v2772
    %v2774 = vrot.slane %v2053, %v2773
    %s2776 = sor.u32 256, 1
    %2777 = vbcast.lane.b32.xlu0 %v2774, %s2776
    %v2778 = vpop.permute.xlu0 %2777
    %s2780 = sor.u32 256, 9
    %2781 = vbcast.lane.b32.xlu0 %v2774, %s2780
    %v2782 = vpop.permute.xlu0 %2781
    %v2783 = vlaneseq
    %v2784 = vshrl.u32 %v2783, 7
    %v2785 = vsub.s32 0, %v2784
    %v2786 = vrot.slane %v2054, %v2785
    %s2788 = sor.u32 256, 1
    %2789 = vbcast.lane.b32.xlu0 %v2786, %s2788
    %v2790 = vpop.permute.xlu0 %2789
    %s2792 = sor.u32 256, 9
    %2793 = vbcast.lane.b32.xlu0 %v2786, %s2792
    %v2794 = vpop.permute.xlu0 %2793
    %v2795 = vlaneseq
    %v2796 = vshrl.u32 %v2795, 7
    %v2797 = vsub.s32 1, %v2796
    %v2798 = vrot.slane %v2054, %v2797
    %s2800 = sor.u32 256, 1
    %2801 = vbcast.lane.b32.xlu0 %v2798, %s2800
    %v2802 = vpop.permute.xlu0 %2801
    %s2804 = sor.u32 256, 9
    %2805 = vbcast.lane.b32.xlu0 %v2798, %s2804
    %v2806 = vpop.permute.xlu0 %2805
    %v2807 = vlaneseq
    %v2808 = vshrl.u32 %v2807, 7
    %v2809 = vsub.s32 2, %v2808
    %v2810 = vrot.slane %v2054, %v2809
    %s2812 = sor.u32 256, 1
    %2813 = vbcast.lane.b32.xlu0 %v2810, %s2812
    %v2814 = vpop.permute.xlu0 %2813
    %s2816 = sor.u32 256, 9
    %2817 = vbcast.lane.b32.xlu0 %v2810, %s2816
    %v2818 = vpop.permute.xlu0 %2817
    %v2819 = vlaneseq
    %v2820 = vshrl.u32 %v2819, 7
    %v2821 = vsub.s32 3, %v2820
    %v2822 = vrot.slane %v2054, %v2821
    %s2824 = sor.u32 256, 1
    %2825 = vbcast.lane.b32.xlu0 %v2822, %s2824
    %v2826 = vpop.permute.xlu0 %2825
    %s2828 = sor.u32 256, 9
    %2829 = vbcast.lane.b32.xlu0 %v2822, %s2828
    %v2830 = vpop.permute.xlu0 %2829
    %v2831 = vlaneseq
    %v2832 = vshrl.u32 %v2831, 7
    %v2833 = vsub.s32 4, %v2832
    %v2834 = vrot.slane %v2054, %v2833
    %s2836 = sor.u32 256, 1
    %2837 = vbcast.lane.b32.xlu0 %v2834, %s2836
    %v2838 = vpop.permute.xlu0 %2837
    %s2840 = sor.u32 256, 9
    %2841 = vbcast.lane.b32.xlu0 %v2834, %s2840
    %v2842 = vpop.permute.xlu0 %2841
    %v2843 = vlaneseq
    %v2844 = vshrl.u32 %v2843, 7
    %v2845 = vsub.s32 5, %v2844
    %v2846 = vrot.slane %v2054, %v2845
    %s2848 = sor.u32 256, 1
    %2849 = vbcast.lane.b32.xlu0 %v2846, %s2848
    %v2850 = vpop.permute.xlu0 %2849
    %s2852 = sor.u32 256, 9
    %2853 = vbcast.lane.b32.xlu0 %v2846, %s2852
    %v2854 = vpop.permute.xlu0 %2853
    %v2855 = vlaneseq
    %v2856 = vshrl.u32 %v2855, 7
    %v2857 = vsub.s32 6, %v2856
    %v2858 = vrot.slane %v2054, %v2857
    %s2860 = sor.u32 256, 1
    %2861 = vbcast.lane.b32.xlu0 %v2858, %s2860
    %v2862 = vpop.permute.xlu0 %2861
    %s2864 = sor.u32 256, 9
    %2865 = vbcast.lane.b32.xlu0 %v2858, %s2864
    %v2866 = vpop.permute.xlu0 %2865
    %v2867 = vlaneseq
    %v2868 = vshrl.u32 %v2867, 7
    %v2869 = vsub.s32 7, %v2868
    %v2870 = vrot.slane %v2054, %v2869
    %s2872 = sor.u32 256, 1
    %2873 = vbcast.lane.b32.xlu0 %v2870, %s2872
    %v2874 = vpop.permute.xlu0 %2873
    %s2876 = sor.u32 256, 9
    %2877 = vbcast.lane.b32.xlu0 %v2870, %s2876
    %v2878 = vpop.permute.xlu0 %2877
    %v2879 = vlaneseq
    %v2880 = vshrl.u32 %v2879, 7
    %v2881 = vsub.s32 0, %v2880
    %v2882 = vrot.slane %v2103, %v2881
    %s2884 = sor.u32 256, 2
    %2885 = vbcast.lane.b32.xlu0 %v2882, %s2884
    %v2886 = vpop.permute.xlu0 %2885
    %s2888 = sor.u32 256, 10
    %2889 = vbcast.lane.b32.xlu0 %v2882, %s2888
    %v2890 = vpop.permute.xlu0 %2889
    %v2891 = vlaneseq
    %v2892 = vshrl.u32 %v2891, 7
    %v2893 = vsub.s32 1, %v2892
    %v2894 = vrot.slane %v2103, %v2893
    %s2896 = sor.u32 256, 2
    %2897 = vbcast.lane.b32.xlu0 %v2894, %s2896
    %v2898 = vpop.permute.xlu0 %2897
    %s2900 = sor.u32 256, 10
    %2901 = vbcast.lane.b32.xlu0 %v2894, %s2900
    %v2902 = vpop.permute.xlu0 %2901
    %v2903 = vlaneseq
    %v2904 = vshrl.u32 %v2903, 7
    %v2905 = vsub.s32 2, %v2904
    %v2906 = vrot.slane %v2103, %v2905
    %s2908 = sor.u32 256, 2
    %2909 = vbcast.lane.b32.xlu0 %v2906, %s2908
    %v2910 = vpop.permute.xlu0 %2909
    %s2912 = sor.u32 256, 10
    %2913 = vbcast.lane.b32.xlu0 %v2906, %s2912
    %v2914 = vpop.permute.xlu0 %2913
    %v2915 = vlaneseq
    %v2916 = vshrl.u32 %v2915, 7
    %v2917 = vsub.s32 3, %v2916
    %v2918 = vrot.slane %v2103, %v2917
    %s2920 = sor.u32 256, 2
    %2921 = vbcast.lane.b32.xlu0 %v2918, %s2920
    %v2922 = vpop.permute.xlu0 %2921
    %s2924 = sor.u32 256, 10
    %2925 = vbcast.lane.b32.xlu0 %v2918, %s2924
    %v2926 = vpop.permute.xlu0 %2925
    %v2927 = vlaneseq
    %v2928 = vshrl.u32 %v2927, 7
    %v2929 = vsub.s32 4, %v2928
    %v2930 = vrot.slane %v2103, %v2929
    %s2932 = sor.u32 256, 2
    %2933 = vbcast.lane.b32.xlu0 %v2930, %s2932
    %v2934 = vpop.permute.xlu0 %2933
    %s2936 = sor.u32 256, 10
    %2937 = vbcast.lane.b32.xlu0 %v2930, %s2936
    %v2938 = vpop.permute.xlu0 %2937
    %v2939 = vlaneseq
    %v2940 = vshrl.u32 %v2939, 7
    %v2941 = vsub.s32 5, %v2940
    %v2942 = vrot.slane %v2103, %v2941
    %s2944 = sor.u32 256, 2
    %2945 = vbcast.lane.b32.xlu0 %v2942, %s2944
    %v2946 = vpop.permute.xlu0 %2945
    %s2948 = sor.u32 256, 10
    %2949 = vbcast.lane.b32.xlu0 %v2942, %s2948
    %v2950 = vpop.permute.xlu0 %2949
    %v2951 = vlaneseq
    %v2952 = vshrl.u32 %v2951, 7
    %v2953 = vsub.s32 6, %v2952
    %v2954 = vrot.slane %v2103, %v2953
    %s2956 = sor.u32 256, 2
    %2957 = vbcast.lane.b32.xlu0 %v2954, %s2956
    %v2958 = vpop.permute.xlu0 %2957
    %s2960 = sor.u32 256, 10
    %2961 = vbcast.lane.b32.xlu0 %v2954, %s2960
    %v2962 = vpop.permute.xlu0 %2961
    %v2963 = vlaneseq
    %v2964 = vshrl.u32 %v2963, 7
    %v2965 = vsub.s32 7, %v2964
    %v2966 = vrot.slane %v2103, %v2965
    %s2968 = sor.u32 256, 2
    %2969 = vbcast.lane.b32.xlu0 %v2966, %s2968
    %v2970 = vpop.permute.xlu0 %2969
    %s2972 = sor.u32 256, 10
    %2973 = vbcast.lane.b32.xlu0 %v2966, %s2972
    %v2974 = vpop.permute.xlu0 %2973
    %v2975 = vlaneseq
    %v2976 = vshrl.u32 %v2975, 7
    %v2977 = vsub.s32 0, %v2976
    %v2978 = vrot.slane %v2104, %v2977
    %s2980 = sor.u32 256, 2
    %2981 = vbcast.lane.b32.xlu0 %v2978, %s2980
    %v2982 = vpop.permute.xlu0 %2981
    %s2984 = sor.u32 256, 10
    %2985 = vbcast.lane.b32.xlu0 %v2978, %s2984
    %v2986 = vpop.permute.xlu0 %2985
    %v2987 = vlaneseq
    %v2988 = vshrl.u32 %v2987, 7
    %v2989 = vsub.s32 1, %v2988
    %v2990 = vrot.slane %v2104, %v2989
    %s2992 = sor.u32 256, 2
    %2993 = vbcast.lane.b32.xlu0 %v2990, %s2992
    %v2994 = vpop.permute.xlu0 %2993
    %s2996 = sor.u32 256, 10
    %2997 = vbcast.lane.b32.xlu0 %v2990, %s2996
    %v2998 = vpop.permute.xlu0 %2997
    %v2999 = vlaneseq
    %v3000 = vshrl.u32 %v2999, 7
    %v3001 = vsub.s32 2, %v3000
    %v3002 = vrot.slane %v2104, %v3001
    %s3004 = sor.u32 256, 2
    %3005 = vbcast.lane.b32.xlu0 %v3002, %s3004
    %v3006 = vpop.permute.xlu0 %3005
    %s3008 = sor.u32 256, 10
    %3009 = vbcast.lane.b32.xlu0 %v3002, %s3008
    %v3010 = vpop.permute.xlu0 %3009
    %v3011 = vlaneseq
    %v3012 = vshrl.u32 %v3011, 7
    %v3013 = vsub.s32 3, %v3012
    %v3014 = vrot.slane %v2104, %v3013
    %s3016 = sor.u32 256, 2
    %3017 = vbcast.lane.b32.xlu0 %v3014, %s3016
    %v3018 = vpop.permute.xlu0 %3017
    %s3020 = sor.u32 256, 10
    %3021 = vbcast.lane.b32.xlu0 %v3014, %s3020
    %v3022 = vpop.permute.xlu0 %3021
    %v3023 = vlaneseq
    %v3024 = vshrl.u32 %v3023, 7
    %v3025 = vsub.s32 4, %v3024
    %v3026 = vrot.slane %v2104, %v3025
    %s3028 = sor.u32 256, 2
    %3029 = vbcast.lane.b32.xlu0 %v3026, %s3028
    %v3030 = vpop.permute.xlu0 %3029
    %s3032 = sor.u32 256, 10
    %3033 = vbcast.lane.b32.xlu0 %v3026, %s3032
    %v3034 = vpop.permute.xlu0 %3033
    %v3035 = vlaneseq
    %v3036 = vshrl.u32 %v3035, 7
    %v3037 = vsub.s32 5, %v3036
    %v3038 = vrot.slane %v2104, %v3037
    %s3040 = sor.u32 256, 2
    %3041 = vbcast.lane.b32.xlu0 %v3038, %s3040
    %v3042 = vpop.permute.xlu0 %3041
    %s3044 = sor.u32 256, 10
    %3045 = vbcast.lane.b32.xlu0 %v3038, %s3044
    %v3046 = vpop.permute.xlu0 %3045
    %v3047 = vlaneseq
    %v3048 = vshrl.u32 %v3047, 7
    %v3049 = vsub.s32 6, %v3048
    %v3050 = vrot.slane %v2104, %v3049
    %s3052 = sor.u32 256, 2
    %3053 = vbcast.lane.b32.xlu0 %v3050, %s3052
    %v3054 = vpop.permute.xlu0 %3053
    %s3056 = sor.u32 256, 10
    %3057 = vbcast.lane.b32.xlu0 %v3050, %s3056
    %v3058 = vpop.permute.xlu0 %3057
    %v3059 = vlaneseq
    %v3060 = vshrl.u32 %v3059, 7
    %v3061 = vsub.s32 7, %v3060
    %v3062 = vrot.slane %v2104, %v3061
    %s3064 = sor.u32 256, 2
    %3065 = vbcast.lane.b32.xlu0 %v3062, %s3064
    %v3066 = vpop.permute.xlu0 %3065
    %s3068 = sor.u32 256, 10
    %3069 = vbcast.lane.b32.xlu0 %v3062, %s3068
    %v3070 = vpop.permute.xlu0 %3069
    %v3071 = vlaneseq
    %v3072 = vshrl.u32 %v3071, 7
    %v3073 = vsub.s32 0, %v3072
    %v3074 = vrot.slane %v2105, %v3073
    %s3076 = sor.u32 256, 2
    %3077 = vbcast.lane.b32.xlu0 %v3074, %s3076
    %v3078 = vpop.permute.xlu0 %3077
    %s3080 = sor.u32 256, 10
    %3081 = vbcast.lane.b32.xlu0 %v3074, %s3080
    %v3082 = vpop.permute.xlu0 %3081
    %v3083 = vlaneseq
    %v3084 = vshrl.u32 %v3083, 7
    %v3085 = vsub.s32 1, %v3084
    %v3086 = vrot.slane %v2105, %v3085
    %s3088 = sor.u32 256, 2
    %3089 = vbcast.lane.b32.xlu0 %v3086, %s3088
    %v3090 = vpop.permute.xlu0 %3089
    %s3092 = sor.u32 256, 10
    %3093 = vbcast.lane.b32.xlu0 %v3086, %s3092
    %v3094 = vpop.permute.xlu0 %3093
    %v3095 = vlaneseq
    %v3096 = vshrl.u32 %v3095, 7
    %v3097 = vsub.s32 2, %v3096
    %v3098 = vrot.slane %v2105, %v3097
    %s3100 = sor.u32 256, 2
    %3101 = vbcast.lane.b32.xlu0 %v3098, %s3100
    %v3102 = vpop.permute.xlu0 %3101
    %s3104 = sor.u32 256, 10
    %3105 = vbcast.lane.b32.xlu0 %v3098, %s3104
    %v3106 = vpop.permute.xlu0 %3105
    %v3107 = vlaneseq
    %v3108 = vshrl.u32 %v3107, 7
    %v3109 = vsub.s32 3, %v3108
    %v3110 = vrot.slane %v2105, %v3109
    %s3112 = sor.u32 256, 2
    %3113 = vbcast.lane.b32.xlu0 %v3110, %s3112
    %v3114 = vpop.permute.xlu0 %3113
    %s3116 = sor.u32 256, 10
    %3117 = vbcast.lane.b32.xlu0 %v3110, %s3116
    %v3118 = vpop.permute.xlu0 %3117
    %v3119 = vlaneseq
    %v3120 = vshrl.u32 %v3119, 7
    %v3121 = vsub.s32 4, %v3120
    %v3122 = vrot.slane %v2105, %v3121
    %s3124 = sor.u32 256, 2
    %3125 = vbcast.lane.b32.xlu0 %v3122, %s3124
    %v3126 = vpop.permute.xlu0 %3125
    %s3128 = sor.u32 256, 10
    %3129 = vbcast.lane.b32.xlu0 %v3122, %s3128
    %v3130 = vpop.permute.xlu0 %3129
    %v3131 = vlaneseq
    %v3132 = vshrl.u32 %v3131, 7
    %v3133 = vsub.s32 5, %v3132
    %v3134 = vrot.slane %v2105, %v3133
    %s3136 = sor.u32 256, 2
    %3137 = vbcast.lane.b32.xlu0 %v3134, %s3136
    %v3138 = vpop.permute.xlu0 %3137
    %s3140 = sor.u32 256, 10
    %3141 = vbcast.lane.b32.xlu0 %v3134, %s3140
    %v3142 = vpop.permute.xlu0 %3141
    %v3143 = vlaneseq
    %v3144 = vshrl.u32 %v3143, 7
    %v3145 = vsub.s32 6, %v3144
    %v3146 = vrot.slane %v2105, %v3145
    %s3148 = sor.u32 256, 2
    %3149 = vbcast.lane.b32.xlu0 %v3146, %s3148
    %v3150 = vpop.permute.xlu0 %3149
    %s3152 = sor.u32 256, 10
    %3153 = vbcast.lane.b32.xlu0 %v3146, %s3152
    %v3154 = vpop.permute.xlu0 %3153
    %v3155 = vlaneseq
    %v3156 = vshrl.u32 %v3155, 7
    %v3157 = vsub.s32 7, %v3156
    %v3158 = vrot.slane %v2105, %v3157
    %s3160 = sor.u32 256, 2
    %3161 = vbcast.lane.b32.xlu0 %v3158, %s3160
    %v3162 = vpop.permute.xlu0 %3161
    %s3164 = sor.u32 256, 10
    %3165 = vbcast.lane.b32.xlu0 %v3158, %s3164
    %v3166 = vpop.permute.xlu0 %3165
    %v3167 = vlaneseq
    %v3168 = vshrl.u32 %v3167, 7
    %v3169 = vsub.s32 0, %v3168
    %v3170 = vrot.slane %v2106, %v3169
    %s3172 = sor.u32 256, 2
    %3173 = vbcast.lane.b32.xlu0 %v3170, %s3172
    %v3174 = vpop.permute.xlu0 %3173
    %s3176 = sor.u32 256, 10
    %3177 = vbcast.lane.b32.xlu0 %v3170, %s3176
    %v3178 = vpop.permute.xlu0 %3177
    %v3179 = vlaneseq
    %v3180 = vshrl.u32 %v3179, 7
    %v3181 = vsub.s32 1, %v3180
    %v3182 = vrot.slane %v2106, %v3181
    %s3184 = sor.u32 256, 2
    %3185 = vbcast.lane.b32.xlu0 %v3182, %s3184
    %v3186 = vpop.permute.xlu0 %3185
    %s3188 = sor.u32 256, 10
    %3189 = vbcast.lane.b32.xlu0 %v3182, %s3188
    %v3190 = vpop.permute.xlu0 %3189
    %v3191 = vlaneseq
    %v3192 = vshrl.u32 %v3191, 7
    %v3193 = vsub.s32 2, %v3192
    %v3194 = vrot.slane %v2106, %v3193
    %s3196 = sor.u32 256, 2
    %3197 = vbcast.lane.b32.xlu0 %v3194, %s3196
    %v3198 = vpop.permute.xlu0 %3197
    %s3200 = sor.u32 256, 10
    %3201 = vbcast.lane.b32.xlu0 %v3194, %s3200
    %v3202 = vpop.permute.xlu0 %3201
    %v3203 = vlaneseq
    %v3204 = vshrl.u32 %v3203, 7
    %v3205 = vsub.s32 3, %v3204
    %v3206 = vrot.slane %v2106, %v3205
    %s3208 = sor.u32 256, 2
    %3209 = vbcast.lane.b32.xlu0 %v3206, %s3208
    %v3210 = vpop.permute.xlu0 %3209
    %s3212 = sor.u32 256, 10
    %3213 = vbcast.lane.b32.xlu0 %v3206, %s3212
    %v3214 = vpop.permute.xlu0 %3213
    %v3215 = vlaneseq
    %v3216 = vshrl.u32 %v3215, 7
    %v3217 = vsub.s32 4, %v3216
    %v3218 = vrot.slane %v2106, %v3217
    %s3220 = sor.u32 256, 2
    %3221 = vbcast.lane.b32.xlu0 %v3218, %s3220
    %v3222 = vpop.permute.xlu0 %3221
    %s3224 = sor.u32 256, 10
    %3225 = vbcast.lane.b32.xlu0 %v3218, %s3224
    %v3226 = vpop.permute.xlu0 %3225
    %v3227 = vlaneseq
    %v3228 = vshrl.u32 %v3227, 7
    %v3229 = vsub.s32 5, %v3228
    %v3230 = vrot.slane %v2106, %v3229
    %s3232 = sor.u32 256, 2
    %3233 = vbcast.lane.b32.xlu0 %v3230, %s3232
    %v3234 = vpop.permute.xlu0 %3233
    %s3236 = sor.u32 256, 10
    %3237 = vbcast.lane.b32.xlu0 %v3230, %s3236
    %v3238 = vpop.permute.xlu0 %3237
    %v3239 = vlaneseq
    %v3240 = vshrl.u32 %v3239, 7
    %v3241 = vsub.s32 6, %v3240
    %v3242 = vrot.slane %v2106, %v3241
    %s3244 = sor.u32 256, 2
    %3245 = vbcast.lane.b32.xlu0 %v3242, %s3244
    %v3246 = vpop.permute.xlu0 %3245
    %s3248 = sor.u32 256, 10
    %3249 = vbcast.lane.b32.xlu0 %v3242, %s3248
    %v3250 = vpop.permute.xlu0 %3249
    %v3251 = vlaneseq
    %v3252 = vshrl.u32 %v3251, 7
    %v3253 = vsub.s32 7, %v3252
    %v3254 = vrot.slane %v2106, %v3253
    %s3256 = sor.u32 256, 2
    %3257 = vbcast.lane.b32.xlu0 %v3254, %s3256
    %v3258 = vpop.permute.xlu0 %3257
    %s3260 = sor.u32 256, 10
    %3261 = vbcast.lane.b32.xlu0 %v3254, %s3260
    %v3262 = vpop.permute.xlu0 %3261
    %v3263 = vlaneseq
    %v3264 = vshrl.u32 %v3263, 7
    %v3265 = vsub.s32 0, %v3264
    %v3266 = vrot.slane %v2107, %v3265
    %s3268 = sor.u32 256, 2
    %3269 = vbcast.lane.b32.xlu0 %v3266, %s3268
    %v3270 = vpop.permute.xlu0 %3269
    %s3272 = sor.u32 256, 10
    %3273 = vbcast.lane.b32.xlu0 %v3266, %s3272
    %v3274 = vpop.permute.xlu0 %3273
    %v3275 = vlaneseq
    %v3276 = vshrl.u32 %v3275, 7
    %v3277 = vsub.s32 1, %v3276
    %v3278 = vrot.slane %v2107, %v3277
    %s3280 = sor.u32 256, 2
    %3281 = vbcast.lane.b32.xlu0 %v3278, %s3280
    %v3282 = vpop.permute.xlu0 %3281
    %s3284 = sor.u32 256, 10
    %3285 = vbcast.lane.b32.xlu0 %v3278, %s3284
    %v3286 = vpop.permute.xlu0 %3285
    %v3287 = vlaneseq
    %v3288 = vshrl.u32 %v3287, 7
    %v3289 = vsub.s32 2, %v3288
    %v3290 = vrot.slane %v2107, %v3289
    %s3292 = sor.u32 256, 2
    %3293 = vbcast.lane.b32.xlu0 %v3290, %s3292
    %v3294 = vpop.permute.xlu0 %3293
    %s3296 = sor.u32 256, 10
    %3297 = vbcast.lane.b32.xlu0 %v3290, %s3296
    %v3298 = vpop.permute.xlu0 %3297
    %v3299 = vlaneseq
    %v3300 = vshrl.u32 %v3299, 7
    %v3301 = vsub.s32 3, %v3300
    %v3302 = vrot.slane %v2107, %v3301
    %s3304 = sor.u32 256, 2
    %3305 = vbcast.lane.b32.xlu0 %v3302, %s3304
    %v3306 = vpop.permute.xlu0 %3305
    %s3308 = sor.u32 256, 10
    %3309 = vbcast.lane.b32.xlu0 %v3302, %s3308
    %v3310 = vpop.permute.xlu0 %3309
    %v3311 = vlaneseq
    %v3312 = vshrl.u32 %v3311, 7
    %v3313 = vsub.s32 4, %v3312
    %v3314 = vrot.slane %v2107, %v3313
    %s3316 = sor.u32 256, 2
    %3317 = vbcast.lane.b32.xlu0 %v3314, %s3316
    %v3318 = vpop.permute.xlu0 %3317
    %s3320 = sor.u32 256, 10
    %3321 = vbcast.lane.b32.xlu0 %v3314, %s3320
    %v3322 = vpop.permute.xlu0 %3321
    %v3323 = vlaneseq
    %v3324 = vshrl.u32 %v3323, 7
    %v3325 = vsub.s32 5, %v3324
    %v3326 = vrot.slane %v2107, %v3325
    %s3328 = sor.u32 256, 2
    %3329 = vbcast.lane.b32.xlu0 %v3326, %s3328
    %v3330 = vpop.permute.xlu0 %3329
    %s3332 = sor.u32 256, 10
    %3333 = vbcast.lane.b32.xlu0 %v3326, %s3332
    %v3334 = vpop.permute.xlu0 %3333
    %v3335 = vlaneseq
    %v3336 = vshrl.u32 %v3335, 7
    %v3337 = vsub.s32 6, %v3336
    %v3338 = vrot.slane %v2107, %v3337
    %s3340 = sor.u32 256, 2
    %3341 = vbcast.lane.b32.xlu0 %v3338, %s3340
    %v3342 = vpop.permute.xlu0 %3341
    %s3344 = sor.u32 256, 10
    %3345 = vbcast.lane.b32.xlu0 %v3338, %s3344
    %v3346 = vpop.permute.xlu0 %3345
    %v3347 = vlaneseq
    %v3348 = vshrl.u32 %v3347, 7
    %v3349 = vsub.s32 7, %v3348
    %v3350 = vrot.slane %v2107, %v3349
    %s3352 = sor.u32 256, 2
    %3353 = vbcast.lane.b32.xlu0 %v3350, %s3352
    %v3354 = vpop.permute.xlu0 %3353
    %s3356 = sor.u32 256, 10
    %3357 = vbcast.lane.b32.xlu0 %v3350, %s3356
    %v3358 = vpop.permute.xlu0 %3357
    %v3359 = vlaneseq
    %v3360 = vshrl.u32 %v3359, 7
    %v3361 = vsub.s32 0, %v3360
    %v3362 = vrot.slane %v2108, %v3361
    %s3364 = sor.u32 256, 2
    %3365 = vbcast.lane.b32.xlu0 %v3362, %s3364
    %v3366 = vpop.permute.xlu0 %3365
    %s3368 = sor.u32 256, 10
    %3369 = vbcast.lane.b32.xlu0 %v3362, %s3368
    %v3370 = vpop.permute.xlu0 %3369
    %v3371 = vlaneseq
    %v3372 = vshrl.u32 %v3371, 7
    %v3373 = vsub.s32 1, %v3372
    %v3374 = vrot.slane %v2108, %v3373
    %s3376 = sor.u32 256, 2
    %3377 = vbcast.lane.b32.xlu0 %v3374, %s3376
    %v3378 = vpop.permute.xlu0 %3377
    %s3380 = sor.u32 256, 10
    %3381 = vbcast.lane.b32.xlu0 %v3374, %s3380
    %v3382 = vpop.permute.xlu0 %3381
    %v3383 = vlaneseq
    %v3384 = vshrl.u32 %v3383, 7
    %v3385 = vsub.s32 2, %v3384
    %v3386 = vrot.slane %v2108, %v3385
    %s3388 = sor.u32 256, 2
    %3389 = vbcast.lane.b32.xlu0 %v3386, %s3388
    %v3390 = vpop.permute.xlu0 %3389
    %s3392 = sor.u32 256, 10
    %3393 = vbcast.lane.b32.xlu0 %v3386, %s3392
    %v3394 = vpop.permute.xlu0 %3393
    %v3395 = vlaneseq
    %v3396 = vshrl.u32 %v3395, 7
    %v3397 = vsub.s32 3, %v3396
    %v3398 = vrot.slane %v2108, %v3397
    %s3400 = sor.u32 256, 2
    %3401 = vbcast.lane.b32.xlu0 %v3398, %s3400
    %v3402 = vpop.permute.xlu0 %3401
    %s3404 = sor.u32 256, 10
    %3405 = vbcast.lane.b32.xlu0 %v3398, %s3404
    %v3406 = vpop.permute.xlu0 %3405
    %v3407 = vlaneseq
    %v3408 = vshrl.u32 %v3407, 7
    %v3409 = vsub.s32 4, %v3408
    %v3410 = vrot.slane %v2108, %v3409
    %s3412 = sor.u32 256, 2
    %3413 = vbcast.lane.b32.xlu0 %v3410, %s3412
    %v3414 = vpop.permute.xlu0 %3413
    %s3416 = sor.u32 256, 10
    %3417 = vbcast.lane.b32.xlu0 %v3410, %s3416
    %v3418 = vpop.permute.xlu0 %3417
    %v3419 = vlaneseq
    %v3420 = vshrl.u32 %v3419, 7
    %v3421 = vsub.s32 5, %v3420
    %v3422 = vrot.slane %v2108, %v3421
    %s3424 = sor.u32 256, 2
    %3425 = vbcast.lane.b32.xlu0 %v3422, %s3424
    %v3426 = vpop.permute.xlu0 %3425
    %s3428 = sor.u32 256, 10
    %3429 = vbcast.lane.b32.xlu0 %v3422, %s3428
    %v3430 = vpop.permute.xlu0 %3429
    %v3431 = vlaneseq
    %v3432 = vshrl.u32 %v3431, 7
    %v3433 = vsub.s32 6, %v3432
    %v3434 = vrot.slane %v2108, %v3433
    %s3436 = sor.u32 256, 2
    %3437 = vbcast.lane.b32.xlu0 %v3434, %s3436
    %v3438 = vpop.permute.xlu0 %3437
    %s3440 = sor.u32 256, 10
    %3441 = vbcast.lane.b32.xlu0 %v3434, %s3440
    %v3442 = vpop.permute.xlu0 %3441
    %v3443 = vlaneseq
    %v3444 = vshrl.u32 %v3443, 7
    %v3445 = vsub.s32 7, %v3444
    %v3446 = vrot.slane %v2108, %v3445
    %s3448 = sor.u32 256, 2
    %3449 = vbcast.lane.b32.xlu0 %v3446, %s3448
    %v3450 = vpop.permute.xlu0 %3449
    %s3452 = sor.u32 256, 10
    %3453 = vbcast.lane.b32.xlu0 %v3446, %s3452
    %v3454 = vpop.permute.xlu0 %3453
    %v3455 = vlaneseq
    %v3456 = vshrl.u32 %v3455, 7
    %v3457 = vsub.s32 0, %v3456
    %v3458 = vrot.slane %v2109, %v3457
    %s3460 = sor.u32 256, 2
    %3461 = vbcast.lane.b32.xlu0 %v3458, %s3460
    %v3462 = vpop.permute.xlu0 %3461
    %s3464 = sor.u32 256, 10
    %3465 = vbcast.lane.b32.xlu0 %v3458, %s3464
    %v3466 = vpop.permute.xlu0 %3465
    %v3467 = vlaneseq
    %v3468 = vshrl.u32 %v3467, 7
    %v3469 = vsub.s32 1, %v3468
    %v3470 = vrot.slane %v2109, %v3469
    %s3472 = sor.u32 256, 2
    %3473 = vbcast.lane.b32.xlu0 %v3470, %s3472
    %v3474 = vpop.permute.xlu0 %3473
    %s3476 = sor.u32 256, 10
    %3477 = vbcast.lane.b32.xlu0 %v3470, %s3476
    %v3478 = vpop.permute.xlu0 %3477
    %v3479 = vlaneseq
    %v3480 = vshrl.u32 %v3479, 7
    %v3481 = vsub.s32 2, %v3480
    %v3482 = vrot.slane %v2109, %v3481
    %s3484 = sor.u32 256, 2
    %3485 = vbcast.lane.b32.xlu0 %v3482, %s3484
    %v3486 = vpop.permute.xlu0 %3485
    %s3488 = sor.u32 256, 10
    %3489 = vbcast.lane.b32.xlu0 %v3482, %s3488
    %v3490 = vpop.permute.xlu0 %3489
    %v3491 = vlaneseq
    %v3492 = vshrl.u32 %v3491, 7
    %v3493 = vsub.s32 3, %v3492
    %v3494 = vrot.slane %v2109, %v3493
    %s3496 = sor.u32 256, 2
    %3497 = vbcast.lane.b32.xlu0 %v3494, %s3496
    %v3498 = vpop.permute.xlu0 %3497
    %s3500 = sor.u32 256, 10
    %3501 = vbcast.lane.b32.xlu0 %v3494, %s3500
    %v3502 = vpop.permute.xlu0 %3501
    %v3503 = vlaneseq
    %v3504 = vshrl.u32 %v3503, 7
    %v3505 = vsub.s32 4, %v3504
    %v3506 = vrot.slane %v2109, %v3505
    %s3508 = sor.u32 256, 2
    %3509 = vbcast.lane.b32.xlu0 %v3506, %s3508
    %v3510 = vpop.permute.xlu0 %3509
    %s3512 = sor.u32 256, 10
    %3513 = vbcast.lane.b32.xlu0 %v3506, %s3512
    %v3514 = vpop.permute.xlu0 %3513
    %v3515 = vlaneseq
    %v3516 = vshrl.u32 %v3515, 7
    %v3517 = vsub.s32 5, %v3516
    %v3518 = vrot.slane %v2109, %v3517
    %s3520 = sor.u32 256, 2
    %3521 = vbcast.lane.b32.xlu0 %v3518, %s3520
    %v3522 = vpop.permute.xlu0 %3521
    %s3524 = sor.u32 256, 10
    %3525 = vbcast.lane.b32.xlu0 %v3518, %s3524
    %v3526 = vpop.permute.xlu0 %3525
    %v3527 = vlaneseq
    %v3528 = vshrl.u32 %v3527, 7
    %v3529 = vsub.s32 6, %v3528
    %v3530 = vrot.slane %v2109, %v3529
    %s3532 = sor.u32 256, 2
    %3533 = vbcast.lane.b32.xlu0 %v3530, %s3532
    %v3534 = vpop.permute.xlu0 %3533
    %s3536 = sor.u32 256, 10
    %3537 = vbcast.lane.b32.xlu0 %v3530, %s3536
    %v3538 = vpop.permute.xlu0 %3537
    %v3539 = vlaneseq
    %v3540 = vshrl.u32 %v3539, 7
    %v3541 = vsub.s32 7, %v3540
    %v3542 = vrot.slane %v2109, %v3541
    %s3544 = sor.u32 256, 2
    %3545 = vbcast.lane.b32.xlu0 %v3542, %s3544
    %v3546 = vpop.permute.xlu0 %3545
    %s3548 = sor.u32 256, 10
    %3549 = vbcast.lane.b32.xlu0 %v3542, %s3548
    %v3550 = vpop.permute.xlu0 %3549
    %v3551 = vlaneseq
    %v3552 = vshrl.u32 %v3551, 7
    %v3553 = vsub.s32 0, %v3552
    %v3554 = vrot.slane %v2110, %v3553
    %s3556 = sor.u32 256, 2
    %3557 = vbcast.lane.b32.xlu0 %v3554, %s3556
    %v3558 = vpop.permute.xlu0 %3557
    %s3560 = sor.u32 256, 10
    %3561 = vbcast.lane.b32.xlu0 %v3554, %s3560
    %v3562 = vpop.permute.xlu0 %3561
    %v3563 = vlaneseq
    %v3564 = vshrl.u32 %v3563, 7
    %v3565 = vsub.s32 1, %v3564
    %v3566 = vrot.slane %v2110, %v3565
    %s3568 = sor.u32 256, 2
    %3569 = vbcast.lane.b32.xlu0 %v3566, %s3568
    %v3570 = vpop.permute.xlu0 %3569
    %s3572 = sor.u32 256, 10
    %3573 = vbcast.lane.b32.xlu0 %v3566, %s3572
    %v3574 = vpop.permute.xlu0 %3573
    %v3575 = vlaneseq
    %v3576 = vshrl.u32 %v3575, 7
    %v3577 = vsub.s32 2, %v3576
    %v3578 = vrot.slane %v2110, %v3577
    %s3580 = sor.u32 256, 2
    %3581 = vbcast.lane.b32.xlu0 %v3578, %s3580
    %v3582 = vpop.permute.xlu0 %3581
    %s3584 = sor.u32 256, 10
    %3585 = vbcast.lane.b32.xlu0 %v3578, %s3584
    %v3586 = vpop.permute.xlu0 %3585
    %v3587 = vlaneseq
    %v3588 = vshrl.u32 %v3587, 7
    %v3589 = vsub.s32 3, %v3588
    %v3590 = vrot.slane %v2110, %v3589
    %s3592 = sor.u32 256, 2
    %3593 = vbcast.lane.b32.xlu0 %v3590, %s3592
    %v3594 = vpop.permute.xlu0 %3593
    %s3596 = sor.u32 256, 10
    %3597 = vbcast.lane.b32.xlu0 %v3590, %s3596
    %v3598 = vpop.permute.xlu0 %3597
    %v3599 = vlaneseq
    %v3600 = vshrl.u32 %v3599, 7
    %v3601 = vsub.s32 4, %v3600
    %v3602 = vrot.slane %v2110, %v3601
    %s3604 = sor.u32 256, 2
    %3605 = vbcast.lane.b32.xlu0 %v3602, %s3604
    %v3606 = vpop.permute.xlu0 %3605
    %s3608 = sor.u32 256, 10
    %3609 = vbcast.lane.b32.xlu0 %v3602, %s3608
    %v3610 = vpop.permute.xlu0 %3609
    %v3611 = vlaneseq
    %v3612 = vshrl.u32 %v3611, 7
    %v3613 = vsub.s32 5, %v3612
    %v3614 = vrot.slane %v2110, %v3613
    %s3616 = sor.u32 256, 2
    %3617 = vbcast.lane.b32.xlu0 %v3614, %s3616
    %v3618 = vpop.permute.xlu0 %3617
    %s3620 = sor.u32 256, 10
    %3621 = vbcast.lane.b32.xlu0 %v3614, %s3620
    %v3622 = vpop.permute.xlu0 %3621
    %v3623 = vlaneseq
    %v3624 = vshrl.u32 %v3623, 7
    %v3625 = vsub.s32 6, %v3624
    %v3626 = vrot.slane %v2110, %v3625
    %s3628 = sor.u32 256, 2
    %3629 = vbcast.lane.b32.xlu0 %v3626, %s3628
    %v3630 = vpop.permute.xlu0 %3629
    %s3632 = sor.u32 256, 10
    %3633 = vbcast.lane.b32.xlu0 %v3626, %s3632
    %v3634 = vpop.permute.xlu0 %3633
    %v3635 = vlaneseq
    %v3636 = vshrl.u32 %v3635, 7
    %v3637 = vsub.s32 7, %v3636
    %v3638 = vrot.slane %v2110, %v3637
    %s3640 = sor.u32 256, 2
    %3641 = vbcast.lane.b32.xlu0 %v3638, %s3640
    %v3642 = vpop.permute.xlu0 %3641
    %s3644 = sor.u32 256, 10
    %3645 = vbcast.lane.b32.xlu0 %v3638, %s3644
    %v3646 = vpop.permute.xlu0 %3645
    %v3647 = vsel %vm1846, %v2118, %v2886
    %v3648 = vsel %vm1846, %v2122, %v2890
    %v3649 = vsel %vm1846, %v2130, %v2898
    %v3650 = vsel %vm1846, %v2134, %v2902
    %v3651 = vsel %vm1846, %v2142, %v2910
    %v3652 = vsel %vm1846, %v2146, %v2914
    %v3653 = vsel %vm1846, %v2154, %v2922
    %v3654 = vsel %vm1846, %v2158, %v2926
    %v3655 = vsel %vm1846, %v2166, %v2934
    %v3656 = vsel %vm1846, %v2170, %v2938
    %v3657 = vsel %vm1846, %v2178, %v2946
    %v3658 = vsel %vm1846, %v2182, %v2950
    %v3659 = vsel %vm1846, %v2190, %v2958
    %v3660 = vsel %vm1846, %v2194, %v2962
    %v3661 = vsel %vm1846, %v2202, %v2970
    %v3662 = vsel %vm1846, %v2206, %v2974
    %v3663 = vsel %vm1846, %v2214, %v2982
    %v3664 = vsel %vm1846, %v2218, %v2986
    %v3665 = vsel %vm1846, %v2226, %v2994
    %v3666 = vsel %vm1846, %v2230, %v2998
    %v3667 = vsel %vm1846, %v2238, %v3006
    %v3668 = vsel %vm1846, %v2242, %v3010
    %v3669 = vsel %vm1846, %v2250, %v3018
    %v3670 = vsel %vm1846, %v2254, %v3022
    %v3671 = vsel %vm1846, %v2262, %v3030
    %v3672 = vsel %vm1846, %v2266, %v3034
    %v3673 = vsel %vm1846, %v2274, %v3042
    %v3674 = vsel %vm1846, %v2278, %v3046
    %v3675 = vsel %vm1846, %v2286, %v3054
    %v3676 = vsel %vm1846, %v2290, %v3058
    %v3677 = vsel %vm1846, %v2298, %v3066
    %v3678 = vsel %vm1846, %v2302, %v3070
    %v3679 = vsel %vm1846, %v2310, %v3078
    %v3680 = vsel %vm1846, %v2314, %v3082
    %v3681 = vsel %vm1846, %v2322, %v3090
    %v3682 = vsel %vm1846, %v2326, %v3094
    %v3683 = vsel %vm1846, %v2334, %v3102
    %v3684 = vsel %vm1846, %v2338, %v3106
    %v3685 = vsel %vm1846, %v2346, %v3114
    %v3686 = vsel %vm1846, %v2350, %v3118
    %v3687 = vsel %vm1846, %v2358, %v3126
    %v3688 = vsel %vm1846, %v2362, %v3130
    %v3689 = vsel %vm1846, %v2370, %v3138
    %v3690 = vsel %vm1846, %v2374, %v3142
    %v3691 = vsel %vm1846, %v2382, %v3150
    %v3692 = vsel %vm1846, %v2386, %v3154
    %v3693 = vsel %vm1846, %v2394, %v3162
    %v3694 = vsel %vm1846, %v2398, %v3166
    %v3695 = vsel %vm1846, %v2406, %v3174
    %v3696 = vsel %vm1846, %v2410, %v3178
    %v3697 = vsel %vm1846, %v2418, %v3186
    %v3698 = vsel %vm1846, %v2422, %v3190
    %v3699 = vsel %vm1846, %v2430, %v3198
    %v3700 = vsel %vm1846, %v2434, %v3202
    %v3701 = vsel %vm1846, %v2442, %v3210
    %v3702 = vsel %vm1846, %v2446, %v3214
    %v3703 = vsel %vm1846, %v2454, %v3222
    %v3704 = vsel %vm1846, %v2458, %v3226
    %v3705 = vsel %vm1846, %v2466, %v3234
    %v3706 = vsel %vm1846, %v2470, %v3238
    %v3707 = vsel %vm1846, %v2478, %v3246
    %v3708 = vsel %vm1846, %v2482, %v3250
    %v3709 = vsel %vm1846, %v2490, %v3258
    %v3710 = vsel %vm1846, %v2494, %v3262
    %v3711 = vsel %vm1846, %v2502, %v3270
    %v3712 = vsel %vm1846, %v2506, %v3274
    %v3713 = vsel %vm1846, %v2514, %v3282
    %v3714 = vsel %vm1846, %v2518, %v3286
    %v3715 = vsel %vm1846, %v2526, %v3294
    %v3716 = vsel %vm1846, %v2530, %v3298
    %v3717 = vsel %vm1846, %v2538, %v3306
    %v3718 = vsel %vm1846, %v2542, %v3310
    %v3719 = vsel %vm1846, %v2550, %v3318
    %v3720 = vsel %vm1846, %v2554, %v3322
    %v3721 = vsel %vm1846, %v2562, %v3330
    %v3722 = vsel %vm1846, %v2566, %v3334
    %v3723 = vsel %vm1846, %v2574, %v3342
    %v3724 = vsel %vm1846, %v2578, %v3346
    %v3725 = vsel %vm1846, %v2586, %v3354
    %v3726 = vsel %vm1846, %v2590, %v3358
    %v3727 = vsel %vm1846, %v2598, %v3366
    %v3728 = vsel %vm1846, %v2602, %v3370
    %v3729 = vsel %vm1846, %v2610, %v3378
    %v3730 = vsel %vm1846, %v2614, %v3382
    %v3731 = vsel %vm1846, %v2622, %v3390
    %v3732 = vsel %vm1846, %v2626, %v3394
    %v3733 = vsel %vm1846, %v2634, %v3402
    %v3734 = vsel %vm1846, %v2638, %v3406
    %v3735 = vsel %vm1846, %v2646, %v3414
    %v3736 = vsel %vm1846, %v2650, %v3418
    %v3737 = vsel %vm1846, %v2658, %v3426
    %v3738 = vsel %vm1846, %v2662, %v3430
    %v3739 = vsel %vm1846, %v2670, %v3438
    %v3740 = vsel %vm1846, %v2674, %v3442
    %v3741 = vsel %vm1846, %v2682, %v3450
    %v3742 = vsel %vm1846, %v2686, %v3454
    %v3743 = vsel %vm1846, %v2694, %v3462
    %v3744 = vsel %vm1846, %v2698, %v3466
    %v3745 = vsel %vm1846, %v2706, %v3474
    %v3746 = vsel %vm1846, %v2710, %v3478
    %v3747 = vsel %vm1846, %v2718, %v3486
    %v3748 = vsel %vm1846, %v2722, %v3490
    %v3749 = vsel %vm1846, %v2730, %v3498
    %v3750 = vsel %vm1846, %v2734, %v3502
    %v3751 = vsel %vm1846, %v2742, %v3510
    %v3752 = vsel %vm1846, %v2746, %v3514
    %v3753 = vsel %vm1846, %v2754, %v3522
    %v3754 = vsel %vm1846, %v2758, %v3526
    %v3755 = vsel %vm1846, %v2766, %v3534
    %v3756 = vsel %vm1846, %v2770, %v3538
    %v3757 = vsel %vm1846, %v2778, %v3546
    %v3758 = vsel %vm1846, %v2782, %v3550
    %v3759 = vsel %vm1846, %v2790, %v3558
    %v3760 = vsel %vm1846, %v2794, %v3562
    %v3761 = vsel %vm1846, %v2802, %v3570
    %v3762 = vsel %vm1846, %v2806, %v3574
    %v3763 = vsel %vm1846, %v2814, %v3582
    %v3764 = vsel %vm1846, %v2818, %v3586
    %v3765 = vsel %vm1846, %v2826, %v3594
    %v3766 = vsel %vm1846, %v2830, %v3598
    %v3767 = vsel %vm1846, %v2838, %v3606
    %v3768 = vsel %vm1846, %v2842, %v3610
    %v3769 = vsel %vm1846, %v2850, %v3618
    %v3770 = vsel %vm1846, %v2854, %v3622
    %v3771 = vsel %vm1846, %v2862, %v3630
    %v3772 = vsel %vm1846, %v2866, %v3634
    %v3773 = vsel %vm1846, %v2874, %v3642
    %v3774 = vsel %vm1846, %v2878, %v3646
    %v3775 = vcombine.low %v1847, %v1849
    %v3776 = vcombine.high %v1847, %v1849
    %v3778 = vunpack.c.l.s4 1983009808
    %v3779 = vunpack.c.0.s8 %v3778
    %v3780 = vlaneseq
    %v3781 = vshrl.u32 %v3780, 7
    %v3782 = vsub.s32 %v3779, %v3781
    %v3783 = vrot.slane %v3775, %v3782
    %v3785 = vunpack.c.l.s4 1983009808
    %v3786 = vunpack.c.0.s8 %v3785
    %v3787 = vlaneseq
    %v3788 = vshrl.u32 %v3787, 7
    %v3789 = vsub.s32 %v3786, %v3788
    %v3790 = vrot.slane %v3776, %v3789
    %v3791 = vcombine.low %v3647, %v3649
    %v3792 = vcombine.high %v3647, %v3649
    %v3794 = vunpack.c.l.s4 1983009808
    %v3795 = vunpack.c.0.s8 %v3794
    %v3796 = vlaneseq
    %v3797 = vshrl.u32 %v3796, 7
    %v3798 = vsub.s32 %v3795, %v3797
    %v3799 = vrot.slane %v3791, %v3798
    %v3801 = vunpack.c.l.s4 1983009808
    %v3802 = vunpack.c.0.s8 %v3801
    %v3803 = vlaneseq
    %v3804 = vshrl.u32 %v3803, 7
    %v3805 = vsub.s32 %v3802, %v3804
    %v3806 = vrot.slane %v3792, %v3805
    %v3807 = vcombine.low %v1851, %v1853
    %v3808 = vcombine.high %v1851, %v1853
    %v3810 = vunpack.c.l.s4 1983009808
    %v3811 = vunpack.c.0.s8 %v3810
    %v3812 = vlaneseq
    %v3813 = vshrl.u32 %v3812, 7
    %v3814 = vsub.s32 %v3811, %v3813
    %v3815 = vrot.slane %v3807, %v3814
    %v3817 = vunpack.c.l.s4 1983009808
    %v3818 = vunpack.c.0.s8 %v3817
    %v3819 = vlaneseq
    %v3820 = vshrl.u32 %v3819, 7
    %v3821 = vsub.s32 %v3818, %v3820
    %v3822 = vrot.slane %v3808, %v3821
    %v3823 = vcombine.low %v3651, %v3653
    %v3824 = vcombine.high %v3651, %v3653
    %v3826 = vunpack.c.l.s4 1983009808
    %v3827 = vunpack.c.0.s8 %v3826
    %v3828 = vlaneseq
    %v3829 = vshrl.u32 %v3828, 7
    %v3830 = vsub.s32 %v3827, %v3829
    %v3831 = vrot.slane %v3823, %v3830
    %v3833 = vunpack.c.l.s4 1983009808
    %v3834 = vunpack.c.0.s8 %v3833
    %v3835 = vlaneseq
    %v3836 = vshrl.u32 %v3835, 7
    %v3837 = vsub.s32 %v3834, %v3836
    %v3838 = vrot.slane %v3824, %v3837
    %v3839 = vcombine.low %v3783, %v3799
    %v3840 = vcombine.high %v3783, %v3799
    %v3842 = vunpack.c.l.s4 1934713408
    %v3843 = vunpack.c.0.s8 %v3842
    %v3844 = vlaneseq
    %v3845 = vshrl.u32 %v3844, 7
    %v3846 = vsub.s32 %v3843, %v3845
    %v3847 = vrot.slane %v3839, %v3846
    %v3849 = vunpack.c.l.s4 1934713408
    %v3850 = vunpack.c.0.s8 %v3849
    %v3851 = vlaneseq
    %v3852 = vshrl.u32 %v3851, 7
    %v3853 = vsub.s32 %v3850, %v3852
    %v3854 = vrot.slane %v3840, %v3853
    %v3855 = vcombine.low %v3790, %v3806
    %v3856 = vcombine.high %v3790, %v3806
    %v3858 = vunpack.c.l.s4 1934713408
    %v3859 = vunpack.c.0.s8 %v3858
    %v3860 = vlaneseq
    %v3861 = vshrl.u32 %v3860, 7
    %v3862 = vsub.s32 %v3859, %v3861
    %v3863 = vrot.slane %v3855, %v3862
    %v3865 = vunpack.c.l.s4 1934713408
    %v3866 = vunpack.c.0.s8 %v3865
    %v3867 = vlaneseq
    %v3868 = vshrl.u32 %v3867, 7
    %v3869 = vsub.s32 %v3866, %v3868
    %v3870 = vrot.slane %v3856, %v3869
    %v3871 = vcombine.low %v3815, %v3831
    %v3872 = vcombine.high %v3815, %v3831
    %v3874 = vunpack.c.l.s4 1934713408
    %v3875 = vunpack.c.0.s8 %v3874
    %v3876 = vlaneseq
    %v3877 = vshrl.u32 %v3876, 7
    %v3878 = vsub.s32 %v3875, %v3877
    %v3879 = vrot.slane %v3871, %v3878
    %v3881 = vunpack.c.l.s4 1934713408
    %v3882 = vunpack.c.0.s8 %v3881
    %v3883 = vlaneseq
    %v3884 = vshrl.u32 %v3883, 7
    %v3885 = vsub.s32 %v3882, %v3884
    %v3886 = vrot.slane %v3872, %v3885
    %v3887 = vcombine.low %v3822, %v3838
    %v3888 = vcombine.high %v3822, %v3838
    %v3890 = vunpack.c.l.s4 1934713408
    %v3891 = vunpack.c.0.s8 %v3890
    %v3892 = vlaneseq
    %v3893 = vshrl.u32 %v3892, 7
    %v3894 = vsub.s32 %v3891, %v3893
    %v3895 = vrot.slane %v3887, %v3894
    %v3897 = vunpack.c.l.s4 1934713408
    %v3898 = vunpack.c.0.s8 %v3897
    %v3899 = vlaneseq
    %v3900 = vshrl.u32 %v3899, 7
    %v3901 = vsub.s32 %v3898, %v3900
    %v3902 = vrot.slane %v3888, %v3901
    %v3903 = vcombine.low %v3847, %v3879
    %v3904 = vcombine.high %v3847, %v3879
    %v3905 = vcombine.low %v3854, %v3886
    %v3906 = vcombine.high %v3854, %v3886
    %v3907 = vcombine.low %v3863, %v3895
    %v3908 = vcombine.high %v3863, %v3895
    %v3909 = vcombine.low %v3870, %v3902
    %v3910 = vcombine.high %v3870, %v3902
    %v3911 = vcombine.low %v1855, %v1857
    %v3912 = vcombine.high %v1855, %v1857
    %v3914 = vunpack.c.l.s4 1983009808
    %v3915 = vunpack.c.0.s8 %v3914
    %v3916 = vlaneseq
    %v3917 = vshrl.u32 %v3916, 7
    %v3918 = vsub.s32 %v3915, %v3917
    %v3919 = vrot.slane %v3911, %v3918
    %v3921 = vunpack.c.l.s4 1983009808
    %v3922 = vunpack.c.0.s8 %v3921
    %v3923 = vlaneseq
    %v3924 = vshrl.u32 %v3923, 7
    %v3925 = vsub.s32 %v3922, %v3924
    %v3926 = vrot.slane %v3912, %v3925
    %v3927 = vcombine.low %v3655, %v3657
    %v3928 = vcombine.high %v3655, %v3657
    %v3930 = vunpack.c.l.s4 1983009808
    %v3931 = vunpack.c.0.s8 %v3930
    %v3932 = vlaneseq
    %v3933 = vshrl.u32 %v3932, 7
    %v3934 = vsub.s32 %v3931, %v3933
    %v3935 = vrot.slane %v3927, %v3934
    %v3937 = vunpack.c.l.s4 1983009808
    %v3938 = vunpack.c.0.s8 %v3937
    %v3939 = vlaneseq
    %v3940 = vshrl.u32 %v3939, 7
    %v3941 = vsub.s32 %v3938, %v3940
    %v3942 = vrot.slane %v3928, %v3941
    %v3943 = vcombine.low %v1859, %v1861
    %v3944 = vcombine.high %v1859, %v1861
    %v3946 = vunpack.c.l.s4 1983009808
    %v3947 = vunpack.c.0.s8 %v3946
    %v3948 = vlaneseq
    %v3949 = vshrl.u32 %v3948, 7
    %v3950 = vsub.s32 %v3947, %v3949
    %v3951 = vrot.slane %v3943, %v3950
    %v3953 = vunpack.c.l.s4 1983009808
    %v3954 = vunpack.c.0.s8 %v3953
    %v3955 = vlaneseq
    %v3956 = vshrl.u32 %v3955, 7
    %v3957 = vsub.s32 %v3954, %v3956
    %v3958 = vrot.slane %v3944, %v3957
    %v3959 = vcombine.low %v3659, %v3661
    %v3960 = vcombine.high %v3659, %v3661
    %v3962 = vunpack.c.l.s4 1983009808
    %v3963 = vunpack.c.0.s8 %v3962
    %v3964 = vlaneseq
    %v3965 = vshrl.u32 %v3964, 7
    %v3966 = vsub.s32 %v3963, %v3965
    %v3967 = vrot.slane %v3959, %v3966
    %v3969 = vunpack.c.l.s4 1983009808
    %v3970 = vunpack.c.0.s8 %v3969
    %v3971 = vlaneseq
    %v3972 = vshrl.u32 %v3971, 7
    %v3973 = vsub.s32 %v3970, %v3972
    %v3974 = vrot.slane %v3960, %v3973
    %v3975 = vcombine.low %v3919, %v3935
    %v3976 = vcombine.high %v3919, %v3935
    %v3978 = vunpack.c.l.s4 1934713408
    %v3979 = vunpack.c.0.s8 %v3978
    %v3980 = vlaneseq
    %v3981 = vshrl.u32 %v3980, 7
    %v3982 = vsub.s32 %v3979, %v3981
    %v3983 = vrot.slane %v3975, %v3982
    %v3985 = vunpack.c.l.s4 1934713408
    %v3986 = vunpack.c.0.s8 %v3985
    %v3987 = vlaneseq
    %v3988 = vshrl.u32 %v3987, 7
    %v3989 = vsub.s32 %v3986, %v3988
    %v3990 = vrot.slane %v3976, %v3989
    %v3991 = vcombine.low %v3926, %v3942
    %v3992 = vcombine.high %v3926, %v3942
    %v3994 = vunpack.c.l.s4 1934713408
    %v3995 = vunpack.c.0.s8 %v3994
    %v3996 = vlaneseq
    %v3997 = vshrl.u32 %v3996, 7
    %v3998 = vsub.s32 %v3995, %v3997
    %v3999 = vrot.slane %v3991, %v3998
    %v4001 = vunpack.c.l.s4 1934713408
    %v4002 = vunpack.c.0.s8 %v4001
    %v4003 = vlaneseq
    %v4004 = vshrl.u32 %v4003, 7
    %v4005 = vsub.s32 %v4002, %v4004
    %v4006 = vrot.slane %v3992, %v4005
    %v4007 = vcombine.low %v3951, %v3967
    %v4008 = vcombine.high %v3951, %v3967
    %v4010 = vunpack.c.l.s4 1934713408
    %v4011 = vunpack.c.0.s8 %v4010
    %v4012 = vlaneseq
    %v4013 = vshrl.u32 %v4012, 7
    %v4014 = vsub.s32 %v4011, %v4013
    %v4015 = vrot.slane %v4007, %v4014
    %v4017 = vunpack.c.l.s4 1934713408
    %v4018 = vunpack.c.0.s8 %v4017
    %v4019 = vlaneseq
    %v4020 = vshrl.u32 %v4019, 7
    %v4021 = vsub.s32 %v4018, %v4020
    %v4022 = vrot.slane %v4008, %v4021
    %v4023 = vcombine.low %v3958, %v3974
    %v4024 = vcombine.high %v3958, %v3974
    %v4026 = vunpack.c.l.s4 1934713408
    %v4027 = vunpack.c.0.s8 %v4026
    %v4028 = vlaneseq
    %v4029 = vshrl.u32 %v4028, 7
    %v4030 = vsub.s32 %v4027, %v4029
    %v4031 = vrot.slane %v4023, %v4030
    %v4033 = vunpack.c.l.s4 1934713408
    %v4034 = vunpack.c.0.s8 %v4033
    %v4035 = vlaneseq
    %v4036 = vshrl.u32 %v4035, 7
    %v4037 = vsub.s32 %v4034, %v4036
    %v4038 = vrot.slane %v4024, %v4037
    %v4039 = vcombine.low %v3983, %v4015
    %v4040 = vcombine.high %v3983, %v4015
    %v4041 = vcombine.low %v3990, %v4022
    %v4042 = vcombine.high %v3990, %v4022
    %v4043 = vcombine.low %v3999, %v4031
    %v4044 = vcombine.high %v3999, %v4031
    %v4045 = vcombine.low %v4006, %v4038
    %v4046 = vcombine.high %v4006, %v4038
    %v4047 = vcombine.low %v1863, %v1865
    %v4048 = vcombine.high %v1863, %v1865
    %v4050 = vunpack.c.l.s4 1983009808
    %v4051 = vunpack.c.0.s8 %v4050
    %v4052 = vlaneseq
    %v4053 = vshrl.u32 %v4052, 7
    %v4054 = vsub.s32 %v4051, %v4053
    %v4055 = vrot.slane %v4047, %v4054
    %v4057 = vunpack.c.l.s4 1983009808
    %v4058 = vunpack.c.0.s8 %v4057
    %v4059 = vlaneseq
    %v4060 = vshrl.u32 %v4059, 7
    %v4061 = vsub.s32 %v4058, %v4060
    %v4062 = vrot.slane %v4048, %v4061
    %v4063 = vcombine.low %v3663, %v3665
    %v4064 = vcombine.high %v3663, %v3665
    %v4066 = vunpack.c.l.s4 1983009808
    %v4067 = vunpack.c.0.s8 %v4066
    %v4068 = vlaneseq
    %v4069 = vshrl.u32 %v4068, 7
    %v4070 = vsub.s32 %v4067, %v4069
    %v4071 = vrot.slane %v4063, %v4070
    %v4073 = vunpack.c.l.s4 1983009808
    %v4074 = vunpack.c.0.s8 %v4073
    %v4075 = vlaneseq
    %v4076 = vshrl.u32 %v4075, 7
    %v4077 = vsub.s32 %v4074, %v4076
    %v4078 = vrot.slane %v4064, %v4077
    %v4079 = vcombine.low %v1867, %v1869
    %v4080 = vcombine.high %v1867, %v1869
    %v4082 = vunpack.c.l.s4 1983009808
    %v4083 = vunpack.c.0.s8 %v4082
    %v4084 = vlaneseq
    %v4085 = vshrl.u32 %v4084, 7
    %v4086 = vsub.s32 %v4083, %v4085
    %v4087 = vrot.slane %v4079, %v4086
    %v4089 = vunpack.c.l.s4 1983009808
    %v4090 = vunpack.c.0.s8 %v4089
    %v4091 = vlaneseq
    %v4092 = vshrl.u32 %v4091, 7
    %v4093 = vsub.s32 %v4090, %v4092
    %v4094 = vrot.slane %v4080, %v4093
    %v4095 = vcombine.low %v3667, %v3669
    %v4096 = vcombine.high %v3667, %v3669
    %v4098 = vunpack.c.l.s4 1983009808
    %v4099 = vunpack.c.0.s8 %v4098
    %v4100 = vlaneseq
    %v4101 = vshrl.u32 %v4100, 7
    %v4102 = vsub.s32 %v4099, %v4101
    %v4103 = vrot.slane %v4095, %v4102
    %v4105 = vunpack.c.l.s4 1983009808
    %v4106 = vunpack.c.0.s8 %v4105
    %v4107 = vlaneseq
    %v4108 = vshrl.u32 %v4107, 7
    %v4109 = vsub.s32 %v4106, %v4108
    %v4110 = vrot.slane %v4096, %v4109
    %v4111 = vcombine.low %v4055, %v4071
    %v4112 = vcombine.high %v4055, %v4071
    %v4114 = vunpack.c.l.s4 1934713408
    %v4115 = vunpack.c.0.s8 %v4114
    %v4116 = vlaneseq
    %v4117 = vshrl.u32 %v4116, 7
    %v4118 = vsub.s32 %v4115, %v4117
    %v4119 = vrot.slane %v4111, %v4118
    %v4121 = vunpack.c.l.s4 1934713408
    %v4122 = vunpack.c.0.s8 %v4121
    %v4123 = vlaneseq
    %v4124 = vshrl.u32 %v4123, 7
    %v4125 = vsub.s32 %v4122, %v4124
    %v4126 = vrot.slane %v4112, %v4125
    %v4127 = vcombine.low %v4062, %v4078
    %v4128 = vcombine.high %v4062, %v4078
    %v4130 = vunpack.c.l.s4 1934713408
    %v4131 = vunpack.c.0.s8 %v4130
    %v4132 = vlaneseq
    %v4133 = vshrl.u32 %v4132, 7
    %v4134 = vsub.s32 %v4131, %v4133
    %v4135 = vrot.slane %v4127, %v4134
    %v4137 = vunpack.c.l.s4 1934713408
    %v4138 = vunpack.c.0.s8 %v4137
    %v4139 = vlaneseq
    %v4140 = vshrl.u32 %v4139, 7
    %v4141 = vsub.s32 %v4138, %v4140
    %v4142 = vrot.slane %v4128, %v4141
    %v4143 = vcombine.low %v4087, %v4103
    %v4144 = vcombine.high %v4087, %v4103
    %v4146 = vunpack.c.l.s4 1934713408
    %v4147 = vunpack.c.0.s8 %v4146
    %v4148 = vlaneseq
    %v4149 = vshrl.u32 %v4148, 7
    %v4150 = vsub.s32 %v4147, %v4149
    %v4151 = vrot.slane %v4143, %v4150
    %v4153 = vunpack.c.l.s4 1934713408
    %v4154 = vunpack.c.0.s8 %v4153
    %v4155 = vlaneseq
    %v4156 = vshrl.u32 %v4155, 7
    %v4157 = vsub.s32 %v4154, %v4156
    %v4158 = vrot.slane %v4144, %v4157
    %v4159 = vcombine.low %v4094, %v4110
    %v4160 = vcombine.high %v4094, %v4110
    %v4162 = vunpack.c.l.s4 1934713408
    %v4163 = vunpack.c.0.s8 %v4162
    %v4164 = vlaneseq
    %v4165 = vshrl.u32 %v4164, 7
    %v4166 = vsub.s32 %v4163, %v4165
    %v4167 = vrot.slane %v4159, %v4166
    %v4169 = vunpack.c.l.s4 1934713408
    %v4170 = vunpack.c.0.s8 %v4169
    %v4171 = vlaneseq
    %v4172 = vshrl.u32 %v4171, 7
    %v4173 = vsub.s32 %v4170, %v4172
    %v4174 = vrot.slane %v4160, %v4173
    %v4175 = vcombine.low %v4119, %v4151
    %v4176 = vcombine.high %v4119, %v4151
    %v4177 = vcombine.low %v4126, %v4158
    %v4178 = vcombine.high %v4126, %v4158
    %v4179 = vcombine.low %v4135, %v4167
    %v4180 = vcombine.high %v4135, %v4167
    %v4181 = vcombine.low %v4142, %v4174
    %v4182 = vcombine.high %v4142, %v4174
    %v4183 = vcombine.low %v1871, %v1873
    %v4184 = vcombine.high %v1871, %v1873
    %v4186 = vunpack.c.l.s4 1983009808
    %v4187 = vunpack.c.0.s8 %v4186
    %v4188 = vlaneseq
    %v4189 = vshrl.u32 %v4188, 7
    %v4190 = vsub.s32 %v4187, %v4189
    %v4191 = vrot.slane %v4183, %v4190
    %v4193 = vunpack.c.l.s4 1983009808
    %v4194 = vunpack.c.0.s8 %v4193
    %v4195 = vlaneseq
    %v4196 = vshrl.u32 %v4195, 7
    %v4197 = vsub.s32 %v4194, %v4196
    %v4198 = vrot.slane %v4184, %v4197
    %v4199 = vcombine.low %v3671, %v3673
    %v4200 = vcombine.high %v3671, %v3673
    %v4202 = vunpack.c.l.s4 1983009808
    %v4203 = vunpack.c.0.s8 %v4202
    %v4204 = vlaneseq
    %v4205 = vshrl.u32 %v4204, 7
    %v4206 = vsub.s32 %v4203, %v4205
    %v4207 = vrot.slane %v4199, %v4206
    %v4209 = vunpack.c.l.s4 1983009808
    %v4210 = vunpack.c.0.s8 %v4209
    %v4211 = vlaneseq
    %v4212 = vshrl.u32 %v4211, 7
    %v4213 = vsub.s32 %v4210, %v4212
    %v4214 = vrot.slane %v4200, %v4213
    %v4215 = vcombine.low %v1875, %v1877
    %v4216 = vcombine.high %v1875, %v1877
    %v4218 = vunpack.c.l.s4 1983009808
    %v4219 = vunpack.c.0.s8 %v4218
    %v4220 = vlaneseq
    %v4221 = vshrl.u32 %v4220, 7
    %v4222 = vsub.s32 %v4219, %v4221
    %v4223 = vrot.slane %v4215, %v4222
    %v4225 = vunpack.c.l.s4 1983009808
    %v4226 = vunpack.c.0.s8 %v4225
    %v4227 = vlaneseq
    %v4228 = vshrl.u32 %v4227, 7
    %v4229 = vsub.s32 %v4226, %v4228
    %v4230 = vrot.slane %v4216, %v4229
    %v4231 = vcombine.low %v3675, %v3677
    %v4232 = vcombine.high %v3675, %v3677
    %v4234 = vunpack.c.l.s4 1983009808
    %v4235 = vunpack.c.0.s8 %v4234
    %v4236 = vlaneseq
    %v4237 = vshrl.u32 %v4236, 7
    %v4238 = vsub.s32 %v4235, %v4237
    %v4239 = vrot.slane %v4231, %v4238
    %v4241 = vunpack.c.l.s4 1983009808
    %v4242 = vunpack.c.0.s8 %v4241
    %v4243 = vlaneseq
    %v4244 = vshrl.u32 %v4243, 7
    %v4245 = vsub.s32 %v4242, %v4244
    %v4246 = vrot.slane %v4232, %v4245
    %v4247 = vcombine.low %v4191, %v4207
    %v4248 = vcombine.high %v4191, %v4207
    %v4250 = vunpack.c.l.s4 1934713408
    %v4251 = vunpack.c.0.s8 %v4250
    %v4252 = vlaneseq
    %v4253 = vshrl.u32 %v4252, 7
    %v4254 = vsub.s32 %v4251, %v4253
    %v4255 = vrot.slane %v4247, %v4254
    %v4257 = vunpack.c.l.s4 1934713408
    %v4258 = vunpack.c.0.s8 %v4257
    %v4259 = vlaneseq
    %v4260 = vshrl.u32 %v4259, 7
    %v4261 = vsub.s32 %v4258, %v4260
    %v4262 = vrot.slane %v4248, %v4261
    %v4263 = vcombine.low %v4198, %v4214
    %v4264 = vcombine.high %v4198, %v4214
    %v4266 = vunpack.c.l.s4 1934713408
    %v4267 = vunpack.c.0.s8 %v4266
    %v4268 = vlaneseq
    %v4269 = vshrl.u32 %v4268, 7
    %v4270 = vsub.s32 %v4267, %v4269
    %v4271 = vrot.slane %v4263, %v4270
    %v4273 = vunpack.c.l.s4 1934713408
    %v4274 = vunpack.c.0.s8 %v4273
    %v4275 = vlaneseq
    %v4276 = vshrl.u32 %v4275, 7
    %v4277 = vsub.s32 %v4274, %v4276
    %v4278 = vrot.slane %v4264, %v4277
    %v4279 = vcombine.low %v4223, %v4239
    %v4280 = vcombine.high %v4223, %v4239
    %v4282 = vunpack.c.l.s4 1934713408
    %v4283 = vunpack.c.0.s8 %v4282
    %v4284 = vlaneseq
    %v4285 = vshrl.u32 %v4284, 7
    %v4286 = vsub.s32 %v4283, %v4285
    %v4287 = vrot.slane %v4279, %v4286
    %v4289 = vunpack.c.l.s4 1934713408
    %v4290 = vunpack.c.0.s8 %v4289
    %v4291 = vlaneseq
    %v4292 = vshrl.u32 %v4291, 7
    %v4293 = vsub.s32 %v4290, %v4292
    %v4294 = vrot.slane %v4280, %v4293
    %v4295 = vcombine.low %v4230, %v4246
    %v4296 = vcombine.high %v4230, %v4246
    %v4298 = vunpack.c.l.s4 1934713408
    %v4299 = vunpack.c.0.s8 %v4298
    %v4300 = vlaneseq
    %v4301 = vshrl.u32 %v4300, 7
    %v4302 = vsub.s32 %v4299, %v4301
    %v4303 = vrot.slane %v4295, %v4302
    %v4305 = vunpack.c.l.s4 1934713408
    %v4306 = vunpack.c.0.s8 %v4305
    %v4307 = vlaneseq
    %v4308 = vshrl.u32 %v4307, 7
    %v4309 = vsub.s32 %v4306, %v4308
    %v4310 = vrot.slane %v4296, %v4309
    %v4311 = vcombine.low %v4255, %v4287
    %v4312 = vcombine.high %v4255, %v4287
    %v4313 = vcombine.low %v4262, %v4294
    %v4314 = vcombine.high %v4262, %v4294
    %v4315 = vcombine.low %v4271, %v4303
    %v4316 = vcombine.high %v4271, %v4303
    %v4317 = vcombine.low %v4278, %v4310
    %v4318 = vcombine.high %v4278, %v4310
    %v4319 = vcombine.low %v1848, %v1850
    %v4320 = vcombine.high %v1848, %v1850
    %v4322 = vunpack.c.l.s4 1983009808
    %v4323 = vunpack.c.0.s8 %v4322
    %v4324 = vlaneseq
    %v4325 = vshrl.u32 %v4324, 7
    %v4326 = vsub.s32 %v4323, %v4325
    %v4327 = vrot.slane %v4319, %v4326
    %v4329 = vunpack.c.l.s4 1983009808
    %v4330 = vunpack.c.0.s8 %v4329
    %v4331 = vlaneseq
    %v4332 = vshrl.u32 %v4331, 7
    %v4333 = vsub.s32 %v4330, %v4332
    %v4334 = vrot.slane %v4320, %v4333
    %v4335 = vcombine.low %v3648, %v3650
    %v4336 = vcombine.high %v3648, %v3650
    %v4338 = vunpack.c.l.s4 1983009808
    %v4339 = vunpack.c.0.s8 %v4338
    %v4340 = vlaneseq
    %v4341 = vshrl.u32 %v4340, 7
    %v4342 = vsub.s32 %v4339, %v4341
    %v4343 = vrot.slane %v4335, %v4342
    %v4345 = vunpack.c.l.s4 1983009808
    %v4346 = vunpack.c.0.s8 %v4345
    %v4347 = vlaneseq
    %v4348 = vshrl.u32 %v4347, 7
    %v4349 = vsub.s32 %v4346, %v4348
    %v4350 = vrot.slane %v4336, %v4349
    %v4351 = vcombine.low %v1852, %v1854
    %v4352 = vcombine.high %v1852, %v1854
    %v4354 = vunpack.c.l.s4 1983009808
    %v4355 = vunpack.c.0.s8 %v4354
    %v4356 = vlaneseq
    %v4357 = vshrl.u32 %v4356, 7
    %v4358 = vsub.s32 %v4355, %v4357
    %v4359 = vrot.slane %v4351, %v4358
    %v4361 = vunpack.c.l.s4 1983009808
    %v4362 = vunpack.c.0.s8 %v4361
    %v4363 = vlaneseq
    %v4364 = vshrl.u32 %v4363, 7
    %v4365 = vsub.s32 %v4362, %v4364
    %v4366 = vrot.slane %v4352, %v4365
    %v4367 = vcombine.low %v3652, %v3654
    %v4368 = vcombine.high %v3652, %v3654
    %v4370 = vunpack.c.l.s4 1983009808
    %v4371 = vunpack.c.0.s8 %v4370
    %v4372 = vlaneseq
    %v4373 = vshrl.u32 %v4372, 7
    %v4374 = vsub.s32 %v4371, %v4373
    %v4375 = vrot.slane %v4367, %v4374
    %v4377 = vunpack.c.l.s4 1983009808
    %v4378 = vunpack.c.0.s8 %v4377
    %v4379 = vlaneseq
    %v4380 = vshrl.u32 %v4379, 7
    %v4381 = vsub.s32 %v4378, %v4380
    %v4382 = vrot.slane %v4368, %v4381
    %v4383 = vcombine.low %v4327, %v4343
    %v4384 = vcombine.high %v4327, %v4343
    %v4386 = vunpack.c.l.s4 1934713408
    %v4387 = vunpack.c.0.s8 %v4386
    %v4388 = vlaneseq
    %v4389 = vshrl.u32 %v4388, 7
    %v4390 = vsub.s32 %v4387, %v4389
    %v4391 = vrot.slane %v4383, %v4390
    %v4393 = vunpack.c.l.s4 1934713408
    %v4394 = vunpack.c.0.s8 %v4393
    %v4395 = vlaneseq
    %v4396 = vshrl.u32 %v4395, 7
    %v4397 = vsub.s32 %v4394, %v4396
    %v4398 = vrot.slane %v4384, %v4397
    %v4399 = vcombine.low %v4334, %v4350
    %v4400 = vcombine.high %v4334, %v4350
    %v4402 = vunpack.c.l.s4 1934713408
    %v4403 = vunpack.c.0.s8 %v4402
    %v4404 = vlaneseq
    %v4405 = vshrl.u32 %v4404, 7
    %v4406 = vsub.s32 %v4403, %v4405
    %v4407 = vrot.slane %v4399, %v4406
    %v4409 = vunpack.c.l.s4 1934713408
    %v4410 = vunpack.c.0.s8 %v4409
    %v4411 = vlaneseq
    %v4412 = vshrl.u32 %v4411, 7
    %v4413 = vsub.s32 %v4410, %v4412
    %v4414 = vrot.slane %v4400, %v4413
    %v4415 = vcombine.low %v4359, %v4375
    %v4416 = vcombine.high %v4359, %v4375
    %v4418 = vunpack.c.l.s4 1934713408
    %v4419 = vunpack.c.0.s8 %v4418
    %v4420 = vlaneseq
    %v4421 = vshrl.u32 %v4420, 7
    %v4422 = vsub.s32 %v4419, %v4421
    %v4423 = vrot.slane %v4415, %v4422
    %v4425 = vunpack.c.l.s4 1934713408
    %v4426 = vunpack.c.0.s8 %v4425
    %v4427 = vlaneseq
    %v4428 = vshrl.u32 %v4427, 7
    %v4429 = vsub.s32 %v4426, %v4428
    %v4430 = vrot.slane %v4416, %v4429
    %v4431 = vcombine.low %v4366, %v4382
    %v4432 = vcombine.high %v4366, %v4382
    %v4434 = vunpack.c.l.s4 1934713408
    %v4435 = vunpack.c.0.s8 %v4434
    %v4436 = vlaneseq
    %v4437 = vshrl.u32 %v4436, 7
    %v4438 = vsub.s32 %v4435, %v4437
    %v4439 = vrot.slane %v4431, %v4438
    %v4441 = vunpack.c.l.s4 1934713408
    %v4442 = vunpack.c.0.s8 %v4441
    %v4443 = vlaneseq
    %v4444 = vshrl.u32 %v4443, 7
    %v4445 = vsub.s32 %v4442, %v4444
    %v4446 = vrot.slane %v4432, %v4445
    %v4447 = vcombine.low %v4391, %v4423
    %v4448 = vcombine.high %v4391, %v4423
    %v4449 = vcombine.low %v4398, %v4430
    %v4450 = vcombine.high %v4398, %v4430
    %v4451 = vcombine.low %v4407, %v4439
    %v4452 = vcombine.high %v4407, %v4439
    %v4453 = vcombine.low %v4414, %v4446
    %v4454 = vcombine.high %v4414, %v4446
    %v4455 = vcombine.low %v1856, %v1858
    %v4456 = vcombine.high %v1856, %v1858
    %v4458 = vunpack.c.l.s4 1983009808
    %v4459 = vunpack.c.0.s8 %v4458
    %v4460 = vlaneseq
    %v4461 = vshrl.u32 %v4460, 7
    %v4462 = vsub.s32 %v4459, %v4461
    %v4463 = vrot.slane %v4455, %v4462
    %v4465 = vunpack.c.l.s4 1983009808
    %v4466 = vunpack.c.0.s8 %v4465
    %v4467 = vlaneseq
    %v4468 = vshrl.u32 %v4467, 7
    %v4469 = vsub.s32 %v4466, %v4468
    %v4470 = vrot.slane %v4456, %v4469
    %v4471 = vcombine.low %v3656, %v3658
    %v4472 = vcombine.high %v3656, %v3658
    %v4474 = vunpack.c.l.s4 1983009808
    %v4475 = vunpack.c.0.s8 %v4474
    %v4476 = vlaneseq
    %v4477 = vshrl.u32 %v4476, 7
    %v4478 = vsub.s32 %v4475, %v4477
    %v4479 = vrot.slane %v4471, %v4478
    %v4481 = vunpack.c.l.s4 1983009808
    %v4482 = vunpack.c.0.s8 %v4481
    %v4483 = vlaneseq
    %v4484 = vshrl.u32 %v4483, 7
    %v4485 = vsub.s32 %v4482, %v4484
    %v4486 = vrot.slane %v4472, %v4485
    %v4487 = vcombine.low %v1860, %v1862
    %v4488 = vcombine.high %v1860, %v1862
    %v4490 = vunpack.c.l.s4 1983009808
    %v4491 = vunpack.c.0.s8 %v4490
    %v4492 = vlaneseq
    %v4493 = vshrl.u32 %v4492, 7
    %v4494 = vsub.s32 %v4491, %v4493
    %v4495 = vrot.slane %v4487, %v4494
    %v4497 = vunpack.c.l.s4 1983009808
    %v4498 = vunpack.c.0.s8 %v4497
    %v4499 = vlaneseq
    %v4500 = vshrl.u32 %v4499, 7
    %v4501 = vsub.s32 %v4498, %v4500
    %v4502 = vrot.slane %v4488, %v4501
    %v4503 = vcombine.low %v3660, %v3662
    %v4504 = vcombine.high %v3660, %v3662
    %v4506 = vunpack.c.l.s4 1983009808
    %v4507 = vunpack.c.0.s8 %v4506
    %v4508 = vlaneseq
    %v4509 = vshrl.u32 %v4508, 7
    %v4510 = vsub.s32 %v4507, %v4509
    %v4511 = vrot.slane %v4503, %v4510
    %v4513 = vunpack.c.l.s4 1983009808
    %v4514 = vunpack.c.0.s8 %v4513
    %v4515 = vlaneseq
    %v4516 = vshrl.u32 %v4515, 7
    %v4517 = vsub.s32 %v4514, %v4516
    %v4518 = vrot.slane %v4504, %v4517
    %v4519 = vcombine.low %v4463, %v4479
    %v4520 = vcombine.high %v4463, %v4479
    %v4522 = vunpack.c.l.s4 1934713408
    %v4523 = vunpack.c.0.s8 %v4522
    %v4524 = vlaneseq
    %v4525 = vshrl.u32 %v4524, 7
    %v4526 = vsub.s32 %v4523, %v4525
    %v4527 = vrot.slane %v4519, %v4526
    %v4529 = vunpack.c.l.s4 1934713408
    %v4530 = vunpack.c.0.s8 %v4529
    %v4531 = vlaneseq
    %v4532 = vshrl.u32 %v4531, 7
    %v4533 = vsub.s32 %v4530, %v4532
    %v4534 = vrot.slane %v4520, %v4533
    %v4535 = vcombine.low %v4470, %v4486
    %v4536 = vcombine.high %v4470, %v4486
    %v4538 = vunpack.c.l.s4 1934713408
    %v4539 = vunpack.c.0.s8 %v4538
    %v4540 = vlaneseq
    %v4541 = vshrl.u32 %v4540, 7
    %v4542 = vsub.s32 %v4539, %v4541
    %v4543 = vrot.slane %v4535, %v4542
    %v4545 = vunpack.c.l.s4 1934713408
    %v4546 = vunpack.c.0.s8 %v4545
    %v4547 = vlaneseq
    %v4548 = vshrl.u32 %v4547, 7
    %v4549 = vsub.s32 %v4546, %v4548
    %v4550 = vrot.slane %v4536, %v4549
    %v4551 = vcombine.low %v4495, %v4511
    %v4552 = vcombine.high %v4495, %v4511
    %v4554 = vunpack.c.l.s4 1934713408
    %v4555 = vunpack.c.0.s8 %v4554
    %v4556 = vlaneseq
    %v4557 = vshrl.u32 %v4556, 7
    %v4558 = vsub.s32 %v4555, %v4557
    %v4559 = vrot.slane %v4551, %v4558
    %v4561 = vunpack.c.l.s4 1934713408
    %v4562 = vunpack.c.0.s8 %v4561
    %v4563 = vlaneseq
    %v4564 = vshrl.u32 %v4563, 7
    %v4565 = vsub.s32 %v4562, %v4564
    %v4566 = vrot.slane %v4552, %v4565
    %v4567 = vcombine.low %v4502, %v4518
    %v4568 = vcombine.high %v4502, %v4518
    %v4570 = vunpack.c.l.s4 1934713408
    %v4571 = vunpack.c.0.s8 %v4570
    %v4572 = vlaneseq
    %v4573 = vshrl.u32 %v4572, 7
    %v4574 = vsub.s32 %v4571, %v4573
    %v4575 = vrot.slane %v4567, %v4574
    %v4577 = vunpack.c.l.s4 1934713408
    %v4578 = vunpack.c.0.s8 %v4577
    %v4579 = vlaneseq
    %v4580 = vshrl.u32 %v4579, 7
    %v4581 = vsub.s32 %v4578, %v4580
    %v4582 = vrot.slane %v4568, %v4581
    %v4583 = vcombine.low %v4527, %v4559
    %v4584 = vcombine.high %v4527, %v4559
    %v4585 = vcombine.low %v4534, %v4566
    %v4586 = vcombine.high %v4534, %v4566
    %v4587 = vcombine.low %v4543, %v4575
    %v4588 = vcombine.high %v4543, %v4575
    %v4589 = vcombine.low %v4550, %v4582
    %v4590 = vcombine.high %v4550, %v4582
    %v4591 = vcombine.low %v1864, %v1866
    %v4592 = vcombine.high %v1864, %v1866
    %v4594 = vunpack.c.l.s4 1983009808
    %v4595 = vunpack.c.0.s8 %v4594
    %v4596 = vlaneseq
    %v4597 = vshrl.u32 %v4596, 7
    %v4598 = vsub.s32 %v4595, %v4597
    %v4599 = vrot.slane %v4591, %v4598
    %v4601 = vunpack.c.l.s4 1983009808
    %v4602 = vunpack.c.0.s8 %v4601
    %v4603 = vlaneseq
    %v4604 = vshrl.u32 %v4603, 7
    %v4605 = vsub.s32 %v4602, %v4604
    %v4606 = vrot.slane %v4592, %v4605
    %v4607 = vcombine.low %v3664, %v3666
    %v4608 = vcombine.high %v3664, %v3666
    %v4610 = vunpack.c.l.s4 1983009808
    %v4611 = vunpack.c.0.s8 %v4610
    %v4612 = vlaneseq
    %v4613 = vshrl.u32 %v4612, 7
    %v4614 = vsub.s32 %v4611, %v4613
    %v4615 = vrot.slane %v4607, %v4614
    %v4617 = vunpack.c.l.s4 1983009808
    %v4618 = vunpack.c.0.s8 %v4617
    %v4619 = vlaneseq
    %v4620 = vshrl.u32 %v4619, 7
    %v4621 = vsub.s32 %v4618, %v4620
    %v4622 = vrot.slane %v4608, %v4621
    %v4623 = vcombine.low %v1868, %v1870
    %v4624 = vcombine.high %v1868, %v1870
    %v4626 = vunpack.c.l.s4 1983009808
    %v4627 = vunpack.c.0.s8 %v4626
    %v4628 = vlaneseq
    %v4629 = vshrl.u32 %v4628, 7
    %v4630 = vsub.s32 %v4627, %v4629
    %v4631 = vrot.slane %v4623, %v4630
    %v4633 = vunpack.c.l.s4 1983009808
    %v4634 = vunpack.c.0.s8 %v4633
    %v4635 = vlaneseq
    %v4636 = vshrl.u32 %v4635, 7
    %v4637 = vsub.s32 %v4634, %v4636
    %v4638 = vrot.slane %v4624, %v4637
    %v4639 = vcombine.low %v3668, %v3670
    %v4640 = vcombine.high %v3668, %v3670
    %v4642 = vunpack.c.l.s4 1983009808
    %v4643 = vunpack.c.0.s8 %v4642
    %v4644 = vlaneseq
    %v4645 = vshrl.u32 %v4644, 7
    %v4646 = vsub.s32 %v4643, %v4645
    %v4647 = vrot.slane %v4639, %v4646
    %v4649 = vunpack.c.l.s4 1983009808
    %v4650 = vunpack.c.0.s8 %v4649
    %v4651 = vlaneseq
    %v4652 = vshrl.u32 %v4651, 7
    %v4653 = vsub.s32 %v4650, %v4652
    %v4654 = vrot.slane %v4640, %v4653
    %v4655 = vcombine.low %v4599, %v4615
    %v4656 = vcombine.high %v4599, %v4615
    %v4658 = vunpack.c.l.s4 1934713408
    %v4659 = vunpack.c.0.s8 %v4658
    %v4660 = vlaneseq
    %v4661 = vshrl.u32 %v4660, 7
    %v4662 = vsub.s32 %v4659, %v4661
    %v4663 = vrot.slane %v4655, %v4662
    %v4665 = vunpack.c.l.s4 1934713408
    %v4666 = vunpack.c.0.s8 %v4665
    %v4667 = vlaneseq
    %v4668 = vshrl.u32 %v4667, 7
    %v4669 = vsub.s32 %v4666, %v4668
    %v4670 = vrot.slane %v4656, %v4669
    %v4671 = vcombine.low %v4606, %v4622
    %v4672 = vcombine.high %v4606, %v4622
    %v4674 = vunpack.c.l.s4 1934713408
    %v4675 = vunpack.c.0.s8 %v4674
    %v4676 = vlaneseq
    %v4677 = vshrl.u32 %v4676, 7
    %v4678 = vsub.s32 %v4675, %v4677
    %v4679 = vrot.slane %v4671, %v4678
    %v4681 = vunpack.c.l.s4 1934713408
    %v4682 = vunpack.c.0.s8 %v4681
    %v4683 = vlaneseq
    %v4684 = vshrl.u32 %v4683, 7
    %v4685 = vsub.s32 %v4682, %v4684
    %v4686 = vrot.slane %v4672, %v4685
    %v4687 = vcombine.low %v4631, %v4647
    %v4688 = vcombine.high %v4631, %v4647
    %v4690 = vunpack.c.l.s4 1934713408
    %v4691 = vunpack.c.0.s8 %v4690
    %v4692 = vlaneseq
    %v4693 = vshrl.u32 %v4692, 7
    %v4694 = vsub.s32 %v4691, %v4693
    %v4695 = vrot.slane %v4687, %v4694
    %v4697 = vunpack.c.l.s4 1934713408
    %v4698 = vunpack.c.0.s8 %v4697
    %v4699 = vlaneseq
    %v4700 = vshrl.u32 %v4699, 7
    %v4701 = vsub.s32 %v4698, %v4700
    %v4702 = vrot.slane %v4688, %v4701
    %v4703 = vcombine.low %v4638, %v4654
    %v4704 = vcombine.high %v4638, %v4654
    %v4706 = vunpack.c.l.s4 1934713408
    %v4707 = vunpack.c.0.s8 %v4706
    %v4708 = vlaneseq
    %v4709 = vshrl.u32 %v4708, 7
    %v4710 = vsub.s32 %v4707, %v4709
    %v4711 = vrot.slane %v4703, %v4710
    %v4713 = vunpack.c.l.s4 1934713408
    %v4714 = vunpack.c.0.s8 %v4713
    %v4715 = vlaneseq
    %v4716 = vshrl.u32 %v4715, 7
    %v4717 = vsub.s32 %v4714, %v4716
    %v4718 = vrot.slane %v4704, %v4717
    %v4719 = vcombine.low %v4663, %v4695
    %v4720 = vcombine.high %v4663, %v4695
    %v4721 = vcombine.low %v4670, %v4702
    %v4722 = vcombine.high %v4670, %v4702
    %v4723 = vcombine.low %v4679, %v4711
    %v4724 = vcombine.high %v4679, %v4711
    %v4725 = vcombine.low %v4686, %v4718
    %v4726 = vcombine.high %v4686, %v4718
    %v4727 = vcombine.low %v1872, %v1874
    %v4728 = vcombine.high %v1872, %v1874
    %v4730 = vunpack.c.l.s4 1983009808
    %v4731 = vunpack.c.0.s8 %v4730
    %v4732 = vlaneseq
    %v4733 = vshrl.u32 %v4732, 7
    %v4734 = vsub.s32 %v4731, %v4733
    %v4735 = vrot.slane %v4727, %v4734
    %v4737 = vunpack.c.l.s4 1983009808
    %v4738 = vunpack.c.0.s8 %v4737
    %v4739 = vlaneseq
    %v4740 = vshrl.u32 %v4739, 7
    %v4741 = vsub.s32 %v4738, %v4740
    %v4742 = vrot.slane %v4728, %v4741
    %v4743 = vcombine.low %v3672, %v3674
    %v4744 = vcombine.high %v3672, %v3674
    %v4746 = vunpack.c.l.s4 1983009808
    %v4747 = vunpack.c.0.s8 %v4746
    %v4748 = vlaneseq
    %v4749 = vshrl.u32 %v4748, 7
    %v4750 = vsub.s32 %v4747, %v4749
    %v4751 = vrot.slane %v4743, %v4750
    %v4753 = vunpack.c.l.s4 1983009808
    %v4754 = vunpack.c.0.s8 %v4753
    %v4755 = vlaneseq
    %v4756 = vshrl.u32 %v4755, 7
    %v4757 = vsub.s32 %v4754, %v4756
    %v4758 = vrot.slane %v4744, %v4757
    %v4759 = vcombine.low %v1876, %v1878
    %v4760 = vcombine.high %v1876, %v1878
    %v4762 = vunpack.c.l.s4 1983009808
    %v4763 = vunpack.c.0.s8 %v4762
    %v4764 = vlaneseq
    %v4765 = vshrl.u32 %v4764, 7
    %v4766 = vsub.s32 %v4763, %v4765
    %v4767 = vrot.slane %v4759, %v4766
    %v4769 = vunpack.c.l.s4 1983009808
    %v4770 = vunpack.c.0.s8 %v4769
    %v4771 = vlaneseq
    %v4772 = vshrl.u32 %v4771, 7
    %v4773 = vsub.s32 %v4770, %v4772
    %v4774 = vrot.slane %v4760, %v4773
    %v4775 = vcombine.low %v3676, %v3678
    %v4776 = vcombine.high %v3676, %v3678
    %v4778 = vunpack.c.l.s4 1983009808
    %v4779 = vunpack.c.0.s8 %v4778
    %v4780 = vlaneseq
    %v4781 = vshrl.u32 %v4780, 7
    %v4782 = vsub.s32 %v4779, %v4781
    %v4783 = vrot.slane %v4775, %v4782
    %v4785 = vunpack.c.l.s4 1983009808
    %v4786 = vunpack.c.0.s8 %v4785
    %v4787 = vlaneseq
    %v4788 = vshrl.u32 %v4787, 7
    %v4789 = vsub.s32 %v4786, %v4788
    %v4790 = vrot.slane %v4776, %v4789
    %v4791 = vcombine.low %v4735, %v4751
    %v4792 = vcombine.high %v4735, %v4751
    %v4794 = vunpack.c.l.s4 1934713408
    %v4795 = vunpack.c.0.s8 %v4794
    %v4796 = vlaneseq
    %v4797 = vshrl.u32 %v4796, 7
    %v4798 = vsub.s32 %v4795, %v4797
    %v4799 = vrot.slane %v4791, %v4798
    %v4801 = vunpack.c.l.s4 1934713408
    %v4802 = vunpack.c.0.s8 %v4801
    %v4803 = vlaneseq
    %v4804 = vshrl.u32 %v4803, 7
    %v4805 = vsub.s32 %v4802, %v4804
    %v4806 = vrot.slane %v4792, %v4805
    %v4807 = vcombine.low %v4742, %v4758
    %v4808 = vcombine.high %v4742, %v4758
    %v4810 = vunpack.c.l.s4 1934713408
    %v4811 = vunpack.c.0.s8 %v4810
    %v4812 = vlaneseq
    %v4813 = vshrl.u32 %v4812, 7
    %v4814 = vsub.s32 %v4811, %v4813
    %v4815 = vrot.slane %v4807, %v4814
    %v4817 = vunpack.c.l.s4 1934713408
    %v4818 = vunpack.c.0.s8 %v4817
    %v4819 = vlaneseq
    %v4820 = vshrl.u32 %v4819, 7
    %v4821 = vsub.s32 %v4818, %v4820
    %v4822 = vrot.slane %v4808, %v4821
    %v4823 = vcombine.low %v4767, %v4783
    %v4824 = vcombine.high %v4767, %v4783
    %v4826 = vunpack.c.l.s4 1934713408
    %v4827 = vunpack.c.0.s8 %v4826
    %v4828 = vlaneseq
    %v4829 = vshrl.u32 %v4828, 7
    %v4830 = vsub.s32 %v4827, %v4829
    %v4831 = vrot.slane %v4823, %v4830
    %v4833 = vunpack.c.l.s4 1934713408
    %v4834 = vunpack.c.0.s8 %v4833
    %v4835 = vlaneseq
    %v4836 = vshrl.u32 %v4835, 7
    %v4837 = vsub.s32 %v4834, %v4836
    %v4838 = vrot.slane %v4824, %v4837
    %v4839 = vcombine.low %v4774, %v4790
    %v4840 = vcombine.high %v4774, %v4790
    %v4842 = vunpack.c.l.s4 1934713408
    %v4843 = vunpack.c.0.s8 %v4842
    %v4844 = vlaneseq
    %v4845 = vshrl.u32 %v4844, 7
    %v4846 = vsub.s32 %v4843, %v4845
    %v4847 = vrot.slane %v4839, %v4846
    %v4849 = vunpack.c.l.s4 1934713408
    %v4850 = vunpack.c.0.s8 %v4849
    %v4851 = vlaneseq
    %v4852 = vshrl.u32 %v4851, 7
    %v4853 = vsub.s32 %v4850, %v4852
    %v4854 = vrot.slane %v4840, %v4853
    %v4855 = vcombine.low %v4799, %v4831
    %v4856 = vcombine.high %v4799, %v4831
    %v4857 = vcombine.low %v4806, %v4838
    %v4858 = vcombine.high %v4806, %v4838
    %v4859 = vcombine.low %v4815, %v4847
    %v4860 = vcombine.high %v4815, %v4847
    %v4861 = vcombine.low %v4822, %v4854
    %v4862 = vcombine.high %v4822, %v4854
    %v4863 = vcombine.low %v1879, %v1881
    %v4864 = vcombine.high %v1879, %v1881
    %v4866 = vunpack.c.l.s4 1983009808
    %v4867 = vunpack.c.0.s8 %v4866
    %v4868 = vlaneseq
    %v4869 = vshrl.u32 %v4868, 7
    %v4870 = vsub.s32 %v4867, %v4869
    %v4871 = vrot.slane %v4863, %v4870
    %v4873 = vunpack.c.l.s4 1983009808
    %v4874 = vunpack.c.0.s8 %v4873
    %v4875 = vlaneseq
    %v4876 = vshrl.u32 %v4875, 7
    %v4877 = vsub.s32 %v4874, %v4876
    %v4878 = vrot.slane %v4864, %v4877
    %v4879 = vcombine.low %v3679, %v3681
    %v4880 = vcombine.high %v3679, %v3681
    %v4882 = vunpack.c.l.s4 1983009808
    %v4883 = vunpack.c.0.s8 %v4882
    %v4884 = vlaneseq
    %v4885 = vshrl.u32 %v4884, 7
    %v4886 = vsub.s32 %v4883, %v4885
    %v4887 = vrot.slane %v4879, %v4886
    %v4889 = vunpack.c.l.s4 1983009808
    %v4890 = vunpack.c.0.s8 %v4889
    %v4891 = vlaneseq
    %v4892 = vshrl.u32 %v4891, 7
    %v4893 = vsub.s32 %v4890, %v4892
    %v4894 = vrot.slane %v4880, %v4893
    %v4895 = vcombine.low %v1883, %v1885
    %v4896 = vcombine.high %v1883, %v1885
    %v4898 = vunpack.c.l.s4 1983009808
    %v4899 = vunpack.c.0.s8 %v4898
    %v4900 = vlaneseq
    %v4901 = vshrl.u32 %v4900, 7
    %v4902 = vsub.s32 %v4899, %v4901
    %v4903 = vrot.slane %v4895, %v4902
    %v4905 = vunpack.c.l.s4 1983009808
    %v4906 = vunpack.c.0.s8 %v4905
    %v4907 = vlaneseq
    %v4908 = vshrl.u32 %v4907, 7
    %v4909 = vsub.s32 %v4906, %v4908
    %v4910 = vrot.slane %v4896, %v4909
    %v4911 = vcombine.low %v3683, %v3685
    %v4912 = vcombine.high %v3683, %v3685
    %v4914 = vunpack.c.l.s4 1983009808
    %v4915 = vunpack.c.0.s8 %v4914
    %v4916 = vlaneseq
    %v4917 = vshrl.u32 %v4916, 7
    %v4918 = vsub.s32 %v4915, %v4917
    %v4919 = vrot.slane %v4911, %v4918
    %v4921 = vunpack.c.l.s4 1983009808
    %v4922 = vunpack.c.0.s8 %v4921
    %v4923 = vlaneseq
    %v4924 = vshrl.u32 %v4923, 7
    %v4925 = vsub.s32 %v4922, %v4924
    %v4926 = vrot.slane %v4912, %v4925
    %v4927 = vcombine.low %v4871, %v4887
    %v4928 = vcombine.high %v4871, %v4887
    %v4930 = vunpack.c.l.s4 1934713408
    %v4931 = vunpack.c.0.s8 %v4930
    %v4932 = vlaneseq
    %v4933 = vshrl.u32 %v4932, 7
    %v4934 = vsub.s32 %v4931, %v4933
    %v4935 = vrot.slane %v4927, %v4934
    %v4937 = vunpack.c.l.s4 1934713408
    %v4938 = vunpack.c.0.s8 %v4937
    %v4939 = vlaneseq
    %v4940 = vshrl.u32 %v4939, 7
    %v4941 = vsub.s32 %v4938, %v4940
    %v4942 = vrot.slane %v4928, %v4941
    %v4943 = vcombine.low %v4878, %v4894
    %v4944 = vcombine.high %v4878, %v4894
    %v4946 = vunpack.c.l.s4 1934713408
    %v4947 = vunpack.c.0.s8 %v4946
    %v4948 = vlaneseq
    %v4949 = vshrl.u32 %v4948, 7
    %v4950 = vsub.s32 %v4947, %v4949
    %v4951 = vrot.slane %v4943, %v4950
    %v4953 = vunpack.c.l.s4 1934713408
    %v4954 = vunpack.c.0.s8 %v4953
    %v4955 = vlaneseq
    %v4956 = vshrl.u32 %v4955, 7
    %v4957 = vsub.s32 %v4954, %v4956
    %v4958 = vrot.slane %v4944, %v4957
    %v4959 = vcombine.low %v4903, %v4919
    %v4960 = vcombine.high %v4903, %v4919
    %v4962 = vunpack.c.l.s4 1934713408
    %v4963 = vunpack.c.0.s8 %v4962
    %v4964 = vlaneseq
    %v4965 = vshrl.u32 %v4964, 7
    %v4966 = vsub.s32 %v4963, %v4965
    %v4967 = vrot.slane %v4959, %v4966
    %v4969 = vunpack.c.l.s4 1934713408
    %v4970 = vunpack.c.0.s8 %v4969
    %v4971 = vlaneseq
    %v4972 = vshrl.u32 %v4971, 7
    %v4973 = vsub.s32 %v4970, %v4972
    %v4974 = vrot.slane %v4960, %v4973
    %v4975 = vcombine.low %v4910, %v4926
    %v4976 = vcombine.high %v4910, %v4926
    %v4978 = vunpack.c.l.s4 1934713408
    %v4979 = vunpack.c.0.s8 %v4978
    %v4980 = vlaneseq
    %v4981 = vshrl.u32 %v4980, 7
    %v4982 = vsub.s32 %v4979, %v4981
    %v4983 = vrot.slane %v4975, %v4982
    %v4985 = vunpack.c.l.s4 1934713408
    %v4986 = vunpack.c.0.s8 %v4985
    %v4987 = vlaneseq
    %v4988 = vshrl.u32 %v4987, 7
    %v4989 = vsub.s32 %v4986, %v4988
    %v4990 = vrot.slane %v4976, %v4989
    %v4991 = vcombine.low %v4935, %v4967
    %v4992 = vcombine.high %v4935, %v4967
    %v4993 = vcombine.low %v4942, %v4974
    %v4994 = vcombine.high %v4942, %v4974
    %v4995 = vcombine.low %v4951, %v4983
    %v4996 = vcombine.high %v4951, %v4983
    %v4997 = vcombine.low %v4958, %v4990
    %v4998 = vcombine.high %v4958, %v4990
    %v4999 = vcombine.low %v1887, %v1889
    %v5000 = vcombine.high %v1887, %v1889
    %v5002 = vunpack.c.l.s4 1983009808
    %v5003 = vunpack.c.0.s8 %v5002
    %v5004 = vlaneseq
    %v5005 = vshrl.u32 %v5004, 7
    %v5006 = vsub.s32 %v5003, %v5005
    %v5007 = vrot.slane %v4999, %v5006
    %v5009 = vunpack.c.l.s4 1983009808
    %v5010 = vunpack.c.0.s8 %v5009
    %v5011 = vlaneseq
    %v5012 = vshrl.u32 %v5011, 7
    %v5013 = vsub.s32 %v5010, %v5012
    %v5014 = vrot.slane %v5000, %v5013
    %v5015 = vcombine.low %v3687, %v3689
    %v5016 = vcombine.high %v3687, %v3689
    %v5018 = vunpack.c.l.s4 1983009808
    %v5019 = vunpack.c.0.s8 %v5018
    %v5020 = vlaneseq
    %v5021 = vshrl.u32 %v5020, 7
    %v5022 = vsub.s32 %v5019, %v5021
    %v5023 = vrot.slane %v5015, %v5022
    %v5025 = vunpack.c.l.s4 1983009808
    %v5026 = vunpack.c.0.s8 %v5025
    %v5027 = vlaneseq
    %v5028 = vshrl.u32 %v5027, 7
    %v5029 = vsub.s32 %v5026, %v5028
    %v5030 = vrot.slane %v5016, %v5029
    %v5031 = vcombine.low %v1891, %v1893
    %v5032 = vcombine.high %v1891, %v1893
    %v5034 = vunpack.c.l.s4 1983009808
    %v5035 = vunpack.c.0.s8 %v5034
    %v5036 = vlaneseq
    %v5037 = vshrl.u32 %v5036, 7
    %v5038 = vsub.s32 %v5035, %v5037
    %v5039 = vrot.slane %v5031, %v5038
    %v5041 = vunpack.c.l.s4 1983009808
    %v5042 = vunpack.c.0.s8 %v5041
    %v5043 = vlaneseq
    %v5044 = vshrl.u32 %v5043, 7
    %v5045 = vsub.s32 %v5042, %v5044
    %v5046 = vrot.slane %v5032, %v5045
    %v5047 = vcombine.low %v3691, %v3693
    %v5048 = vcombine.high %v3691, %v3693
    %v5050 = vunpack.c.l.s4 1983009808
    %v5051 = vunpack.c.0.s8 %v5050
    %v5052 = vlaneseq
    %v5053 = vshrl.u32 %v5052, 7
    %v5054 = vsub.s32 %v5051, %v5053
    %v5055 = vrot.slane %v5047, %v5054
    %v5057 = vunpack.c.l.s4 1983009808
    %v5058 = vunpack.c.0.s8 %v5057
    %v5059 = vlaneseq
    %v5060 = vshrl.u32 %v5059, 7
    %v5061 = vsub.s32 %v5058, %v5060
    %v5062 = vrot.slane %v5048, %v5061
    %v5063 = vcombine.low %v5007, %v5023
    %v5064 = vcombine.high %v5007, %v5023
    %v5066 = vunpack.c.l.s4 1934713408
    %v5067 = vunpack.c.0.s8 %v5066
    %v5068 = vlaneseq
    %v5069 = vshrl.u32 %v5068, 7
    %v5070 = vsub.s32 %v5067, %v5069
    %v5071 = vrot.slane %v5063, %v5070
    %v5073 = vunpack.c.l.s4 1934713408
    %v5074 = vunpack.c.0.s8 %v5073
    %v5075 = vlaneseq
    %v5076 = vshrl.u32 %v5075, 7
    %v5077 = vsub.s32 %v5074, %v5076
    %v5078 = vrot.slane %v5064, %v5077
    %v5079 = vcombine.low %v5014, %v5030
    %v5080 = vcombine.high %v5014, %v5030
    %v5082 = vunpack.c.l.s4 1934713408
    %v5083 = vunpack.c.0.s8 %v5082
    %v5084 = vlaneseq
    %v5085 = vshrl.u32 %v5084, 7
    %v5086 = vsub.s32 %v5083, %v5085
    %v5087 = vrot.slane %v5079, %v5086
    %v5089 = vunpack.c.l.s4 1934713408
    %v5090 = vunpack.c.0.s8 %v5089
    %v5091 = vlaneseq
    %v5092 = vshrl.u32 %v5091, 7
    %v5093 = vsub.s32 %v5090, %v5092
    %v5094 = vrot.slane %v5080, %v5093
    %v5095 = vcombine.low %v5039, %v5055
    %v5096 = vcombine.high %v5039, %v5055
    %v5098 = vunpack.c.l.s4 1934713408
    %v5099 = vunpack.c.0.s8 %v5098
    %v5100 = vlaneseq
    %v5101 = vshrl.u32 %v5100, 7
    %v5102 = vsub.s32 %v5099, %v5101
    %v5103 = vrot.slane %v5095, %v5102
    %v5105 = vunpack.c.l.s4 1934713408
    %v5106 = vunpack.c.0.s8 %v5105
    %v5107 = vlaneseq
    %v5108 = vshrl.u32 %v5107, 7
    %v5109 = vsub.s32 %v5106, %v5108
    %v5110 = vrot.slane %v5096, %v5109
    %v5111 = vcombine.low %v5046, %v5062
    %v5112 = vcombine.high %v5046, %v5062
    %v5114 = vunpack.c.l.s4 1934713408
    %v5115 = vunpack.c.0.s8 %v5114
    %v5116 = vlaneseq
    %v5117 = vshrl.u32 %v5116, 7
    %v5118 = vsub.s32 %v5115, %v5117
    %v5119 = vrot.slane %v5111, %v5118
    %v5121 = vunpack.c.l.s4 1934713408
    %v5122 = vunpack.c.0.s8 %v5121
    %v5123 = vlaneseq
    %v5124 = vshrl.u32 %v5123, 7
    %v5125 = vsub.s32 %v5122, %v5124
    %v5126 = vrot.slane %v5112, %v5125
    %v5127 = vcombine.low %v5071, %v5103
    %v5128 = vcombine.high %v5071, %v5103
    %v5129 = vcombine.low %v5078, %v5110
    %v5130 = vcombine.high %v5078, %v5110
    %v5131 = vcombine.low %v5087, %v5119
    %v5132 = vcombine.high %v5087, %v5119
    %v5133 = vcombine.low %v5094, %v5126
    %v5134 = vcombine.high %v5094, %v5126
    %v5135 = vcombine.low %v1895, %v1897
    %v5136 = vcombine.high %v1895, %v1897
    %v5138 = vunpack.c.l.s4 1983009808
    %v5139 = vunpack.c.0.s8 %v5138
    %v5140 = vlaneseq
    %v5141 = vshrl.u32 %v5140, 7
    %v5142 = vsub.s32 %v5139, %v5141
    %v5143 = vrot.slane %v5135, %v5142
    %v5145 = vunpack.c.l.s4 1983009808
    %v5146 = vunpack.c.0.s8 %v5145
    %v5147 = vlaneseq
    %v5148 = vshrl.u32 %v5147, 7
    %v5149 = vsub.s32 %v5146, %v5148
    %v5150 = vrot.slane %v5136, %v5149
    %v5151 = vcombine.low %v3695, %v3697
    %v5152 = vcombine.high %v3695, %v3697
    %v5154 = vunpack.c.l.s4 1983009808
    %v5155 = vunpack.c.0.s8 %v5154
    %v5156 = vlaneseq
    %v5157 = vshrl.u32 %v5156, 7
    %v5158 = vsub.s32 %v5155, %v5157
    %v5159 = vrot.slane %v5151, %v5158
    %v5161 = vunpack.c.l.s4 1983009808
    %v5162 = vunpack.c.0.s8 %v5161
    %v5163 = vlaneseq
    %v5164 = vshrl.u32 %v5163, 7
    %v5165 = vsub.s32 %v5162, %v5164
    %v5166 = vrot.slane %v5152, %v5165
    %v5167 = vcombine.low %v1899, %v1901
    %v5168 = vcombine.high %v1899, %v1901
    %v5170 = vunpack.c.l.s4 1983009808
    %v5171 = vunpack.c.0.s8 %v5170
    %v5172 = vlaneseq
    %v5173 = vshrl.u32 %v5172, 7
    %v5174 = vsub.s32 %v5171, %v5173
    %v5175 = vrot.slane %v5167, %v5174
    %v5177 = vunpack.c.l.s4 1983009808
    %v5178 = vunpack.c.0.s8 %v5177
    %v5179 = vlaneseq
    %v5180 = vshrl.u32 %v5179, 7
    %v5181 = vsub.s32 %v5178, %v5180
    %v5182 = vrot.slane %v5168, %v5181
    %v5183 = vcombine.low %v3699, %v3701
    %v5184 = vcombine.high %v3699, %v3701
    %v5186 = vunpack.c.l.s4 1983009808
    %v5187 = vunpack.c.0.s8 %v5186
    %v5188 = vlaneseq
    %v5189 = vshrl.u32 %v5188, 7
    %v5190 = vsub.s32 %v5187, %v5189
    %v5191 = vrot.slane %v5183, %v5190
    %v5193 = vunpack.c.l.s4 1983009808
    %v5194 = vunpack.c.0.s8 %v5193
    %v5195 = vlaneseq
    %v5196 = vshrl.u32 %v5195, 7
    %v5197 = vsub.s32 %v5194, %v5196
    %v5198 = vrot.slane %v5184, %v5197
    %v5199 = vcombine.low %v5143, %v5159
    %v5200 = vcombine.high %v5143, %v5159
    %v5202 = vunpack.c.l.s4 1934713408
    %v5203 = vunpack.c.0.s8 %v5202
    %v5204 = vlaneseq
    %v5205 = vshrl.u32 %v5204, 7
    %v5206 = vsub.s32 %v5203, %v5205
    %v5207 = vrot.slane %v5199, %v5206
    %v5209 = vunpack.c.l.s4 1934713408
    %v5210 = vunpack.c.0.s8 %v5209
    %v5211 = vlaneseq
    %v5212 = vshrl.u32 %v5211, 7
    %v5213 = vsub.s32 %v5210, %v5212
    %v5214 = vrot.slane %v5200, %v5213
    %v5215 = vcombine.low %v5150, %v5166
    %v5216 = vcombine.high %v5150, %v5166
    %v5218 = vunpack.c.l.s4 1934713408
    %v5219 = vunpack.c.0.s8 %v5218
    %v5220 = vlaneseq
    %v5221 = vshrl.u32 %v5220, 7
    %v5222 = vsub.s32 %v5219, %v5221
    %v5223 = vrot.slane %v5215, %v5222
    %v5225 = vunpack.c.l.s4 1934713408
    %v5226 = vunpack.c.0.s8 %v5225
    %v5227 = vlaneseq
    %v5228 = vshrl.u32 %v5227, 7
    %v5229 = vsub.s32 %v5226, %v5228
    %v5230 = vrot.slane %v5216, %v5229
    %v5231 = vcombine.low %v5175, %v5191
    %v5232 = vcombine.high %v5175, %v5191
    %v5234 = vunpack.c.l.s4 1934713408
    %v5235 = vunpack.c.0.s8 %v5234
    %v5236 = vlaneseq
    %v5237 = vshrl.u32 %v5236, 7
    %v5238 = vsub.s32 %v5235, %v5237
    %v5239 = vrot.slane %v5231, %v5238
    %v5241 = vunpack.c.l.s4 1934713408
    %v5242 = vunpack.c.0.s8 %v5241
    %v5243 = vlaneseq
    %v5244 = vshrl.u32 %v5243, 7
    %v5245 = vsub.s32 %v5242, %v5244
    %v5246 = vrot.slane %v5232, %v5245
    %v5247 = vcombine.low %v5182, %v5198
    %v5248 = vcombine.high %v5182, %v5198
    %v5250 = vunpack.c.l.s4 1934713408
    %v5251 = vunpack.c.0.s8 %v5250
    %v5252 = vlaneseq
    %v5253 = vshrl.u32 %v5252, 7
    %v5254 = vsub.s32 %v5251, %v5253
    %v5255 = vrot.slane %v5247, %v5254
    %v5257 = vunpack.c.l.s4 1934713408
    %v5258 = vunpack.c.0.s8 %v5257
    %v5259 = vlaneseq
    %v5260 = vshrl.u32 %v5259, 7
    %v5261 = vsub.s32 %v5258, %v5260
    %v5262 = vrot.slane %v5248, %v5261
    %v5263 = vcombine.low %v5207, %v5239
    %v5264 = vcombine.high %v5207, %v5239
    %v5265 = vcombine.low %v5214, %v5246
    %v5266 = vcombine.high %v5214, %v5246
    %v5267 = vcombine.low %v5223, %v5255
    %v5268 = vcombine.high %v5223, %v5255
    %v5269 = vcombine.low %v5230, %v5262
    %v5270 = vcombine.high %v5230, %v5262
    %v5271 = vcombine.low %v1903, %v1905
    %v5272 = vcombine.high %v1903, %v1905
    %v5274 = vunpack.c.l.s4 1983009808
    %v5275 = vunpack.c.0.s8 %v5274
    %v5276 = vlaneseq
    %v5277 = vshrl.u32 %v5276, 7
    %v5278 = vsub.s32 %v5275, %v5277
    %v5279 = vrot.slane %v5271, %v5278
    %v5281 = vunpack.c.l.s4 1983009808
    %v5282 = vunpack.c.0.s8 %v5281
    %v5283 = vlaneseq
    %v5284 = vshrl.u32 %v5283, 7
    %v5285 = vsub.s32 %v5282, %v5284
    %v5286 = vrot.slane %v5272, %v5285
    %v5287 = vcombine.low %v3703, %v3705
    %v5288 = vcombine.high %v3703, %v3705
    %v5290 = vunpack.c.l.s4 1983009808
    %v5291 = vunpack.c.0.s8 %v5290
    %v5292 = vlaneseq
    %v5293 = vshrl.u32 %v5292, 7
    %v5294 = vsub.s32 %v5291, %v5293
    %v5295 = vrot.slane %v5287, %v5294
    %v5297 = vunpack.c.l.s4 1983009808
    %v5298 = vunpack.c.0.s8 %v5297
    %v5299 = vlaneseq
    %v5300 = vshrl.u32 %v5299, 7
    %v5301 = vsub.s32 %v5298, %v5300
    %v5302 = vrot.slane %v5288, %v5301
    %v5303 = vcombine.low %v1907, %v1909
    %v5304 = vcombine.high %v1907, %v1909
    %v5306 = vunpack.c.l.s4 1983009808
    %v5307 = vunpack.c.0.s8 %v5306
    %v5308 = vlaneseq
    %v5309 = vshrl.u32 %v5308, 7
    %v5310 = vsub.s32 %v5307, %v5309
    %v5311 = vrot.slane %v5303, %v5310
    %v5313 = vunpack.c.l.s4 1983009808
    %v5314 = vunpack.c.0.s8 %v5313
    %v5315 = vlaneseq
    %v5316 = vshrl.u32 %v5315, 7
    %v5317 = vsub.s32 %v5314, %v5316
    %v5318 = vrot.slane %v5304, %v5317
    %v5319 = vcombine.low %v3707, %v3709
    %v5320 = vcombine.high %v3707, %v3709
    %v5322 = vunpack.c.l.s4 1983009808
    %v5323 = vunpack.c.0.s8 %v5322
    %v5324 = vlaneseq
    %v5325 = vshrl.u32 %v5324, 7
    %v5326 = vsub.s32 %v5323, %v5325
    %v5327 = vrot.slane %v5319, %v5326
    %v5329 = vunpack.c.l.s4 1983009808
    %v5330 = vunpack.c.0.s8 %v5329
    %v5331 = vlaneseq
    %v5332 = vshrl.u32 %v5331, 7
    %v5333 = vsub.s32 %v5330, %v5332
    %v5334 = vrot.slane %v5320, %v5333
    %v5335 = vcombine.low %v5279, %v5295
    %v5336 = vcombine.high %v5279, %v5295
    %v5338 = vunpack.c.l.s4 1934713408
    %v5339 = vunpack.c.0.s8 %v5338
    %v5340 = vlaneseq
    %v5341 = vshrl.u32 %v5340, 7
    %v5342 = vsub.s32 %v5339, %v5341
    %v5343 = vrot.slane %v5335, %v5342
    %v5345 = vunpack.c.l.s4 1934713408
    %v5346 = vunpack.c.0.s8 %v5345
    %v5347 = vlaneseq
    %v5348 = vshrl.u32 %v5347, 7
    %v5349 = vsub.s32 %v5346, %v5348
    %v5350 = vrot.slane %v5336, %v5349
    %v5351 = vcombine.low %v5286, %v5302
    %v5352 = vcombine.high %v5286, %v5302
    %v5354 = vunpack.c.l.s4 1934713408
    %v5355 = vunpack.c.0.s8 %v5354
    %v5356 = vlaneseq
    %v5357 = vshrl.u32 %v5356, 7
    %v5358 = vsub.s32 %v5355, %v5357
    %v5359 = vrot.slane %v5351, %v5358
    %v5361 = vunpack.c.l.s4 1934713408
    %v5362 = vunpack.c.0.s8 %v5361
    %v5363 = vlaneseq
    %v5364 = vshrl.u32 %v5363, 7
    %v5365 = vsub.s32 %v5362, %v5364
    %v5366 = vrot.slane %v5352, %v5365
    %v5367 = vcombine.low %v5311, %v5327
    %v5368 = vcombine.high %v5311, %v5327
    %v5370 = vunpack.c.l.s4 1934713408
    %v5371 = vunpack.c.0.s8 %v5370
    %v5372 = vlaneseq
    %v5373 = vshrl.u32 %v5372, 7
    %v5374 = vsub.s32 %v5371, %v5373
    %v5375 = vrot.slane %v5367, %v5374
    %v5377 = vunpack.c.l.s4 1934713408
    %v5378 = vunpack.c.0.s8 %v5377
    %v5379 = vlaneseq
    %v5380 = vshrl.u32 %v5379, 7
    %v5381 = vsub.s32 %v5378, %v5380
    %v5382 = vrot.slane %v5368, %v5381
    %v5383 = vcombine.low %v5318, %v5334
    %v5384 = vcombine.high %v5318, %v5334
    %v5386 = vunpack.c.l.s4 1934713408
    %v5387 = vunpack.c.0.s8 %v5386
    %v5388 = vlaneseq
    %v5389 = vshrl.u32 %v5388, 7
    %v5390 = vsub.s32 %v5387, %v5389
    %v5391 = vrot.slane %v5383, %v5390
    %v5393 = vunpack.c.l.s4 1934713408
    %v5394 = vunpack.c.0.s8 %v5393
    %v5395 = vlaneseq
    %v5396 = vshrl.u32 %v5395, 7
    %v5397 = vsub.s32 %v5394, %v5396
    %v5398 = vrot.slane %v5384, %v5397
    %v5399 = vcombine.low %v5343, %v5375
    %v5400 = vcombine.high %v5343, %v5375
    %v5401 = vcombine.low %v5350, %v5382
    %v5402 = vcombine.high %v5350, %v5382
    %v5403 = vcombine.low %v5359, %v5391
    %v5404 = vcombine.high %v5359, %v5391
    %v5405 = vcombine.low %v5366, %v5398
    %v5406 = vcombine.high %v5366, %v5398
    %v5407 = vcombine.low %v1880, %v1882
    %v5408 = vcombine.high %v1880, %v1882
    %v5410 = vunpack.c.l.s4 1983009808
    %v5411 = vunpack.c.0.s8 %v5410
    %v5412 = vlaneseq
    %v5413 = vshrl.u32 %v5412, 7
    %v5414 = vsub.s32 %v5411, %v5413
    %v5415 = vrot.slane %v5407, %v5414
    %v5417 = vunpack.c.l.s4 1983009808
    %v5418 = vunpack.c.0.s8 %v5417
    %v5419 = vlaneseq
    %v5420 = vshrl.u32 %v5419, 7
    %v5421 = vsub.s32 %v5418, %v5420
    %v5422 = vrot.slane %v5408, %v5421
    %v5423 = vcombine.low %v3680, %v3682
    %v5424 = vcombine.high %v3680, %v3682
    %v5426 = vunpack.c.l.s4 1983009808
    %v5427 = vunpack.c.0.s8 %v5426
    %v5428 = vlaneseq
    %v5429 = vshrl.u32 %v5428, 7
    %v5430 = vsub.s32 %v5427, %v5429
    %v5431 = vrot.slane %v5423, %v5430
    %v5433 = vunpack.c.l.s4 1983009808
    %v5434 = vunpack.c.0.s8 %v5433
    %v5435 = vlaneseq
    %v5436 = vshrl.u32 %v5435, 7
    %v5437 = vsub.s32 %v5434, %v5436
    %v5438 = vrot.slane %v5424, %v5437
    %v5439 = vcombine.low %v1884, %v1886
    %v5440 = vcombine.high %v1884, %v1886
    %v5442 = vunpack.c.l.s4 1983009808
    %v5443 = vunpack.c.0.s8 %v5442
    %v5444 = vlaneseq
    %v5445 = vshrl.u32 %v5444, 7
    %v5446 = vsub.s32 %v5443, %v5445
    %v5447 = vrot.slane %v5439, %v5446
    %v5449 = vunpack.c.l.s4 1983009808
    %v5450 = vunpack.c.0.s8 %v5449
    %v5451 = vlaneseq
    %v5452 = vshrl.u32 %v5451, 7
    %v5453 = vsub.s32 %v5450, %v5452
    %v5454 = vrot.slane %v5440, %v5453
    %v5455 = vcombine.low %v3684, %v3686
    %v5456 = vcombine.high %v3684, %v3686
    %v5458 = vunpack.c.l.s4 1983009808
    %v5459 = vunpack.c.0.s8 %v5458
    %v5460 = vlaneseq
    %v5461 = vshrl.u32 %v5460, 7
    %v5462 = vsub.s32 %v5459, %v5461
    %v5463 = vrot.slane %v5455, %v5462
    %v5465 = vunpack.c.l.s4 1983009808
    %v5466 = vunpack.c.0.s8 %v5465
    %v5467 = vlaneseq
    %v5468 = vshrl.u32 %v5467, 7
    %v5469 = vsub.s32 %v5466, %v5468
    %v5470 = vrot.slane %v5456, %v5469
    %v5471 = vcombine.low %v5415, %v5431
    %v5472 = vcombine.high %v5415, %v5431
    %v5474 = vunpack.c.l.s4 1934713408
    %v5475 = vunpack.c.0.s8 %v5474
    %v5476 = vlaneseq
    %v5477 = vshrl.u32 %v5476, 7
    %v5478 = vsub.s32 %v5475, %v5477
    %v5479 = vrot.slane %v5471, %v5478
    %v5481 = vunpack.c.l.s4 1934713408
    %v5482 = vunpack.c.0.s8 %v5481
    %v5483 = vlaneseq
    %v5484 = vshrl.u32 %v5483, 7
    %v5485 = vsub.s32 %v5482, %v5484
    %v5486 = vrot.slane %v5472, %v5485
    %v5487 = vcombine.low %v5422, %v5438
    %v5488 = vcombine.high %v5422, %v5438
    %v5490 = vunpack.c.l.s4 1934713408
    %v5491 = vunpack.c.0.s8 %v5490
    %v5492 = vlaneseq
    %v5493 = vshrl.u32 %v5492, 7
    %v5494 = vsub.s32 %v5491, %v5493
    %v5495 = vrot.slane %v5487, %v5494
    %v5497 = vunpack.c.l.s4 1934713408
    %v5498 = vunpack.c.0.s8 %v5497
    %v5499 = vlaneseq
    %v5500 = vshrl.u32 %v5499, 7
    %v5501 = vsub.s32 %v5498, %v5500
    %v5502 = vrot.slane %v5488, %v5501
    %v5503 = vcombine.low %v5447, %v5463
    %v5504 = vcombine.high %v5447, %v5463
    %v5506 = vunpack.c.l.s4 1934713408
    %v5507 = vunpack.c.0.s8 %v5506
    %v5508 = vlaneseq
    %v5509 = vshrl.u32 %v5508, 7
    %v5510 = vsub.s32 %v5507, %v5509
    %v5511 = vrot.slane %v5503, %v5510
    %v5513 = vunpack.c.l.s4 1934713408
    %v5514 = vunpack.c.0.s8 %v5513
    %v5515 = vlaneseq
    %v5516 = vshrl.u32 %v5515, 7
    %v5517 = vsub.s32 %v5514, %v5516
    %v5518 = vrot.slane %v5504, %v5517
    %v5519 = vcombine.low %v5454, %v5470
    %v5520 = vcombine.high %v5454, %v5470
    %v5522 = vunpack.c.l.s4 1934713408
    %v5523 = vunpack.c.0.s8 %v5522
    %v5524 = vlaneseq
    %v5525 = vshrl.u32 %v5524, 7
    %v5526 = vsub.s32 %v5523, %v5525
    %v5527 = vrot.slane %v5519, %v5526
    %v5529 = vunpack.c.l.s4 1934713408
    %v5530 = vunpack.c.0.s8 %v5529
    %v5531 = vlaneseq
    %v5532 = vshrl.u32 %v5531, 7
    %v5533 = vsub.s32 %v5530, %v5532
    %v5534 = vrot.slane %v5520, %v5533
    %v5535 = vcombine.low %v5479, %v5511
    %v5536 = vcombine.high %v5479, %v5511
    %v5537 = vcombine.low %v5486, %v5518
    %v5538 = vcombine.high %v5486, %v5518
    %v5539 = vcombine.low %v5495, %v5527
    %v5540 = vcombine.high %v5495, %v5527
    %v5541 = vcombine.low %v5502, %v5534
    %v5542 = vcombine.high %v5502, %v5534
    %v5543 = vcombine.low %v1888, %v1890
    %v5544 = vcombine.high %v1888, %v1890
    %v5546 = vunpack.c.l.s4 1983009808
    %v5547 = vunpack.c.0.s8 %v5546
    %v5548 = vlaneseq
    %v5549 = vshrl.u32 %v5548, 7
    %v5550 = vsub.s32 %v5547, %v5549
    %v5551 = vrot.slane %v5543, %v5550
    %v5553 = vunpack.c.l.s4 1983009808
    %v5554 = vunpack.c.0.s8 %v5553
    %v5555 = vlaneseq
    %v5556 = vshrl.u32 %v5555, 7
    %v5557 = vsub.s32 %v5554, %v5556
    %v5558 = vrot.slane %v5544, %v5557
    %v5559 = vcombine.low %v3688, %v3690
    %v5560 = vcombine.high %v3688, %v3690
    %v5562 = vunpack.c.l.s4 1983009808
    %v5563 = vunpack.c.0.s8 %v5562
    %v5564 = vlaneseq
    %v5565 = vshrl.u32 %v5564, 7
    %v5566 = vsub.s32 %v5563, %v5565
    %v5567 = vrot.slane %v5559, %v5566
    %v5569 = vunpack.c.l.s4 1983009808
    %v5570 = vunpack.c.0.s8 %v5569
    %v5571 = vlaneseq
    %v5572 = vshrl.u32 %v5571, 7
    %v5573 = vsub.s32 %v5570, %v5572
    %v5574 = vrot.slane %v5560, %v5573
    %v5575 = vcombine.low %v1892, %v1894
    %v5576 = vcombine.high %v1892, %v1894
    %v5578 = vunpack.c.l.s4 1983009808
    %v5579 = vunpack.c.0.s8 %v5578
    %v5580 = vlaneseq
    %v5581 = vshrl.u32 %v5580, 7
    %v5582 = vsub.s32 %v5579, %v5581
    %v5583 = vrot.slane %v5575, %v5582
    %v5585 = vunpack.c.l.s4 1983009808
    %v5586 = vunpack.c.0.s8 %v5585
    %v5587 = vlaneseq
    %v5588 = vshrl.u32 %v5587, 7
    %v5589 = vsub.s32 %v5586, %v5588
    %v5590 = vrot.slane %v5576, %v5589
    %v5591 = vcombine.low %v3692, %v3694
    %v5592 = vcombine.high %v3692, %v3694
    %v5594 = vunpack.c.l.s4 1983009808
    %v5595 = vunpack.c.0.s8 %v5594
    %v5596 = vlaneseq
    %v5597 = vshrl.u32 %v5596, 7
    %v5598 = vsub.s32 %v5595, %v5597
    %v5599 = vrot.slane %v5591, %v5598
    %v5601 = vunpack.c.l.s4 1983009808
    %v5602 = vunpack.c.0.s8 %v5601
    %v5603 = vlaneseq
    %v5604 = vshrl.u32 %v5603, 7
    %v5605 = vsub.s32 %v5602, %v5604
    %v5606 = vrot.slane %v5592, %v5605
    %v5607 = vcombine.low %v5551, %v5567
    %v5608 = vcombine.high %v5551, %v5567
    %v5610 = vunpack.c.l.s4 1934713408
    %v5611 = vunpack.c.0.s8 %v5610
    %v5612 = vlaneseq
    %v5613 = vshrl.u32 %v5612, 7
    %v5614 = vsub.s32 %v5611, %v5613
    %v5615 = vrot.slane %v5607, %v5614
    %v5617 = vunpack.c.l.s4 1934713408
    %v5618 = vunpack.c.0.s8 %v5617
    %v5619 = vlaneseq
    %v5620 = vshrl.u32 %v5619, 7
    %v5621 = vsub.s32 %v5618, %v5620
    %v5622 = vrot.slane %v5608, %v5621
    %v5623 = vcombine.low %v5558, %v5574
    %v5624 = vcombine.high %v5558, %v5574
    %v5626 = vunpack.c.l.s4 1934713408
    %v5627 = vunpack.c.0.s8 %v5626
    %v5628 = vlaneseq
    %v5629 = vshrl.u32 %v5628, 7
    %v5630 = vsub.s32 %v5627, %v5629
    %v5631 = vrot.slane %v5623, %v5630
    %v5633 = vunpack.c.l.s4 1934713408
    %v5634 = vunpack.c.0.s8 %v5633
    %v5635 = vlaneseq
    %v5636 = vshrl.u32 %v5635, 7
    %v5637 = vsub.s32 %v5634, %v5636
    %v5638 = vrot.slane %v5624, %v5637
    %v5639 = vcombine.low %v5583, %v5599
    %v5640 = vcombine.high %v5583, %v5599
    %v5642 = vunpack.c.l.s4 1934713408
    %v5643 = vunpack.c.0.s8 %v5642
    %v5644 = vlaneseq
    %v5645 = vshrl.u32 %v5644, 7
    %v5646 = vsub.s32 %v5643, %v5645
    %v5647 = vrot.slane %v5639, %v5646
    %v5649 = vunpack.c.l.s4 1934713408
    %v5650 = vunpack.c.0.s8 %v5649
    %v5651 = vlaneseq
    %v5652 = vshrl.u32 %v5651, 7
    %v5653 = vsub.s32 %v5650, %v5652
    %v5654 = vrot.slane %v5640, %v5653
    %v5655 = vcombine.low %v5590, %v5606
    %v5656 = vcombine.high %v5590, %v5606
    %v5658 = vunpack.c.l.s4 1934713408
    %v5659 = vunpack.c.0.s8 %v5658
    %v5660 = vlaneseq
    %v5661 = vshrl.u32 %v5660, 7
    %v5662 = vsub.s32 %v5659, %v5661
    %v5663 = vrot.slane %v5655, %v5662
    %v5665 = vunpack.c.l.s4 1934713408
    %v5666 = vunpack.c.0.s8 %v5665
    %v5667 = vlaneseq
    %v5668 = vshrl.u32 %v5667, 7
    %v5669 = vsub.s32 %v5666, %v5668
    %v5670 = vrot.slane %v5656, %v5669
    %v5671 = vcombine.low %v5615, %v5647
    %v5672 = vcombine.high %v5615, %v5647
    %v5673 = vcombine.low %v5622, %v5654
    %v5674 = vcombine.high %v5622, %v5654
    %v5675 = vcombine.low %v5631, %v5663
    %v5676 = vcombine.high %v5631, %v5663
    %v5677 = vcombine.low %v5638, %v5670
    %v5678 = vcombine.high %v5638, %v5670
    %v5679 = vcombine.low %v1896, %v1898
    %v5680 = vcombine.high %v1896, %v1898
    %v5682 = vunpack.c.l.s4 1983009808
    %v5683 = vunpack.c.0.s8 %v5682
    %v5684 = vlaneseq
    %v5685 = vshrl.u32 %v5684, 7
    %v5686 = vsub.s32 %v5683, %v5685
    %v5687 = vrot.slane %v5679, %v5686
    %v5689 = vunpack.c.l.s4 1983009808
    %v5690 = vunpack.c.0.s8 %v5689
    %v5691 = vlaneseq
    %v5692 = vshrl.u32 %v5691, 7
    %v5693 = vsub.s32 %v5690, %v5692
    %v5694 = vrot.slane %v5680, %v5693
    %v5695 = vcombine.low %v3696, %v3698
    %v5696 = vcombine.high %v3696, %v3698
    %v5698 = vunpack.c.l.s4 1983009808
    %v5699 = vunpack.c.0.s8 %v5698
    %v5700 = vlaneseq
    %v5701 = vshrl.u32 %v5700, 7
    %v5702 = vsub.s32 %v5699, %v5701
    %v5703 = vrot.slane %v5695, %v5702
    %v5705 = vunpack.c.l.s4 1983009808
    %v5706 = vunpack.c.0.s8 %v5705
    %v5707 = vlaneseq
    %v5708 = vshrl.u32 %v5707, 7
    %v5709 = vsub.s32 %v5706, %v5708
    %v5710 = vrot.slane %v5696, %v5709
    %v5711 = vcombine.low %v1900, %v1902
    %v5712 = vcombine.high %v1900, %v1902
    %v5714 = vunpack.c.l.s4 1983009808
    %v5715 = vunpack.c.0.s8 %v5714
    %v5716 = vlaneseq
    %v5717 = vshrl.u32 %v5716, 7
    %v5718 = vsub.s32 %v5715, %v5717
    %v5719 = vrot.slane %v5711, %v5718
    %v5721 = vunpack.c.l.s4 1983009808
    %v5722 = vunpack.c.0.s8 %v5721
    %v5723 = vlaneseq
    %v5724 = vshrl.u32 %v5723, 7
    %v5725 = vsub.s32 %v5722, %v5724
    %v5726 = vrot.slane %v5712, %v5725
    %v5727 = vcombine.low %v3700, %v3702
    %v5728 = vcombine.high %v3700, %v3702
    %v5730 = vunpack.c.l.s4 1983009808
    %v5731 = vunpack.c.0.s8 %v5730
    %v5732 = vlaneseq
    %v5733 = vshrl.u32 %v5732, 7
    %v5734 = vsub.s32 %v5731, %v5733
    %v5735 = vrot.slane %v5727, %v5734
    %v5737 = vunpack.c.l.s4 1983009808
    %v5738 = vunpack.c.0.s8 %v5737
    %v5739 = vlaneseq
    %v5740 = vshrl.u32 %v5739, 7
    %v5741 = vsub.s32 %v5738, %v5740
    %v5742 = vrot.slane %v5728, %v5741
    %v5743 = vcombine.low %v5687, %v5703
    %v5744 = vcombine.high %v5687, %v5703
    %v5746 = vunpack.c.l.s4 1934713408
    %v5747 = vunpack.c.0.s8 %v5746
    %v5748 = vlaneseq
    %v5749 = vshrl.u32 %v5748, 7
    %v5750 = vsub.s32 %v5747, %v5749
    %v5751 = vrot.slane %v5743, %v5750
    %v5753 = vunpack.c.l.s4 1934713408
    %v5754 = vunpack.c.0.s8 %v5753
    %v5755 = vlaneseq
    %v5756 = vshrl.u32 %v5755, 7
    %v5757 = vsub.s32 %v5754, %v5756
    %v5758 = vrot.slane %v5744, %v5757
    %v5759 = vcombine.low %v5694, %v5710
    %v5760 = vcombine.high %v5694, %v5710
    %v5762 = vunpack.c.l.s4 1934713408
    %v5763 = vunpack.c.0.s8 %v5762
    %v5764 = vlaneseq
    %v5765 = vshrl.u32 %v5764, 7
    %v5766 = vsub.s32 %v5763, %v5765
    %v5767 = vrot.slane %v5759, %v5766
    %v5769 = vunpack.c.l.s4 1934713408
    %v5770 = vunpack.c.0.s8 %v5769
    %v5771 = vlaneseq
    %v5772 = vshrl.u32 %v5771, 7
    %v5773 = vsub.s32 %v5770, %v5772
    %v5774 = vrot.slane %v5760, %v5773
    %v5775 = vcombine.low %v5719, %v5735
    %v5776 = vcombine.high %v5719, %v5735
    %v5778 = vunpack.c.l.s4 1934713408
    %v5779 = vunpack.c.0.s8 %v5778
    %v5780 = vlaneseq
    %v5781 = vshrl.u32 %v5780, 7
    %v5782 = vsub.s32 %v5779, %v5781
    %v5783 = vrot.slane %v5775, %v5782
    %v5785 = vunpack.c.l.s4 1934713408
    %v5786 = vunpack.c.0.s8 %v5785
    %v5787 = vlaneseq
    %v5788 = vshrl.u32 %v5787, 7
    %v5789 = vsub.s32 %v5786, %v5788
    %v5790 = vrot.slane %v5776, %v5789
    %v5791 = vcombine.low %v5726, %v5742
    %v5792 = vcombine.high %v5726, %v5742
    %v5794 = vunpack.c.l.s4 1934713408
    %v5795 = vunpack.c.0.s8 %v5794
    %v5796 = vlaneseq
    %v5797 = vshrl.u32 %v5796, 7
    %v5798 = vsub.s32 %v5795, %v5797
    %v5799 = vrot.slane %v5791, %v5798
    %v5801 = vunpack.c.l.s4 1934713408
    %v5802 = vunpack.c.0.s8 %v5801
    %v5803 = vlaneseq
    %v5804 = vshrl.u32 %v5803, 7
    %v5805 = vsub.s32 %v5802, %v5804
    %v5806 = vrot.slane %v5792, %v5805
    %v5807 = vcombine.low %v5751, %v5783
    %v5808 = vcombine.high %v5751, %v5783
    %v5809 = vcombine.low %v5758, %v5790
    %v5810 = vcombine.high %v5758, %v5790
    %v5811 = vcombine.low %v5767, %v5799
    %v5812 = vcombine.high %v5767, %v5799
    %v5813 = vcombine.low %v5774, %v5806
    %v5814 = vcombine.high %v5774, %v5806
    %v5815 = vcombine.low %v1904, %v1906
    %v5816 = vcombine.high %v1904, %v1906
    %v5818 = vunpack.c.l.s4 1983009808
    %v5819 = vunpack.c.0.s8 %v5818
    %v5820 = vlaneseq
    %v5821 = vshrl.u32 %v5820, 7
    %v5822 = vsub.s32 %v5819, %v5821
    %v5823 = vrot.slane %v5815, %v5822
    %v5825 = vunpack.c.l.s4 1983009808
    %v5826 = vunpack.c.0.s8 %v5825
    %v5827 = vlaneseq
    %v5828 = vshrl.u32 %v5827, 7
    %v5829 = vsub.s32 %v5826, %v5828
    %v5830 = vrot.slane %v5816, %v5829
    %v5831 = vcombine.low %v3704, %v3706
    %v5832 = vcombine.high %v3704, %v3706
    %v5834 = vunpack.c.l.s4 1983009808
    %v5835 = vunpack.c.0.s8 %v5834
    %v5836 = vlaneseq
    %v5837 = vshrl.u32 %v5836, 7
    %v5838 = vsub.s32 %v5835, %v5837
    %v5839 = vrot.slane %v5831, %v5838
    %v5841 = vunpack.c.l.s4 1983009808
    %v5842 = vunpack.c.0.s8 %v5841
    %v5843 = vlaneseq
    %v5844 = vshrl.u32 %v5843, 7
    %v5845 = vsub.s32 %v5842, %v5844
    %v5846 = vrot.slane %v5832, %v5845
    %v5847 = vcombine.low %v1908, %v1910
    %v5848 = vcombine.high %v1908, %v1910
    %v5850 = vunpack.c.l.s4 1983009808
    %v5851 = vunpack.c.0.s8 %v5850
    %v5852 = vlaneseq
    %v5853 = vshrl.u32 %v5852, 7
    %v5854 = vsub.s32 %v5851, %v5853
    %v5855 = vrot.slane %v5847, %v5854
    %v5857 = vunpack.c.l.s4 1983009808
    %v5858 = vunpack.c.0.s8 %v5857
    %v5859 = vlaneseq
    %v5860 = vshrl.u32 %v5859, 7
    %v5861 = vsub.s32 %v5858, %v5860
    %v5862 = vrot.slane %v5848, %v5861
    %v5863 = vcombine.low %v3708, %v3710
    %v5864 = vcombine.high %v3708, %v3710
    %v5866 = vunpack.c.l.s4 1983009808
    %v5867 = vunpack.c.0.s8 %v5866
    %v5868 = vlaneseq
    %v5869 = vshrl.u32 %v5868, 7
    %v5870 = vsub.s32 %v5867, %v5869
    %v5871 = vrot.slane %v5863, %v5870
    %v5873 = vunpack.c.l.s4 1983009808
    %v5874 = vunpack.c.0.s8 %v5873
    %v5875 = vlaneseq
    %v5876 = vshrl.u32 %v5875, 7
    %v5877 = vsub.s32 %v5874, %v5876
    %v5878 = vrot.slane %v5864, %v5877
    %v5879 = vcombine.low %v5823, %v5839
    %v5880 = vcombine.high %v5823, %v5839
    %v5882 = vunpack.c.l.s4 1934713408
    %v5883 = vunpack.c.0.s8 %v5882
    %v5884 = vlaneseq
    %v5885 = vshrl.u32 %v5884, 7
    %v5886 = vsub.s32 %v5883, %v5885
    %v5887 = vrot.slane %v5879, %v5886
    %v5889 = vunpack.c.l.s4 1934713408
    %v5890 = vunpack.c.0.s8 %v5889
    %v5891 = vlaneseq
    %v5892 = vshrl.u32 %v5891, 7
    %v5893 = vsub.s32 %v5890, %v5892
    %v5894 = vrot.slane %v5880, %v5893
    %v5895 = vcombine.low %v5830, %v5846
    %v5896 = vcombine.high %v5830, %v5846
    %v5898 = vunpack.c.l.s4 1934713408
    %v5899 = vunpack.c.0.s8 %v5898
    %v5900 = vlaneseq
    %v5901 = vshrl.u32 %v5900, 7
    %v5902 = vsub.s32 %v5899, %v5901
    %v5903 = vrot.slane %v5895, %v5902
    %v5905 = vunpack.c.l.s4 1934713408
    %v5906 = vunpack.c.0.s8 %v5905
    %v5907 = vlaneseq
    %v5908 = vshrl.u32 %v5907, 7
    %v5909 = vsub.s32 %v5906, %v5908
    %v5910 = vrot.slane %v5896, %v5909
    %v5911 = vcombine.low %v5855, %v5871
    %v5912 = vcombine.high %v5855, %v5871
    %v5914 = vunpack.c.l.s4 1934713408
    %v5915 = vunpack.c.0.s8 %v5914
    %v5916 = vlaneseq
    %v5917 = vshrl.u32 %v5916, 7
    %v5918 = vsub.s32 %v5915, %v5917
    %v5919 = vrot.slane %v5911, %v5918
    %v5921 = vunpack.c.l.s4 1934713408
    %v5922 = vunpack.c.0.s8 %v5921
    %v5923 = vlaneseq
    %v5924 = vshrl.u32 %v5923, 7
    %v5925 = vsub.s32 %v5922, %v5924
    %v5926 = vrot.slane %v5912, %v5925
    %v5927 = vcombine.low %v5862, %v5878
    %v5928 = vcombine.high %v5862, %v5878
    %v5930 = vunpack.c.l.s4 1934713408
    %v5931 = vunpack.c.0.s8 %v5930
    %v5932 = vlaneseq
    %v5933 = vshrl.u32 %v5932, 7
    %v5934 = vsub.s32 %v5931, %v5933
    %v5935 = vrot.slane %v5927, %v5934
    %v5937 = vunpack.c.l.s4 1934713408
    %v5938 = vunpack.c.0.s8 %v5937
    %v5939 = vlaneseq
    %v5940 = vshrl.u32 %v5939, 7
    %v5941 = vsub.s32 %v5938, %v5940
    %v5942 = vrot.slane %v5928, %v5941
    %v5943 = vcombine.low %v5887, %v5919
    %v5944 = vcombine.high %v5887, %v5919
    %v5945 = vcombine.low %v5894, %v5926
    %v5946 = vcombine.high %v5894, %v5926
    %v5947 = vcombine.low %v5903, %v5935
    %v5948 = vcombine.high %v5903, %v5935
    %v5949 = vcombine.low %v5910, %v5942
    %v5950 = vcombine.high %v5910, %v5942
    %v5951 = vcombine.low %v1911, %v1913
    %v5952 = vcombine.high %v1911, %v1913
    %v5954 = vunpack.c.l.s4 1983009808
    %v5955 = vunpack.c.0.s8 %v5954
    %v5956 = vlaneseq
    %v5957 = vshrl.u32 %v5956, 7
    %v5958 = vsub.s32 %v5955, %v5957
    %v5959 = vrot.slane %v5951, %v5958
    %v5961 = vunpack.c.l.s4 1983009808
    %v5962 = vunpack.c.0.s8 %v5961
    %v5963 = vlaneseq
    %v5964 = vshrl.u32 %v5963, 7
    %v5965 = vsub.s32 %v5962, %v5964
    %v5966 = vrot.slane %v5952, %v5965
    %v5967 = vcombine.low %v3711, %v3713
    %v5968 = vcombine.high %v3711, %v3713
    %v5970 = vunpack.c.l.s4 1983009808
    %v5971 = vunpack.c.0.s8 %v5970
    %v5972 = vlaneseq
    %v5973 = vshrl.u32 %v5972, 7
    %v5974 = vsub.s32 %v5971, %v5973
    %v5975 = vrot.slane %v5967, %v5974
    %v5977 = vunpack.c.l.s4 1983009808
    %v5978 = vunpack.c.0.s8 %v5977
    %v5979 = vlaneseq
    %v5980 = vshrl.u32 %v5979, 7
    %v5981 = vsub.s32 %v5978, %v5980
    %v5982 = vrot.slane %v5968, %v5981
    %v5983 = vcombine.low %v1915, %v1917
    %v5984 = vcombine.high %v1915, %v1917
    %v5986 = vunpack.c.l.s4 1983009808
    %v5987 = vunpack.c.0.s8 %v5986
    %v5988 = vlaneseq
    %v5989 = vshrl.u32 %v5988, 7
    %v5990 = vsub.s32 %v5987, %v5989
    %v5991 = vrot.slane %v5983, %v5990
    %v5993 = vunpack.c.l.s4 1983009808
    %v5994 = vunpack.c.0.s8 %v5993
    %v5995 = vlaneseq
    %v5996 = vshrl.u32 %v5995, 7
    %v5997 = vsub.s32 %v5994, %v5996
    %v5998 = vrot.slane %v5984, %v5997
    %v5999 = vcombine.low %v3715, %v3717
    %v6000 = vcombine.high %v3715, %v3717
    %v6002 = vunpack.c.l.s4 1983009808
    %v6003 = vunpack.c.0.s8 %v6002
    %v6004 = vlaneseq
    %v6005 = vshrl.u32 %v6004, 7
    %v6006 = vsub.s32 %v6003, %v6005
    %v6007 = vrot.slane %v5999, %v6006
    %v6009 = vunpack.c.l.s4 1983009808
    %v6010 = vunpack.c.0.s8 %v6009
    %v6011 = vlaneseq
    %v6012 = vshrl.u32 %v6011, 7
    %v6013 = vsub.s32 %v6010, %v6012
    %v6014 = vrot.slane %v6000, %v6013
    %v6015 = vcombine.low %v5959, %v5975
    %v6016 = vcombine.high %v5959, %v5975
    %v6018 = vunpack.c.l.s4 1934713408
    %v6019 = vunpack.c.0.s8 %v6018
    %v6020 = vlaneseq
    %v6021 = vshrl.u32 %v6020, 7
    %v6022 = vsub.s32 %v6019, %v6021
    %v6023 = vrot.slane %v6015, %v6022
    %v6025 = vunpack.c.l.s4 1934713408
    %v6026 = vunpack.c.0.s8 %v6025
    %v6027 = vlaneseq
    %v6028 = vshrl.u32 %v6027, 7
    %v6029 = vsub.s32 %v6026, %v6028
    %v6030 = vrot.slane %v6016, %v6029
    %v6031 = vcombine.low %v5966, %v5982
    %v6032 = vcombine.high %v5966, %v5982
    %v6034 = vunpack.c.l.s4 1934713408
    %v6035 = vunpack.c.0.s8 %v6034
    %v6036 = vlaneseq
    %v6037 = vshrl.u32 %v6036, 7
    %v6038 = vsub.s32 %v6035, %v6037
    %v6039 = vrot.slane %v6031, %v6038
    %v6041 = vunpack.c.l.s4 1934713408
    %v6042 = vunpack.c.0.s8 %v6041
    %v6043 = vlaneseq
    %v6044 = vshrl.u32 %v6043, 7
    %v6045 = vsub.s32 %v6042, %v6044
    %v6046 = vrot.slane %v6032, %v6045
    %v6047 = vcombine.low %v5991, %v6007
    %v6048 = vcombine.high %v5991, %v6007
    %v6050 = vunpack.c.l.s4 1934713408
    %v6051 = vunpack.c.0.s8 %v6050
    %v6052 = vlaneseq
    %v6053 = vshrl.u32 %v6052, 7
    %v6054 = vsub.s32 %v6051, %v6053
    %v6055 = vrot.slane %v6047, %v6054
    %v6057 = vunpack.c.l.s4 1934713408
    %v6058 = vunpack.c.0.s8 %v6057
    %v6059 = vlaneseq
    %v6060 = vshrl.u32 %v6059, 7
    %v6061 = vsub.s32 %v6058, %v6060
    %v6062 = vrot.slane %v6048, %v6061
    %v6063 = vcombine.low %v5998, %v6014
    %v6064 = vcombine.high %v5998, %v6014
    %v6066 = vunpack.c.l.s4 1934713408
    %v6067 = vunpack.c.0.s8 %v6066
    %v6068 = vlaneseq
    %v6069 = vshrl.u32 %v6068, 7
    %v6070 = vsub.s32 %v6067, %v6069
    %v6071 = vrot.slane %v6063, %v6070
    %v6073 = vunpack.c.l.s4 1934713408
    %v6074 = vunpack.c.0.s8 %v6073
    %v6075 = vlaneseq
    %v6076 = vshrl.u32 %v6075, 7
    %v6077 = vsub.s32 %v6074, %v6076
    %v6078 = vrot.slane %v6064, %v6077
    %v6079 = vcombine.low %v6023, %v6055
    %v6080 = vcombine.high %v6023, %v6055
    %v6081 = vcombine.low %v6030, %v6062
    %v6082 = vcombine.high %v6030, %v6062
    %v6083 = vcombine.low %v6039, %v6071
    %v6084 = vcombine.high %v6039, %v6071
    %v6085 = vcombine.low %v6046, %v6078
    %v6086 = vcombine.high %v6046, %v6078
    %v6087 = vcombine.low %v1919, %v1921
    %v6088 = vcombine.high %v1919, %v1921
    %v6090 = vunpack.c.l.s4 1983009808
    %v6091 = vunpack.c.0.s8 %v6090
    %v6092 = vlaneseq
    %v6093 = vshrl.u32 %v6092, 7
    %v6094 = vsub.s32 %v6091, %v6093
    %v6095 = vrot.slane %v6087, %v6094
    %v6097 = vunpack.c.l.s4 1983009808
    %v6098 = vunpack.c.0.s8 %v6097
    %v6099 = vlaneseq
    %v6100 = vshrl.u32 %v6099, 7
    %v6101 = vsub.s32 %v6098, %v6100
    %v6102 = vrot.slane %v6088, %v6101
    %v6103 = vcombine.low %v3719, %v3721
    %v6104 = vcombine.high %v3719, %v3721
    %v6106 = vunpack.c.l.s4 1983009808
    %v6107 = vunpack.c.0.s8 %v6106
    %v6108 = vlaneseq
    %v6109 = vshrl.u32 %v6108, 7
    %v6110 = vsub.s32 %v6107, %v6109
    %v6111 = vrot.slane %v6103, %v6110
    %v6113 = vunpack.c.l.s4 1983009808
    %v6114 = vunpack.c.0.s8 %v6113
    %v6115 = vlaneseq
    %v6116 = vshrl.u32 %v6115, 7
    %v6117 = vsub.s32 %v6114, %v6116
    %v6118 = vrot.slane %v6104, %v6117
    %v6119 = vcombine.low %v1923, %v1925
    %v6120 = vcombine.high %v1923, %v1925
    %v6122 = vunpack.c.l.s4 1983009808
    %v6123 = vunpack.c.0.s8 %v6122
    %v6124 = vlaneseq
    %v6125 = vshrl.u32 %v6124, 7
    %v6126 = vsub.s32 %v6123, %v6125
    %v6127 = vrot.slane %v6119, %v6126
    %v6129 = vunpack.c.l.s4 1983009808
    %v6130 = vunpack.c.0.s8 %v6129
    %v6131 = vlaneseq
    %v6132 = vshrl.u32 %v6131, 7
    %v6133 = vsub.s32 %v6130, %v6132
    %v6134 = vrot.slane %v6120, %v6133
    %v6135 = vcombine.low %v3723, %v3725
    %v6136 = vcombine.high %v3723, %v3725
    %v6138 = vunpack.c.l.s4 1983009808
    %v6139 = vunpack.c.0.s8 %v6138
    %v6140 = vlaneseq
    %v6141 = vshrl.u32 %v6140, 7
    %v6142 = vsub.s32 %v6139, %v6141
    %v6143 = vrot.slane %v6135, %v6142
    %v6145 = vunpack.c.l.s4 1983009808
    %v6146 = vunpack.c.0.s8 %v6145
    %v6147 = vlaneseq
    %v6148 = vshrl.u32 %v6147, 7
    %v6149 = vsub.s32 %v6146, %v6148
    %v6150 = vrot.slane %v6136, %v6149
    %v6151 = vcombine.low %v6095, %v6111
    %v6152 = vcombine.high %v6095, %v6111
    %v6154 = vunpack.c.l.s4 1934713408
    %v6155 = vunpack.c.0.s8 %v6154
    %v6156 = vlaneseq
    %v6157 = vshrl.u32 %v6156, 7
    %v6158 = vsub.s32 %v6155, %v6157
    %v6159 = vrot.slane %v6151, %v6158
    %v6161 = vunpack.c.l.s4 1934713408
    %v6162 = vunpack.c.0.s8 %v6161
    %v6163 = vlaneseq
    %v6164 = vshrl.u32 %v6163, 7
    %v6165 = vsub.s32 %v6162, %v6164
    %v6166 = vrot.slane %v6152, %v6165
    %v6167 = vcombine.low %v6102, %v6118
    %v6168 = vcombine.high %v6102, %v6118
    %v6170 = vunpack.c.l.s4 1934713408
    %v6171 = vunpack.c.0.s8 %v6170
    %v6172 = vlaneseq
    %v6173 = vshrl.u32 %v6172, 7
    %v6174 = vsub.s32 %v6171, %v6173
    %v6175 = vrot.slane %v6167, %v6174
    %v6177 = vunpack.c.l.s4 1934713408
    %v6178 = vunpack.c.0.s8 %v6177
    %v6179 = vlaneseq
    %v6180 = vshrl.u32 %v6179, 7
    %v6181 = vsub.s32 %v6178, %v6180
    %v6182 = vrot.slane %v6168, %v6181
    %v6183 = vcombine.low %v6127, %v6143
    %v6184 = vcombine.high %v6127, %v6143
    %v6186 = vunpack.c.l.s4 1934713408
    %v6187 = vunpack.c.0.s8 %v6186
    %v6188 = vlaneseq
    %v6189 = vshrl.u32 %v6188, 7
    %v6190 = vsub.s32 %v6187, %v6189
    %v6191 = vrot.slane %v6183, %v6190
    %v6193 = vunpack.c.l.s4 1934713408
    %v6194 = vunpack.c.0.s8 %v6193
    %v6195 = vlaneseq
    %v6196 = vshrl.u32 %v6195, 7
    %v6197 = vsub.s32 %v6194, %v6196
    %v6198 = vrot.slane %v6184, %v6197
    %v6199 = vcombine.low %v6134, %v6150
    %v6200 = vcombine.high %v6134, %v6150
    %v6202 = vunpack.c.l.s4 1934713408
    %v6203 = vunpack.c.0.s8 %v6202
    %v6204 = vlaneseq
    %v6205 = vshrl.u32 %v6204, 7
    %v6206 = vsub.s32 %v6203, %v6205
    %v6207 = vrot.slane %v6199, %v6206
    %v6209 = vunpack.c.l.s4 1934713408
    %v6210 = vunpack.c.0.s8 %v6209
    %v6211 = vlaneseq
    %v6212 = vshrl.u32 %v6211, 7
    %v6213 = vsub.s32 %v6210, %v6212
    %v6214 = vrot.slane %v6200, %v6213
    %v6215 = vcombine.low %v6159, %v6191
    %v6216 = vcombine.high %v6159, %v6191
    %v6217 = vcombine.low %v6166, %v6198
    %v6218 = vcombine.high %v6166, %v6198
    %v6219 = vcombine.low %v6175, %v6207
    %v6220 = vcombine.high %v6175, %v6207
    %v6221 = vcombine.low %v6182, %v6214
    %v6222 = vcombine.high %v6182, %v6214
    %v6223 = vcombine.low %v1927, %v1929
    %v6224 = vcombine.high %v1927, %v1929
    %v6226 = vunpack.c.l.s4 1983009808
    %v6227 = vunpack.c.0.s8 %v6226
    %v6228 = vlaneseq
    %v6229 = vshrl.u32 %v6228, 7
    %v6230 = vsub.s32 %v6227, %v6229
    %v6231 = vrot.slane %v6223, %v6230
    %v6233 = vunpack.c.l.s4 1983009808
    %v6234 = vunpack.c.0.s8 %v6233
    %v6235 = vlaneseq
    %v6236 = vshrl.u32 %v6235, 7
    %v6237 = vsub.s32 %v6234, %v6236
    %v6238 = vrot.slane %v6224, %v6237
    %v6239 = vcombine.low %v3727, %v3729
    %v6240 = vcombine.high %v3727, %v3729
    %v6242 = vunpack.c.l.s4 1983009808
    %v6243 = vunpack.c.0.s8 %v6242
    %v6244 = vlaneseq
    %v6245 = vshrl.u32 %v6244, 7
    %v6246 = vsub.s32 %v6243, %v6245
    %v6247 = vrot.slane %v6239, %v6246
    %v6249 = vunpack.c.l.s4 1983009808
    %v6250 = vunpack.c.0.s8 %v6249
    %v6251 = vlaneseq
    %v6252 = vshrl.u32 %v6251, 7
    %v6253 = vsub.s32 %v6250, %v6252
    %v6254 = vrot.slane %v6240, %v6253
    %v6255 = vcombine.low %v1931, %v1933
    %v6256 = vcombine.high %v1931, %v1933
    %v6258 = vunpack.c.l.s4 1983009808
    %v6259 = vunpack.c.0.s8 %v6258
    %v6260 = vlaneseq
    %v6261 = vshrl.u32 %v6260, 7
    %v6262 = vsub.s32 %v6259, %v6261
    %v6263 = vrot.slane %v6255, %v6262
    %v6265 = vunpack.c.l.s4 1983009808
    %v6266 = vunpack.c.0.s8 %v6265
    %v6267 = vlaneseq
    %v6268 = vshrl.u32 %v6267, 7
    %v6269 = vsub.s32 %v6266, %v6268
    %v6270 = vrot.slane %v6256, %v6269
    %v6271 = vcombine.low %v3731, %v3733
    %v6272 = vcombine.high %v3731, %v3733
    %v6274 = vunpack.c.l.s4 1983009808
    %v6275 = vunpack.c.0.s8 %v6274
    %v6276 = vlaneseq
    %v6277 = vshrl.u32 %v6276, 7
    %v6278 = vsub.s32 %v6275, %v6277
    %v6279 = vrot.slane %v6271, %v6278
    %v6281 = vunpack.c.l.s4 1983009808
    %v6282 = vunpack.c.0.s8 %v6281
    %v6283 = vlaneseq
    %v6284 = vshrl.u32 %v6283, 7
    %v6285 = vsub.s32 %v6282, %v6284
    %v6286 = vrot.slane %v6272, %v6285
    %v6287 = vcombine.low %v6231, %v6247
    %v6288 = vcombine.high %v6231, %v6247
    %v6290 = vunpack.c.l.s4 1934713408
    %v6291 = vunpack.c.0.s8 %v6290
    %v6292 = vlaneseq
    %v6293 = vshrl.u32 %v6292, 7
    %v6294 = vsub.s32 %v6291, %v6293
    %v6295 = vrot.slane %v6287, %v6294
    %v6297 = vunpack.c.l.s4 1934713408
    %v6298 = vunpack.c.0.s8 %v6297
    %v6299 = vlaneseq
    %v6300 = vshrl.u32 %v6299, 7
    %v6301 = vsub.s32 %v6298, %v6300
    %v6302 = vrot.slane %v6288, %v6301
    %v6303 = vcombine.low %v6238, %v6254
    %v6304 = vcombine.high %v6238, %v6254
    %v6306 = vunpack.c.l.s4 1934713408
    %v6307 = vunpack.c.0.s8 %v6306
    %v6308 = vlaneseq
    %v6309 = vshrl.u32 %v6308, 7
    %v6310 = vsub.s32 %v6307, %v6309
    %v6311 = vrot.slane %v6303, %v6310
    %v6313 = vunpack.c.l.s4 1934713408
    %v6314 = vunpack.c.0.s8 %v6313
    %v6315 = vlaneseq
    %v6316 = vshrl.u32 %v6315, 7
    %v6317 = vsub.s32 %v6314, %v6316
    %v6318 = vrot.slane %v6304, %v6317
    %v6319 = vcombine.low %v6263, %v6279
    %v6320 = vcombine.high %v6263, %v6279
    %v6322 = vunpack.c.l.s4 1934713408
    %v6323 = vunpack.c.0.s8 %v6322
    %v6324 = vlaneseq
    %v6325 = vshrl.u32 %v6324, 7
    %v6326 = vsub.s32 %v6323, %v6325
    %v6327 = vrot.slane %v6319, %v6326
    %v6329 = vunpack.c.l.s4 1934713408
    %v6330 = vunpack.c.0.s8 %v6329
    %v6331 = vlaneseq
    %v6332 = vshrl.u32 %v6331, 7
    %v6333 = vsub.s32 %v6330, %v6332
    %v6334 = vrot.slane %v6320, %v6333
    %v6335 = vcombine.low %v6270, %v6286
    %v6336 = vcombine.high %v6270, %v6286
    %v6338 = vunpack.c.l.s4 1934713408
    %v6339 = vunpack.c.0.s8 %v6338
    %v6340 = vlaneseq
    %v6341 = vshrl.u32 %v6340, 7
    %v6342 = vsub.s32 %v6339, %v6341
    %v6343 = vrot.slane %v6335, %v6342
    %v6345 = vunpack.c.l.s4 1934713408
    %v6346 = vunpack.c.0.s8 %v6345
    %v6347 = vlaneseq
    %v6348 = vshrl.u32 %v6347, 7
    %v6349 = vsub.s32 %v6346, %v6348
    %v6350 = vrot.slane %v6336, %v6349
    %v6351 = vcombine.low %v6295, %v6327
    %v6352 = vcombine.high %v6295, %v6327
    %v6353 = vcombine.low %v6302, %v6334
    %v6354 = vcombine.high %v6302, %v6334
    %v6355 = vcombine.low %v6311, %v6343
    %v6356 = vcombine.high %v6311, %v6343
    %v6357 = vcombine.low %v6318, %v6350
    %v6358 = vcombine.high %v6318, %v6350
    %v6359 = vcombine.low %v1935, %v1937
    %v6360 = vcombine.high %v1935, %v1937
    %v6362 = vunpack.c.l.s4 1983009808
    %v6363 = vunpack.c.0.s8 %v6362
    %v6364 = vlaneseq
    %v6365 = vshrl.u32 %v6364, 7
    %v6366 = vsub.s32 %v6363, %v6365
    %v6367 = vrot.slane %v6359, %v6366
    %v6369 = vunpack.c.l.s4 1983009808
    %v6370 = vunpack.c.0.s8 %v6369
    %v6371 = vlaneseq
    %v6372 = vshrl.u32 %v6371, 7
    %v6373 = vsub.s32 %v6370, %v6372
    %v6374 = vrot.slane %v6360, %v6373
    %v6375 = vcombine.low %v3735, %v3737
    %v6376 = vcombine.high %v3735, %v3737
    %v6378 = vunpack.c.l.s4 1983009808
    %v6379 = vunpack.c.0.s8 %v6378
    %v6380 = vlaneseq
    %v6381 = vshrl.u32 %v6380, 7
    %v6382 = vsub.s32 %v6379, %v6381
    %v6383 = vrot.slane %v6375, %v6382
    %v6385 = vunpack.c.l.s4 1983009808
    %v6386 = vunpack.c.0.s8 %v6385
    %v6387 = vlaneseq
    %v6388 = vshrl.u32 %v6387, 7
    %v6389 = vsub.s32 %v6386, %v6388
    %v6390 = vrot.slane %v6376, %v6389
    %v6391 = vcombine.low %v1939, %v1941
    %v6392 = vcombine.high %v1939, %v1941
    %v6394 = vunpack.c.l.s4 1983009808
    %v6395 = vunpack.c.0.s8 %v6394
    %v6396 = vlaneseq
    %v6397 = vshrl.u32 %v6396, 7
    %v6398 = vsub.s32 %v6395, %v6397
    %v6399 = vrot.slane %v6391, %v6398
    %v6401 = vunpack.c.l.s4 1983009808
    %v6402 = vunpack.c.0.s8 %v6401
    %v6403 = vlaneseq
    %v6404 = vshrl.u32 %v6403, 7
    %v6405 = vsub.s32 %v6402, %v6404
    %v6406 = vrot.slane %v6392, %v6405
    %v6407 = vcombine.low %v3739, %v3741
    %v6408 = vcombine.high %v3739, %v3741
    %v6410 = vunpack.c.l.s4 1983009808
    %v6411 = vunpack.c.0.s8 %v6410
    %v6412 = vlaneseq
    %v6413 = vshrl.u32 %v6412, 7
    %v6414 = vsub.s32 %v6411, %v6413
    %v6415 = vrot.slane %v6407, %v6414
    %v6417 = vunpack.c.l.s4 1983009808
    %v6418 = vunpack.c.0.s8 %v6417
    %v6419 = vlaneseq
    %v6420 = vshrl.u32 %v6419, 7
    %v6421 = vsub.s32 %v6418, %v6420
    %v6422 = vrot.slane %v6408, %v6421
    %v6423 = vcombine.low %v6367, %v6383
    %v6424 = vcombine.high %v6367, %v6383
    %v6426 = vunpack.c.l.s4 1934713408
    %v6427 = vunpack.c.0.s8 %v6426
    %v6428 = vlaneseq
    %v6429 = vshrl.u32 %v6428, 7
    %v6430 = vsub.s32 %v6427, %v6429
    %v6431 = vrot.slane %v6423, %v6430
    %v6433 = vunpack.c.l.s4 1934713408
    %v6434 = vunpack.c.0.s8 %v6433
    %v6435 = vlaneseq
    %v6436 = vshrl.u32 %v6435, 7
    %v6437 = vsub.s32 %v6434, %v6436
    %v6438 = vrot.slane %v6424, %v6437
    %v6439 = vcombine.low %v6374, %v6390
    %v6440 = vcombine.high %v6374, %v6390
    %v6442 = vunpack.c.l.s4 1934713408
    %v6443 = vunpack.c.0.s8 %v6442
    %v6444 = vlaneseq
    %v6445 = vshrl.u32 %v6444, 7
    %v6446 = vsub.s32 %v6443, %v6445
    %v6447 = vrot.slane %v6439, %v6446
    %v6449 = vunpack.c.l.s4 1934713408
    %v6450 = vunpack.c.0.s8 %v6449
    %v6451 = vlaneseq
    %v6452 = vshrl.u32 %v6451, 7
    %v6453 = vsub.s32 %v6450, %v6452
    %v6454 = vrot.slane %v6440, %v6453
    %v6455 = vcombine.low %v6399, %v6415
    %v6456 = vcombine.high %v6399, %v6415
    %v6458 = vunpack.c.l.s4 1934713408
    %v6459 = vunpack.c.0.s8 %v6458
    %v6460 = vlaneseq
    %v6461 = vshrl.u32 %v6460, 7
    %v6462 = vsub.s32 %v6459, %v6461
    %v6463 = vrot.slane %v6455, %v6462
    %v6465 = vunpack.c.l.s4 1934713408
    %v6466 = vunpack.c.0.s8 %v6465
    %v6467 = vlaneseq
    %v6468 = vshrl.u32 %v6467, 7
    %v6469 = vsub.s32 %v6466, %v6468
    %v6470 = vrot.slane %v6456, %v6469
    %v6471 = vcombine.low %v6406, %v6422
    %v6472 = vcombine.high %v6406, %v6422
    %v6474 = vunpack.c.l.s4 1934713408
    %v6475 = vunpack.c.0.s8 %v6474
    %v6476 = vlaneseq
    %v6477 = vshrl.u32 %v6476, 7
    %v6478 = vsub.s32 %v6475, %v6477
    %v6479 = vrot.slane %v6471, %v6478
    %v6481 = vunpack.c.l.s4 1934713408
    %v6482 = vunpack.c.0.s8 %v6481
    %v6483 = vlaneseq
    %v6484 = vshrl.u32 %v6483, 7
    %v6485 = vsub.s32 %v6482, %v6484
    %v6486 = vrot.slane %v6472, %v6485
    %v6487 = vcombine.low %v6431, %v6463
    %v6488 = vcombine.high %v6431, %v6463
    %v6489 = vcombine.low %v6438, %v6470
    %v6490 = vcombine.high %v6438, %v6470
    %v6491 = vcombine.low %v6447, %v6479
    %v6492 = vcombine.high %v6447, %v6479
    %v6493 = vcombine.low %v6454, %v6486
    %v6494 = vcombine.high %v6454, %v6486
    %v6495 = vcombine.low %v1912, %v1914
    %v6496 = vcombine.high %v1912, %v1914
    %v6498 = vunpack.c.l.s4 1983009808
    %v6499 = vunpack.c.0.s8 %v6498
    %v6500 = vlaneseq
    %v6501 = vshrl.u32 %v6500, 7
    %v6502 = vsub.s32 %v6499, %v6501
    %v6503 = vrot.slane %v6495, %v6502
    %v6505 = vunpack.c.l.s4 1983009808
    %v6506 = vunpack.c.0.s8 %v6505
    %v6507 = vlaneseq
    %v6508 = vshrl.u32 %v6507, 7
    %v6509 = vsub.s32 %v6506, %v6508
    %v6510 = vrot.slane %v6496, %v6509
    %v6511 = vcombine.low %v3712, %v3714
    %v6512 = vcombine.high %v3712, %v3714
    %v6514 = vunpack.c.l.s4 1983009808
    %v6515 = vunpack.c.0.s8 %v6514
    %v6516 = vlaneseq
    %v6517 = vshrl.u32 %v6516, 7
    %v6518 = vsub.s32 %v6515, %v6517
    %v6519 = vrot.slane %v6511, %v6518
    %v6521 = vunpack.c.l.s4 1983009808
    %v6522 = vunpack.c.0.s8 %v6521
    %v6523 = vlaneseq
    %v6524 = vshrl.u32 %v6523, 7
    %v6525 = vsub.s32 %v6522, %v6524
    %v6526 = vrot.slane %v6512, %v6525
    %v6527 = vcombine.low %v1916, %v1918
    %v6528 = vcombine.high %v1916, %v1918
    %v6530 = vunpack.c.l.s4 1983009808
    %v6531 = vunpack.c.0.s8 %v6530
    %v6532 = vlaneseq
    %v6533 = vshrl.u32 %v6532, 7
    %v6534 = vsub.s32 %v6531, %v6533
    %v6535 = vrot.slane %v6527, %v6534
    %v6537 = vunpack.c.l.s4 1983009808
    %v6538 = vunpack.c.0.s8 %v6537
    %v6539 = vlaneseq
    %v6540 = vshrl.u32 %v6539, 7
    %v6541 = vsub.s32 %v6538, %v6540
    %v6542 = vrot.slane %v6528, %v6541
    %v6543 = vcombine.low %v3716, %v3718
    %v6544 = vcombine.high %v3716, %v3718
    %v6546 = vunpack.c.l.s4 1983009808
    %v6547 = vunpack.c.0.s8 %v6546
    %v6548 = vlaneseq
    %v6549 = vshrl.u32 %v6548, 7
    %v6550 = vsub.s32 %v6547, %v6549
    %v6551 = vrot.slane %v6543, %v6550
    %v6553 = vunpack.c.l.s4 1983009808
    %v6554 = vunpack.c.0.s8 %v6553
    %v6555 = vlaneseq
    %v6556 = vshrl.u32 %v6555, 7
    %v6557 = vsub.s32 %v6554, %v6556
    %v6558 = vrot.slane %v6544, %v6557
    %v6559 = vcombine.low %v6503, %v6519
    %v6560 = vcombine.high %v6503, %v6519
    %v6562 = vunpack.c.l.s4 1934713408
    %v6563 = vunpack.c.0.s8 %v6562
    %v6564 = vlaneseq
    %v6565 = vshrl.u32 %v6564, 7
    %v6566 = vsub.s32 %v6563, %v6565
    %v6567 = vrot.slane %v6559, %v6566
    %v6569 = vunpack.c.l.s4 1934713408
    %v6570 = vunpack.c.0.s8 %v6569
    %v6571 = vlaneseq
    %v6572 = vshrl.u32 %v6571, 7
    %v6573 = vsub.s32 %v6570, %v6572
    %v6574 = vrot.slane %v6560, %v6573
    %v6575 = vcombine.low %v6510, %v6526
    %v6576 = vcombine.high %v6510, %v6526
    %v6578 = vunpack.c.l.s4 1934713408
    %v6579 = vunpack.c.0.s8 %v6578
    %v6580 = vlaneseq
    %v6581 = vshrl.u32 %v6580, 7
    %v6582 = vsub.s32 %v6579, %v6581
    %v6583 = vrot.slane %v6575, %v6582
    %v6585 = vunpack.c.l.s4 1934713408
    %v6586 = vunpack.c.0.s8 %v6585
    %v6587 = vlaneseq
    %v6588 = vshrl.u32 %v6587, 7
    %v6589 = vsub.s32 %v6586, %v6588
    %v6590 = vrot.slane %v6576, %v6589
    %v6591 = vcombine.low %v6535, %v6551
    %v6592 = vcombine.high %v6535, %v6551
    %v6594 = vunpack.c.l.s4 1934713408
    %v6595 = vunpack.c.0.s8 %v6594
    %v6596 = vlaneseq
    %v6597 = vshrl.u32 %v6596, 7
    %v6598 = vsub.s32 %v6595, %v6597
    %v6599 = vrot.slane %v6591, %v6598
    %v6601 = vunpack.c.l.s4 1934713408
    %v6602 = vunpack.c.0.s8 %v6601
    %v6603 = vlaneseq
    %v6604 = vshrl.u32 %v6603, 7
    %v6605 = vsub.s32 %v6602, %v6604
    %v6606 = vrot.slane %v6592, %v6605
    %v6607 = vcombine.low %v6542, %v6558
    %v6608 = vcombine.high %v6542, %v6558
    %v6610 = vunpack.c.l.s4 1934713408
    %v6611 = vunpack.c.0.s8 %v6610
    %v6612 = vlaneseq
    %v6613 = vshrl.u32 %v6612, 7
    %v6614 = vsub.s32 %v6611, %v6613
    %v6615 = vrot.slane %v6607, %v6614
    %v6617 = vunpack.c.l.s4 1934713408
    %v6618 = vunpack.c.0.s8 %v6617
    %v6619 = vlaneseq
    %v6620 = vshrl.u32 %v6619, 7
    %v6621 = vsub.s32 %v6618, %v6620
    %v6622 = vrot.slane %v6608, %v6621
    %v6623 = vcombine.low %v6567, %v6599
    %v6624 = vcombine.high %v6567, %v6599
    %v6625 = vcombine.low %v6574, %v6606
    %v6626 = vcombine.high %v6574, %v6606
    %v6627 = vcombine.low %v6583, %v6615
    %v6628 = vcombine.high %v6583, %v6615
    %v6629 = vcombine.low %v6590, %v6622
    %v6630 = vcombine.high %v6590, %v6622
    %v6631 = vcombine.low %v1920, %v1922
    %v6632 = vcombine.high %v1920, %v1922
    %v6634 = vunpack.c.l.s4 1983009808
    %v6635 = vunpack.c.0.s8 %v6634
    %v6636 = vlaneseq
    %v6637 = vshrl.u32 %v6636, 7
    %v6638 = vsub.s32 %v6635, %v6637
    %v6639 = vrot.slane %v6631, %v6638
    %v6641 = vunpack.c.l.s4 1983009808
    %v6642 = vunpack.c.0.s8 %v6641
    %v6643 = vlaneseq
    %v6644 = vshrl.u32 %v6643, 7
    %v6645 = vsub.s32 %v6642, %v6644
    %v6646 = vrot.slane %v6632, %v6645
    %v6647 = vcombine.low %v3720, %v3722
    %v6648 = vcombine.high %v3720, %v3722
    %v6650 = vunpack.c.l.s4 1983009808
    %v6651 = vunpack.c.0.s8 %v6650
    %v6652 = vlaneseq
    %v6653 = vshrl.u32 %v6652, 7
    %v6654 = vsub.s32 %v6651, %v6653
    %v6655 = vrot.slane %v6647, %v6654
    %v6657 = vunpack.c.l.s4 1983009808
    %v6658 = vunpack.c.0.s8 %v6657
    %v6659 = vlaneseq
    %v6660 = vshrl.u32 %v6659, 7
    %v6661 = vsub.s32 %v6658, %v6660
    %v6662 = vrot.slane %v6648, %v6661
    %v6663 = vcombine.low %v1924, %v1926
    %v6664 = vcombine.high %v1924, %v1926
    %v6666 = vunpack.c.l.s4 1983009808
    %v6667 = vunpack.c.0.s8 %v6666
    %v6668 = vlaneseq
    %v6669 = vshrl.u32 %v6668, 7
    %v6670 = vsub.s32 %v6667, %v6669
    %v6671 = vrot.slane %v6663, %v6670
    %v6673 = vunpack.c.l.s4 1983009808
    %v6674 = vunpack.c.0.s8 %v6673
    %v6675 = vlaneseq
    %v6676 = vshrl.u32 %v6675, 7
    %v6677 = vsub.s32 %v6674, %v6676
    %v6678 = vrot.slane %v6664, %v6677
    %v6679 = vcombine.low %v3724, %v3726
    %v6680 = vcombine.high %v3724, %v3726
    %v6682 = vunpack.c.l.s4 1983009808
    %v6683 = vunpack.c.0.s8 %v6682
    %v6684 = vlaneseq
    %v6685 = vshrl.u32 %v6684, 7
    %v6686 = vsub.s32 %v6683, %v6685
    %v6687 = vrot.slane %v6679, %v6686
    %v6689 = vunpack.c.l.s4 1983009808
    %v6690 = vunpack.c.0.s8 %v6689
    %v6691 = vlaneseq
    %v6692 = vshrl.u32 %v6691, 7
    %v6693 = vsub.s32 %v6690, %v6692
    %v6694 = vrot.slane %v6680, %v6693
    %v6695 = vcombine.low %v6639, %v6655
    %v6696 = vcombine.high %v6639, %v6655
    %v6698 = vunpack.c.l.s4 1934713408
    %v6699 = vunpack.c.0.s8 %v6698
    %v6700 = vlaneseq
    %v6701 = vshrl.u32 %v6700, 7
    %v6702 = vsub.s32 %v6699, %v6701
    %v6703 = vrot.slane %v6695, %v6702
    %v6705 = vunpack.c.l.s4 1934713408
    %v6706 = vunpack.c.0.s8 %v6705
    %v6707 = vlaneseq
    %v6708 = vshrl.u32 %v6707, 7
    %v6709 = vsub.s32 %v6706, %v6708
    %v6710 = vrot.slane %v6696, %v6709
    %v6711 = vcombine.low %v6646, %v6662
    %v6712 = vcombine.high %v6646, %v6662
    %v6714 = vunpack.c.l.s4 1934713408
    %v6715 = vunpack.c.0.s8 %v6714
    %v6716 = vlaneseq
    %v6717 = vshrl.u32 %v6716, 7
    %v6718 = vsub.s32 %v6715, %v6717
    %v6719 = vrot.slane %v6711, %v6718
    %v6721 = vunpack.c.l.s4 1934713408
    %v6722 = vunpack.c.0.s8 %v6721
    %v6723 = vlaneseq
    %v6724 = vshrl.u32 %v6723, 7
    %v6725 = vsub.s32 %v6722, %v6724
    %v6726 = vrot.slane %v6712, %v6725
    %v6727 = vcombine.low %v6671, %v6687
    %v6728 = vcombine.high %v6671, %v6687
    %v6730 = vunpack.c.l.s4 1934713408
    %v6731 = vunpack.c.0.s8 %v6730
    %v6732 = vlaneseq
    %v6733 = vshrl.u32 %v6732, 7
    %v6734 = vsub.s32 %v6731, %v6733
    %v6735 = vrot.slane %v6727, %v6734
    %v6737 = vunpack.c.l.s4 1934713408
    %v6738 = vunpack.c.0.s8 %v6737
    %v6739 = vlaneseq
    %v6740 = vshrl.u32 %v6739, 7
    %v6741 = vsub.s32 %v6738, %v6740
    %v6742 = vrot.slane %v6728, %v6741
    %v6743 = vcombine.low %v6678, %v6694
    %v6744 = vcombine.high %v6678, %v6694
    %v6746 = vunpack.c.l.s4 1934713408
    %v6747 = vunpack.c.0.s8 %v6746
    %v6748 = vlaneseq
    %v6749 = vshrl.u32 %v6748, 7
    %v6750 = vsub.s32 %v6747, %v6749
    %v6751 = vrot.slane %v6743, %v6750
    %v6753 = vunpack.c.l.s4 1934713408
    %v6754 = vunpack.c.0.s8 %v6753
    %v6755 = vlaneseq
    %v6756 = vshrl.u32 %v6755, 7
    %v6757 = vsub.s32 %v6754, %v6756
    %v6758 = vrot.slane %v6744, %v6757
    %v6759 = vcombine.low %v6703, %v6735
    %v6760 = vcombine.high %v6703, %v6735
    %v6761 = vcombine.low %v6710, %v6742
    %v6762 = vcombine.high %v6710, %v6742
    %v6763 = vcombine.low %v6719, %v6751
    %v6764 = vcombine.high %v6719, %v6751
    %v6765 = vcombine.low %v6726, %v6758
    %v6766 = vcombine.high %v6726, %v6758
    %v6767 = vcombine.low %v1928, %v1930
    %v6768 = vcombine.high %v1928, %v1930
    %v6770 = vunpack.c.l.s4 1983009808
    %v6771 = vunpack.c.0.s8 %v6770
    %v6772 = vlaneseq
    %v6773 = vshrl.u32 %v6772, 7
    %v6774 = vsub.s32 %v6771, %v6773
    %v6775 = vrot.slane %v6767, %v6774
    %v6777 = vunpack.c.l.s4 1983009808
    %v6778 = vunpack.c.0.s8 %v6777
    %v6779 = vlaneseq
    %v6780 = vshrl.u32 %v6779, 7
    %v6781 = vsub.s32 %v6778, %v6780
    %v6782 = vrot.slane %v6768, %v6781
    %v6783 = vcombine.low %v3728, %v3730
    %v6784 = vcombine.high %v3728, %v3730
    %v6786 = vunpack.c.l.s4 1983009808
    %v6787 = vunpack.c.0.s8 %v6786
    %v6788 = vlaneseq
    %v6789 = vshrl.u32 %v6788, 7
    %v6790 = vsub.s32 %v6787, %v6789
    %v6791 = vrot.slane %v6783, %v6790
    %v6793 = vunpack.c.l.s4 1983009808
    %v6794 = vunpack.c.0.s8 %v6793
    %v6795 = vlaneseq
    %v6796 = vshrl.u32 %v6795, 7
    %v6797 = vsub.s32 %v6794, %v6796
    %v6798 = vrot.slane %v6784, %v6797
    %v6799 = vcombine.low %v1932, %v1934
    %v6800 = vcombine.high %v1932, %v1934
    %v6802 = vunpack.c.l.s4 1983009808
    %v6803 = vunpack.c.0.s8 %v6802
    %v6804 = vlaneseq
    %v6805 = vshrl.u32 %v6804, 7
    %v6806 = vsub.s32 %v6803, %v6805
    %v6807 = vrot.slane %v6799, %v6806
    %v6809 = vunpack.c.l.s4 1983009808
    %v6810 = vunpack.c.0.s8 %v6809
    %v6811 = vlaneseq
    %v6812 = vshrl.u32 %v6811, 7
    %v6813 = vsub.s32 %v6810, %v6812
    %v6814 = vrot.slane %v6800, %v6813
    %v6815 = vcombine.low %v3732, %v3734
    %v6816 = vcombine.high %v3732, %v3734
    %v6818 = vunpack.c.l.s4 1983009808
    %v6819 = vunpack.c.0.s8 %v6818
    %v6820 = vlaneseq
    %v6821 = vshrl.u32 %v6820, 7
    %v6822 = vsub.s32 %v6819, %v6821
    %v6823 = vrot.slane %v6815, %v6822
    %v6825 = vunpack.c.l.s4 1983009808
    %v6826 = vunpack.c.0.s8 %v6825
    %v6827 = vlaneseq
    %v6828 = vshrl.u32 %v6827, 7
    %v6829 = vsub.s32 %v6826, %v6828
    %v6830 = vrot.slane %v6816, %v6829
    %v6831 = vcombine.low %v6775, %v6791
    %v6832 = vcombine.high %v6775, %v6791
    %v6834 = vunpack.c.l.s4 1934713408
    %v6835 = vunpack.c.0.s8 %v6834
    %v6836 = vlaneseq
    %v6837 = vshrl.u32 %v6836, 7
    %v6838 = vsub.s32 %v6835, %v6837
    %v6839 = vrot.slane %v6831, %v6838
    %v6841 = vunpack.c.l.s4 1934713408
    %v6842 = vunpack.c.0.s8 %v6841
    %v6843 = vlaneseq
    %v6844 = vshrl.u32 %v6843, 7
    %v6845 = vsub.s32 %v6842, %v6844
    %v6846 = vrot.slane %v6832, %v6845
    %v6847 = vcombine.low %v6782, %v6798
    %v6848 = vcombine.high %v6782, %v6798
    %v6850 = vunpack.c.l.s4 1934713408
    %v6851 = vunpack.c.0.s8 %v6850
    %v6852 = vlaneseq
    %v6853 = vshrl.u32 %v6852, 7
    %v6854 = vsub.s32 %v6851, %v6853
    %v6855 = vrot.slane %v6847, %v6854
    %v6857 = vunpack.c.l.s4 1934713408
    %v6858 = vunpack.c.0.s8 %v6857
    %v6859 = vlaneseq
    %v6860 = vshrl.u32 %v6859, 7
    %v6861 = vsub.s32 %v6858, %v6860
    %v6862 = vrot.slane %v6848, %v6861
    %v6863 = vcombine.low %v6807, %v6823
    %v6864 = vcombine.high %v6807, %v6823
    %v6866 = vunpack.c.l.s4 1934713408
    %v6867 = vunpack.c.0.s8 %v6866
    %v6868 = vlaneseq
    %v6869 = vshrl.u32 %v6868, 7
    %v6870 = vsub.s32 %v6867, %v6869
    %v6871 = vrot.slane %v6863, %v6870
    %v6873 = vunpack.c.l.s4 1934713408
    %v6874 = vunpack.c.0.s8 %v6873
    %v6875 = vlaneseq
    %v6876 = vshrl.u32 %v6875, 7
    %v6877 = vsub.s32 %v6874, %v6876
    %v6878 = vrot.slane %v6864, %v6877
    %v6879 = vcombine.low %v6814, %v6830
    %v6880 = vcombine.high %v6814, %v6830
    %v6882 = vunpack.c.l.s4 1934713408
    %v6883 = vunpack.c.0.s8 %v6882
    %v6884 = vlaneseq
    %v6885 = vshrl.u32 %v6884, 7
    %v6886 = vsub.s32 %v6883, %v6885
    %v6887 = vrot.slane %v6879, %v6886
    %v6889 = vunpack.c.l.s4 1934713408
    %v6890 = vunpack.c.0.s8 %v6889
    %v6891 = vlaneseq
    %v6892 = vshrl.u32 %v6891, 7
    %v6893 = vsub.s32 %v6890, %v6892
    %v6894 = vrot.slane %v6880, %v6893
    %v6895 = vcombine.low %v6839, %v6871
    %v6896 = vcombine.high %v6839, %v6871
    %v6897 = vcombine.low %v6846, %v6878
    %v6898 = vcombine.high %v6846, %v6878
    %v6899 = vcombine.low %v6855, %v6887
    %v6900 = vcombine.high %v6855, %v6887
    %v6901 = vcombine.low %v6862, %v6894
    %v6902 = vcombine.high %v6862, %v6894
    %v6903 = vcombine.low %v1936, %v1938
    %v6904 = vcombine.high %v1936, %v1938
    %v6906 = vunpack.c.l.s4 1983009808
    %v6907 = vunpack.c.0.s8 %v6906
    %v6908 = vlaneseq
    %v6909 = vshrl.u32 %v6908, 7
    %v6910 = vsub.s32 %v6907, %v6909
    %v6911 = vrot.slane %v6903, %v6910
    %v6913 = vunpack.c.l.s4 1983009808
    %v6914 = vunpack.c.0.s8 %v6913
    %v6915 = vlaneseq
    %v6916 = vshrl.u32 %v6915, 7
    %v6917 = vsub.s32 %v6914, %v6916
    %v6918 = vrot.slane %v6904, %v6917
    %v6919 = vcombine.low %v3736, %v3738
    %v6920 = vcombine.high %v3736, %v3738
    %v6922 = vunpack.c.l.s4 1983009808
    %v6923 = vunpack.c.0.s8 %v6922
    %v6924 = vlaneseq
    %v6925 = vshrl.u32 %v6924, 7
    %v6926 = vsub.s32 %v6923, %v6925
    %v6927 = vrot.slane %v6919, %v6926
    %v6929 = vunpack.c.l.s4 1983009808
    %v6930 = vunpack.c.0.s8 %v6929
    %v6931 = vlaneseq
    %v6932 = vshrl.u32 %v6931, 7
    %v6933 = vsub.s32 %v6930, %v6932
    %v6934 = vrot.slane %v6920, %v6933
    %v6935 = vcombine.low %v1940, %v1942
    %v6936 = vcombine.high %v1940, %v1942
    %v6938 = vunpack.c.l.s4 1983009808
    %v6939 = vunpack.c.0.s8 %v6938
    %v6940 = vlaneseq
    %v6941 = vshrl.u32 %v6940, 7
    %v6942 = vsub.s32 %v6939, %v6941
    %v6943 = vrot.slane %v6935, %v6942
    %v6945 = vunpack.c.l.s4 1983009808
    %v6946 = vunpack.c.0.s8 %v6945
    %v6947 = vlaneseq
    %v6948 = vshrl.u32 %v6947, 7
    %v6949 = vsub.s32 %v6946, %v6948
    %v6950 = vrot.slane %v6936, %v6949
    %v6951 = vcombine.low %v3740, %v3742
    %v6952 = vcombine.high %v3740, %v3742
    %v6954 = vunpack.c.l.s4 1983009808
    %v6955 = vunpack.c.0.s8 %v6954
    %v6956 = vlaneseq
    %v6957 = vshrl.u32 %v6956, 7
    %v6958 = vsub.s32 %v6955, %v6957
    %v6959 = vrot.slane %v6951, %v6958
    %v6961 = vunpack.c.l.s4 1983009808
    %v6962 = vunpack.c.0.s8 %v6961
    %v6963 = vlaneseq
    %v6964 = vshrl.u32 %v6963, 7
    %v6965 = vsub.s32 %v6962, %v6964
    %v6966 = vrot.slane %v6952, %v6965
    %v6967 = vcombine.low %v6911, %v6927
    %v6968 = vcombine.high %v6911, %v6927
    %v6970 = vunpack.c.l.s4 1934713408
    %v6971 = vunpack.c.0.s8 %v6970
    %v6972 = vlaneseq
    %v6973 = vshrl.u32 %v6972, 7
    %v6974 = vsub.s32 %v6971, %v6973
    %v6975 = vrot.slane %v6967, %v6974
    %v6977 = vunpack.c.l.s4 1934713408
    %v6978 = vunpack.c.0.s8 %v6977
    %v6979 = vlaneseq
    %v6980 = vshrl.u32 %v6979, 7
    %v6981 = vsub.s32 %v6978, %v6980
    %v6982 = vrot.slane %v6968, %v6981
    %v6983 = vcombine.low %v6918, %v6934
    %v6984 = vcombine.high %v6918, %v6934
    %v6986 = vunpack.c.l.s4 1934713408
    %v6987 = vunpack.c.0.s8 %v6986
    %v6988 = vlaneseq
    %v6989 = vshrl.u32 %v6988, 7
    %v6990 = vsub.s32 %v6987, %v6989
    %v6991 = vrot.slane %v6983, %v6990
    %v6993 = vunpack.c.l.s4 1934713408
    %v6994 = vunpack.c.0.s8 %v6993
    %v6995 = vlaneseq
    %v6996 = vshrl.u32 %v6995, 7
    %v6997 = vsub.s32 %v6994, %v6996
    %v6998 = vrot.slane %v6984, %v6997
    %v6999 = vcombine.low %v6943, %v6959
    %v7000 = vcombine.high %v6943, %v6959
    %v7002 = vunpack.c.l.s4 1934713408
    %v7003 = vunpack.c.0.s8 %v7002
    %v7004 = vlaneseq
    %v7005 = vshrl.u32 %v7004, 7
    %v7006 = vsub.s32 %v7003, %v7005
    %v7007 = vrot.slane %v6999, %v7006
    %v7009 = vunpack.c.l.s4 1934713408
    %v7010 = vunpack.c.0.s8 %v7009
    %v7011 = vlaneseq
    %v7012 = vshrl.u32 %v7011, 7
    %v7013 = vsub.s32 %v7010, %v7012
    %v7014 = vrot.slane %v7000, %v7013
    %v7015 = vcombine.low %v6950, %v6966
    %v7016 = vcombine.high %v6950, %v6966
    %v7018 = vunpack.c.l.s4 1934713408
    %v7019 = vunpack.c.0.s8 %v7018
    %v7020 = vlaneseq
    %v7021 = vshrl.u32 %v7020, 7
    %v7022 = vsub.s32 %v7019, %v7021
    %v7023 = vrot.slane %v7015, %v7022
    %v7025 = vunpack.c.l.s4 1934713408
    %v7026 = vunpack.c.0.s8 %v7025
    %v7027 = vlaneseq
    %v7028 = vshrl.u32 %v7027, 7
    %v7029 = vsub.s32 %v7026, %v7028
    %v7030 = vrot.slane %v7016, %v7029
    %v7031 = vcombine.low %v6975, %v7007
    %v7032 = vcombine.high %v6975, %v7007
    %v7033 = vcombine.low %v6982, %v7014
    %v7034 = vcombine.high %v6982, %v7014
    %v7035 = vcombine.low %v6991, %v7023
    %v7036 = vcombine.high %v6991, %v7023
    %v7037 = vcombine.low %v6998, %v7030
    %v7038 = vcombine.high %v6998, %v7030
    %v7039 = vcombine.low %v1943, %v1945
    %v7040 = vcombine.high %v1943, %v1945
    %v7042 = vunpack.c.l.s4 1983009808
    %v7043 = vunpack.c.0.s8 %v7042
    %v7044 = vlaneseq
    %v7045 = vshrl.u32 %v7044, 7
    %v7046 = vsub.s32 %v7043, %v7045
    %v7047 = vrot.slane %v7039, %v7046
    %v7049 = vunpack.c.l.s4 1983009808
    %v7050 = vunpack.c.0.s8 %v7049
    %v7051 = vlaneseq
    %v7052 = vshrl.u32 %v7051, 7
    %v7053 = vsub.s32 %v7050, %v7052
    %v7054 = vrot.slane %v7040, %v7053
    %v7055 = vcombine.low %v3743, %v3745
    %v7056 = vcombine.high %v3743, %v3745
    %v7058 = vunpack.c.l.s4 1983009808
    %v7059 = vunpack.c.0.s8 %v7058
    %v7060 = vlaneseq
    %v7061 = vshrl.u32 %v7060, 7
    %v7062 = vsub.s32 %v7059, %v7061
    %v7063 = vrot.slane %v7055, %v7062
    %v7065 = vunpack.c.l.s4 1983009808
    %v7066 = vunpack.c.0.s8 %v7065
    %v7067 = vlaneseq
    %v7068 = vshrl.u32 %v7067, 7
    %v7069 = vsub.s32 %v7066, %v7068
    %v7070 = vrot.slane %v7056, %v7069
    %v7071 = vcombine.low %v1947, %v1949
    %v7072 = vcombine.high %v1947, %v1949
    %v7074 = vunpack.c.l.s4 1983009808
    %v7075 = vunpack.c.0.s8 %v7074
    %v7076 = vlaneseq
    %v7077 = vshrl.u32 %v7076, 7
    %v7078 = vsub.s32 %v7075, %v7077
    %v7079 = vrot.slane %v7071, %v7078
    %v7081 = vunpack.c.l.s4 1983009808
    %v7082 = vunpack.c.0.s8 %v7081
    %v7083 = vlaneseq
    %v7084 = vshrl.u32 %v7083, 7
    %v7085 = vsub.s32 %v7082, %v7084
    %v7086 = vrot.slane %v7072, %v7085
    %v7087 = vcombine.low %v3747, %v3749
    %v7088 = vcombine.high %v3747, %v3749
    %v7090 = vunpack.c.l.s4 1983009808
    %v7091 = vunpack.c.0.s8 %v7090
    %v7092 = vlaneseq
    %v7093 = vshrl.u32 %v7092, 7
    %v7094 = vsub.s32 %v7091, %v7093
    %v7095 = vrot.slane %v7087, %v7094
    %v7097 = vunpack.c.l.s4 1983009808
    %v7098 = vunpack.c.0.s8 %v7097
    %v7099 = vlaneseq
    %v7100 = vshrl.u32 %v7099, 7
    %v7101 = vsub.s32 %v7098, %v7100
    %v7102 = vrot.slane %v7088, %v7101
    %v7103 = vcombine.low %v7047, %v7063
    %v7104 = vcombine.high %v7047, %v7063
    %v7106 = vunpack.c.l.s4 1934713408
    %v7107 = vunpack.c.0.s8 %v7106
    %v7108 = vlaneseq
    %v7109 = vshrl.u32 %v7108, 7
    %v7110 = vsub.s32 %v7107, %v7109
    %v7111 = vrot.slane %v7103, %v7110
    %v7113 = vunpack.c.l.s4 1934713408
    %v7114 = vunpack.c.0.s8 %v7113
    %v7115 = vlaneseq
    %v7116 = vshrl.u32 %v7115, 7
    %v7117 = vsub.s32 %v7114, %v7116
    %v7118 = vrot.slane %v7104, %v7117
    %v7119 = vcombine.low %v7054, %v7070
    %v7120 = vcombine.high %v7054, %v7070
    %v7122 = vunpack.c.l.s4 1934713408
    %v7123 = vunpack.c.0.s8 %v7122
    %v7124 = vlaneseq
    %v7125 = vshrl.u32 %v7124, 7
    %v7126 = vsub.s32 %v7123, %v7125
    %v7127 = vrot.slane %v7119, %v7126
    %v7129 = vunpack.c.l.s4 1934713408
    %v7130 = vunpack.c.0.s8 %v7129
    %v7131 = vlaneseq
    %v7132 = vshrl.u32 %v7131, 7
    %v7133 = vsub.s32 %v7130, %v7132
    %v7134 = vrot.slane %v7120, %v7133
    %v7135 = vcombine.low %v7079, %v7095
    %v7136 = vcombine.high %v7079, %v7095
    %v7138 = vunpack.c.l.s4 1934713408
    %v7139 = vunpack.c.0.s8 %v7138
    %v7140 = vlaneseq
    %v7141 = vshrl.u32 %v7140, 7
    %v7142 = vsub.s32 %v7139, %v7141
    %v7143 = vrot.slane %v7135, %v7142
    %v7145 = vunpack.c.l.s4 1934713408
    %v7146 = vunpack.c.0.s8 %v7145
    %v7147 = vlaneseq
    %v7148 = vshrl.u32 %v7147, 7
    %v7149 = vsub.s32 %v7146, %v7148
    %v7150 = vrot.slane %v7136, %v7149
    %v7151 = vcombine.low %v7086, %v7102
    %v7152 = vcombine.high %v7086, %v7102
    %v7154 = vunpack.c.l.s4 1934713408
    %v7155 = vunpack.c.0.s8 %v7154
    %v7156 = vlaneseq
    %v7157 = vshrl.u32 %v7156, 7
    %v7158 = vsub.s32 %v7155, %v7157
    %v7159 = vrot.slane %v7151, %v7158
    %v7161 = vunpack.c.l.s4 1934713408
    %v7162 = vunpack.c.0.s8 %v7161
    %v7163 = vlaneseq
    %v7164 = vshrl.u32 %v7163, 7
    %v7165 = vsub.s32 %v7162, %v7164
    %v7166 = vrot.slane %v7152, %v7165
    %v7167 = vcombine.low %v7111, %v7143
    %v7168 = vcombine.high %v7111, %v7143
    %v7169 = vcombine.low %v7118, %v7150
    %v7170 = vcombine.high %v7118, %v7150
    %v7171 = vcombine.low %v7127, %v7159
    %v7172 = vcombine.high %v7127, %v7159
    %v7173 = vcombine.low %v7134, %v7166
    %v7174 = vcombine.high %v7134, %v7166
    %v7175 = vcombine.low %v1951, %v1953
    %v7176 = vcombine.high %v1951, %v1953
    %v7178 = vunpack.c.l.s4 1983009808
    %v7179 = vunpack.c.0.s8 %v7178
    %v7180 = vlaneseq
    %v7181 = vshrl.u32 %v7180, 7
    %v7182 = vsub.s32 %v7179, %v7181
    %v7183 = vrot.slane %v7175, %v7182
    %v7185 = vunpack.c.l.s4 1983009808
    %v7186 = vunpack.c.0.s8 %v7185
    %v7187 = vlaneseq
    %v7188 = vshrl.u32 %v7187, 7
    %v7189 = vsub.s32 %v7186, %v7188
    %v7190 = vrot.slane %v7176, %v7189
    %v7191 = vcombine.low %v3751, %v3753
    %v7192 = vcombine.high %v3751, %v3753
    %v7194 = vunpack.c.l.s4 1983009808
    %v7195 = vunpack.c.0.s8 %v7194
    %v7196 = vlaneseq
    %v7197 = vshrl.u32 %v7196, 7
    %v7198 = vsub.s32 %v7195, %v7197
    %v7199 = vrot.slane %v7191, %v7198
    %v7201 = vunpack.c.l.s4 1983009808
    %v7202 = vunpack.c.0.s8 %v7201
    %v7203 = vlaneseq
    %v7204 = vshrl.u32 %v7203, 7
    %v7205 = vsub.s32 %v7202, %v7204
    %v7206 = vrot.slane %v7192, %v7205
    %v7207 = vcombine.low %v1955, %v1957
    %v7208 = vcombine.high %v1955, %v1957
    %v7210 = vunpack.c.l.s4 1983009808
    %v7211 = vunpack.c.0.s8 %v7210
    %v7212 = vlaneseq
    %v7213 = vshrl.u32 %v7212, 7
    %v7214 = vsub.s32 %v7211, %v7213
    %v7215 = vrot.slane %v7207, %v7214
    %v7217 = vunpack.c.l.s4 1983009808
    %v7218 = vunpack.c.0.s8 %v7217
    %v7219 = vlaneseq
    %v7220 = vshrl.u32 %v7219, 7
    %v7221 = vsub.s32 %v7218, %v7220
    %v7222 = vrot.slane %v7208, %v7221
    %v7223 = vcombine.low %v3755, %v3757
    %v7224 = vcombine.high %v3755, %v3757
    %v7226 = vunpack.c.l.s4 1983009808
    %v7227 = vunpack.c.0.s8 %v7226
    %v7228 = vlaneseq
    %v7229 = vshrl.u32 %v7228, 7
    %v7230 = vsub.s32 %v7227, %v7229
    %v7231 = vrot.slane %v7223, %v7230
    %v7233 = vunpack.c.l.s4 1983009808
    %v7234 = vunpack.c.0.s8 %v7233
    %v7235 = vlaneseq
    %v7236 = vshrl.u32 %v7235, 7
    %v7237 = vsub.s32 %v7234, %v7236
    %v7238 = vrot.slane %v7224, %v7237
    %v7239 = vcombine.low %v7183, %v7199
    %v7240 = vcombine.high %v7183, %v7199
    %v7242 = vunpack.c.l.s4 1934713408
    %v7243 = vunpack.c.0.s8 %v7242
    %v7244 = vlaneseq
    %v7245 = vshrl.u32 %v7244, 7
    %v7246 = vsub.s32 %v7243, %v7245
    %v7247 = vrot.slane %v7239, %v7246
    %v7249 = vunpack.c.l.s4 1934713408
    %v7250 = vunpack.c.0.s8 %v7249
    %v7251 = vlaneseq
    %v7252 = vshrl.u32 %v7251, 7
    %v7253 = vsub.s32 %v7250, %v7252
    %v7254 = vrot.slane %v7240, %v7253
    %v7255 = vcombine.low %v7190, %v7206
    %v7256 = vcombine.high %v7190, %v7206
    %v7258 = vunpack.c.l.s4 1934713408
    %v7259 = vunpack.c.0.s8 %v7258
    %v7260 = vlaneseq
    %v7261 = vshrl.u32 %v7260, 7
    %v7262 = vsub.s32 %v7259, %v7261
    %v7263 = vrot.slane %v7255, %v7262
    %v7265 = vunpack.c.l.s4 1934713408
    %v7266 = vunpack.c.0.s8 %v7265
    %v7267 = vlaneseq
    %v7268 = vshrl.u32 %v7267, 7
    %v7269 = vsub.s32 %v7266, %v7268
    %v7270 = vrot.slane %v7256, %v7269
    %v7271 = vcombine.low %v7215, %v7231
    %v7272 = vcombine.high %v7215, %v7231
    %v7274 = vunpack.c.l.s4 1934713408
    %v7275 = vunpack.c.0.s8 %v7274
    %v7276 = vlaneseq
    %v7277 = vshrl.u32 %v7276, 7
    %v7278 = vsub.s32 %v7275, %v7277
    %v7279 = vrot.slane %v7271, %v7278
    %v7281 = vunpack.c.l.s4 1934713408
    %v7282 = vunpack.c.0.s8 %v7281
    %v7283 = vlaneseq
    %v7284 = vshrl.u32 %v7283, 7
    %v7285 = vsub.s32 %v7282, %v7284
    %v7286 = vrot.slane %v7272, %v7285
    %v7287 = vcombine.low %v7222, %v7238
    %v7288 = vcombine.high %v7222, %v7238
    %v7290 = vunpack.c.l.s4 1934713408
    %v7291 = vunpack.c.0.s8 %v7290
    %v7292 = vlaneseq
    %v7293 = vshrl.u32 %v7292, 7
    %v7294 = vsub.s32 %v7291, %v7293
    %v7295 = vrot.slane %v7287, %v7294
    %v7297 = vunpack.c.l.s4 1934713408
    %v7298 = vunpack.c.0.s8 %v7297
    %v7299 = vlaneseq
    %v7300 = vshrl.u32 %v7299, 7
    %v7301 = vsub.s32 %v7298, %v7300
    %v7302 = vrot.slane %v7288, %v7301
    %v7303 = vcombine.low %v7247, %v7279
    %v7304 = vcombine.high %v7247, %v7279
    %v7305 = vcombine.low %v7254, %v7286
    %v7306 = vcombine.high %v7254, %v7286
    %v7307 = vcombine.low %v7263, %v7295
    %v7308 = vcombine.high %v7263, %v7295
    %v7309 = vcombine.low %v7270, %v7302
    %v7310 = vcombine.high %v7270, %v7302
    %v7311 = vcombine.low %v1959, %v1961
    %v7312 = vcombine.high %v1959, %v1961
    %v7314 = vunpack.c.l.s4 1983009808
    %v7315 = vunpack.c.0.s8 %v7314
    %v7316 = vlaneseq
    %v7317 = vshrl.u32 %v7316, 7
    %v7318 = vsub.s32 %v7315, %v7317
    %v7319 = vrot.slane %v7311, %v7318
    %v7321 = vunpack.c.l.s4 1983009808
    %v7322 = vunpack.c.0.s8 %v7321
    %v7323 = vlaneseq
    %v7324 = vshrl.u32 %v7323, 7
    %v7325 = vsub.s32 %v7322, %v7324
    %v7326 = vrot.slane %v7312, %v7325
    %v7327 = vcombine.low %v3759, %v3761
    %v7328 = vcombine.high %v3759, %v3761
    %v7330 = vunpack.c.l.s4 1983009808
    %v7331 = vunpack.c.0.s8 %v7330
    %v7332 = vlaneseq
    %v7333 = vshrl.u32 %v7332, 7
    %v7334 = vsub.s32 %v7331, %v7333
    %v7335 = vrot.slane %v7327, %v7334
    %v7337 = vunpack.c.l.s4 1983009808
    %v7338 = vunpack.c.0.s8 %v7337
    %v7339 = vlaneseq
    %v7340 = vshrl.u32 %v7339, 7
    %v7341 = vsub.s32 %v7338, %v7340
    %v7342 = vrot.slane %v7328, %v7341
    %v7343 = vcombine.low %v1963, %v1965
    %v7344 = vcombine.high %v1963, %v1965
    %v7346 = vunpack.c.l.s4 1983009808
    %v7347 = vunpack.c.0.s8 %v7346
    %v7348 = vlaneseq
    %v7349 = vshrl.u32 %v7348, 7
    %v7350 = vsub.s32 %v7347, %v7349
    %v7351 = vrot.slane %v7343, %v7350
    %v7353 = vunpack.c.l.s4 1983009808
    %v7354 = vunpack.c.0.s8 %v7353
    %v7355 = vlaneseq
    %v7356 = vshrl.u32 %v7355, 7
    %v7357 = vsub.s32 %v7354, %v7356
    %v7358 = vrot.slane %v7344, %v7357
    %v7359 = vcombine.low %v3763, %v3765
    %v7360 = vcombine.high %v3763, %v3765
    %v7362 = vunpack.c.l.s4 1983009808
    %v7363 = vunpack.c.0.s8 %v7362
    %v7364 = vlaneseq
    %v7365 = vshrl.u32 %v7364, 7
    %v7366 = vsub.s32 %v7363, %v7365
    %v7367 = vrot.slane %v7359, %v7366
    %v7369 = vunpack.c.l.s4 1983009808
    %v7370 = vunpack.c.0.s8 %v7369
    %v7371 = vlaneseq
    %v7372 = vshrl.u32 %v7371, 7
    %v7373 = vsub.s32 %v7370, %v7372
    %v7374 = vrot.slane %v7360, %v7373
    %v7375 = vcombine.low %v7319, %v7335
    %v7376 = vcombine.high %v7319, %v7335
    %v7378 = vunpack.c.l.s4 1934713408
    %v7379 = vunpack.c.0.s8 %v7378
    %v7380 = vlaneseq
    %v7381 = vshrl.u32 %v7380, 7
    %v7382 = vsub.s32 %v7379, %v7381
    %v7383 = vrot.slane %v7375, %v7382
    %v7385 = vunpack.c.l.s4 1934713408
    %v7386 = vunpack.c.0.s8 %v7385
    %v7387 = vlaneseq
    %v7388 = vshrl.u32 %v7387, 7
    %v7389 = vsub.s32 %v7386, %v7388
    %v7390 = vrot.slane %v7376, %v7389
    %v7391 = vcombine.low %v7326, %v7342
    %v7392 = vcombine.high %v7326, %v7342
    %v7394 = vunpack.c.l.s4 1934713408
    %v7395 = vunpack.c.0.s8 %v7394
    %v7396 = vlaneseq
    %v7397 = vshrl.u32 %v7396, 7
    %v7398 = vsub.s32 %v7395, %v7397
    %v7399 = vrot.slane %v7391, %v7398
    %v7401 = vunpack.c.l.s4 1934713408
    %v7402 = vunpack.c.0.s8 %v7401
    %v7403 = vlaneseq
    %v7404 = vshrl.u32 %v7403, 7
    %v7405 = vsub.s32 %v7402, %v7404
    %v7406 = vrot.slane %v7392, %v7405
    %v7407 = vcombine.low %v7351, %v7367
    %v7408 = vcombine.high %v7351, %v7367
    %v7410 = vunpack.c.l.s4 1934713408
    %v7411 = vunpack.c.0.s8 %v7410
    %v7412 = vlaneseq
    %v7413 = vshrl.u32 %v7412, 7
    %v7414 = vsub.s32 %v7411, %v7413
    %v7415 = vrot.slane %v7407, %v7414
    %v7417 = vunpack.c.l.s4 1934713408
    %v7418 = vunpack.c.0.s8 %v7417
    %v7419 = vlaneseq
    %v7420 = vshrl.u32 %v7419, 7
    %v7421 = vsub.s32 %v7418, %v7420
    %v7422 = vrot.slane %v7408, %v7421
    %v7423 = vcombine.low %v7358, %v7374
    %v7424 = vcombine.high %v7358, %v7374
    %v7426 = vunpack.c.l.s4 1934713408
    %v7427 = vunpack.c.0.s8 %v7426
    %v7428 = vlaneseq
    %v7429 = vshrl.u32 %v7428, 7
    %v7430 = vsub.s32 %v7427, %v7429
    %v7431 = vrot.slane %v7423, %v7430
    %v7433 = vunpack.c.l.s4 1934713408
    %v7434 = vunpack.c.0.s8 %v7433
    %v7435 = vlaneseq
    %v7436 = vshrl.u32 %v7435, 7
    %v7437 = vsub.s32 %v7434, %v7436
    %v7438 = vrot.slane %v7424, %v7437
    %v7439 = vcombine.low %v7383, %v7415
    %v7440 = vcombine.high %v7383, %v7415
    %v7441 = vcombine.low %v7390, %v7422
    %v7442 = vcombine.high %v7390, %v7422
    %v7443 = vcombine.low %v7399, %v7431
    %v7444 = vcombine.high %v7399, %v7431
    %v7445 = vcombine.low %v7406, %v7438
    %v7446 = vcombine.high %v7406, %v7438
    %v7447 = vcombine.low %v1967, %v1969
    %v7448 = vcombine.high %v1967, %v1969
    %v7450 = vunpack.c.l.s4 1983009808
    %v7451 = vunpack.c.0.s8 %v7450
    %v7452 = vlaneseq
    %v7453 = vshrl.u32 %v7452, 7
    %v7454 = vsub.s32 %v7451, %v7453
    %v7455 = vrot.slane %v7447, %v7454
    %v7457 = vunpack.c.l.s4 1983009808
    %v7458 = vunpack.c.0.s8 %v7457
    %v7459 = vlaneseq
    %v7460 = vshrl.u32 %v7459, 7
    %v7461 = vsub.s32 %v7458, %v7460
    %v7462 = vrot.slane %v7448, %v7461
    %v7463 = vcombine.low %v3767, %v3769
    %v7464 = vcombine.high %v3767, %v3769
    %v7466 = vunpack.c.l.s4 1983009808
    %v7467 = vunpack.c.0.s8 %v7466
    %v7468 = vlaneseq
    %v7469 = vshrl.u32 %v7468, 7
    %v7470 = vsub.s32 %v7467, %v7469
    %v7471 = vrot.slane %v7463, %v7470
    %v7473 = vunpack.c.l.s4 1983009808
    %v7474 = vunpack.c.0.s8 %v7473
    %v7475 = vlaneseq
    %v7476 = vshrl.u32 %v7475, 7
    %v7477 = vsub.s32 %v7474, %v7476
    %v7478 = vrot.slane %v7464, %v7477
    %v7479 = vcombine.low %v1971, %v1973
    %v7480 = vcombine.high %v1971, %v1973
    %v7482 = vunpack.c.l.s4 1983009808
    %v7483 = vunpack.c.0.s8 %v7482
    %v7484 = vlaneseq
    %v7485 = vshrl.u32 %v7484, 7
    %v7486 = vsub.s32 %v7483, %v7485
    %v7487 = vrot.slane %v7479, %v7486
    %v7489 = vunpack.c.l.s4 1983009808
    %v7490 = vunpack.c.0.s8 %v7489
    %v7491 = vlaneseq
    %v7492 = vshrl.u32 %v7491, 7
    %v7493 = vsub.s32 %v7490, %v7492
    %v7494 = vrot.slane %v7480, %v7493
    %v7495 = vcombine.low %v3771, %v3773
    %v7496 = vcombine.high %v3771, %v3773
    %v7498 = vunpack.c.l.s4 1983009808
    %v7499 = vunpack.c.0.s8 %v7498
    %v7500 = vlaneseq
    %v7501 = vshrl.u32 %v7500, 7
    %v7502 = vsub.s32 %v7499, %v7501
    %v7503 = vrot.slane %v7495, %v7502
    %v7505 = vunpack.c.l.s4 1983009808
    %v7506 = vunpack.c.0.s8 %v7505
    %v7507 = vlaneseq
    %v7508 = vshrl.u32 %v7507, 7
    %v7509 = vsub.s32 %v7506, %v7508
    %v7510 = vrot.slane %v7496, %v7509
    %v7511 = vcombine.low %v7455, %v7471
    %v7512 = vcombine.high %v7455, %v7471
    %v7514 = vunpack.c.l.s4 1934713408
    %v7515 = vunpack.c.0.s8 %v7514
    %v7516 = vlaneseq
    %v7517 = vshrl.u32 %v7516, 7
    %v7518 = vsub.s32 %v7515, %v7517
    %v7519 = vrot.slane %v7511, %v7518
    %v7521 = vunpack.c.l.s4 1934713408
    %v7522 = vunpack.c.0.s8 %v7521
    %v7523 = vlaneseq
    %v7524 = vshrl.u32 %v7523, 7
    %v7525 = vsub.s32 %v7522, %v7524
    %v7526 = vrot.slane %v7512, %v7525
    %v7527 = vcombine.low %v7462, %v7478
    %v7528 = vcombine.high %v7462, %v7478
    %v7530 = vunpack.c.l.s4 1934713408
    %v7531 = vunpack.c.0.s8 %v7530
    %v7532 = vlaneseq
    %v7533 = vshrl.u32 %v7532, 7
    %v7534 = vsub.s32 %v7531, %v7533
    %v7535 = vrot.slane %v7527, %v7534
    %v7537 = vunpack.c.l.s4 1934713408
    %v7538 = vunpack.c.0.s8 %v7537
    %v7539 = vlaneseq
    %v7540 = vshrl.u32 %v7539, 7
    %v7541 = vsub.s32 %v7538, %v7540
    %v7542 = vrot.slane %v7528, %v7541
    %v7543 = vcombine.low %v7487, %v7503
    %v7544 = vcombine.high %v7487, %v7503
    %v7546 = vunpack.c.l.s4 1934713408
    %v7547 = vunpack.c.0.s8 %v7546
    %v7548 = vlaneseq
    %v7549 = vshrl.u32 %v7548, 7
    %v7550 = vsub.s32 %v7547, %v7549
    %v7551 = vrot.slane %v7543, %v7550
    %v7553 = vunpack.c.l.s4 1934713408
    %v7554 = vunpack.c.0.s8 %v7553
    %v7555 = vlaneseq
    %v7556 = vshrl.u32 %v7555, 7
    %v7557 = vsub.s32 %v7554, %v7556
    %v7558 = vrot.slane %v7544, %v7557
    %v7559 = vcombine.low %v7494, %v7510
    %v7560 = vcombine.high %v7494, %v7510
    %v7562 = vunpack.c.l.s4 1934713408
    %v7563 = vunpack.c.0.s8 %v7562
    %v7564 = vlaneseq
    %v7565 = vshrl.u32 %v7564, 7
    %v7566 = vsub.s32 %v7563, %v7565
    %v7567 = vrot.slane %v7559, %v7566
    %v7569 = vunpack.c.l.s4 1934713408
    %v7570 = vunpack.c.0.s8 %v7569
    %v7571 = vlaneseq
    %v7572 = vshrl.u32 %v7571, 7
    %v7573 = vsub.s32 %v7570, %v7572
    %v7574 = vrot.slane %v7560, %v7573
    %v7575 = vcombine.low %v7519, %v7551
    %v7576 = vcombine.high %v7519, %v7551
    %v7577 = vcombine.low %v7526, %v7558
    %v7578 = vcombine.high %v7526, %v7558
    %v7579 = vcombine.low %v7535, %v7567
    %v7580 = vcombine.high %v7535, %v7567
    %v7581 = vcombine.low %v7542, %v7574
    %v7582 = vcombine.high %v7542, %v7574
    %v7583 = vcombine.low %v1944, %v1946
    %v7584 = vcombine.high %v1944, %v1946
    %v7586 = vunpack.c.l.s4 1983009808
    %v7587 = vunpack.c.0.s8 %v7586
    %v7588 = vlaneseq
    %v7589 = vshrl.u32 %v7588, 7
    %v7590 = vsub.s32 %v7587, %v7589
    %v7591 = vrot.slane %v7583, %v7590
    %v7593 = vunpack.c.l.s4 1983009808
    %v7594 = vunpack.c.0.s8 %v7593
    %v7595 = vlaneseq
    %v7596 = vshrl.u32 %v7595, 7
    %v7597 = vsub.s32 %v7594, %v7596
    %v7598 = vrot.slane %v7584, %v7597
    %v7599 = vcombine.low %v3744, %v3746
    %v7600 = vcombine.high %v3744, %v3746
    %v7602 = vunpack.c.l.s4 1983009808
    %v7603 = vunpack.c.0.s8 %v7602
    %v7604 = vlaneseq
    %v7605 = vshrl.u32 %v7604, 7
    %v7606 = vsub.s32 %v7603, %v7605
    %v7607 = vrot.slane %v7599, %v7606
    %v7609 = vunpack.c.l.s4 1983009808
    %v7610 = vunpack.c.0.s8 %v7609
    %v7611 = vlaneseq
    %v7612 = vshrl.u32 %v7611, 7
    %v7613 = vsub.s32 %v7610, %v7612
    %v7614 = vrot.slane %v7600, %v7613
    %v7615 = vcombine.low %v1948, %v1950
    %v7616 = vcombine.high %v1948, %v1950
    %v7618 = vunpack.c.l.s4 1983009808
    %v7619 = vunpack.c.0.s8 %v7618
    %v7620 = vlaneseq
    %v7621 = vshrl.u32 %v7620, 7
    %v7622 = vsub.s32 %v7619, %v7621
    %v7623 = vrot.slane %v7615, %v7622
    %v7625 = vunpack.c.l.s4 1983009808
    %v7626 = vunpack.c.0.s8 %v7625
    %v7627 = vlaneseq
    %v7628 = vshrl.u32 %v7627, 7
    %v7629 = vsub.s32 %v7626, %v7628
    %v7630 = vrot.slane %v7616, %v7629
    %v7631 = vcombine.low %v3748, %v3750
    %v7632 = vcombine.high %v3748, %v3750
    %v7634 = vunpack.c.l.s4 1983009808
    %v7635 = vunpack.c.0.s8 %v7634
    %v7636 = vlaneseq
    %v7637 = vshrl.u32 %v7636, 7
    %v7638 = vsub.s32 %v7635, %v7637
    %v7639 = vrot.slane %v7631, %v7638
    %v7641 = vunpack.c.l.s4 1983009808
    %v7642 = vunpack.c.0.s8 %v7641
    %v7643 = vlaneseq
    %v7644 = vshrl.u32 %v7643, 7
    %v7645 = vsub.s32 %v7642, %v7644
    %v7646 = vrot.slane %v7632, %v7645
    %v7647 = vcombine.low %v7591, %v7607
    %v7648 = vcombine.high %v7591, %v7607
    %v7650 = vunpack.c.l.s4 1934713408
    %v7651 = vunpack.c.0.s8 %v7650
    %v7652 = vlaneseq
    %v7653 = vshrl.u32 %v7652, 7
    %v7654 = vsub.s32 %v7651, %v7653
    %v7655 = vrot.slane %v7647, %v7654
    %v7657 = vunpack.c.l.s4 1934713408
    %v7658 = vunpack.c.0.s8 %v7657
    %v7659 = vlaneseq
    %v7660 = vshrl.u32 %v7659, 7
    %v7661 = vsub.s32 %v7658, %v7660
    %v7662 = vrot.slane %v7648, %v7661
    %v7663 = vcombine.low %v7598, %v7614
    %v7664 = vcombine.high %v7598, %v7614
    %v7666 = vunpack.c.l.s4 1934713408
    %v7667 = vunpack.c.0.s8 %v7666
    %v7668 = vlaneseq
    %v7669 = vshrl.u32 %v7668, 7
    %v7670 = vsub.s32 %v7667, %v7669
    %v7671 = vrot.slane %v7663, %v7670
    %v7673 = vunpack.c.l.s4 1934713408
    %v7674 = vunpack.c.0.s8 %v7673
    %v7675 = vlaneseq
    %v7676 = vshrl.u32 %v7675, 7
    %v7677 = vsub.s32 %v7674, %v7676
    %v7678 = vrot.slane %v7664, %v7677
    %v7679 = vcombine.low %v7623, %v7639
    %v7680 = vcombine.high %v7623, %v7639
    %v7682 = vunpack.c.l.s4 1934713408
    %v7683 = vunpack.c.0.s8 %v7682
    %v7684 = vlaneseq
    %v7685 = vshrl.u32 %v7684, 7
    %v7686 = vsub.s32 %v7683, %v7685
    %v7687 = vrot.slane %v7679, %v7686
    %v7689 = vunpack.c.l.s4 1934713408
    %v7690 = vunpack.c.0.s8 %v7689
    %v7691 = vlaneseq
    %v7692 = vshrl.u32 %v7691, 7
    %v7693 = vsub.s32 %v7690, %v7692
    %v7694 = vrot.slane %v7680, %v7693
    %v7695 = vcombine.low %v7630, %v7646
    %v7696 = vcombine.high %v7630, %v7646
    %v7698 = vunpack.c.l.s4 1934713408
    %v7699 = vunpack.c.0.s8 %v7698
    %v7700 = vlaneseq
    %v7701 = vshrl.u32 %v7700, 7
    %v7702 = vsub.s32 %v7699, %v7701
    %v7703 = vrot.slane %v7695, %v7702
    %v7705 = vunpack.c.l.s4 1934713408
    %v7706 = vunpack.c.0.s8 %v7705
    %v7707 = vlaneseq
    %v7708 = vshrl.u32 %v7707, 7
    %v7709 = vsub.s32 %v7706, %v7708
    %v7710 = vrot.slane %v7696, %v7709
    %v7711 = vcombine.low %v7655, %v7687
    %v7712 = vcombine.high %v7655, %v7687
    %v7713 = vcombine.low %v7662, %v7694
    %v7714 = vcombine.high %v7662, %v7694
    %v7715 = vcombine.low %v7671, %v7703
    %v7716 = vcombine.high %v7671, %v7703
    %v7717 = vcombine.low %v7678, %v7710
    %v7718 = vcombine.high %v7678, %v7710
    %v7719 = vcombine.low %v1952, %v1954
    %v7720 = vcombine.high %v1952, %v1954
    %v7722 = vunpack.c.l.s4 1983009808
    %v7723 = vunpack.c.0.s8 %v7722
    %v7724 = vlaneseq
    %v7725 = vshrl.u32 %v7724, 7
    %v7726 = vsub.s32 %v7723, %v7725
    %v7727 = vrot.slane %v7719, %v7726
    %v7729 = vunpack.c.l.s4 1983009808
    %v7730 = vunpack.c.0.s8 %v7729
    %v7731 = vlaneseq
    %v7732 = vshrl.u32 %v7731, 7
    %v7733 = vsub.s32 %v7730, %v7732
    %v7734 = vrot.slane %v7720, %v7733
    %v7735 = vcombine.low %v3752, %v3754
    %v7736 = vcombine.high %v3752, %v3754
    %v7738 = vunpack.c.l.s4 1983009808
    %v7739 = vunpack.c.0.s8 %v7738
    %v7740 = vlaneseq
    %v7741 = vshrl.u32 %v7740, 7
    %v7742 = vsub.s32 %v7739, %v7741
    %v7743 = vrot.slane %v7735, %v7742
    %v7745 = vunpack.c.l.s4 1983009808
    %v7746 = vunpack.c.0.s8 %v7745
    %v7747 = vlaneseq
    %v7748 = vshrl.u32 %v7747, 7
    %v7749 = vsub.s32 %v7746, %v7748
    %v7750 = vrot.slane %v7736, %v7749
    %v7751 = vcombine.low %v1956, %v1958
    %v7752 = vcombine.high %v1956, %v1958
    %v7754 = vunpack.c.l.s4 1983009808
    %v7755 = vunpack.c.0.s8 %v7754
    %v7756 = vlaneseq
    %v7757 = vshrl.u32 %v7756, 7
    %v7758 = vsub.s32 %v7755, %v7757
    %v7759 = vrot.slane %v7751, %v7758
    %v7761 = vunpack.c.l.s4 1983009808
    %v7762 = vunpack.c.0.s8 %v7761
    %v7763 = vlaneseq
    %v7764 = vshrl.u32 %v7763, 7
    %v7765 = vsub.s32 %v7762, %v7764
    %v7766 = vrot.slane %v7752, %v7765
    %v7767 = vcombine.low %v3756, %v3758
    %v7768 = vcombine.high %v3756, %v3758
    %v7770 = vunpack.c.l.s4 1983009808
    %v7771 = vunpack.c.0.s8 %v7770
    %v7772 = vlaneseq
    %v7773 = vshrl.u32 %v7772, 7
    %v7774 = vsub.s32 %v7771, %v7773
    %v7775 = vrot.slane %v7767, %v7774
    %v7777 = vunpack.c.l.s4 1983009808
    %v7778 = vunpack.c.0.s8 %v7777
    %v7779 = vlaneseq
    %v7780 = vshrl.u32 %v7779, 7
    %v7781 = vsub.s32 %v7778, %v7780
    %v7782 = vrot.slane %v7768, %v7781
    %v7783 = vcombine.low %v7727, %v7743
    %v7784 = vcombine.high %v7727, %v7743
    %v7786 = vunpack.c.l.s4 1934713408
    %v7787 = vunpack.c.0.s8 %v7786
    %v7788 = vlaneseq
    %v7789 = vshrl.u32 %v7788, 7
    %v7790 = vsub.s32 %v7787, %v7789
    %v7791 = vrot.slane %v7783, %v7790
    %v7793 = vunpack.c.l.s4 1934713408
    %v7794 = vunpack.c.0.s8 %v7793
    %v7795 = vlaneseq
    %v7796 = vshrl.u32 %v7795, 7
    %v7797 = vsub.s32 %v7794, %v7796
    %v7798 = vrot.slane %v7784, %v7797
    %v7799 = vcombine.low %v7734, %v7750
    %v7800 = vcombine.high %v7734, %v7750
    %v7802 = vunpack.c.l.s4 1934713408
    %v7803 = vunpack.c.0.s8 %v7802
    %v7804 = vlaneseq
    %v7805 = vshrl.u32 %v7804, 7
    %v7806 = vsub.s32 %v7803, %v7805
    %v7807 = vrot.slane %v7799, %v7806
    %v7809 = vunpack.c.l.s4 1934713408
    %v7810 = vunpack.c.0.s8 %v7809
    %v7811 = vlaneseq
    %v7812 = vshrl.u32 %v7811, 7
    %v7813 = vsub.s32 %v7810, %v7812
    %v7814 = vrot.slane %v7800, %v7813
    %v7815 = vcombine.low %v7759, %v7775
    %v7816 = vcombine.high %v7759, %v7775
    %v7818 = vunpack.c.l.s4 1934713408
    %v7819 = vunpack.c.0.s8 %v7818
    %v7820 = vlaneseq
    %v7821 = vshrl.u32 %v7820, 7
    %v7822 = vsub.s32 %v7819, %v7821
    %v7823 = vrot.slane %v7815, %v7822
    %v7825 = vunpack.c.l.s4 1934713408
    %v7826 = vunpack.c.0.s8 %v7825
    %v7827 = vlaneseq
    %v7828 = vshrl.u32 %v7827, 7
    %v7829 = vsub.s32 %v7826, %v7828
    %v7830 = vrot.slane %v7816, %v7829
    %v7831 = vcombine.low %v7766, %v7782
    %v7832 = vcombine.high %v7766, %v7782
    %v7834 = vunpack.c.l.s4 1934713408
    %v7835 = vunpack.c.0.s8 %v7834
    %v7836 = vlaneseq
    %v7837 = vshrl.u32 %v7836, 7
    %v7838 = vsub.s32 %v7835, %v7837
    %v7839 = vrot.slane %v7831, %v7838
    %v7841 = vunpack.c.l.s4 1934713408
    %v7842 = vunpack.c.0.s8 %v7841
    %v7843 = vlaneseq
    %v7844 = vshrl.u32 %v7843, 7
    %v7845 = vsub.s32 %v7842, %v7844
    %v7846 = vrot.slane %v7832, %v7845
    %v7847 = vcombine.low %v7791, %v7823
    %v7848 = vcombine.high %v7791, %v7823
    %v7849 = vcombine.low %v7798, %v7830
    %v7850 = vcombine.high %v7798, %v7830
    %v7851 = vcombine.low %v7807, %v7839
    %v7852 = vcombine.high %v7807, %v7839
    %v7853 = vcombine.low %v7814, %v7846
    %v7854 = vcombine.high %v7814, %v7846
    %v7855 = vcombine.low %v1960, %v1962
    %v7856 = vcombine.high %v1960, %v1962
    %v7858 = vunpack.c.l.s4 1983009808
    %v7859 = vunpack.c.0.s8 %v7858
    %v7860 = vlaneseq
    %v7861 = vshrl.u32 %v7860, 7
    %v7862 = vsub.s32 %v7859, %v7861
    %v7863 = vrot.slane %v7855, %v7862
    %v7865 = vunpack.c.l.s4 1983009808
    %v7866 = vunpack.c.0.s8 %v7865
    %v7867 = vlaneseq
    %v7868 = vshrl.u32 %v7867, 7
    %v7869 = vsub.s32 %v7866, %v7868
    %v7870 = vrot.slane %v7856, %v7869
    %v7871 = vcombine.low %v3760, %v3762
    %v7872 = vcombine.high %v3760, %v3762
    %v7874 = vunpack.c.l.s4 1983009808
    %v7875 = vunpack.c.0.s8 %v7874
    %v7876 = vlaneseq
    %v7877 = vshrl.u32 %v7876, 7
    %v7878 = vsub.s32 %v7875, %v7877
    %v7879 = vrot.slane %v7871, %v7878
    %v7881 = vunpack.c.l.s4 1983009808
    %v7882 = vunpack.c.0.s8 %v7881
    %v7883 = vlaneseq
    %v7884 = vshrl.u32 %v7883, 7
    %v7885 = vsub.s32 %v7882, %v7884
    %v7886 = vrot.slane %v7872, %v7885
    %v7887 = vcombine.low %v1964, %v1966
    %v7888 = vcombine.high %v1964, %v1966
    %v7890 = vunpack.c.l.s4 1983009808
    %v7891 = vunpack.c.0.s8 %v7890
    %v7892 = vlaneseq
    %v7893 = vshrl.u32 %v7892, 7
    %v7894 = vsub.s32 %v7891, %v7893
    %v7895 = vrot.slane %v7887, %v7894
    %v7897 = vunpack.c.l.s4 1983009808
    %v7898 = vunpack.c.0.s8 %v7897
    %v7899 = vlaneseq
    %v7900 = vshrl.u32 %v7899, 7
    %v7901 = vsub.s32 %v7898, %v7900
    %v7902 = vrot.slane %v7888, %v7901
    %v7903 = vcombine.low %v3764, %v3766
    %v7904 = vcombine.high %v3764, %v3766
    %v7906 = vunpack.c.l.s4 1983009808
    %v7907 = vunpack.c.0.s8 %v7906
    %v7908 = vlaneseq
    %v7909 = vshrl.u32 %v7908, 7
    %v7910 = vsub.s32 %v7907, %v7909
    %v7911 = vrot.slane %v7903, %v7910
    %v7913 = vunpack.c.l.s4 1983009808
    %v7914 = vunpack.c.0.s8 %v7913
    %v7915 = vlaneseq
    %v7916 = vshrl.u32 %v7915, 7
    %v7917 = vsub.s32 %v7914, %v7916
    %v7918 = vrot.slane %v7904, %v7917
    %v7919 = vcombine.low %v7863, %v7879
    %v7920 = vcombine.high %v7863, %v7879
    %v7922 = vunpack.c.l.s4 1934713408
    %v7923 = vunpack.c.0.s8 %v7922
    %v7924 = vlaneseq
    %v7925 = vshrl.u32 %v7924, 7
    %v7926 = vsub.s32 %v7923, %v7925
    %v7927 = vrot.slane %v7919, %v7926
    %v7929 = vunpack.c.l.s4 1934713408
    %v7930 = vunpack.c.0.s8 %v7929
    %v7931 = vlaneseq
    %v7932 = vshrl.u32 %v7931, 7
    %v7933 = vsub.s32 %v7930, %v7932
    %v7934 = vrot.slane %v7920, %v7933
    %v7935 = vcombine.low %v7870, %v7886
    %v7936 = vcombine.high %v7870, %v7886
    %v7938 = vunpack.c.l.s4 1934713408
    %v7939 = vunpack.c.0.s8 %v7938
    %v7940 = vlaneseq
    %v7941 = vshrl.u32 %v7940, 7
    %v7942 = vsub.s32 %v7939, %v7941
    %v7943 = vrot.slane %v7935, %v7942
    %v7945 = vunpack.c.l.s4 1934713408
    %v7946 = vunpack.c.0.s8 %v7945
    %v7947 = vlaneseq
    %v7948 = vshrl.u32 %v7947, 7
    %v7949 = vsub.s32 %v7946, %v7948
    %v7950 = vrot.slane %v7936, %v7949
    %v7951 = vcombine.low %v7895, %v7911
    %v7952 = vcombine.high %v7895, %v7911
    %v7954 = vunpack.c.l.s4 1934713408
    %v7955 = vunpack.c.0.s8 %v7954
    %v7956 = vlaneseq
    %v7957 = vshrl.u32 %v7956, 7
    %v7958 = vsub.s32 %v7955, %v7957
    %v7959 = vrot.slane %v7951, %v7958
    %v7961 = vunpack.c.l.s4 1934713408
    %v7962 = vunpack.c.0.s8 %v7961
    %v7963 = vlaneseq
    %v7964 = vshrl.u32 %v7963, 7
    %v7965 = vsub.s32 %v7962, %v7964
    %v7966 = vrot.slane %v7952, %v7965
    %v7967 = vcombine.low %v7902, %v7918
    %v7968 = vcombine.high %v7902, %v7918
    %v7970 = vunpack.c.l.s4 1934713408
    %v7971 = vunpack.c.0.s8 %v7970
    %v7972 = vlaneseq
    %v7973 = vshrl.u32 %v7972, 7
    %v7974 = vsub.s32 %v7971, %v7973
    %v7975 = vrot.slane %v7967, %v7974
    %v7977 = vunpack.c.l.s4 1934713408
    %v7978 = vunpack.c.0.s8 %v7977
    %v7979 = vlaneseq
    %v7980 = vshrl.u32 %v7979, 7
    %v7981 = vsub.s32 %v7978, %v7980
    %v7982 = vrot.slane %v7968, %v7981
    %v7983 = vcombine.low %v7927, %v7959
    %v7984 = vcombine.high %v7927, %v7959
    %v7985 = vcombine.low %v7934, %v7966
    %v7986 = vcombine.high %v7934, %v7966
    %v7987 = vcombine.low %v7943, %v7975
    %v7988 = vcombine.high %v7943, %v7975
    %v7989 = vcombine.low %v7950, %v7982
    %v7990 = vcombine.high %v7950, %v7982
    %v7991 = vcombine.low %v1968, %v1970
    %v7992 = vcombine.high %v1968, %v1970
    %v7994 = vunpack.c.l.s4 1983009808
    %v7995 = vunpack.c.0.s8 %v7994
    %v7996 = vlaneseq
    %v7997 = vshrl.u32 %v7996, 7
    %v7998 = vsub.s32 %v7995, %v7997
    %v7999 = vrot.slane %v7991, %v7998
    %v8001 = vunpack.c.l.s4 1983009808
    %v8002 = vunpack.c.0.s8 %v8001
    %v8003 = vlaneseq
    %v8004 = vshrl.u32 %v8003, 7
    %v8005 = vsub.s32 %v8002, %v8004
    %v8006 = vrot.slane %v7992, %v8005
    %v8007 = vcombine.low %v3768, %v3770
    %v8008 = vcombine.high %v3768, %v3770
    %v8010 = vunpack.c.l.s4 1983009808
    %v8011 = vunpack.c.0.s8 %v8010
    %v8012 = vlaneseq
    %v8013 = vshrl.u32 %v8012, 7
    %v8014 = vsub.s32 %v8011, %v8013
    %v8015 = vrot.slane %v8007, %v8014
    %v8017 = vunpack.c.l.s4 1983009808
    %v8018 = vunpack.c.0.s8 %v8017
    %v8019 = vlaneseq
    %v8020 = vshrl.u32 %v8019, 7
    %v8021 = vsub.s32 %v8018, %v8020
    %v8022 = vrot.slane %v8008, %v8021
    %v8023 = vcombine.low %v1972, %v1974
    %v8024 = vcombine.high %v1972, %v1974
    %v8026 = vunpack.c.l.s4 1983009808
    %v8027 = vunpack.c.0.s8 %v8026
    %v8028 = vlaneseq
    %v8029 = vshrl.u32 %v8028, 7
    %v8030 = vsub.s32 %v8027, %v8029
    %v8031 = vrot.slane %v8023, %v8030
    %v8033 = vunpack.c.l.s4 1983009808
    %v8034 = vunpack.c.0.s8 %v8033
    %v8035 = vlaneseq
    %v8036 = vshrl.u32 %v8035, 7
    %v8037 = vsub.s32 %v8034, %v8036
    %v8038 = vrot.slane %v8024, %v8037
    %v8039 = vcombine.low %v3772, %v3774
    %v8040 = vcombine.high %v3772, %v3774
    %v8042 = vunpack.c.l.s4 1983009808
    %v8043 = vunpack.c.0.s8 %v8042
    %v8044 = vlaneseq
    %v8045 = vshrl.u32 %v8044, 7
    %v8046 = vsub.s32 %v8043, %v8045
    %v8047 = vrot.slane %v8039, %v8046
    %v8049 = vunpack.c.l.s4 1983009808
    %v8050 = vunpack.c.0.s8 %v8049
    %v8051 = vlaneseq
    %v8052 = vshrl.u32 %v8051, 7
    %v8053 = vsub.s32 %v8050, %v8052
    %v8054 = vrot.slane %v8040, %v8053
    %v8055 = vcombine.low %v7999, %v8015
    %v8056 = vcombine.high %v7999, %v8015
    %v8058 = vunpack.c.l.s4 1934713408
    %v8059 = vunpack.c.0.s8 %v8058
    %v8060 = vlaneseq
    %v8061 = vshrl.u32 %v8060, 7
    %v8062 = vsub.s32 %v8059, %v8061
    %v8063 = vrot.slane %v8055, %v8062
    %v8065 = vunpack.c.l.s4 1934713408
    %v8066 = vunpack.c.0.s8 %v8065
    %v8067 = vlaneseq
    %v8068 = vshrl.u32 %v8067, 7
    %v8069 = vsub.s32 %v8066, %v8068
    %v8070 = vrot.slane %v8056, %v8069
    %v8071 = vcombine.low %v8006, %v8022
    %v8072 = vcombine.high %v8006, %v8022
    %v8074 = vunpack.c.l.s4 1934713408
    %v8075 = vunpack.c.0.s8 %v8074
    %v8076 = vlaneseq
    %v8077 = vshrl.u32 %v8076, 7
    %v8078 = vsub.s32 %v8075, %v8077
    %v8079 = vrot.slane %v8071, %v8078
    %v8081 = vunpack.c.l.s4 1934713408
    %v8082 = vunpack.c.0.s8 %v8081
    %v8083 = vlaneseq
    %v8084 = vshrl.u32 %v8083, 7
    %v8085 = vsub.s32 %v8082, %v8084
    %v8086 = vrot.slane %v8072, %v8085
    %v8087 = vcombine.low %v8031, %v8047
    %v8088 = vcombine.high %v8031, %v8047
    %v8090 = vunpack.c.l.s4 1934713408
    %v8091 = vunpack.c.0.s8 %v8090
    %v8092 = vlaneseq
    %v8093 = vshrl.u32 %v8092, 7
    %v8094 = vsub.s32 %v8091, %v8093
    %v8095 = vrot.slane %v8087, %v8094
    %v8097 = vunpack.c.l.s4 1934713408
    %v8098 = vunpack.c.0.s8 %v8097
    %v8099 = vlaneseq
    %v8100 = vshrl.u32 %v8099, 7
    %v8101 = vsub.s32 %v8098, %v8100
    %v8102 = vrot.slane %v8088, %v8101
    %v8103 = vcombine.low %v8038, %v8054
    %v8104 = vcombine.high %v8038, %v8054
    %v8106 = vunpack.c.l.s4 1934713408
    %v8107 = vunpack.c.0.s8 %v8106
    %v8108 = vlaneseq
    %v8109 = vshrl.u32 %v8108, 7
    %v8110 = vsub.s32 %v8107, %v8109
    %v8111 = vrot.slane %v8103, %v8110
    %v8113 = vunpack.c.l.s4 1934713408
    %v8114 = vunpack.c.0.s8 %v8113
    %v8115 = vlaneseq
    %v8116 = vshrl.u32 %v8115, 7
    %v8117 = vsub.s32 %v8114, %v8116
    %v8118 = vrot.slane %v8104, %v8117
    %v8119 = vcombine.low %v8063, %v8095
    %v8120 = vcombine.high %v8063, %v8095
    %v8121 = vcombine.low %v8070, %v8102
    %v8122 = vcombine.high %v8070, %v8102
    %v8123 = vcombine.low %v8079, %v8111
    %v8124 = vcombine.high %v8079, %v8111
    %v8125 = vcombine.low %v8086, %v8118
    %v8126 = vcombine.high %v8086, %v8118
    %8143 = vrot.lane.b32.xlu0 %v3904, 2
    %v8144 = vpop.permute.xlu0 %8143
    %8145 = vrot.lane.b32.xlu0 %v4040, 2
    %v8146 = vpop.permute.xlu0 %8145
    %8147 = vrot.lane.b32.xlu0 %v4176, 2
    %v8148 = vpop.permute.xlu0 %8147
    %8149 = vrot.lane.b32.xlu0 %v4312, 2
    %v8150 = vpop.permute.xlu0 %8149
    %8151 = vrot.lane.b32.xlu0 %v4992, 2
    %v8152 = vpop.permute.xlu0 %8151
    %8153 = vrot.lane.b32.xlu0 %v5128, 2
    %v8154 = vpop.permute.xlu0 %8153
    %8155 = vrot.lane.b32.xlu0 %v5264, 2
    %v8156 = vpop.permute.xlu0 %8155
    %8157 = vrot.lane.b32.xlu0 %v5400, 2
    %v8158 = vpop.permute.xlu0 %8157
    %8159 = vrot.lane.b32.xlu0 %v6080, 2
    %v8160 = vpop.permute.xlu0 %8159
    %8161 = vrot.lane.b32.xlu0 %v6216, 2
    %v8162 = vpop.permute.xlu0 %8161
    %8163 = vrot.lane.b32.xlu0 %v6352, 2
    %v8164 = vpop.permute.xlu0 %8163
    %8165 = vrot.lane.b32.xlu0 %v6488, 2
    %v8166 = vpop.permute.xlu0 %8165
    %8167 = vrot.lane.b32.xlu0 %v7168, 2
    %v8168 = vpop.permute.xlu0 %8167
    %8169 = vrot.lane.b32.xlu0 %v7304, 2
    %v8170 = vpop.permute.xlu0 %8169
    %8171 = vrot.lane.b32.xlu0 %v7440, 2
    %v8172 = vpop.permute.xlu0 %8171
    %8173 = vrot.lane.b32.xlu0 %v7576, 2
    %v8174 = vpop.permute.xlu0 %8173
    %8207 = vrot.lane.b32.xlu0 %v3905, 4
    %v8208 = vpop.permute.xlu0 %8207
    %8209 = vrot.lane.b32.xlu0 %v4041, 4
    %v8210 = vpop.permute.xlu0 %8209
    %8211 = vrot.lane.b32.xlu0 %v4177, 4
    %v8212 = vpop.permute.xlu0 %8211
    %8213 = vrot.lane.b32.xlu0 %v4313, 4
    %v8214 = vpop.permute.xlu0 %8213
    %8215 = vrot.lane.b32.xlu0 %v4993, 4
    %v8216 = vpop.permute.xlu0 %8215
    %8217 = vrot.lane.b32.xlu0 %v5129, 4
    %v8218 = vpop.permute.xlu0 %8217
    %8219 = vrot.lane.b32.xlu0 %v5265, 4
    %v8220 = vpop.permute.xlu0 %8219
    %8221 = vrot.lane.b32.xlu0 %v5401, 4
    %v8222 = vpop.permute.xlu0 %8221
    %8223 = vrot.lane.b32.xlu0 %v6081, 4
    %v8224 = vpop.permute.xlu0 %8223
    %8225 = vrot.lane.b32.xlu0 %v6217, 4
    %v8226 = vpop.permute.xlu0 %8225
    %8227 = vrot.lane.b32.xlu0 %v6353, 4
    %v8228 = vpop.permute.xlu0 %8227
    %8229 = vrot.lane.b32.xlu0 %v6489, 4
    %v8230 = vpop.permute.xlu0 %8229
    %8231 = vrot.lane.b32.xlu0 %v7169, 4
    %v8232 = vpop.permute.xlu0 %8231
    %8233 = vrot.lane.b32.xlu0 %v7305, 4
    %v8234 = vpop.permute.xlu0 %8233
    %8235 = vrot.lane.b32.xlu0 %v7441, 4
    %v8236 = vpop.permute.xlu0 %8235
    %8237 = vrot.lane.b32.xlu0 %v7577, 4
    %v8238 = vpop.permute.xlu0 %8237
    %8271 = vrot.lane.b32.xlu0 %v3906, 6
    %v8272 = vpop.permute.xlu0 %8271
    %8273 = vrot.lane.b32.xlu0 %v4042, 6
    %v8274 = vpop.permute.xlu0 %8273
    %8275 = vrot.lane.b32.xlu0 %v4178, 6
    %v8276 = vpop.permute.xlu0 %8275
    %8277 = vrot.lane.b32.xlu0 %v4314, 6
    %v8278 = vpop.permute.xlu0 %8277
    %8279 = vrot.lane.b32.xlu0 %v4994, 6
    %v8280 = vpop.permute.xlu0 %8279
    %8281 = vrot.lane.b32.xlu0 %v5130, 6
    %v8282 = vpop.permute.xlu0 %8281
    %8283 = vrot.lane.b32.xlu0 %v5266, 6
    %v8284 = vpop.permute.xlu0 %8283
    %8285 = vrot.lane.b32.xlu0 %v5402, 6
    %v8286 = vpop.permute.xlu0 %8285
    %8287 = vrot.lane.b32.xlu0 %v6082, 6
    %v8288 = vpop.permute.xlu0 %8287
    %8289 = vrot.lane.b32.xlu0 %v6218, 6
    %v8290 = vpop.permute.xlu0 %8289
    %8291 = vrot.lane.b32.xlu0 %v6354, 6
    %v8292 = vpop.permute.xlu0 %8291
    %8293 = vrot.lane.b32.xlu0 %v6490, 6
    %v8294 = vpop.permute.xlu0 %8293
    %8295 = vrot.lane.b32.xlu0 %v7170, 6
    %v8296 = vpop.permute.xlu0 %8295
    %8297 = vrot.lane.b32.xlu0 %v7306, 6
    %v8298 = vpop.permute.xlu0 %8297
    %8299 = vrot.lane.b32.xlu0 %v7442, 6
    %v8300 = vpop.permute.xlu0 %8299
    %8301 = vrot.lane.b32.xlu0 %v7578, 6
    %v8302 = vpop.permute.xlu0 %8301
    %8335 = vrot.lane.b32.xlu0 %v3907, 8
    %v8336 = vpop.permute.xlu0 %8335
    %8337 = vrot.lane.b32.xlu0 %v4043, 8
    %v8338 = vpop.permute.xlu0 %8337
    %8339 = vrot.lane.b32.xlu0 %v4179, 8
    %v8340 = vpop.permute.xlu0 %8339
    %8341 = vrot.lane.b32.xlu0 %v4315, 8
    %v8342 = vpop.permute.xlu0 %8341
    %8343 = vrot.lane.b32.xlu0 %v4995, 8
    %v8344 = vpop.permute.xlu0 %8343
    %8345 = vrot.lane.b32.xlu0 %v5131, 8
    %v8346 = vpop.permute.xlu0 %8345
    %8347 = vrot.lane.b32.xlu0 %v5267, 8
    %v8348 = vpop.permute.xlu0 %8347
    %8349 = vrot.lane.b32.xlu0 %v5403, 8
    %v8350 = vpop.permute.xlu0 %8349
    %8351 = vrot.lane.b32.xlu0 %v6083, 8
    %v8352 = vpop.permute.xlu0 %8351
    %8353 = vrot.lane.b32.xlu0 %v6219, 8
    %v8354 = vpop.permute.xlu0 %8353
    %8355 = vrot.lane.b32.xlu0 %v6355, 8
    %v8356 = vpop.permute.xlu0 %8355
    %8357 = vrot.lane.b32.xlu0 %v6491, 8
    %v8358 = vpop.permute.xlu0 %8357
    %8359 = vrot.lane.b32.xlu0 %v7171, 8
    %v8360 = vpop.permute.xlu0 %8359
    %8361 = vrot.lane.b32.xlu0 %v7307, 8
    %v8362 = vpop.permute.xlu0 %8361
    %8363 = vrot.lane.b32.xlu0 %v7443, 8
    %v8364 = vpop.permute.xlu0 %8363
    %8365 = vrot.lane.b32.xlu0 %v7579, 8
    %v8366 = vpop.permute.xlu0 %8365
    %8399 = vrot.lane.b32.xlu0 %v3908, 10
    %v8400 = vpop.permute.xlu0 %8399
    %8401 = vrot.lane.b32.xlu0 %v4044, 10
    %v8402 = vpop.permute.xlu0 %8401
    %8403 = vrot.lane.b32.xlu0 %v4180, 10
    %v8404 = vpop.permute.xlu0 %8403
    %8405 = vrot.lane.b32.xlu0 %v4316, 10
    %v8406 = vpop.permute.xlu0 %8405
    %8407 = vrot.lane.b32.xlu0 %v4996, 10
    %v8408 = vpop.permute.xlu0 %8407
    %8409 = vrot.lane.b32.xlu0 %v5132, 10
    %v8410 = vpop.permute.xlu0 %8409
    %8411 = vrot.lane.b32.xlu0 %v5268, 10
    %v8412 = vpop.permute.xlu0 %8411
    %8413 = vrot.lane.b32.xlu0 %v5404, 10
    %v8414 = vpop.permute.xlu0 %8413
    %8415 = vrot.lane.b32.xlu0 %v6084, 10
    %v8416 = vpop.permute.xlu0 %8415
    %8417 = vrot.lane.b32.xlu0 %v6220, 10
    %v8418 = vpop.permute.xlu0 %8417
    %8419 = vrot.lane.b32.xlu0 %v6356, 10
    %v8420 = vpop.permute.xlu0 %8419
    %8421 = vrot.lane.b32.xlu0 %v6492, 10
    %v8422 = vpop.permute.xlu0 %8421
    %8423 = vrot.lane.b32.xlu0 %v7172, 10
    %v8424 = vpop.permute.xlu0 %8423
    %8425 = vrot.lane.b32.xlu0 %v7308, 10
    %v8426 = vpop.permute.xlu0 %8425
    %8427 = vrot.lane.b32.xlu0 %v7444, 10
    %v8428 = vpop.permute.xlu0 %8427
    %8429 = vrot.lane.b32.xlu0 %v7580, 10
    %v8430 = vpop.permute.xlu0 %8429
    %8463 = vrot.lane.b32.xlu0 %v3909, 12
    %v8464 = vpop.permute.xlu0 %8463
    %8465 = vrot.lane.b32.xlu0 %v4045, 12
    %v8466 = vpop.permute.xlu0 %8465
    %8467 = vrot.lane.b32.xlu0 %v4181, 12
    %v8468 = vpop.permute.xlu0 %8467
    %8469 = vrot.lane.b32.xlu0 %v4317, 12
    %v8470 = vpop.permute.xlu0 %8469
    %8471 = vrot.lane.b32.xlu0 %v4997, 12
    %v8472 = vpop.permute.xlu0 %8471
    %8473 = vrot.lane.b32.xlu0 %v5133, 12
    %v8474 = vpop.permute.xlu0 %8473
    %8475 = vrot.lane.b32.xlu0 %v5269, 12
    %v8476 = vpop.permute.xlu0 %8475
    %8477 = vrot.lane.b32.xlu0 %v5405, 12
    %v8478 = vpop.permute.xlu0 %8477
    %8479 = vrot.lane.b32.xlu0 %v6085, 12
    %v8480 = vpop.permute.xlu0 %8479
    %8481 = vrot.lane.b32.xlu0 %v6221, 12
    %v8482 = vpop.permute.xlu0 %8481
    %8483 = vrot.lane.b32.xlu0 %v6357, 12
    %v8484 = vpop.permute.xlu0 %8483
    %8485 = vrot.lane.b32.xlu0 %v6493, 12
    %v8486 = vpop.permute.xlu0 %8485
    %8487 = vrot.lane.b32.xlu0 %v7173, 12
    %v8488 = vpop.permute.xlu0 %8487
    %8489 = vrot.lane.b32.xlu0 %v7309, 12
    %v8490 = vpop.permute.xlu0 %8489
    %8491 = vrot.lane.b32.xlu0 %v7445, 12
    %v8492 = vpop.permute.xlu0 %8491
    %8493 = vrot.lane.b32.xlu0 %v7581, 12
    %v8494 = vpop.permute.xlu0 %8493
    %8527 = vrot.lane.b32.xlu0 %v3910, 14
    %v8528 = vpop.permute.xlu0 %8527
    %8529 = vrot.lane.b32.xlu0 %v4046, 14
    %v8530 = vpop.permute.xlu0 %8529
    %8531 = vrot.lane.b32.xlu0 %v4182, 14
    %v8532 = vpop.permute.xlu0 %8531
    %8533 = vrot.lane.b32.xlu0 %v4318, 14
    %v8534 = vpop.permute.xlu0 %8533
    %8535 = vrot.lane.b32.xlu0 %v4998, 14
    %v8536 = vpop.permute.xlu0 %8535
    %8537 = vrot.lane.b32.xlu0 %v5134, 14
    %v8538 = vpop.permute.xlu0 %8537
    %8539 = vrot.lane.b32.xlu0 %v5270, 14
    %v8540 = vpop.permute.xlu0 %8539
    %8541 = vrot.lane.b32.xlu0 %v5406, 14
    %v8542 = vpop.permute.xlu0 %8541
    %8543 = vrot.lane.b32.xlu0 %v6086, 14
    %v8544 = vpop.permute.xlu0 %8543
    %8545 = vrot.lane.b32.xlu0 %v6222, 14
    %v8546 = vpop.permute.xlu0 %8545
    %8547 = vrot.lane.b32.xlu0 %v6358, 14
    %v8548 = vpop.permute.xlu0 %8547
    %8549 = vrot.lane.b32.xlu0 %v6494, 14
    %v8550 = vpop.permute.xlu0 %8549
    %8551 = vrot.lane.b32.xlu0 %v7174, 14
    %v8552 = vpop.permute.xlu0 %8551
    %8553 = vrot.lane.b32.xlu0 %v7310, 14
    %v8554 = vpop.permute.xlu0 %8553
    %8555 = vrot.lane.b32.xlu0 %v7446, 14
    %v8556 = vpop.permute.xlu0 %8555
    %8557 = vrot.lane.b32.xlu0 %v7582, 14
    %v8558 = vpop.permute.xlu0 %8557
    %8591 = vrot.lane.b32.xlu0 %v4447, 16
    %v8592 = vpop.permute.xlu0 %8591
    %8593 = vrot.lane.b32.xlu0 %v4583, 16
    %v8594 = vpop.permute.xlu0 %8593
    %8595 = vrot.lane.b32.xlu0 %v4719, 16
    %v8596 = vpop.permute.xlu0 %8595
    %8597 = vrot.lane.b32.xlu0 %v4855, 16
    %v8598 = vpop.permute.xlu0 %8597
    %8599 = vrot.lane.b32.xlu0 %v5535, 16
    %v8600 = vpop.permute.xlu0 %8599
    %8601 = vrot.lane.b32.xlu0 %v5671, 16
    %v8602 = vpop.permute.xlu0 %8601
    %8603 = vrot.lane.b32.xlu0 %v5807, 16
    %v8604 = vpop.permute.xlu0 %8603
    %8605 = vrot.lane.b32.xlu0 %v5943, 16
    %v8606 = vpop.permute.xlu0 %8605
    %8607 = vrot.lane.b32.xlu0 %v6623, 16
    %v8608 = vpop.permute.xlu0 %8607
    %8609 = vrot.lane.b32.xlu0 %v6759, 16
    %v8610 = vpop.permute.xlu0 %8609
    %8611 = vrot.lane.b32.xlu0 %v6895, 16
    %v8612 = vpop.permute.xlu0 %8611
    %8613 = vrot.lane.b32.xlu0 %v7031, 16
    %v8614 = vpop.permute.xlu0 %8613
    %8615 = vrot.lane.b32.xlu0 %v7711, 16
    %v8616 = vpop.permute.xlu0 %8615
    %8617 = vrot.lane.b32.xlu0 %v7847, 16
    %v8618 = vpop.permute.xlu0 %8617
    %8619 = vrot.lane.b32.xlu0 %v7983, 16
    %v8620 = vpop.permute.xlu0 %8619
    %8621 = vrot.lane.b32.xlu0 %v8119, 16
    %v8622 = vpop.permute.xlu0 %8621
    %8655 = vrot.lane.b32.xlu0 %v4448, 18
    %v8656 = vpop.permute.xlu0 %8655
    %8657 = vrot.lane.b32.xlu0 %v4584, 18
    %v8658 = vpop.permute.xlu0 %8657
    %8659 = vrot.lane.b32.xlu0 %v4720, 18
    %v8660 = vpop.permute.xlu0 %8659
    %8661 = vrot.lane.b32.xlu0 %v4856, 18
    %v8662 = vpop.permute.xlu0 %8661
    %8663 = vrot.lane.b32.xlu0 %v5536, 18
    %v8664 = vpop.permute.xlu0 %8663
    %8665 = vrot.lane.b32.xlu0 %v5672, 18
    %v8666 = vpop.permute.xlu0 %8665
    %8667 = vrot.lane.b32.xlu0 %v5808, 18
    %v8668 = vpop.permute.xlu0 %8667
    %8669 = vrot.lane.b32.xlu0 %v5944, 18
    %v8670 = vpop.permute.xlu0 %8669
    %8671 = vrot.lane.b32.xlu0 %v6624, 18
    %v8672 = vpop.permute.xlu0 %8671
    %8673 = vrot.lane.b32.xlu0 %v6760, 18
    %v8674 = vpop.permute.xlu0 %8673
    %8675 = vrot.lane.b32.xlu0 %v6896, 18
    %v8676 = vpop.permute.xlu0 %8675
    %8677 = vrot.lane.b32.xlu0 %v7032, 18
    %v8678 = vpop.permute.xlu0 %8677
    %8679 = vrot.lane.b32.xlu0 %v7712, 18
    %v8680 = vpop.permute.xlu0 %8679
    %8681 = vrot.lane.b32.xlu0 %v7848, 18
    %v8682 = vpop.permute.xlu0 %8681
    %8683 = vrot.lane.b32.xlu0 %v7984, 18
    %v8684 = vpop.permute.xlu0 %8683
    %8685 = vrot.lane.b32.xlu0 %v8120, 18
    %v8686 = vpop.permute.xlu0 %8685
    %8719 = vrot.lane.b32.xlu0 %v4449, 20
    %v8720 = vpop.permute.xlu0 %8719
    %8721 = vrot.lane.b32.xlu0 %v4585, 20
    %v8722 = vpop.permute.xlu0 %8721
    %8723 = vrot.lane.b32.xlu0 %v4721, 20
    %v8724 = vpop.permute.xlu0 %8723
    %8725 = vrot.lane.b32.xlu0 %v4857, 20
    %v8726 = vpop.permute.xlu0 %8725
    %8727 = vrot.lane.b32.xlu0 %v5537, 20
    %v8728 = vpop.permute.xlu0 %8727
    %8729 = vrot.lane.b32.xlu0 %v5673, 20
    %v8730 = vpop.permute.xlu0 %8729
    %8731 = vrot.lane.b32.xlu0 %v5809, 20
    %v8732 = vpop.permute.xlu0 %8731
    %8733 = vrot.lane.b32.xlu0 %v5945, 20
    %v8734 = vpop.permute.xlu0 %8733
    %8735 = vrot.lane.b32.xlu0 %v6625, 20
    %v8736 = vpop.permute.xlu0 %8735
    %8737 = vrot.lane.b32.xlu0 %v6761, 20
    %v8738 = vpop.permute.xlu0 %8737
    %8739 = vrot.lane.b32.xlu0 %v6897, 20
    %v8740 = vpop.permute.xlu0 %8739
    %8741 = vrot.lane.b32.xlu0 %v7033, 20
    %v8742 = vpop.permute.xlu0 %8741
    %8743 = vrot.lane.b32.xlu0 %v7713, 20
    %v8744 = vpop.permute.xlu0 %8743
    %8745 = vrot.lane.b32.xlu0 %v7849, 20
    %v8746 = vpop.permute.xlu0 %8745
    %8747 = vrot.lane.b32.xlu0 %v7985, 20
    %v8748 = vpop.permute.xlu0 %8747
    %8749 = vrot.lane.b32.xlu0 %v8121, 20
    %v8750 = vpop.permute.xlu0 %8749
    %8783 = vrot.lane.b32.xlu0 %v4450, 22
    %v8784 = vpop.permute.xlu0 %8783
    %8785 = vrot.lane.b32.xlu0 %v4586, 22
    %v8786 = vpop.permute.xlu0 %8785
    %8787 = vrot.lane.b32.xlu0 %v4722, 22
    %v8788 = vpop.permute.xlu0 %8787
    %8789 = vrot.lane.b32.xlu0 %v4858, 22
    %v8790 = vpop.permute.xlu0 %8789
    %8791 = vrot.lane.b32.xlu0 %v5538, 22
    %v8792 = vpop.permute.xlu0 %8791
    %8793 = vrot.lane.b32.xlu0 %v5674, 22
    %v8794 = vpop.permute.xlu0 %8793
    %8795 = vrot.lane.b32.xlu0 %v5810, 22
    %v8796 = vpop.permute.xlu0 %8795
    %8797 = vrot.lane.b32.xlu0 %v5946, 22
    %v8798 = vpop.permute.xlu0 %8797
    %8799 = vrot.lane.b32.xlu0 %v6626, 22
    %v8800 = vpop.permute.xlu0 %8799
    %8801 = vrot.lane.b32.xlu0 %v6762, 22
    %v8802 = vpop.permute.xlu0 %8801
    %8803 = vrot.lane.b32.xlu0 %v6898, 22
    %v8804 = vpop.permute.xlu0 %8803
    %8805 = vrot.lane.b32.xlu0 %v7034, 22
    %v8806 = vpop.permute.xlu0 %8805
    %8807 = vrot.lane.b32.xlu0 %v7714, 22
    %v8808 = vpop.permute.xlu0 %8807
    %8809 = vrot.lane.b32.xlu0 %v7850, 22
    %v8810 = vpop.permute.xlu0 %8809
    %8811 = vrot.lane.b32.xlu0 %v7986, 22
    %v8812 = vpop.permute.xlu0 %8811
    %8813 = vrot.lane.b32.xlu0 %v8122, 22
    %v8814 = vpop.permute.xlu0 %8813
    %8847 = vrot.lane.b32.xlu0 %v4451, 24
    %v8848 = vpop.permute.xlu0 %8847
    %8849 = vrot.lane.b32.xlu0 %v4587, 24
    %v8850 = vpop.permute.xlu0 %8849
    %8851 = vrot.lane.b32.xlu0 %v4723, 24
    %v8852 = vpop.permute.xlu0 %8851
    %8853 = vrot.lane.b32.xlu0 %v4859, 24
    %v8854 = vpop.permute.xlu0 %8853
    %8855 = vrot.lane.b32.xlu0 %v5539, 24
    %v8856 = vpop.permute.xlu0 %8855
    %8857 = vrot.lane.b32.xlu0 %v5675, 24
    %v8858 = vpop.permute.xlu0 %8857
    %8859 = vrot.lane.b32.xlu0 %v5811, 24
    %v8860 = vpop.permute.xlu0 %8859
    %8861 = vrot.lane.b32.xlu0 %v5947, 24
    %v8862 = vpop.permute.xlu0 %8861
    %8863 = vrot.lane.b32.xlu0 %v6627, 24
    %v8864 = vpop.permute.xlu0 %8863
    %8865 = vrot.lane.b32.xlu0 %v6763, 24
    %v8866 = vpop.permute.xlu0 %8865
    %8867 = vrot.lane.b32.xlu0 %v6899, 24
    %v8868 = vpop.permute.xlu0 %8867
    %8869 = vrot.lane.b32.xlu0 %v7035, 24
    %v8870 = vpop.permute.xlu0 %8869
    %8871 = vrot.lane.b32.xlu0 %v7715, 24
    %v8872 = vpop.permute.xlu0 %8871
    %8873 = vrot.lane.b32.xlu0 %v7851, 24
    %v8874 = vpop.permute.xlu0 %8873
    %8875 = vrot.lane.b32.xlu0 %v7987, 24
    %v8876 = vpop.permute.xlu0 %8875
    %8877 = vrot.lane.b32.xlu0 %v8123, 24
    %v8878 = vpop.permute.xlu0 %8877
    %8911 = vrot.lane.b32.xlu0 %v4452, 26
    %v8912 = vpop.permute.xlu0 %8911
    %8913 = vrot.lane.b32.xlu0 %v4588, 26
    %v8914 = vpop.permute.xlu0 %8913
    %8915 = vrot.lane.b32.xlu0 %v4724, 26
    %v8916 = vpop.permute.xlu0 %8915
    %8917 = vrot.lane.b32.xlu0 %v4860, 26
    %v8918 = vpop.permute.xlu0 %8917
    %8919 = vrot.lane.b32.xlu0 %v5540, 26
    %v8920 = vpop.permute.xlu0 %8919
    %8921 = vrot.lane.b32.xlu0 %v5676, 26
    %v8922 = vpop.permute.xlu0 %8921
    %8923 = vrot.lane.b32.xlu0 %v5812, 26
    %v8924 = vpop.permute.xlu0 %8923
    %8925 = vrot.lane.b32.xlu0 %v5948, 26
    %v8926 = vpop.permute.xlu0 %8925
    %8927 = vrot.lane.b32.xlu0 %v6628, 26
    %v8928 = vpop.permute.xlu0 %8927
    %8929 = vrot.lane.b32.xlu0 %v6764, 26
    %v8930 = vpop.permute.xlu0 %8929
    %8931 = vrot.lane.b32.xlu0 %v6900, 26
    %v8932 = vpop.permute.xlu0 %8931
    %8933 = vrot.lane.b32.xlu0 %v7036, 26
    %v8934 = vpop.permute.xlu0 %8933
    %8935 = vrot.lane.b32.xlu0 %v7716, 26
    %v8936 = vpop.permute.xlu0 %8935
    %8937 = vrot.lane.b32.xlu0 %v7852, 26
    %v8938 = vpop.permute.xlu0 %8937
    %8939 = vrot.lane.b32.xlu0 %v7988, 26
    %v8940 = vpop.permute.xlu0 %8939
    %8941 = vrot.lane.b32.xlu0 %v8124, 26
    %v8942 = vpop.permute.xlu0 %8941
    %8975 = vrot.lane.b32.xlu0 %v4453, 28
    %v8976 = vpop.permute.xlu0 %8975
    %8977 = vrot.lane.b32.xlu0 %v4589, 28
    %v8978 = vpop.permute.xlu0 %8977
    %8979 = vrot.lane.b32.xlu0 %v4725, 28
    %v8980 = vpop.permute.xlu0 %8979
    %8981 = vrot.lane.b32.xlu0 %v4861, 28
    %v8982 = vpop.permute.xlu0 %8981
    %8983 = vrot.lane.b32.xlu0 %v5541, 28
    %v8984 = vpop.permute.xlu0 %8983
    %8985 = vrot.lane.b32.xlu0 %v5677, 28
    %v8986 = vpop.permute.xlu0 %8985
    %8987 = vrot.lane.b32.xlu0 %v5813, 28
    %v8988 = vpop.permute.xlu0 %8987
    %8989 = vrot.lane.b32.xlu0 %v5949, 28
    %v8990 = vpop.permute.xlu0 %8989
    %8991 = vrot.lane.b32.xlu0 %v6629, 28
    %v8992 = vpop.permute.xlu0 %8991
    %8993 = vrot.lane.b32.xlu0 %v6765, 28
    %v8994 = vpop.permute.xlu0 %8993
    %8995 = vrot.lane.b32.xlu0 %v6901, 28
    %v8996 = vpop.permute.xlu0 %8995
    %8997 = vrot.lane.b32.xlu0 %v7037, 28
    %v8998 = vpop.permute.xlu0 %8997
    %8999 = vrot.lane.b32.xlu0 %v7717, 28
    %v9000 = vpop.permute.xlu0 %8999
    %9001 = vrot.lane.b32.xlu0 %v7853, 28
    %v9002 = vpop.permute.xlu0 %9001
    %9003 = vrot.lane.b32.xlu0 %v7989, 28
    %v9004 = vpop.permute.xlu0 %9003
    %9005 = vrot.lane.b32.xlu0 %v8125, 28
    %v9006 = vpop.permute.xlu0 %9005
    %9039 = vrot.lane.b32.xlu0 %v4454, 30
    %v9040 = vpop.permute.xlu0 %9039
    %9041 = vrot.lane.b32.xlu0 %v4590, 30
    %v9042 = vpop.permute.xlu0 %9041
    %9043 = vrot.lane.b32.xlu0 %v4726, 30
    %v9044 = vpop.permute.xlu0 %9043
    %9045 = vrot.lane.b32.xlu0 %v4862, 30
    %v9046 = vpop.permute.xlu0 %9045
    %9047 = vrot.lane.b32.xlu0 %v5542, 30
    %v9048 = vpop.permute.xlu0 %9047
    %9049 = vrot.lane.b32.xlu0 %v5678, 30
    %v9050 = vpop.permute.xlu0 %9049
    %9051 = vrot.lane.b32.xlu0 %v5814, 30
    %v9052 = vpop.permute.xlu0 %9051
    %9053 = vrot.lane.b32.xlu0 %v5950, 30
    %v9054 = vpop.permute.xlu0 %9053
    %9055 = vrot.lane.b32.xlu0 %v6630, 30
    %v9056 = vpop.permute.xlu0 %9055
    %9057 = vrot.lane.b32.xlu0 %v6766, 30
    %v9058 = vpop.permute.xlu0 %9057
    %9059 = vrot.lane.b32.xlu0 %v6902, 30
    %v9060 = vpop.permute.xlu0 %9059
    %9061 = vrot.lane.b32.xlu0 %v7038, 30
    %v9062 = vpop.permute.xlu0 %9061
    %9063 = vrot.lane.b32.xlu0 %v7718, 30
    %v9064 = vpop.permute.xlu0 %9063
    %9065 = vrot.lane.b32.xlu0 %v7854, 30
    %v9066 = vpop.permute.xlu0 %9065
    %9067 = vrot.lane.b32.xlu0 %v7990, 30
    %v9068 = vpop.permute.xlu0 %9067
    %9069 = vrot.lane.b32.xlu0 %v8126, 30
    %v9070 = vpop.permute.xlu0 %9069
    %vm9087 = vcmask 15360
    %v9088 = vsel %vm9087, %v3903, %v8144
    %v9089 = vsel %vm9087, %v4039, %v8146
    %v9090 = vsel %vm9087, %v4175, %v8148
    %v9091 = vsel %vm9087, %v4311, %v8150
    %v9092 = vsel %vm9087, %v4991, %v8152
    %v9093 = vsel %vm9087, %v5127, %v8154
    %v9094 = vsel %vm9087, %v5263, %v8156
    %v9095 = vsel %vm9087, %v5399, %v8158
    %v9096 = vsel %vm9087, %v6079, %v8160
    %v9097 = vsel %vm9087, %v6215, %v8162
    %v9098 = vsel %vm9087, %v6351, %v8164
    %v9099 = vsel %vm9087, %v6487, %v8166
    %v9100 = vsel %vm9087, %v7167, %v8168
    %v9101 = vsel %vm9087, %v7303, %v8170
    %v9102 = vsel %vm9087, %v7439, %v8172
    %v9103 = vsel %vm9087, %v7575, %v8174
    %vm9104 = vcmask 31744
    %v9105 = vsel %vm9104, %v9088, %v8208
    %v9106 = vsel %vm9104, %v9089, %v8210
    %v9107 = vsel %vm9104, %v9090, %v8212
    %v9108 = vsel %vm9104, %v9091, %v8214
    %v9109 = vsel %vm9104, %v9092, %v8216
    %v9110 = vsel %vm9104, %v9093, %v8218
    %v9111 = vsel %vm9104, %v9094, %v8220
    %v9112 = vsel %vm9104, %v9095, %v8222
    %v9113 = vsel %vm9104, %v9096, %v8224
    %v9114 = vsel %vm9104, %v9097, %v8226
    %v9115 = vsel %vm9104, %v9098, %v8228
    %v9116 = vsel %vm9104, %v9099, %v8230
    %v9117 = vsel %vm9104, %v9100, %v8232
    %v9118 = vsel %vm9104, %v9101, %v8234
    %v9119 = vsel %vm9104, %v9102, %v8236
    %v9120 = vsel %vm9104, %v9103, %v8238
    %vm9121 = vcmask 48128
    %v9122 = vsel %vm9121, %v9105, %v8272
    %v9123 = vsel %vm9121, %v9106, %v8274
    %v9124 = vsel %vm9121, %v9107, %v8276
    %v9125 = vsel %vm9121, %v9108, %v8278
    %v9126 = vsel %vm9121, %v9109, %v8280
    %v9127 = vsel %vm9121, %v9110, %v8282
    %v9128 = vsel %vm9121, %v9111, %v8284
    %v9129 = vsel %vm9121, %v9112, %v8286
    %v9130 = vsel %vm9121, %v9113, %v8288
    %v9131 = vsel %vm9121, %v9114, %v8290
    %v9132 = vsel %vm9121, %v9115, %v8292
    %v9133 = vsel %vm9121, %v9116, %v8294
    %v9134 = vsel %vm9121, %v9117, %v8296
    %v9135 = vsel %vm9121, %v9118, %v8298
    %v9136 = vsel %vm9121, %v9119, %v8300
    %v9137 = vsel %vm9121, %v9120, %v8302
    %vm9138 = vcmask 64512
    %v9139 = vsel %vm9138, %v9122, %v8336
    %v9140 = vsel %vm9138, %v9123, %v8338
    %v9141 = vsel %vm9138, %v9124, %v8340
    %v9142 = vsel %vm9138, %v9125, %v8342
    %v9143 = vsel %vm9138, %v9126, %v8344
    %v9144 = vsel %vm9138, %v9127, %v8346
    %v9145 = vsel %vm9138, %v9128, %v8348
    %v9146 = vsel %vm9138, %v9129, %v8350
    %v9147 = vsel %vm9138, %v9130, %v8352
    %v9148 = vsel %vm9138, %v9131, %v8354
    %v9149 = vsel %vm9138, %v9132, %v8356
    %v9150 = vsel %vm9138, %v9133, %v8358
    %v9151 = vsel %vm9138, %v9134, %v8360
    %v9152 = vsel %vm9138, %v9135, %v8362
    %v9153 = vsel %vm9138, %v9136, %v8364
    %v9154 = vsel %vm9138, %v9137, %v8366
    %vm9155 = vcmask 80896
    %v9156 = vsel %vm9155, %v9139, %v8400
    %v9157 = vsel %vm9155, %v9140, %v8402
    %v9158 = vsel %vm9155, %v9141, %v8404
    %v9159 = vsel %vm9155, %v9142, %v8406
    %v9160 = vsel %vm9155, %v9143, %v8408
    %v9161 = vsel %vm9155, %v9144, %v8410
    %v9162 = vsel %vm9155, %v9145, %v8412
    %v9163 = vsel %vm9155, %v9146, %v8414
    %v9164 = vsel %vm9155, %v9147, %v8416
    %v9165 = vsel %vm9155, %v9148, %v8418
    %v9166 = vsel %vm9155, %v9149, %v8420
    %v9167 = vsel %vm9155, %v9150, %v8422
    %v9168 = vsel %vm9155, %v9151, %v8424
    %v9169 = vsel %vm9155, %v9152, %v8426
    %v9170 = vsel %vm9155, %v9153, %v8428
    %v9171 = vsel %vm9155, %v9154, %v8430
    %vm9172 = vcmask 97280
    %v9173 = vsel %vm9172, %v9156, %v8464
    %v9174 = vsel %vm9172, %v9157, %v8466
    %v9175 = vsel %vm9172, %v9158, %v8468
    %v9176 = vsel %vm9172, %v9159, %v8470
    %v9177 = vsel %vm9172, %v9160, %v8472
    %v9178 = vsel %vm9172, %v9161, %v8474
    %v9179 = vsel %vm9172, %v9162, %v8476
    %v9180 = vsel %vm9172, %v9163, %v8478
    %v9181 = vsel %vm9172, %v9164, %v8480
    %v9182 = vsel %vm9172, %v9165, %v8482
    %v9183 = vsel %vm9172, %v9166, %v8484
    %v9184 = vsel %vm9172, %v9167, %v8486
    %v9185 = vsel %vm9172, %v9168, %v8488
    %v9186 = vsel %vm9172, %v9169, %v8490
    %v9187 = vsel %vm9172, %v9170, %v8492
    %v9188 = vsel %vm9172, %v9171, %v8494
    %vm9189 = vcmask 113664
    %v9190 = vsel %vm9189, %v9173, %v8528
    %v9191 = vsel %vm9189, %v9174, %v8530
    %v9192 = vsel %vm9189, %v9175, %v8532
    %v9193 = vsel %vm9189, %v9176, %v8534
    %v9194 = vsel %vm9189, %v9177, %v8536
    %v9195 = vsel %vm9189, %v9178, %v8538
    %v9196 = vsel %vm9189, %v9179, %v8540
    %v9197 = vsel %vm9189, %v9180, %v8542
    %v9198 = vsel %vm9189, %v9181, %v8544
    %v9199 = vsel %vm9189, %v9182, %v8546
    %v9200 = vsel %vm9189, %v9183, %v8548
    %v9201 = vsel %vm9189, %v9184, %v8550
    %v9202 = vsel %vm9189, %v9185, %v8552
    %v9203 = vsel %vm9189, %v9186, %v8554
    %v9204 = vsel %vm9189, %v9187, %v8556
    %v9205 = vsel %vm9189, %v9188, %v8558
    %vm9206 = vcmask 130048
    %v9207 = vsel %vm9206, %v9190, %v8592
    %v9208 = vsel %vm9206, %v9191, %v8594
    %v9209 = vsel %vm9206, %v9192, %v8596
    %v9210 = vsel %vm9206, %v9193, %v8598
    %v9211 = vsel %vm9206, %v9194, %v8600
    %v9212 = vsel %vm9206, %v9195, %v8602
    %v9213 = vsel %vm9206, %v9196, %v8604
    %v9214 = vsel %vm9206, %v9197, %v8606
    %v9215 = vsel %vm9206, %v9198, %v8608
    %v9216 = vsel %vm9206, %v9199, %v8610
    %v9217 = vsel %vm9206, %v9200, %v8612
    %v9218 = vsel %vm9206, %v9201, %v8614
    %v9219 = vsel %vm9206, %v9202, %v8616
    %v9220 = vsel %vm9206, %v9203, %v8618
    %v9221 = vsel %vm9206, %v9204, %v8620
    %v9222 = vsel %vm9206, %v9205, %v8622
    %v9223 = vsel %vm23, %v9207, %v8656
    %v9224 = vsel %vm23, %v9208, %v8658
    %v9225 = vsel %vm23, %v9209, %v8660
    %v9226 = vsel %vm23, %v9210, %v8662
    %v9227 = vsel %vm23, %v9211, %v8664
    %v9228 = vsel %vm23, %v9212, %v8666
    %v9229 = vsel %vm23, %v9213, %v8668
    %v9230 = vsel %vm23, %v9214, %v8670
    %v9231 = vsel %vm23, %v9215, %v8672
    %v9232 = vsel %vm23, %v9216, %v8674
    %v9233 = vsel %vm23, %v9217, %v8676
    %v9234 = vsel %vm23, %v9218, %v8678
    %v9235 = vsel %vm23, %v9219, %v8680
    %v9236 = vsel %vm23, %v9220, %v8682
    %v9237 = vsel %vm23, %v9221, %v8684
    %v9238 = vsel %vm23, %v9222, %v8686
    %vm9239 = vcmask 162816
    %v9240 = vsel %vm9239, %v9223, %v8720
    %v9241 = vsel %vm9239, %v9224, %v8722
    %v9242 = vsel %vm9239, %v9225, %v8724
    %v9243 = vsel %vm9239, %v9226, %v8726
    %v9244 = vsel %vm9239, %v9227, %v8728
    %v9245 = vsel %vm9239, %v9228, %v8730
    %v9246 = vsel %vm9239, %v9229, %v8732
    %v9247 = vsel %vm9239, %v9230, %v8734
    %v9248 = vsel %vm9239, %v9231, %v8736
    %v9249 = vsel %vm9239, %v9232, %v8738
    %v9250 = vsel %vm9239, %v9233, %v8740
    %v9251 = vsel %vm9239, %v9234, %v8742
    %v9252 = vsel %vm9239, %v9235, %v8744
    %v9253 = vsel %vm9239, %v9236, %v8746
    %v9254 = vsel %vm9239, %v9237, %v8748
    %v9255 = vsel %vm9239, %v9238, %v8750
    %vm9256 = vcmask 179200
    %v9257 = vsel %vm9256, %v9240, %v8784
    %v9258 = vsel %vm9256, %v9241, %v8786
    %v9259 = vsel %vm9256, %v9242, %v8788
    %v9260 = vsel %vm9256, %v9243, %v8790
    %v9261 = vsel %vm9256, %v9244, %v8792
    %v9262 = vsel %vm9256, %v9245, %v8794
    %v9263 = vsel %vm9256, %v9246, %v8796
    %v9264 = vsel %vm9256, %v9247, %v8798
    %v9265 = vsel %vm9256, %v9248, %v8800
    %v9266 = vsel %vm9256, %v9249, %v8802
    %v9267 = vsel %vm9256, %v9250, %v8804
    %v9268 = vsel %vm9256, %v9251, %v8806
    %v9269 = vsel %vm9256, %v9252, %v8808
    %v9270 = vsel %vm9256, %v9253, %v8810
    %v9271 = vsel %vm9256, %v9254, %v8812
    %v9272 = vsel %vm9256, %v9255, %v8814
    %vm9273 = vcmask 195584
    %v9274 = vsel %vm9273, %v9257, %v8848
    %v9275 = vsel %vm9273, %v9258, %v8850
    %v9276 = vsel %vm9273, %v9259, %v8852
    %v9277 = vsel %vm9273, %v9260, %v8854
    %v9278 = vsel %vm9273, %v9261, %v8856
    %v9279 = vsel %vm9273, %v9262, %v8858
    %v9280 = vsel %vm9273, %v9263, %v8860
    %v9281 = vsel %vm9273, %v9264, %v8862
    %v9282 = vsel %vm9273, %v9265, %v8864
    %v9283 = vsel %vm9273, %v9266, %v8866
    %v9284 = vsel %vm9273, %v9267, %v8868
    %v9285 = vsel %vm9273, %v9268, %v8870
    %v9286 = vsel %vm9273, %v9269, %v8872
    %v9287 = vsel %vm9273, %v9270, %v8874
    %v9288 = vsel %vm9273, %v9271, %v8876
    %v9289 = vsel %vm9273, %v9272, %v8878
    %vm9290 = vcmask 211968
    %v9291 = vsel %vm9290, %v9274, %v8912
    %v9292 = vsel %vm9290, %v9275, %v8914
    %v9293 = vsel %vm9290, %v9276, %v8916
    %v9294 = vsel %vm9290, %v9277, %v8918
    %v9295 = vsel %vm9290, %v9278, %v8920
    %v9296 = vsel %vm9290, %v9279, %v8922
    %v9297 = vsel %vm9290, %v9280, %v8924
    %v9298 = vsel %vm9290, %v9281, %v8926
    %v9299 = vsel %vm9290, %v9282, %v8928
    %v9300 = vsel %vm9290, %v9283, %v8930
    %v9301 = vsel %vm9290, %v9284, %v8932
    %v9302 = vsel %vm9290, %v9285, %v8934
    %v9303 = vsel %vm9290, %v9286, %v8936
    %v9304 = vsel %vm9290, %v9287, %v8938
    %v9305 = vsel %vm9290, %v9288, %v8940
    %v9306 = vsel %vm9290, %v9289, %v8942
    %vm9307 = vcmask 228352
    %v9308 = vsel %vm9307, %v9291, %v8976
    %v9309 = vsel %vm9307, %v9292, %v8978
    %v9310 = vsel %vm9307, %v9293, %v8980
    %v9311 = vsel %vm9307, %v9294, %v8982
    %v9312 = vsel %vm9307, %v9295, %v8984
    %v9313 = vsel %vm9307, %v9296, %v8986
    %v9314 = vsel %vm9307, %v9297, %v8988
    %v9315 = vsel %vm9307, %v9298, %v8990
    %v9316 = vsel %vm9307, %v9299, %v8992
    %v9317 = vsel %vm9307, %v9300, %v8994
    %v9318 = vsel %vm9307, %v9301, %v8996
    %v9319 = vsel %vm9307, %v9302, %v8998
    %v9320 = vsel %vm9307, %v9303, %v9000
    %v9321 = vsel %vm9307, %v9304, %v9002
    %v9322 = vsel %vm9307, %v9305, %v9004
    %v9323 = vsel %vm9307, %v9306, %v9006
    %vm9324 = vcmask 244736
    %v9325 = vsel %vm9324, %v9308, %v9040
    %v9326 = vsel %vm9324, %v9309, %v9042
    %v9327 = vsel %vm9324, %v9310, %v9044
    %v9328 = vsel %vm9324, %v9311, %v9046
    %v9329 = vsel %vm9324, %v9312, %v9048
    %v9330 = vsel %vm9324, %v9313, %v9050
    %v9331 = vsel %vm9324, %v9314, %v9052
    %v9332 = vsel %vm9324, %v9315, %v9054
    %v9333 = vsel %vm9324, %v9316, %v9056
    %v9334 = vsel %vm9324, %v9317, %v9058
    %v9335 = vsel %vm9324, %v9318, %v9060
    %v9336 = vsel %vm9324, %v9319, %v9062
    %v9337 = vsel %vm9324, %v9320, %v9064
    %v9338 = vsel %vm9324, %v9321, %v9066
    %v9339 = vsel %vm9324, %v9322, %v9068
    %v9340 = vsel %vm9324, %v9323, %v9070
    %vm9341 = vcmask 261120
    %9342 = vst.msk [vmem:[#allocation6] sm:$0xff] %vm9341, %v9325
    %9343 = vst.msk [vmem:[#allocation6 + $0x8] sm:$0xff] %vm9341, %v9326
    %9344 = vst.msk [vmem:[#allocation6 + $0x10] sm:$0xff] %vm9341, %v9327
    %9345 = vst.msk [vmem:[#allocation6 + $0x18] sm:$0xff] %vm9341, %v9328
    %9346 = vst.msk [vmem:[#allocation6 + $0x20] sm:$0xff] %vm9341, %v9329
    %9347 = vst.msk [vmem:[#allocation6 + $0x28] sm:$0xff] %vm9341, %v9330
    %9348 = vst.msk [vmem:[#allocation6 + $0x30] sm:$0xff] %vm9341, %v9331
    %9349 = vst.msk [vmem:[#allocation6 + $0x38] sm:$0xff] %vm9341, %v9332
    %9350 = vst.msk [vmem:[#allocation6 + $0x40] sm:$0xff] %vm9341, %v9333
    %9351 = vst.msk [vmem:[#allocation6 + $0x48] sm:$0xff] %vm9341, %v9334
    %9352 = vst.msk [vmem:[#allocation6 + $0x50] sm:$0xff] %vm9341, %v9335
    %9353 = vst.msk [vmem:[#allocation6 + $0x58] sm:$0xff] %vm9341, %v9336
    %9354 = vst.msk [vmem:[#allocation6 + $0x60] sm:$0xff] %vm9341, %v9337
    %9355 = vst.msk [vmem:[#allocation6 + $0x68] sm:$0xff] %vm9341, %v9338
    %9356 = vst.msk [vmem:[#allocation6 + $0x70] sm:$0xff] %vm9341, %v9339
    %9357 = vst.msk [vmem:[#allocation6 + $0x78] sm:$0xff] %vm9341, %v9340
    // Predicated region
    $region10: #{tpu_custom_call.1} parent=1 // pred_check
      _
    $region11: #{tpu_custom_call.1} parent=1 // pred_check_branch
      %9359 = sbr.rel (0) target = $region13
    $region12: #{tpu_custom_call.1} parent=1 // pred_region
      %s9361 = ssub.s32 2048, 2048
      %9362 = vsyncadd [#allocation5], %s9361
      %s9363 = sshll.u32 [#allocation6], 4
      %s9364 = int_to_ptr.vmem [resolvable:$true] %s9363
      %9369 = dma.vmem_to_hbm [thread:$0]  %s9364, 2048, %s1, [#allocation5], 128, 128, 8
    $region13: #{tpu_custom_call.1} parent=1 // pred_fallthru
      _
    // Predicated region
    $region14: #{tpu_custom_call.1} parent=1 // pred_check
      _
    $region15: #{tpu_custom_call.1} parent=1 // pred_check_branch
      %9371 = sbr.rel (0) target = $region17
    $region16: #{tpu_custom_call.1} parent=1 // pred_region
      %9372 = dma.done [#allocation5], 2048
    $region17: #{tpu_custom_call.1} parent=1 // pred_fallthru
      _
    %9373 = vsyncpa [#allocation4], 1
    %9374 = vsyncpa [#allocation5], 1

// kernel: tpu_custom_call.1
$region0: #{tpu_custom_call.1}
  #allocation0 [shape = 'u32[]', space=smem, size = 0x4, offset = 0x4, fixed_abs, tag = 'smem constant byte address 0x4 - core index']
  #allocation1 [shape = 'u32[144,128]{1,0:T(1,128)}', space=vmem, size = 0x12000, scoped, tag = 'internal scratch']
  #allocation2 [shape = 'f32[8,18,18]{2,1,0:T(8,128)}', space=vmem, size = 0x18000, scoped, tag = 'scratch operand']
  %s0 = inlined_call_operand.hbm [shape: f32[8,16,16], index: 0, kind: input, shape index: {}]
  %s1 = inlined_call_operand.hbm [shape: f32[8,4,16,16], index: 1, kind: output, shape index: {}]
  %s2 = sld [smem:[#allocation0]]
  $region18: #{tpu_custom_call.1} parent=0
    _
  %s4 = ssub.s32 1, %s2
  %s5 = scalar_select 0, %s4, %s2
  $region1: #{tpu_custom_call.1} parent=0
    #allocation3 [shape = 'u8[65536]{0}', space=vmem, size = 0x10000, scoped, tag = 'input window, operand 0, single buffered']
    #allocation4 [shape = 's32[1]{0}', space=sflag, size = 0x4, scoped, tag = 'scoped memory for tpu_custom_call.1']
    #allocation5 [shape = 's32[1]{0}', space=sflag, size = 0x4, scoped, tag = 'scoped memory for tpu_custom_call.1']
    #allocation6 [shape = 'u8[262144]{0}', space=vmem, size = 0x40000, scoped, tag = 'output window, operand 0, single buffered']
    %6 = vsyncpa [#allocation4], 0
    %7 = vsyncpa [#allocation5], 0
    // Predicated region
    $region2: #{tpu_custom_call.1} parent=1 // pred_check
      _
    $region3: #{tpu_custom_call.1} parent=1 // pred_check_branch
      %9 = sbr.rel (0) target = $region5
    $region4: #{tpu_custom_call.1} parent=1 // pred_region
      %s11 = ssub.s32 2048, 2048
      %12 = vsyncadd [#allocation4], %s11
      %s13 = sshll.u32 [#allocation3], 4
      %s14 = int_to_ptr.vmem [resolvable:$true] %s13
      %19 = dma.hbm_to_vmem [thread:$0]  %s0, 2048, %s14, [#allocation4], 128, 128, 8
    $region5: #{tpu_custom_call.1} parent=1 // pred_fallthru
      _
    // Predicated region
    $region6: #{tpu_custom_call.1} parent=1 // pred_check
      _
    $region7: #{tpu_custom_call.1} parent=1 // pred_check_branch
      %21 = sbr.rel (0) target = $region9
    $region8: #{tpu_custom_call.1} parent=1 // pred_region
      %22 = dma.done [#allocation4], 2048
    $region9: #{tpu_custom_call.1} parent=1 // pred_fallthru
      _
    %vm23 = vcmask 146432
    %24 = vst.msk [vmem:[#allocation2] sm:$0xff] %vm23, 0.0
    %25 = vst.msk [vmem:[#allocation2 + $0x8] sm:$0xff] %vm23, 0.0
    %vm26 = vcmask 140288
    %27 = vst.msk [vmem:[#allocation2 + $0x10] sm:$0x3] %vm26, 0.0
    %28 = vst.msk [vmem:[#allocation2 + $0x18] sm:$0xff] %vm23, 0.0
    %29 = vst.msk [vmem:[#allocation2 + $0x20] sm:$0xff] %vm23, 0.0
    %30 = vst.msk [vmem:[#allocation2 + $0x28] sm:$0x3] %vm26, 0.0
    %31 = vst.msk [vmem:[#allocation2 + $0x30] sm:$0xff] %vm23, 0.0
    %32 = vst.msk [vmem:[#allocation2 + $0x38] sm:$0xff] %vm23, 0.0
    %33 = vst.msk [vmem:[#allocation2 + $0x40] sm:$0x3] %vm26, 0.0
    %34 = vst.msk [vmem:[#allocation2 + $0x48] sm:$0xff] %vm23, 0.0
    %35 = vst.msk [vmem:[#allocation2 + $0x50] sm:$0xff] %vm23, 0.0
    %36 = vst.msk [vmem:[#allocation2 + $0x58] sm:$0x3] %vm26, 0.0
    %37 = vst.msk [vmem:[#allocation2 + $0x60] sm:$0xff] %vm23, 0.0
    %38 = vst.msk [vmem:[#allocation2 + $0x68] sm:$0xff] %vm23, 0.0
    %39 = vst.msk [vmem:[#allocation2 + $0x70] sm:$0x3] %vm26, 0.0
    %40 = vst.msk [vmem:[#allocation2 + $0x78] sm:$0xff] %vm23, 0.0
    %41 = vst.msk [vmem:[#allocation2 + $0x80] sm:$0xff] %vm23, 0.0
    %42 = vst.msk [vmem:[#allocation2 + $0x88] sm:$0x3] %vm26, 0.0
    %43 = vst.msk [vmem:[#allocation2 + $0x90] sm:$0xff] %vm23, 0.0
    %44 = vst.msk [vmem:[#allocation2 + $0x98] sm:$0xff] %vm23, 0.0
    %45 = vst.msk [vmem:[#allocation2 + $0xa0] sm:$0x3] %vm26, 0.0
    %46 = vst.msk [vmem:[#allocation2 + $0xa8] sm:$0xff] %vm23, 0.0
    %47 = vst.msk [vmem:[#allocation2 + $0xb0] sm:$0xff] %vm23, 0.0
    %48 = vst.msk [vmem:[#allocation2 + $0xb8] sm:$0x3] %vm26, 0.0
    %v49 = vld [vmem:[#allocation3] sm:$0xff]
    %v50 = vld [vmem:[#allocation3 + $0x8] sm:$0xff]
    %v51 = vld [vmem:[#allocation3 + $0x10] sm:$0xff]
    %v52 = vld [vmem:[#allocation3 + $0x18] sm:$0xff]
    %v53 = vld [vmem:[#allocation3 + $0x20] sm:$0xff]
    %v54 = vld [vmem:[#allocation3 + $0x28] sm:$0xff]
    %v55 = vld [vmem:[#allocation3 + $0x30] sm:$0xff]
    %v56 = vld [vmem:[#allocation3 + $0x38] sm:$0xff]
    %v57 = vld [vmem:[#allocation3 + $0x40] sm:$0xff]
    %v58 = vld [vmem:[#allocation3 + $0x48] sm:$0xff]
    %v59 = vld [vmem:[#allocation3 + $0x50] sm:$0xff]
    %v60 = vld [vmem:[#allocation3 + $0x58] sm:$0xff]
    %v61 = vld [vmem:[#allocation3 + $0x60] sm:$0xff]
    %v62 = vld [vmem:[#allocation3 + $0x68] sm:$0xff]
    %v63 = vld [vmem:[#allocation3 + $0x70] sm:$0xff]
    %v64 = vld [vmem:[#allocation3 + $0x78] sm:$0xff]
    %81 = vrot.lane.b32.xlu0 %v49, 1
    %v82 = vpop.permute.xlu0 %81
    %83 = vrot.lane.b32.xlu0 %v50, 1
    %v84 = vpop.permute.xlu0 %83
    %85 = vrot.lane.b32.xlu0 %v51, 1
    %v86 = vpop.permute.xlu0 %85
    %87 = vrot.lane.b32.xlu0 %v52, 1
    %v88 = vpop.permute.xlu0 %87
    %89 = vrot.lane.b32.xlu0 %v53, 1
    %v90 = vpop.permute.xlu0 %89
    %91 = vrot.lane.b32.xlu0 %v54, 1
    %v92 = vpop.permute.xlu0 %91
    %93 = vrot.lane.b32.xlu0 %v55, 1
    %v94 = vpop.permute.xlu0 %93
    %95 = vrot.lane.b32.xlu0 %v56, 1
    %v96 = vpop.permute.xlu0 %95
    %97 = vrot.lane.b32.xlu0 %v57, 1
    %v98 = vpop.permute.xlu0 %97
    %99 = vrot.lane.b32.xlu0 %v58, 1
    %v100 = vpop.permute.xlu0 %99
    %101 = vrot.lane.b32.xlu0 %v59, 1
    %v102 = vpop.permute.xlu0 %101
    %103 = vrot.lane.b32.xlu0 %v60, 1
    %v104 = vpop.permute.xlu0 %103
    %105 = vrot.lane.b32.xlu0 %v61, 1
    %v106 = vpop.permute.xlu0 %105
    %107 = vrot.lane.b32.xlu0 %v62, 1
    %v108 = vpop.permute.xlu0 %107
    %109 = vrot.lane.b32.xlu0 %v63, 1
    %v110 = vpop.permute.xlu0 %109
    %111 = vrot.lane.b32.xlu0 %v64, 1
    %v112 = vpop.permute.xlu0 %111
    %vm129 = vcmask 138248
    %130 = vst.msk [vmem:[#allocation2 + $0x1] sm:$0xff] %vm129, %v82
    %131 = vst.msk [vmem:[#allocation2 + $0x9] sm:$0xff] %vm129, %v84
    %132 = vst.msk [vmem:[#allocation2 + $0x19] sm:$0xff] %vm129, %v86
    %133 = vst.msk [vmem:[#allocation2 + $0x21] sm:$0xff] %vm129, %v88
    %134 = vst.msk [vmem:[#allocation2 + $0x31] sm:$0xff] %vm129, %v90
    %135 = vst.msk [vmem:[#allocation2 + $0x39] sm:$0xff] %vm129, %v92
    %136 = vst.msk [vmem:[#allocation2 + $0x49] sm:$0xff] %vm129, %v94
    %137 = vst.msk [vmem:[#allocation2 + $0x51] sm:$0xff] %vm129, %v96
    %138 = vst.msk [vmem:[#allocation2 + $0x61] sm:$0xff] %vm129, %v98
    %139 = vst.msk [vmem:[#allocation2 + $0x69] sm:$0xff] %vm129, %v100
    %140 = vst.msk [vmem:[#allocation2 + $0x79] sm:$0xff] %vm129, %v102
    %141 = vst.msk [vmem:[#allocation2 + $0x81] sm:$0xff] %vm129, %v104
    %142 = vst.msk [vmem:[#allocation2 + $0x91] sm:$0xff] %vm129, %v106
    %143 = vst.msk [vmem:[#allocation2 + $0x99] sm:$0xff] %vm129, %v108
    %144 = vst.msk [vmem:[#allocation2 + $0xa9] sm:$0xff] %vm129, %v110
    %145 = vst.msk [vmem:[#allocation2 + $0xb1] sm:$0xff] %vm129, %v112
    %v146 = vld [vmem:[#allocation2 + $0x1] sm:$0xff]
    %v147 = vld [vmem:[#allocation2 + $0x9] sm:$0xff]
    %v148 = vld [vmem:[#allocation2 + $0x19] sm:$0xff]
    %v149 = vld [vmem:[#allocation2 + $0x21] sm:$0xff]
    %v150 = vld [vmem:[#allocation2 + $0x31] sm:$0xff]
    %v151 = vld [vmem:[#allocation2 + $0x39] sm:$0xff]
    %v152 = vld [vmem:[#allocation2 + $0x49] sm:$0xff]
    %v153 = vld [vmem:[#allocation2 + $0x51] sm:$0xff]
    %v154 = vld [vmem:[#allocation2 + $0x61] sm:$0xff]
    %v155 = vld [vmem:[#allocation2 + $0x69] sm:$0xff]
    %v156 = vld [vmem:[#allocation2 + $0x79] sm:$0xff]
    %v157 = vld [vmem:[#allocation2 + $0x81] sm:$0xff]
    %v158 = vld [vmem:[#allocation2 + $0x91] sm:$0xff]
    %v159 = vld [vmem:[#allocation2 + $0x99] sm:$0xff]
    %v160 = vld [vmem:[#allocation2 + $0xa9] sm:$0xff]
    %v161 = vld [vmem:[#allocation2 + $0xb1] sm:$0xff]
    %v162 = vmul.f32 %v146, 0.5625
    %v163 = vmul.f32 %v147, 0.5625
    %v164 = vmul.f32 %v148, 0.5625
    %v165 = vmul.f32 %v149, 0.5625
    %v166 = vmul.f32 %v150, 0.5625
    %v167 = vmul.f32 %v151, 0.5625
    %v168 = vmul.f32 %v152, 0.5625
    %v169 = vmul.f32 %v153, 0.5625
    %v170 = vmul.f32 %v154, 0.5625
    %v171 = vmul.f32 %v155, 0.5625
    %v172 = vmul.f32 %v156, 0.5625
    %v173 = vmul.f32 %v157, 0.5625
    %v174 = vmul.f32 %v158, 0.5625
    %v175 = vmul.f32 %v159, 0.5625
    %v176 = vmul.f32 %v160, 0.5625
    %v177 = vmul.f32 %v161, 0.5625
    %v178 = vmul.f32 %v146, 0.1875
    %v179 = vmul.f32 %v147, 0.1875
    %v180 = vmul.f32 %v148, 0.1875
    %v181 = vmul.f32 %v149, 0.1875
    %v182 = vmul.f32 %v150, 0.1875
    %v183 = vmul.f32 %v151, 0.1875
    %v184 = vmul.f32 %v152, 0.1875
    %v185 = vmul.f32 %v153, 0.1875
    %v186 = vmul.f32 %v154, 0.1875
    %v187 = vmul.f32 %v155, 0.1875
    %v188 = vmul.f32 %v156, 0.1875
    %v189 = vmul.f32 %v157, 0.1875
    %v190 = vmul.f32 %v158, 0.1875
    %v191 = vmul.f32 %v159, 0.1875
    %v192 = vmul.f32 %v160, 0.1875
    %v193 = vmul.f32 %v161, 0.1875
    %210 = vrot.lane.b32.xlu0 %v178, 1
    %v211 = vpop.permute.xlu0 %210
    %212 = vrot.lane.b32.xlu0 %v179, 1
    %v213 = vpop.permute.xlu0 %212
    %214 = vrot.lane.b32.xlu0 %v180, 1
    %v215 = vpop.permute.xlu0 %214
    %216 = vrot.lane.b32.xlu0 %v181, 1
    %v217 = vpop.permute.xlu0 %216
    %218 = vrot.lane.b32.xlu0 %v182, 1
    %v219 = vpop.permute.xlu0 %218
    %220 = vrot.lane.b32.xlu0 %v183, 1
    %v221 = vpop.permute.xlu0 %220
    %222 = vrot.lane.b32.xlu0 %v184, 1
    %v223 = vpop.permute.xlu0 %222
    %224 = vrot.lane.b32.xlu0 %v185, 1
    %v225 = vpop.permute.xlu0 %224
    %226 = vrot.lane.b32.xlu0 %v186, 1
    %v227 = vpop.permute.xlu0 %226
    %228 = vrot.lane.b32.xlu0 %v187, 1
    %v229 = vpop.permute.xlu0 %228
    %230 = vrot.lane.b32.xlu0 %v188, 1
    %v231 = vpop.permute.xlu0 %230
    %232 = vrot.lane.b32.xlu0 %v189, 1
    %v233 = vpop.permute.xlu0 %232
    %234 = vrot.lane.b32.xlu0 %v190, 1
    %v235 = vpop.permute.xlu0 %234
    %236 = vrot.lane.b32.xlu0 %v191, 1
    %v237 = vpop.permute.xlu0 %236
    %238 = vrot.lane.b32.xlu0 %v192, 1
    %v239 = vpop.permute.xlu0 %238
    %240 = vrot.lane.b32.xlu0 %v193, 1
    %v241 = vpop.permute.xlu0 %240
    %v258 = vadd.f32 %v162, %v211
    %v259 = vadd.f32 %v163, %v213
    %v260 = vadd.f32 %v164, %v215
    %v261 = vadd.f32 %v165, %v217
    %v262 = vadd.f32 %v166, %v219
    %v263 = vadd.f32 %v167, %v221
    %v264 = vadd.f32 %v168, %v223
    %v265 = vadd.f32 %v169, %v225
    %v266 = vadd.f32 %v170, %v227
    %v267 = vadd.f32 %v171, %v229
    %v268 = vadd.f32 %v172, %v231
    %v269 = vadd.f32 %v173, %v233
    %v270 = vadd.f32 %v174, %v235
    %v271 = vadd.f32 %v175, %v237
    %v272 = vadd.f32 %v176, %v239
    %v273 = vadd.f32 %v177, %v241
    %v274 = vld [vmem:[#allocation2] sm:$0xff]
    %v275 = vld [vmem:[#allocation2 + $0x8] sm:$0xff]
    %v276 = vld [vmem:[#allocation2 + $0x18] sm:$0xff]
    %v277 = vld [vmem:[#allocation2 + $0x20] sm:$0xff]
    %v278 = vld [vmem:[#allocation2 + $0x30] sm:$0xff]
    %v279 = vld [vmem:[#allocation2 + $0x38] sm:$0xff]
    %v280 = vld [vmem:[#allocation2 + $0x48] sm:$0xff]
    %v281 = vld [vmem:[#allocation2 + $0x50] sm:$0xff]
    %v282 = vld [vmem:[#allocation2 + $0x60] sm:$0xff]
    %v283 = vld [vmem:[#allocation2 + $0x68] sm:$0xff]
    %v284 = vld [vmem:[#allocation2 + $0x78] sm:$0xff]
    %v285 = vld [vmem:[#allocation2 + $0x80] sm:$0xff]
    %v286 = vld [vmem:[#allocation2 + $0x90] sm:$0xff]
    %v287 = vld [vmem:[#allocation2 + $0x98] sm:$0xff]
    %v288 = vld [vmem:[#allocation2 + $0xa8] sm:$0xff]
    %v289 = vld [vmem:[#allocation2 + $0xb0] sm:$0xff]
    %v290 = vmul.f32 %v274, 0.1875
    %v291 = vmul.f32 %v275, 0.1875
    %v292 = vmul.f32 %v276, 0.1875
    %v293 = vmul.f32 %v277, 0.1875
    %v294 = vmul.f32 %v278, 0.1875
    %v295 = vmul.f32 %v279, 0.1875
    %v296 = vmul.f32 %v280, 0.1875
    %v297 = vmul.f32 %v281, 0.1875
    %v298 = vmul.f32 %v282, 0.1875
    %v299 = vmul.f32 %v283, 0.1875
    %v300 = vmul.f32 %v284, 0.1875
    %v301 = vmul.f32 %v285, 0.1875
    %v302 = vmul.f32 %v286, 0.1875
    %v303 = vmul.f32 %v287, 0.1875
    %v304 = vmul.f32 %v288, 0.1875
    %v305 = vmul.f32 %v289, 0.1875
    %v306 = vadd.f32 %v258, %v290
    %v307 = vadd.f32 %v259, %v291
    %v308 = vadd.f32 %v260, %v292
    %v309 = vadd.f32 %v261, %v293
    %v310 = vadd.f32 %v262, %v294
    %v311 = vadd.f32 %v263, %v295
    %v312 = vadd.f32 %v264, %v296
    %v313 = vadd.f32 %v265, %v297
    %v314 = vadd.f32 %v266, %v298
    %v315 = vadd.f32 %v267, %v299
    %v316 = vadd.f32 %v268, %v300
    %v317 = vadd.f32 %v269, %v301
    %v318 = vadd.f32 %v270, %v302
    %v319 = vadd.f32 %v271, %v303
    %v320 = vadd.f32 %v272, %v304
    %v321 = vadd.f32 %v273, %v305
    %v322 = vmul.f32 %v274, 0.0625
    %v323 = vmul.f32 %v275, 0.0625
    %v324 = vmul.f32 %v276, 0.0625
    %v325 = vmul.f32 %v277, 0.0625
    %v326 = vmul.f32 %v278, 0.0625
    %v327 = vmul.f32 %v279, 0.0625
    %v328 = vmul.f32 %v280, 0.0625
    %v329 = vmul.f32 %v281, 0.0625
    %v330 = vmul.f32 %v282, 0.0625
    %v331 = vmul.f32 %v283, 0.0625
    %v332 = vmul.f32 %v284, 0.0625
    %v333 = vmul.f32 %v285, 0.0625
    %v334 = vmul.f32 %v286, 0.0625
    %v335 = vmul.f32 %v287, 0.0625
    %v336 = vmul.f32 %v288, 0.0625
    %v337 = vmul.f32 %v289, 0.0625
    %354 = vrot.lane.b32.xlu0 %v322, 1
    %v355 = vpop.permute.xlu0 %354
    %356 = vrot.lane.b32.xlu0 %v323, 1
    %v357 = vpop.permute.xlu0 %356
    %358 = vrot.lane.b32.xlu0 %v324, 1
    %v359 = vpop.permute.xlu0 %358
    %360 = vrot.lane.b32.xlu0 %v325, 1
    %v361 = vpop.permute.xlu0 %360
    %362 = vrot.lane.b32.xlu0 %v326, 1
    %v363 = vpop.permute.xlu0 %362
    %364 = vrot.lane.b32.xlu0 %v327, 1
    %v365 = vpop.permute.xlu0 %364
    %366 = vrot.lane.b32.xlu0 %v328, 1
    %v367 = vpop.permute.xlu0 %366
    %368 = vrot.lane.b32.xlu0 %v329, 1
    %v369 = vpop.permute.xlu0 %368
    %370 = vrot.lane.b32.xlu0 %v330, 1
    %v371 = vpop.permute.xlu0 %370
    %372 = vrot.lane.b32.xlu0 %v331, 1
    %v373 = vpop.permute.xlu0 %372
    %374 = vrot.lane.b32.xlu0 %v332, 1
    %v375 = vpop.permute.xlu0 %374
    %376 = vrot.lane.b32.xlu0 %v333, 1
    %v377 = vpop.permute.xlu0 %376
    %378 = vrot.lane.b32.xlu0 %v334, 1
    %v379 = vpop.permute.xlu0 %378
    %380 = vrot.lane.b32.xlu0 %v335, 1
    %v381 = vpop.permute.xlu0 %380
    %382 = vrot.lane.b32.xlu0 %v336, 1
    %v383 = vpop.permute.xlu0 %382
    %384 = vrot.lane.b32.xlu0 %v337, 1
    %v385 = vpop.permute.xlu0 %384
    %v402 = vadd.f32 %v306, %v355
    %v403 = vadd.f32 %v307, %v357
    %v404 = vadd.f32 %v308, %v359
    %v405 = vadd.f32 %v309, %v361
    %v406 = vadd.f32 %v310, %v363
    %v407 = vadd.f32 %v311, %v365
    %v408 = vadd.f32 %v312, %v367
    %v409 = vadd.f32 %v313, %v369
    %v410 = vadd.f32 %v314, %v371
    %v411 = vadd.f32 %v315, %v373
    %v412 = vadd.f32 %v316, %v375
    %v413 = vadd.f32 %v317, %v377
    %v414 = vadd.f32 %v318, %v379
    %v415 = vadd.f32 %v319, %v381
    %v416 = vadd.f32 %v320, %v383
    %v417 = vadd.f32 %v321, %v385
    %434 = vrot.lane.b32.xlu0 %v402, 127
    %v435 = vpop.permute.xlu0 %434
    %436 = vrot.lane.b32.xlu0 %v403, 127
    %v437 = vpop.permute.xlu0 %436
    %438 = vrot.lane.b32.xlu0 %v404, 127
    %v439 = vpop.permute.xlu0 %438
    %440 = vrot.lane.b32.xlu0 %v405, 127
    %v441 = vpop.permute.xlu0 %440
    %442 = vrot.lane.b32.xlu0 %v406, 127
    %v443 = vpop.permute.xlu0 %442
    %444 = vrot.lane.b32.xlu0 %v407, 127
    %v445 = vpop.permute.xlu0 %444
    %446 = vrot.lane.b32.xlu0 %v408, 127
    %v447 = vpop.permute.xlu0 %446
    %448 = vrot.lane.b32.xlu0 %v409, 127
    %v449 = vpop.permute.xlu0 %448
    %450 = vrot.lane.b32.xlu0 %v410, 127
    %v451 = vpop.permute.xlu0 %450
    %452 = vrot.lane.b32.xlu0 %v411, 127
    %v453 = vpop.permute.xlu0 %452
    %454 = vrot.lane.b32.xlu0 %v412, 127
    %v455 = vpop.permute.xlu0 %454
    %456 = vrot.lane.b32.xlu0 %v413, 127
    %v457 = vpop.permute.xlu0 %456
    %458 = vrot.lane.b32.xlu0 %v414, 127
    %v459 = vpop.permute.xlu0 %458
    %460 = vrot.lane.b32.xlu0 %v415, 127
    %v461 = vpop.permute.xlu0 %460
    %462 = vrot.lane.b32.xlu0 %v416, 127
    %v463 = vpop.permute.xlu0 %462
    %464 = vrot.lane.b32.xlu0 %v417, 127
    %v465 = vpop.permute.xlu0 %464
    %vm482 = vcmask 130048
    %483 = vst.msk [vmem:[#allocation6] sm:$0xff] %vm482, %v435
    %484 = vst.msk [vmem:[#allocation6 + $0x8] sm:$0xff] %vm482, %v437
    %485 = vst.msk [vmem:[#allocation6 + $0x40] sm:$0xff] %vm482, %v439
    %486 = vst.msk [vmem:[#allocation6 + $0x48] sm:$0xff] %vm482, %v441
    %487 = vst.msk [vmem:[#allocation6 + $0x80] sm:$0xff] %vm482, %v443
    %488 = vst.msk [vmem:[#allocation6 + $0x88] sm:$0xff] %vm482, %v445
    %489 = vst.msk [vmem:[#allocation6 + $0xc0] sm:$0xff] %vm482, %v447
    %490 = vst.msk [vmem:[#allocation6 + $0xc8] sm:$0xff] %vm482, %v449
    %491 = vst.msk [vmem:[#allocation6 + $0x100] sm:$0xff] %vm482, %v451
    %492 = vst.msk [vmem:[#allocation6 + $0x108] sm:$0xff] %vm482, %v453
    %493 = vst.msk [vmem:[#allocation6 + $0x140] sm:$0xff] %vm482, %v455
    %494 = vst.msk [vmem:[#allocation6 + $0x148] sm:$0xff] %vm482, %v457
    %495 = vst.msk [vmem:[#allocation6 + $0x180] sm:$0xff] %vm482, %v459
    %496 = vst.msk [vmem:[#allocation6 + $0x188] sm:$0xff] %vm482, %v461
    %497 = vst.msk [vmem:[#allocation6 + $0x1c0] sm:$0xff] %vm482, %v463
    %498 = vst.msk [vmem:[#allocation6 + $0x1c8] sm:$0xff] %vm482, %v465
    %v499 = vld [vmem:[#allocation2 + $0x1] sm:$0xff]
    %v500 = vld [vmem:[#allocation2 + $0x9] sm:$0xff]
    %v501 = vld [vmem:[#allocation2 + $0x19] sm:$0xff]
    %v502 = vld [vmem:[#allocation2 + $0x21] sm:$0xff]
    %v503 = vld [vmem:[#allocation2 + $0x31] sm:$0xff]
    %v504 = vld [vmem:[#allocation2 + $0x39] sm:$0xff]
    %v505 = vld [vmem:[#allocation2 + $0x49] sm:$0xff]
    %v506 = vld [vmem:[#allocation2 + $0x51] sm:$0xff]
    %v507 = vld [vmem:[#allocation2 + $0x61] sm:$0xff]
    %v508 = vld [vmem:[#allocation2 + $0x69] sm:$0xff]
    %v509 = vld [vmem:[#allocation2 + $0x79] sm:$0xff]
    %v510 = vld [vmem:[#allocation2 + $0x81] sm:$0xff]
    %v511 = vld [vmem:[#allocation2 + $0x91] sm:$0xff]
    %v512 = vld [vmem:[#allocation2 + $0x99] sm:$0xff]
    %v513 = vld [vmem:[#allocation2 + $0xa9] sm:$0xff]
    %v514 = vld [vmem:[#allocation2 + $0xb1] sm:$0xff]
    %v515 = vmul.f32 %v499, 0.1875
    %v516 = vmul.f32 %v500, 0.1875
    %v517 = vmul.f32 %v501, 0.1875
    %v518 = vmul.f32 %v502, 0.1875
    %v519 = vmul.f32 %v503, 0.1875
    %v520 = vmul.f32 %v504, 0.1875
    %v521 = vmul.f32 %v505, 0.1875
    %v522 = vmul.f32 %v506, 0.1875
    %v523 = vmul.f32 %v507, 0.1875
    %v524 = vmul.f32 %v508, 0.1875
    %v525 = vmul.f32 %v509, 0.1875
    %v526 = vmul.f32 %v510, 0.1875
    %v527 = vmul.f32 %v511, 0.1875
    %v528 = vmul.f32 %v512, 0.1875
    %v529 = vmul.f32 %v513, 0.1875
    %v530 = vmul.f32 %v514, 0.1875
    %547 = vrot.lane.b32.xlu0 %v162, 1
    %v548 = vpop.permute.xlu0 %547
    %549 = vrot.lane.b32.xlu0 %v163, 1
    %v550 = vpop.permute.xlu0 %549
    %551 = vrot.lane.b32.xlu0 %v164, 1
    %v552 = vpop.permute.xlu0 %551
    %553 = vrot.lane.b32.xlu0 %v165, 1
    %v554 = vpop.permute.xlu0 %553
    %555 = vrot.lane.b32.xlu0 %v166, 1
    %v556 = vpop.permute.xlu0 %555
    %557 = vrot.lane.b32.xlu0 %v167, 1
    %v558 = vpop.permute.xlu0 %557
    %559 = vrot.lane.b32.xlu0 %v168, 1
    %v560 = vpop.permute.xlu0 %559
    %561 = vrot.lane.b32.xlu0 %v169, 1
    %v562 = vpop.permute.xlu0 %561
    %563 = vrot.lane.b32.xlu0 %v170, 1
    %v564 = vpop.permute.xlu0 %563
    %565 = vrot.lane.b32.xlu0 %v171, 1
    %v566 = vpop.permute.xlu0 %565
    %567 = vrot.lane.b32.xlu0 %v172, 1
    %v568 = vpop.permute.xlu0 %567
    %569 = vrot.lane.b32.xlu0 %v173, 1
    %v570 = vpop.permute.xlu0 %569
    %571 = vrot.lane.b32.xlu0 %v174, 1
    %v572 = vpop.permute.xlu0 %571
    %573 = vrot.lane.b32.xlu0 %v175, 1
    %v574 = vpop.permute.xlu0 %573
    %575 = vrot.lane.b32.xlu0 %v176, 1
    %v576 = vpop.permute.xlu0 %575
    %577 = vrot.lane.b32.xlu0 %v177, 1
    %v578 = vpop.permute.xlu0 %577
    %v595 = vadd.f32 %v515, %v548
    %v596 = vadd.f32 %v516, %v550
    %v597 = vadd.f32 %v517, %v552
    %v598 = vadd.f32 %v518, %v554
    %v599 = vadd.f32 %v519, %v556
    %v600 = vadd.f32 %v520, %v558
    %v601 = vadd.f32 %v521, %v560
    %v602 = vadd.f32 %v522, %v562
    %v603 = vadd.f32 %v523, %v564
    %v604 = vadd.f32 %v524, %v566
    %v605 = vadd.f32 %v525, %v568
    %v606 = vadd.f32 %v526, %v570
    %v607 = vadd.f32 %v527, %v572
    %v608 = vadd.f32 %v528, %v574
    %v609 = vadd.f32 %v529, %v576
    %v610 = vadd.f32 %v530, %v578
    %v611 = vld [vmem:[#allocation2] sm:$0xff]
    %v612 = vld [vmem:[#allocation2 + $0x8] sm:$0xff]
    %v613 = vld [vmem:[#allocation2 + $0x18] sm:$0xff]
    %v614 = vld [vmem:[#allocation2 + $0x20] sm:$0xff]
    %v615 = vld [vmem:[#allocation2 + $0x30] sm:$0xff]
    %v616 = vld [vmem:[#allocation2 + $0x38] sm:$0xff]
    %v617 = vld [vmem:[#allocation2 + $0x48] sm:$0xff]
    %v618 = vld [vmem:[#allocation2 + $0x50] sm:$0xff]
    %v619 = vld [vmem:[#allocation2 + $0x60] sm:$0xff]
    %v620 = vld [vmem:[#allocation2 + $0x68] sm:$0xff]
    %v621 = vld [vmem:[#allocation2 + $0x78] sm:$0xff]
    %v622 = vld [vmem:[#allocation2 + $0x80] sm:$0xff]
    %v623 = vld [vmem:[#allocation2 + $0x90] sm:$0xff]
    %v624 = vld [vmem:[#allocation2 + $0x98] sm:$0xff]
    %v625 = vld [vmem:[#allocation2 + $0xa8] sm:$0xff]
    %v626 = vld [vmem:[#allocation2 + $0xb0] sm:$0xff]
    %v627 = vmul.f32 %v611, 0.0625
    %v628 = vmul.f32 %v612, 0.0625
    %v629 = vmul.f32 %v613, 0.0625
    %v630 = vmul.f32 %v614, 0.0625
    %v631 = vmul.f32 %v615, 0.0625
    %v632 = vmul.f32 %v616, 0.0625
    %v633 = vmul.f32 %v617, 0.0625
    %v634 = vmul.f32 %v618, 0.0625
    %v635 = vmul.f32 %v619, 0.0625
    %v636 = vmul.f32 %v620, 0.0625
    %v637 = vmul.f32 %v621, 0.0625
    %v638 = vmul.f32 %v622, 0.0625
    %v639 = vmul.f32 %v623, 0.0625
    %v640 = vmul.f32 %v624, 0.0625
    %v641 = vmul.f32 %v625, 0.0625
    %v642 = vmul.f32 %v626, 0.0625
    %v643 = vadd.f32 %v595, %v627
    %v644 = vadd.f32 %v596, %v628
    %v645 = vadd.f32 %v597, %v629
    %v646 = vadd.f32 %v598, %v630
    %v647 = vadd.f32 %v599, %v631
    %v648 = vadd.f32 %v600, %v632
    %v649 = vadd.f32 %v601, %v633
    %v650 = vadd.f32 %v602, %v634
    %v651 = vadd.f32 %v603, %v635
    %v652 = vadd.f32 %v604, %v636
    %v653 = vadd.f32 %v605, %v637
    %v654 = vadd.f32 %v606, %v638
    %v655 = vadd.f32 %v607, %v639
    %v656 = vadd.f32 %v608, %v640
    %v657 = vadd.f32 %v609, %v641
    %v658 = vadd.f32 %v610, %v642
    %675 = vrot.lane.b32.xlu0 %v290, 1
    %v676 = vpop.permute.xlu0 %675
    %677 = vrot.lane.b32.xlu0 %v291, 1
    %v678 = vpop.permute.xlu0 %677
    %679 = vrot.lane.b32.xlu0 %v292, 1
    %v680 = vpop.permute.xlu0 %679
    %681 = vrot.lane.b32.xlu0 %v293, 1
    %v682 = vpop.permute.xlu0 %681
    %683 = vrot.lane.b32.xlu0 %v294, 1
    %v684 = vpop.permute.xlu0 %683
    %685 = vrot.lane.b32.xlu0 %v295, 1
    %v686 = vpop.permute.xlu0 %685
    %687 = vrot.lane.b32.xlu0 %v296, 1
    %v688 = vpop.permute.xlu0 %687
    %689 = vrot.lane.b32.xlu0 %v297, 1
    %v690 = vpop.permute.xlu0 %689
    %691 = vrot.lane.b32.xlu0 %v298, 1
    %v692 = vpop.permute.xlu0 %691
    %693 = vrot.lane.b32.xlu0 %v299, 1
    %v694 = vpop.permute.xlu0 %693
    %695 = vrot.lane.b32.xlu0 %v300, 1
    %v696 = vpop.permute.xlu0 %695
    %697 = vrot.lane.b32.xlu0 %v301, 1
    %v698 = vpop.permute.xlu0 %697
    %699 = vrot.lane.b32.xlu0 %v302, 1
    %v700 = vpop.permute.xlu0 %699
    %701 = vrot.lane.b32.xlu0 %v303, 1
    %v702 = vpop.permute.xlu0 %701
    %703 = vrot.lane.b32.xlu0 %v304, 1
    %v704 = vpop.permute.xlu0 %703
    %705 = vrot.lane.b32.xlu0 %v305, 1
    %v706 = vpop.permute.xlu0 %705
    %v723 = vadd.f32 %v643, %v676
    %v724 = vadd.f32 %v644, %v678
    %v725 = vadd.f32 %v645, %v680
    %v726 = vadd.f32 %v646, %v682
    %v727 = vadd.f32 %v647, %v684
    %v728 = vadd.f32 %v648, %v686
    %v729 = vadd.f32 %v649, %v688
    %v730 = vadd.f32 %v650, %v690
    %v731 = vadd.f32 %v651, %v692
    %v732 = vadd.f32 %v652, %v694
    %v733 = vadd.f32 %v653, %v696
    %v734 = vadd.f32 %v654, %v698
    %v735 = vadd.f32 %v655, %v700
    %v736 = vadd.f32 %v656, %v702
    %v737 = vadd.f32 %v657, %v704
    %v738 = vadd.f32 %v658, %v706
    %755 = vrot.lane.b32.xlu0 %v723, 126
    %v756 = vpop.permute.xlu0 %755
    %757 = vrot.lane.b32.xlu0 %v724, 126
    %v758 = vpop.permute.xlu0 %757
    %759 = vrot.lane.b32.xlu0 %v725, 126
    %v760 = vpop.permute.xlu0 %759
    %761 = vrot.lane.b32.xlu0 %v726, 126
    %v762 = vpop.permute.xlu0 %761
    %763 = vrot.lane.b32.xlu0 %v727, 126
    %v764 = vpop.permute.xlu0 %763
    %765 = vrot.lane.b32.xlu0 %v728, 126
    %v766 = vpop.permute.xlu0 %765
    %767 = vrot.lane.b32.xlu0 %v729, 126
    %v768 = vpop.permute.xlu0 %767
    %769 = vrot.lane.b32.xlu0 %v730, 126
    %v770 = vpop.permute.xlu0 %769
    %771 = vrot.lane.b32.xlu0 %v731, 126
    %v772 = vpop.permute.xlu0 %771
    %773 = vrot.lane.b32.xlu0 %v732, 126
    %v774 = vpop.permute.xlu0 %773
    %775 = vrot.lane.b32.xlu0 %v733, 126
    %v776 = vpop.permute.xlu0 %775
    %777 = vrot.lane.b32.xlu0 %v734, 126
    %v778 = vpop.permute.xlu0 %777
    %779 = vrot.lane.b32.xlu0 %v735, 126
    %v780 = vpop.permute.xlu0 %779
    %781 = vrot.lane.b32.xlu0 %v736, 126
    %v782 = vpop.permute.xlu0 %781
    %783 = vrot.lane.b32.xlu0 %v737, 126
    %v784 = vpop.permute.xlu0 %783
    %785 = vrot.lane.b32.xlu0 %v738, 126
    %v786 = vpop.permute.xlu0 %785
    %s803 = scalar_lea.vmem [#allocation6], 16
    %804 = vst.msk [vmem:[%s803] sm:$0xff] %vm482, %v756
    %805 = vst.msk [vmem:[%s803 + $0x8] sm:$0xff] %vm482, %v758
    %806 = vst.msk [vmem:[%s803 + $0x40] sm:$0xff] %vm482, %v760
    %807 = vst.msk [vmem:[%s803 + $0x48] sm:$0xff] %vm482, %v762
    %808 = vst.msk [vmem:[%s803 + $0x80] sm:$0xff] %vm482, %v764
    %809 = vst.msk [vmem:[%s803 + $0x88] sm:$0xff] %vm482, %v766
    %810 = vst.msk [vmem:[%s803 + $0xc0] sm:$0xff] %vm482, %v768
    %811 = vst.msk [vmem:[%s803 + $0xc8] sm:$0xff] %vm482, %v770
    %812 = vst.msk [vmem:[%s803 + $0x100] sm:$0xff] %vm482, %v772
    %813 = vst.msk [vmem:[%s803 + $0x108] sm:$0xff] %vm482, %v774
    %814 = vst.msk [vmem:[%s803 + $0x140] sm:$0xff] %vm482, %v776
    %815 = vst.msk [vmem:[%s803 + $0x148] sm:$0xff] %vm482, %v778
    %816 = vst.msk [vmem:[%s803 + $0x180] sm:$0xff] %vm482, %v780
    %817 = vst.msk [vmem:[%s803 + $0x188] sm:$0xff] %vm482, %v782
    %818 = vst.msk [vmem:[%s803 + $0x1c0] sm:$0xff] %vm482, %v784
    %819 = vst.msk [vmem:[%s803 + $0x1c8] sm:$0xff] %vm482, %v786
    %v820 = vld [vmem:[#allocation2 + $0x2] sm:$0xff]
    %v821 = vld [vmem:[#allocation2 + $0xa] sm:$0xff]
    %v822 = vld [vmem:[#allocation2 + $0x1a] sm:$0xff]
    %v823 = vld [vmem:[#allocation2 + $0x22] sm:$0xff]
    %v824 = vld [vmem:[#allocation2 + $0x32] sm:$0xff]
    %v825 = vld [vmem:[#allocation2 + $0x3a] sm:$0xff]
    %v826 = vld [vmem:[#allocation2 + $0x4a] sm:$0xff]
    %v827 = vld [vmem:[#allocation2 + $0x52] sm:$0xff]
    %v828 = vld [vmem:[#allocation2 + $0x62] sm:$0xff]
    %v829 = vld [vmem:[#allocation2 + $0x6a] sm:$0xff]
    %v830 = vld [vmem:[#allocation2 + $0x7a] sm:$0xff]
    %v831 = vld [vmem:[#allocation2 + $0x82] sm:$0xff]
    %v832 = vld [vmem:[#allocation2 + $0x92] sm:$0xff]
    %v833 = vld [vmem:[#allocation2 + $0x9a] sm:$0xff]
    %v834 = vld [vmem:[#allocation2 + $0xaa] sm:$0xff]
    %v835 = vld [vmem:[#allocation2 + $0xb2] sm:$0xff]
    %v836 = vmul.f32 %v820, 0.1875
    %v837 = vmul.f32 %v821, 0.1875
    %v838 = vmul.f32 %v822, 0.1875
    %v839 = vmul.f32 %v823, 0.1875
    %v840 = vmul.f32 %v824, 0.1875
    %v841 = vmul.f32 %v825, 0.1875
    %v842 = vmul.f32 %v826, 0.1875
    %v843 = vmul.f32 %v827, 0.1875
    %v844 = vmul.f32 %v828, 0.1875
    %v845 = vmul.f32 %v829, 0.1875
    %v846 = vmul.f32 %v830, 0.1875
    %v847 = vmul.f32 %v831, 0.1875
    %v848 = vmul.f32 %v832, 0.1875
    %v849 = vmul.f32 %v833, 0.1875
    %v850 = vmul.f32 %v834, 0.1875
    %v851 = vmul.f32 %v835, 0.1875
    %v852 = vmul.f32 %v820, 0.0625
    %v853 = vmul.f32 %v821, 0.0625
    %v854 = vmul.f32 %v822, 0.0625
    %v855 = vmul.f32 %v823, 0.0625
    %v856 = vmul.f32 %v824, 0.0625
    %v857 = vmul.f32 %v825, 0.0625
    %v858 = vmul.f32 %v826, 0.0625
    %v859 = vmul.f32 %v827, 0.0625
    %v860 = vmul.f32 %v828, 0.0625
    %v861 = vmul.f32 %v829, 0.0625
    %v862 = vmul.f32 %v830, 0.0625
    %v863 = vmul.f32 %v831, 0.0625
    %v864 = vmul.f32 %v832, 0.0625
    %v865 = vmul.f32 %v833, 0.0625
    %v866 = vmul.f32 %v834, 0.0625
    %v867 = vmul.f32 %v835, 0.0625
    %884 = vrot.lane.b32.xlu0 %v852, 1
    %v885 = vpop.permute.xlu0 %884
    %886 = vrot.lane.b32.xlu0 %v853, 1
    %v887 = vpop.permute.xlu0 %886
    %888 = vrot.lane.b32.xlu0 %v854, 1
    %v889 = vpop.permute.xlu0 %888
    %890 = vrot.lane.b32.xlu0 %v855, 1
    %v891 = vpop.permute.xlu0 %890
    %892 = vrot.lane.b32.xlu0 %v856, 1
    %v893 = vpop.permute.xlu0 %892
    %894 = vrot.lane.b32.xlu0 %v857, 1
    %v895 = vpop.permute.xlu0 %894
    %896 = vrot.lane.b32.xlu0 %v858, 1
    %v897 = vpop.permute.xlu0 %896
    %898 = vrot.lane.b32.xlu0 %v859, 1
    %v899 = vpop.permute.xlu0 %898
    %900 = vrot.lane.b32.xlu0 %v860, 1
    %v901 = vpop.permute.xlu0 %900
    %902 = vrot.lane.b32.xlu0 %v861, 1
    %v903 = vpop.permute.xlu0 %902
    %904 = vrot.lane.b32.xlu0 %v862, 1
    %v905 = vpop.permute.xlu0 %904
    %906 = vrot.lane.b32.xlu0 %v863, 1
    %v907 = vpop.permute.xlu0 %906
    %908 = vrot.lane.b32.xlu0 %v864, 1
    %v909 = vpop.permute.xlu0 %908
    %910 = vrot.lane.b32.xlu0 %v865, 1
    %v911 = vpop.permute.xlu0 %910
    %912 = vrot.lane.b32.xlu0 %v866, 1
    %v913 = vpop.permute.xlu0 %912
    %914 = vrot.lane.b32.xlu0 %v867, 1
    %v915 = vpop.permute.xlu0 %914
    %v932 = vadd.f32 %v836, %v885
    %v933 = vadd.f32 %v837, %v887
    %v934 = vadd.f32 %v838, %v889
    %v935 = vadd.f32 %v839, %v891
    %v936 = vadd.f32 %v840, %v893
    %v937 = vadd.f32 %v841, %v895
    %v938 = vadd.f32 %v842, %v897
    %v939 = vadd.f32 %v843, %v899
    %v940 = vadd.f32 %v844, %v901
    %v941 = vadd.f32 %v845, %v903
    %v942 = vadd.f32 %v846, %v905
    %v943 = vadd.f32 %v847, %v907
    %v944 = vadd.f32 %v848, %v909
    %v945 = vadd.f32 %v849, %v911
    %v946 = vadd.f32 %v850, %v913
    %v947 = vadd.f32 %v851, %v915
    %v948 = vadd.f32 %v932, %v162
    %v949 = vadd.f32 %v933, %v163
    %v950 = vadd.f32 %v934, %v164
    %v951 = vadd.f32 %v935, %v165
    %v952 = vadd.f32 %v936, %v166
    %v953 = vadd.f32 %v937, %v167
    %v954 = vadd.f32 %v938, %v168
    %v955 = vadd.f32 %v939, %v169
    %v956 = vadd.f32 %v940, %v170
    %v957 = vadd.f32 %v941, %v171
    %v958 = vadd.f32 %v942, %v172
    %v959 = vadd.f32 %v943, %v173
    %v960 = vadd.f32 %v944, %v174
    %v961 = vadd.f32 %v945, %v175
    %v962 = vadd.f32 %v946, %v176
    %v963 = vadd.f32 %v947, %v177
    %v964 = vadd.f32 %v948, %v211
    %v965 = vadd.f32 %v949, %v213
    %v966 = vadd.f32 %v950, %v215
    %v967 = vadd.f32 %v951, %v217
    %v968 = vadd.f32 %v952, %v219
    %v969 = vadd.f32 %v953, %v221
    %v970 = vadd.f32 %v954, %v223
    %v971 = vadd.f32 %v955, %v225
    %v972 = vadd.f32 %v956, %v227
    %v973 = vadd.f32 %v957, %v229
    %v974 = vadd.f32 %v958, %v231
    %v975 = vadd.f32 %v959, %v233
    %v976 = vadd.f32 %v960, %v235
    %v977 = vadd.f32 %v961, %v237
    %v978 = vadd.f32 %v962, %v239
    %v979 = vadd.f32 %v963, %v241
    %996 = vrot.lane.b32.xlu0 %v964, 127
    %v997 = vpop.permute.xlu0 %996
    %998 = vrot.lane.b32.xlu0 %v965, 127
    %v999 = vpop.permute.xlu0 %998
    %1000 = vrot.lane.b32.xlu0 %v966, 127
    %v1001 = vpop.permute.xlu0 %1000
    %1002 = vrot.lane.b32.xlu0 %v967, 127
    %v1003 = vpop.permute.xlu0 %1002
    %1004 = vrot.lane.b32.xlu0 %v968, 127
    %v1005 = vpop.permute.xlu0 %1004
    %1006 = vrot.lane.b32.xlu0 %v969, 127
    %v1007 = vpop.permute.xlu0 %1006
    %1008 = vrot.lane.b32.xlu0 %v970, 127
    %v1009 = vpop.permute.xlu0 %1008
    %1010 = vrot.lane.b32.xlu0 %v971, 127
    %v1011 = vpop.permute.xlu0 %1010
    %1012 = vrot.lane.b32.xlu0 %v972, 127
    %v1013 = vpop.permute.xlu0 %1012
    %1014 = vrot.lane.b32.xlu0 %v973, 127
    %v1015 = vpop.permute.xlu0 %1014
    %1016 = vrot.lane.b32.xlu0 %v974, 127
    %v1017 = vpop.permute.xlu0 %1016
    %1018 = vrot.lane.b32.xlu0 %v975, 127
    %v1019 = vpop.permute.xlu0 %1018
    %1020 = vrot.lane.b32.xlu0 %v976, 127
    %v1021 = vpop.permute.xlu0 %1020
    %1022 = vrot.lane.b32.xlu0 %v977, 127
    %v1023 = vpop.permute.xlu0 %1022
    %1024 = vrot.lane.b32.xlu0 %v978, 127
    %v1025 = vpop.permute.xlu0 %1024
    %1026 = vrot.lane.b32.xlu0 %v979, 127
    %v1027 = vpop.permute.xlu0 %1026
    %s1044 = scalar_lea.vmem [#allocation6], 32
    %1045 = vst.msk [vmem:[%s1044] sm:$0xff] %vm482, %v997
    %1046 = vst.msk [vmem:[%s1044 + $0x8] sm:$0xff] %vm482, %v999
    %1047 = vst.msk [vmem:[%s1044 + $0x40] sm:$0xff] %vm482, %v1001
    %1048 = vst.msk [vmem:[%s1044 + $0x48] sm:$0xff] %vm482, %v1003
    %1049 = vst.msk [vmem:[%s1044 + $0x80] sm:$0xff] %vm482, %v1005
    %1050 = vst.msk [vmem:[%s1044 + $0x88] sm:$0xff] %vm482, %v1007
    %1051 = vst.msk [vmem:[%s1044 + $0xc0] sm:$0xff] %vm482, %v1009
    %1052 = vst.msk [vmem:[%s1044 + $0xc8] sm:$0xff] %vm482, %v1011
    %1053 = vst.msk [vmem:[%s1044 + $0x100] sm:$0xff] %vm482, %v1013
    %1054 = vst.msk [vmem:[%s1044 + $0x108] sm:$0xff] %vm482, %v1015
    %1055 = vst.msk [vmem:[%s1044 + $0x140] sm:$0xff] %vm482, %v1017
    %1056 = vst.msk [vmem:[%s1044 + $0x148] sm:$0xff] %vm482, %v1019
    %1057 = vst.msk [vmem:[%s1044 + $0x180] sm:$0xff] %vm482, %v1021
    %1058 = vst.msk [vmem:[%s1044 + $0x188] sm:$0xff] %vm482, %v1023
    %1059 = vst.msk [vmem:[%s1044 + $0x1c0] sm:$0xff] %vm482, %v1025
    %1060 = vst.msk [vmem:[%s1044 + $0x1c8] sm:$0xff] %vm482, %v1027
    %v1061 = vld [vmem:[#allocation2 + $0x2] sm:$0xff]
    %v1062 = vld [vmem:[#allocation2 + $0xa] sm:$0xff]
    %v1063 = vld [vmem:[#allocation2 + $0x1a] sm:$0xff]
    %v1064 = vld [vmem:[#allocation2 + $0x22] sm:$0xff]
    %v1065 = vld [vmem:[#allocation2 + $0x32] sm:$0xff]
    %v1066 = vld [vmem:[#allocation2 + $0x3a] sm:$0xff]
    %v1067 = vld [vmem:[#allocation2 + $0x4a] sm:$0xff]
    %v1068 = vld [vmem:[#allocation2 + $0x52] sm:$0xff]
    %v1069 = vld [vmem:[#allocation2 + $0x62] sm:$0xff]
    %v1070 = vld [vmem:[#allocation2 + $0x6a] sm:$0xff]
    %v1071 = vld [vmem:[#allocation2 + $0x7a] sm:$0xff]
    %v1072 = vld [vmem:[#allocation2 + $0x82] sm:$0xff]
    %v1073 = vld [vmem:[#allocation2 + $0x92] sm:$0xff]
    %v1074 = vld [vmem:[#allocation2 + $0x9a] sm:$0xff]
    %v1075 = vld [vmem:[#allocation2 + $0xaa] sm:$0xff]
    %v1076 = vld [vmem:[#allocation2 + $0xb2] sm:$0xff]
    %v1077 = vmul.f32 %v1061, 0.0625
    %v1078 = vmul.f32 %v1062, 0.0625
    %v1079 = vmul.f32 %v1063, 0.0625
    %v1080 = vmul.f32 %v1064, 0.0625
    %v1081 = vmul.f32 %v1065, 0.0625
    %v1082 = vmul.f32 %v1066, 0.0625
    %v1083 = vmul.f32 %v1067, 0.0625
    %v1084 = vmul.f32 %v1068, 0.0625
    %v1085 = vmul.f32 %v1069, 0.0625
    %v1086 = vmul.f32 %v1070, 0.0625
    %v1087 = vmul.f32 %v1071, 0.0625
    %v1088 = vmul.f32 %v1072, 0.0625
    %v1089 = vmul.f32 %v1073, 0.0625
    %v1090 = vmul.f32 %v1074, 0.0625
    %v1091 = vmul.f32 %v1075, 0.0625
    %v1092 = vmul.f32 %v1076, 0.0625
    %1109 = vrot.lane.b32.xlu0 %v836, 1
    %v1110 = vpop.permute.xlu0 %1109
    %1111 = vrot.lane.b32.xlu0 %v837, 1
    %v1112 = vpop.permute.xlu0 %1111
    %1113 = vrot.lane.b32.xlu0 %v838, 1
    %v1114 = vpop.permute.xlu0 %1113
    %1115 = vrot.lane.b32.xlu0 %v839, 1
    %v1116 = vpop.permute.xlu0 %1115
    %1117 = vrot.lane.b32.xlu0 %v840, 1
    %v1118 = vpop.permute.xlu0 %1117
    %1119 = vrot.lane.b32.xlu0 %v841, 1
    %v1120 = vpop.permute.xlu0 %1119
    %1121 = vrot.lane.b32.xlu0 %v842, 1
    %v1122 = vpop.permute.xlu0 %1121
    %1123 = vrot.lane.b32.xlu0 %v843, 1
    %v1124 = vpop.permute.xlu0 %1123
    %1125 = vrot.lane.b32.xlu0 %v844, 1
    %v1126 = vpop.permute.xlu0 %1125
    %1127 = vrot.lane.b32.xlu0 %v845, 1
    %v1128 = vpop.permute.xlu0 %1127
    %1129 = vrot.lane.b32.xlu0 %v846, 1
    %v1130 = vpop.permute.xlu0 %1129
    %1131 = vrot.lane.b32.xlu0 %v847, 1
    %v1132 = vpop.permute.xlu0 %1131
    %1133 = vrot.lane.b32.xlu0 %v848, 1
    %v1134 = vpop.permute.xlu0 %1133
    %1135 = vrot.lane.b32.xlu0 %v849, 1
    %v1136 = vpop.permute.xlu0 %1135
    %1137 = vrot.lane.b32.xlu0 %v850, 1
    %v1138 = vpop.permute.xlu0 %1137
    %1139 = vrot.lane.b32.xlu0 %v851, 1
    %v1140 = vpop.permute.xlu0 %1139
    %v1157 = vadd.f32 %v1077, %v1110
    %v1158 = vadd.f32 %v1078, %v1112
    %v1159 = vadd.f32 %v1079, %v1114
    %v1160 = vadd.f32 %v1080, %v1116
    %v1161 = vadd.f32 %v1081, %v1118
    %v1162 = vadd.f32 %v1082, %v1120
    %v1163 = vadd.f32 %v1083, %v1122
    %v1164 = vadd.f32 %v1084, %v1124
    %v1165 = vadd.f32 %v1085, %v1126
    %v1166 = vadd.f32 %v1086, %v1128
    %v1167 = vadd.f32 %v1087, %v1130
    %v1168 = vadd.f32 %v1088, %v1132
    %v1169 = vadd.f32 %v1089, %v1134
    %v1170 = vadd.f32 %v1090, %v1136
    %v1171 = vadd.f32 %v1091, %v1138
    %v1172 = vadd.f32 %v1092, %v1140
    %v1173 = vadd.f32 %v1157, %v515
    %v1174 = vadd.f32 %v1158, %v516
    %v1175 = vadd.f32 %v1159, %v517
    %v1176 = vadd.f32 %v1160, %v518
    %v1177 = vadd.f32 %v1161, %v519
    %v1178 = vadd.f32 %v1162, %v520
    %v1179 = vadd.f32 %v1163, %v521
    %v1180 = vadd.f32 %v1164, %v522
    %v1181 = vadd.f32 %v1165, %v523
    %v1182 = vadd.f32 %v1166, %v524
    %v1183 = vadd.f32 %v1167, %v525
    %v1184 = vadd.f32 %v1168, %v526
    %v1185 = vadd.f32 %v1169, %v527
    %v1186 = vadd.f32 %v1170, %v528
    %v1187 = vadd.f32 %v1171, %v529
    %v1188 = vadd.f32 %v1172, %v530
    %v1189 = vadd.f32 %v1173, %v548
    %v1190 = vadd.f32 %v1174, %v550
    %v1191 = vadd.f32 %v1175, %v552
    %v1192 = vadd.f32 %v1176, %v554
    %v1193 = vadd.f32 %v1177, %v556
    %v1194 = vadd.f32 %v1178, %v558
    %v1195 = vadd.f32 %v1179, %v560
    %v1196 = vadd.f32 %v1180, %v562
    %v1197 = vadd.f32 %v1181, %v564
    %v1198 = vadd.f32 %v1182, %v566
    %v1199 = vadd.f32 %v1183, %v568
    %v1200 = vadd.f32 %v1184, %v570
    %v1201 = vadd.f32 %v1185, %v572
    %v1202 = vadd.f32 %v1186, %v574
    %v1203 = vadd.f32 %v1187, %v576
    %v1204 = vadd.f32 %v1188, %v578
    %1221 = vrot.lane.b32.xlu0 %v1189, 126
    %v1222 = vpop.permute.xlu0 %1221
    %1223 = vrot.lane.b32.xlu0 %v1190, 126
    %v1224 = vpop.permute.xlu0 %1223
    %1225 = vrot.lane.b32.xlu0 %v1191, 126
    %v1226 = vpop.permute.xlu0 %1225
    %1227 = vrot.lane.b32.xlu0 %v1192, 126
    %v1228 = vpop.permute.xlu0 %1227
    %1229 = vrot.lane.b32.xlu0 %v1193, 126
    %v1230 = vpop.permute.xlu0 %1229
    %1231 = vrot.lane.b32.xlu0 %v1194, 126
    %v1232 = vpop.permute.xlu0 %1231
    %1233 = vrot.lane.b32.xlu0 %v1195, 126
    %v1234 = vpop.permute.xlu0 %1233
    %1235 = vrot.lane.b32.xlu0 %v1196, 126
    %v1236 = vpop.permute.xlu0 %1235
    %1237 = vrot.lane.b32.xlu0 %v1197, 126
    %v1238 = vpop.permute.xlu0 %1237
    %1239 = vrot.lane.b32.xlu0 %v1198, 126
    %v1240 = vpop.permute.xlu0 %1239
    %1241 = vrot.lane.b32.xlu0 %v1199, 126
    %v1242 = vpop.permute.xlu0 %1241
    %1243 = vrot.lane.b32.xlu0 %v1200, 126
    %v1244 = vpop.permute.xlu0 %1243
    %1245 = vrot.lane.b32.xlu0 %v1201, 126
    %v1246 = vpop.permute.xlu0 %1245
    %1247 = vrot.lane.b32.xlu0 %v1202, 126
    %v1248 = vpop.permute.xlu0 %1247
    %1249 = vrot.lane.b32.xlu0 %v1203, 126
    %v1250 = vpop.permute.xlu0 %1249
    %1251 = vrot.lane.b32.xlu0 %v1204, 126
    %v1252 = vpop.permute.xlu0 %1251
    %s1269 = scalar_lea.vmem [#allocation6], 48
    %1270 = vst.msk [vmem:[%s1269] sm:$0xff] %vm482, %v1222
    %1271 = vst.msk [vmem:[%s1269 + $0x8] sm:$0xff] %vm482, %v1224
    %1272 = vst.msk [vmem:[%s1269 + $0x40] sm:$0xff] %vm482, %v1226
    %1273 = vst.msk [vmem:[%s1269 + $0x48] sm:$0xff] %vm482, %v1228
    %1274 = vst.msk [vmem:[%s1269 + $0x80] sm:$0xff] %vm482, %v1230
    %1275 = vst.msk [vmem:[%s1269 + $0x88] sm:$0xff] %vm482, %v1232
    %1276 = vst.msk [vmem:[%s1269 + $0xc0] sm:$0xff] %vm482, %v1234
    %1277 = vst.msk [vmem:[%s1269 + $0xc8] sm:$0xff] %vm482, %v1236
    %1278 = vst.msk [vmem:[%s1269 + $0x100] sm:$0xff] %vm482, %v1238
    %1279 = vst.msk [vmem:[%s1269 + $0x108] sm:$0xff] %vm482, %v1240
    %1280 = vst.msk [vmem:[%s1269 + $0x140] sm:$0xff] %vm482, %v1242
    %1281 = vst.msk [vmem:[%s1269 + $0x148] sm:$0xff] %vm482, %v1244
    %1282 = vst.msk [vmem:[%s1269 + $0x180] sm:$0xff] %vm482, %v1246
    %1283 = vst.msk [vmem:[%s1269 + $0x188] sm:$0xff] %vm482, %v1248
    %1284 = vst.msk [vmem:[%s1269 + $0x1c0] sm:$0xff] %vm482, %v1250
    %1285 = vst.msk [vmem:[%s1269 + $0x1c8] sm:$0xff] %vm482, %v1252
    // Predicated region
    $region10: #{tpu_custom_call.1} parent=1 // pred_check
      _
    $region11: #{tpu_custom_call.1} parent=1 // pred_check_branch
      %1287 = sbr.rel (0) target = $region13
    $region12: #{tpu_custom_call.1} parent=1 // pred_region
      %s1289 = ssub.s32 8192, 8192
      %1290 = vsyncadd [#allocation5], %s1289
      %s1291 = sshll.u32 [#allocation6], 4
      %s1292 = int_to_ptr.vmem [resolvable:$true] %s1291
      %1297 = dma.vmem_to_hbm [thread:$0]  %s1292, 8192, %s1, [#allocation5], 128, 128, 8
    $region13: #{tpu_custom_call.1} parent=1 // pred_fallthru
      _
    // Predicated region
    $region14: #{tpu_custom_call.1} parent=1 // pred_check
      _
    $region15: #{tpu_custom_call.1} parent=1 // pred_check_branch
      %1299 = sbr.rel (0) target = $region17
    $region16: #{tpu_custom_call.1} parent=1 // pred_region
      %1300 = dma.done [#allocation5], 8192
    $region17: #{tpu_custom_call.1} parent=1 // pred_fallthru
      _
    %1301 = vsyncpa [#allocation4], 1
    %1302 = vsyncpa [#allocation5], 1

</llo_original>
